<compile_context>
chip_gen: v6e
topology: v6e:2x2x1
jax: 0.10.0
libtpu: 0.0.40
codegen_flags: <defaults>
</compile_context>

<pallas_src>
import functools
import math

import jax
import jax.numpy as jnp
from jax.experimental import pallas as pl
from jax.experimental.pallas import tpu as pltpu


# ---------------------------------------------------------------------------
# In-kernel building blocks
# ---------------------------------------------------------------------------

def _layer_norm(z, gamma, beta, *, eps, n):
    """Module's LayerNormalization: unbiased std (torch.std), eps added to sigma."""
    mu = jnp.mean(z, axis=-1, keepdims=True)
    sigma = jnp.sqrt(jnp.sum((z - mu) ** 2, axis=-1, keepdims=True) / (n - 1))
    inv = pl.reciprocal(sigma + eps, approx=False)
    return (z - mu) * inv * gamma + beta


def _mha_block(x, kv_src, wq, wk, wv, wp, bp, gamma, beta, *,
               n_head, bb, lq, lkv, d_k, d_v, d_model,
               inv_temper, apply_ln, eps):
    """MultiHeadAttention.forward (use_residual=True, dropout=identity).

    x      : (bb*lq,  D)  queries + residual
    kv_src : (bb*lkv, D)  key/value source
    wq/wk/wv : (D, H*d)   head-concatenated projections (pre-transposed)
    wp     : (H*d_v, D)   output projection (pre-transposed)
    bp/gamma/beta : (1, D)
    """
    # Wide projections: one matmul each with N = n_head*d_k (good MXU fill).
    q_all = jnp.dot(x, wq, preferred_element_type=jnp.float32)       # (bb*lq,  H*dk)
    k_all = jnp.dot(kv_src, wk, preferred_element_type=jnp.float32)  # (bb*lkv, H*dk)
    v_all = jnp.dot(kv_src, wv, preferred_element_type=jnp.float32)  # (bb*lkv, H*dv)

    # Start from residual + projection bias; accumulate per-head projections
    # (equivalent to concat(heads) @ wp, but without materializing the concat).
    y = x + bp
    for h in range(n_head):                                          # static unroll
        qh = q_all[:, h * d_k:(h + 1) * d_k].reshape(bb, lq, d_k)
        kh = k_all[:, h * d_k:(h + 1) * d_k].reshape(bb, lkv, d_k)
        vh = v_all[:, h * d_v:(h + 1) * d_v].reshape(bb, lkv, d_v)
        s = jnp.einsum('bqd,bkd->bqk', qh, kh,
                       preferred_element_type=jnp.float32) * inv_temper
        m = jnp.max(s, axis=-1, keepdims=True)
        p = jnp.exp(s - m)
        attn = p * pl.reciprocal(jnp.sum(p, axis=-1, keepdims=True), approx=False)
        ho = jnp.einsum('bqk,bkd->bqd', attn, vh,
                        preferred_element_type=jnp.float32).reshape(bb * lq, d_v)
        y = y + jnp.dot(ho, wp[h * d_v:(h + 1) * d_v, :],
                        preferred_element_type=jnp.float32)
    if apply_ln:                                      # torch skips LN iff seq len == 1
        y = _layer_norm(y, gamma, beta, eps=eps, n=d_model)
    return y


def _ffn_block(x, w1, b1, w2, b2, gamma, beta, *, d_model, apply_ln, eps):
    """PositionwiseFeedForward.forward (1x1 convs == matmuls, dropout=identity)."""
    h = jnp.dot(x, w1, preferred_element_type=jnp.float32) + b1
    h = jnp.maximum(h, 0.0)
    y = jnp.dot(h, w2, preferred_element_type=jnp.float32) + b2 + x
    if apply_ln:
        y = _layer_norm(y, gamma, beta, eps=eps, n=d_model)
    return y


# ---------------------------------------------------------------------------
# Fully fused decoder kernel: all layers, all three sub-blocks per layer.
# Weight refs carry a leading num_layers axis; `h` stays on-chip throughout.
# ---------------------------------------------------------------------------

def _decoder_kernel(q_ref, kv_ref,
                    s_wq, s_wk, s_wv, s_wp, s_bp, s_g, s_b,
                    c_wq, c_wk, c_wv, c_wp, c_bp, c_g, c_b,
                    f_w1, f_b1, f_w2, f_b2, f_g, f_b,
                    out_ref, *,
                    num_layers, n_head, bb, lq, lkv, d_k, d_v, d_model,
                    inv_temper, apply_ln, eps):
    h = q_ref[...]                                    # (bb*lq,  D)
    kv = kv_ref[...]                                  # (bb*lkv, D)

    mha = functools.partial(_mha_block, n_head=n_head, bb=bb, lq=lq,
                            d_k=d_k, d_v=d_v, d_model=d_model,
                            inv_temper=inv_temper, apply_ln=apply_ln, eps=eps)
    ffn = functools.partial(_ffn_block, d_model=d_model, apply_ln=apply_ln, eps=eps)

    for l in range(num_layers):                       # small & static -> unrolled
        # self-attention: q == k == v == h (single on-chip copy, no double DMA)
        h = mha(h, h, s_wq[l], s_wk[l], s_wv[l], s_wp[l],
                s_bp[l], s_g[l], s_b[l], lkv=lq)
        # encoder/decoder cross-attention: k == v == conv_features
        h = mha(h, kv, c_wq[l], c_wk[l], c_wv[l], c_wp[l],
                c_bp[l], c_g[l], c_b[l], lkv=lkv)
        # position-wise feed-forward
        h = ffn(h, f_w1[l], f_b1[l], f_w2[l], f_b2[l], f_g[l], f_b[l])

    out_ref[...] = h.astype(out_ref.dtype)


# ---------------------------------------------------------------------------
# Wrappers
# ---------------------------------------------------------------------------

def _pick_bb(batch, lq, lkv, *, target_rows=512, min_blocks=2):
    """Batches fused per grid step.

    Preference order: (1) row block fits `target_rows` (amortizes per-step
    overhead / fills the 256-wide MXU on v6e/v7x), (2) at least `min_blocks`
    parallel grid steps (keeps both v7x TensorCores busy), (3) largest rows.
    Row counts must be 8-divisible unless the block spans the whole batch.
    """
    def valid(c):
        if batch % c:
            return False
        if c == batch:
            return True
        return (c * lq) % 8 == 0 and (c * lkv) % 8 == 0

    cands = [c for c in range(1, batch + 1) if valid(c)]
    cap = max(target_rows, lq)

    def score(c):
        rows = c * lq
        return (rows <= cap, (batch // c) >= min_blocks, rows)

    return max(cands, key=score)


def _prep_decoder_params(layers):
    """Stack per-layer params on a leading axis; pre-transpose / head-concat."""
    d_model = layers[0]['slf']['w_qs'].shape[1]

    def cat_heads(w):                       # (H, D, d) -> (D, H*d)
        return jnp.transpose(w, (1, 0, 2)).reshape(d_model, -1)

    def stack(part, key, fn):
        return jnp.stack([fn(lp[part][key]) for lp in layers])

    def mha_stack(part):
        return dict(
            wq=stack(part, 'w_qs', cat_heads),
            wk=stack(part, 'w_ks', cat_heads),
            wv=stack(part, 'w_vs', cat_heads),
            wp=stack(part, 'proj_w', lambda w: w.T),
            bp=stack(part, 'proj_b', lambda b: b.reshape(1, -1)),
            g=stack(part, 'ln_a', lambda a: a.reshape(1, -1)),
            b=stack(part, 'ln_b', lambda a: a.reshape(1, -1)),
        )

    slf = mha_stack('slf')
    enc = mha_stack('enc')
    ffn = dict(
        w1=stack('ffn', 'w1', lambda w: w.T),
        b1=stack('ffn', 'b1', lambda b: b.reshape(1, -1)),
        w2=stack('ffn', 'w2', lambda w: w.T),
        b2=stack('ffn', 'b2', lambda b: b.reshape(1, -1)),
        g=stack('ffn', 'ln_a', lambda a: a.reshape(1, -1)),
        b=stack('ffn', 'ln_b', lambda a: a.reshape(1, -1)),
    )
    return slf, enc, ffn


def _fused_decoder_call(hidden, conv, slf, enc, ffn, *, n_head, eps):
    B, Lq, D = hidden.shape
    _, Lkv, _ = conv.shape
    num_layers = slf['wq'].shape[0]
    d_k = slf['wq'].shape[-1] // n_head
    d_v = slf['wv'].shape[-1] // n_head

    bb = _pick_bb(B, Lq, Lkv)
    nb = B // bb
    rq, rk = bb * Lq, bb * Lkv

    q_flat = hidden.reshape(B * Lq, D)
    kv_flat = conv.reshape(B * Lkv, D)

    weights = [slf['wq'], slf['wk'], slf['wv'], slf['wp'], slf['bp'], slf['g'], slf['b'],
               enc['wq'], enc['wk'], enc['wv'], enc['wp'], enc['bp'], enc['g'], enc['b'],
               ffn['w1'], ffn['b1'], ffn['w2'], ffn['b2'], ffn['g'], ffn['b']]

    def full_spec(a):
        nd = a.ndim
        # whole array as one block; constant index_map -> fetched once, stays resident
        return pl.BlockSpec(a.shape, lambda i, _nd=nd: (0,) * _nd)

    weight_specs = [full_spec(w) for w in weights]

    # Explicit VMEM budget (review: v7x has 64 MiB physical / 32 MiB default scoped).
    weight_bytes = sum(int(w.size) * w.dtype.itemsize for w in weights)
    vmem_limit = min(max(32 * 1024 * 1024, 2 * weight_bytes + 8 * 1024 * 1024),
                     60 * 1024 * 1024)

    kernel = functools.partial(
        _decoder_kernel, num_layers=num_layers, n_head=n_head, bb=bb,
        lq=Lq, lkv=Lkv, d_k=d_k, d_v=d_v, d_model=D,
        inv_temper=1.0 / math.sqrt(D), apply_ln=(Lq != 1), eps=eps)

    out = pl.pallas_call(
        kernel,
        out_shape=jax.ShapeDtypeStruct((B * Lq, D), jnp.float32),
        grid_spec=pltpu.PrefetchScalarGridSpec(
            num_scalar_prefetch=0,
            grid=(nb,),
            in_specs=[pl.BlockSpec((rq, D), lambda i: (i, 0)),
                      pl.BlockSpec((rk, D), lambda i: (i, 0))] + weight_specs,
            out_specs=pl.BlockSpec((rq, D), lambda i: (i, 0)),
        ),
        compiler_params=pltpu.CompilerParams(
            dimension_semantics=("parallel",),
            vmem_limit_bytes=vmem_limit),
    )(q_flat, kv_flat, *weights)
    return out.reshape(B, Lq, D)


# Resident f32 weight budget for the whole-decoder-fused path (leaves headroom
# for double-buffer allocation under v7x's 64 MiB physical VMEM).
_RESIDENT_WEIGHT_BUDGET = 24 * 1024 * 1024


def decoder_forward(conv_features, hidden_encoding, layers, *, n_head, eps=1e-3):
    """_InternalSequentialTransformerDecoder.forward (Pallas, fully fused)."""
    slf, enc, ffn = _prep_decoder_params(layers)
    all_w = list(slf.values()) + list(enc.values()) + list(ffn.values())
    total_bytes = sum(int(w.size) * w.dtype.itemsize for w in all_w)

    if total_bytes <= _RESIDENT_WEIGHT_BUDGET:
        # Whole decoder in ONE kernel launch; h never leaves VMEM.
        return _fused_decoder_call(hidden_encoding, conv_features, slf, enc, ffn,
                                   n_head=n_head, eps=eps)

    # Deep stack fallback: one fused kernel per layer (weights still fused per layer).
    # TODO(synk): for very deep stacks, stream layer weights with a layer grid axis.
    h = hidden_encoding
    for l in range(len(layers)):
        sl = {k: v[l:l + 1] for k, v in slf.items()}
        el = {k: v[l:l + 1] for k, v in enc.items()}
        fl = {k: v[l:l + 1] for k, v in ffn.items()}
        h = _fused_decoder_call(h, conv_features, sl, el, fl, n_head=n_head, eps=eps)
    return h


# ---------------------------------------------------------------------------
# Pure-JAX reference (mirrors the PyTorch forward, eval mode)
# ---------------------------------------------------------------------------

_P_HI = jax.lax.Precision.HIGHEST


def _layer_norm_ref(z, a, b, eps=1e-3):
    if z.shape[1] == 1:
        return z
    mu = jnp.mean(z, axis=-1, keepdims=True)
    n = z.shape[-1]
    sigma = jnp.sqrt(jnp.sum((z - mu) ** 2, axis=-1, keepdims=True) / (n - 1))
    return (z - mu) / (sigma + eps) * a + b


def _mha_ref(q, kv, p, n_head, eps=1e-3):
    B, Lq, D = q.shape
    d_v = p['w_vs'].shape[-1]
    qh = jnp.einsum('bld,hdk->hblk', q, p['w_qs'], precision=_P_HI)
    kh = jnp.einsum('bld,hdk->hblk', kv, p['w_ks'], precision=_P_HI)
    vh = jnp.einsum('bld,hdk->hblk', kv, p['w_vs'], precision=_P_HI)
    s = jnp.einsum('hbqk,hbmk->hbqm', qh, kh, precision=_P_HI) / math.sqrt(D)
    attn = jax.nn.softmax(s, axis=-1)
    o = jnp.einsum('hbqm,hbmv->hbqv', attn, vh, precision=_P_HI)
    o = jnp.transpose(o, (1, 2, 0, 3)).reshape(B, Lq, n_head * d_v)
    y = jnp.einsum('blk,ok->blo', o, p['proj_w'], precision=_P_HI) + p['proj_b'] + q
    return _layer_norm_ref(y, p['ln_a'], p['ln_b'], eps)


def _ffn_ref(x, p, eps=1e-3):
    h = jnp.maximum(jnp.einsum('bld,id->bli', x, p['w1'], precision=_P_HI) + p['b1'], 0.0)
    y = jnp.einsum('bli,oi->blo', h, p['w2'], precision=_P_HI) + p['b2'] + x
    return _layer_norm_ref(y, p['ln_a'], p['ln_b'], eps)


def decoder_reference(conv_features, hidden_encoding, layers, *, n_head):
    h = hidden_encoding
    for lp in layers:
        h = _mha_ref(h, h, lp['slf'], n_head)
        h = _mha_ref(h, conv_features, lp['enc'], n_head)
        h = _ffn_ref(h, lp['ffn'])
    return h


# ---------------------------------------------------------------------------
# Deterministic parameter construction (shapes match the PyTorch module)
# ---------------------------------------------------------------------------

def _init_mha(key, n_head, d_model, d_k, d_v, d_out):
    ks = jax.random.split(key, 5)

    def xavier(k, shape, fi, fo):
        return jax.random.normal(k, shape, jnp.float32) * math.sqrt(2.0 / (fi + fo))

    bound = 1.0 / math.sqrt(n_head * d_v)
    return dict(
        w_qs=xavier(ks[0], (n_head, d_model, d_k), d_model, d_k),
        w_ks=xavier(ks[1], (n_head, d_model, d_k), d_model, d_k),
        w_vs=xavier(ks[2], (n_head, d_model, d_v), d_model, d_v),
        proj_w=xavier(ks[3], (d_out, n_head * d_v), n_head * d_v, d_out),
        proj_b=jax.random.uniform(ks[4], (d_out,), jnp.float32, -bound, bound),
        ln_a=jnp.ones((d_out,), jnp.float32),
        ln_b=jnp.zeros((d_out,), jnp.float32),
    )


def _init_ffn(key, d_hid, d_inner):
    ks = jax.random.split(key, 4)

    def unif(k, shape, fan_in):
        b = 1.0 / math.sqrt(fan_in)
        return jax.random.uniform(k, shape, jnp.float32, -b, b)

    return dict(
        w1=unif(ks[0], (d_inner, d_hid), d_hid),     # Conv1d(d_hid, d_inner, 1) weight
        b1=unif(ks[1], (d_inner,), d_hid),
        w2=unif(ks[2], (d_hid, d_inner), d_inner),   # Conv1d(d_inner, d_hid, 1) weight
        b2=unif(ks[3], (d_hid,), d_inner),
        ln_a=jnp.ones((d_hid,), jnp.float32),
        ln_b=jnp.zeros((d_hid,), jnp.float32),
    )


def init_decoder_params(key, feature_dim=128, ffn_dim=512, n_head=8, num_layers=1):
    layers = []
    for _ in range(num_layers):
        key, k1, k2, k3 = jax.random.split(key, 4)
        layers.append(dict(
            slf=_init_mha(k1, n_head, feature_dim, feature_dim, feature_dim, feature_dim),
            enc=_init_mha(k2, n_head, feature_dim, feature_dim, feature_dim, feature_dim),
            ffn=_init_ffn(k3, feature_dim, ffn_dim),
        ))
    return layers


if __name__ == "__main__":
    # Module defaults: feature_dim=128, ffn_dim=512, n_head=8, num_layers=1.
    feature_dim = 128
    ffn_dim = 512
    n_head = 8
    num_layers = 1
    B, Lq, Lk = 2, 8, 16      # batch, decoder seq (hidden_encoding), encoder seq (conv_features)

    key = jax.random.PRNGKey(0)
    kp, kh, kc = jax.random.split(key, 3)
    layers = init_decoder_params(kp, feature_dim, ffn_dim, n_head, num_layers)
    hidden_encoding = jax.random.normal(kh, (B, Lq, feature_dim), jnp.float32)
    conv_features = jax.random.normal(kc, (B, Lk, feature_dim), jnp.float32)

    fwd = jax.jit(functools.partial(decoder_forward, n_head=n_head))
    out = jax.block_until_ready(fwd(conv_features, hidden_encoding, layers))

    ref = decoder_reference(conv_features, hidden_encoding, layers, n_head=n_head)
    assert out.shape == (B, Lq, feature_dim), out.shape
    max_err = float(jnp.max(jnp.abs(out - ref)))
    assert jnp.allclose(out, ref, atol=1e-3, rtol=1e-3), max_err

    print("KERNEL_OK")
</pallas_src>

<mosaic_0001>
module attributes {stable_mosaic.version = 11 : i64} {
  func.func @_decoder_kernel(%arg0: i32, %arg1: memref<8x128xf32, #tpu.memory_space<vmem>>, %arg2: memref<16x128xf32, #tpu.memory_space<vmem>>, %arg3: memref<1x128x1024xf32, #tpu.memory_space<vmem>>, %arg4: memref<1x128x1024xf32, #tpu.memory_space<vmem>>, %arg5: memref<1x128x1024xf32, #tpu.memory_space<vmem>>, %arg6: memref<1x1024x128xf32, #tpu.memory_space<vmem>>, %arg7: memref<1x1x128xf32, #tpu.memory_space<vmem>>, %arg8: memref<1x1x128xf32, #tpu.memory_space<vmem>>, %arg9: memref<1x1x128xf32, #tpu.memory_space<vmem>>, %arg10: memref<1x128x1024xf32, #tpu.memory_space<vmem>>, %arg11: memref<1x128x1024xf32, #tpu.memory_space<vmem>>, %arg12: memref<1x128x1024xf32, #tpu.memory_space<vmem>>, %arg13: memref<1x1024x128xf32, #tpu.memory_space<vmem>>, %arg14: memref<1x1x128xf32, #tpu.memory_space<vmem>>, %arg15: memref<1x1x128xf32, #tpu.memory_space<vmem>>, %arg16: memref<1x1x128xf32, #tpu.memory_space<vmem>>, %arg17: memref<1x128x512xf32, #tpu.memory_space<vmem>>, %arg18: memref<1x1x512xf32, #tpu.memory_space<vmem>>, %arg19: memref<1x512x128xf32, #tpu.memory_space<vmem>>, %arg20: memref<1x1x128xf32, #tpu.memory_space<vmem>>, %arg21: memref<1x1x128xf32, #tpu.memory_space<vmem>>, %arg22: memref<1x1x128xf32, #tpu.memory_space<vmem>>, %arg23: memref<8x128xf32, #tpu.memory_space<vmem>>) attributes {dimension_semantics = [#tpu.dimension_semantics<parallel>], iteration_bounds = array<i64: 2>, scalar_prefetch = 0 : i64, scratch_operands = 0 : i64, tpu.core_type = #tpu.core_type<tc>, window_params = [{transform_indices = @transform_0, window_bounds = array<i64: 8, 128>}, {transform_indices = @transform_1, window_bounds = array<i64: 16, 128>}, {pipeline_mode = #tpu.pipeline_mode<synchronous>, transform_indices = @transform_2, window_bounds = array<i64: 1, 128, 1024>}, {pipeline_mode = #tpu.pipeline_mode<synchronous>, transform_indices = @transform_3, window_bounds = array<i64: 1, 128, 1024>}, {pipeline_mode = #tpu.pipeline_mode<synchronous>, transform_indices = @transform_4, window_bounds = array<i64: 1, 128, 1024>}, {pipeline_mode = #tpu.pipeline_mode<synchronous>, transform_indices = @transform_5, window_bounds = array<i64: 1, 1024, 128>}, {pipeline_mode = #tpu.pipeline_mode<synchronous>, transform_indices = @transform_6, window_bounds = array<i64: 1, 1, 128>}, {pipeline_mode = #tpu.pipeline_mode<synchronous>, transform_indices = @transform_7, window_bounds = array<i64: 1, 1, 128>}, {pipeline_mode = #tpu.pipeline_mode<synchronous>, transform_indices = @transform_8, window_bounds = array<i64: 1, 1, 128>}, {pipeline_mode = #tpu.pipeline_mode<synchronous>, transform_indices = @transform_9, window_bounds = array<i64: 1, 128, 1024>}, {pipeline_mode = #tpu.pipeline_mode<synchronous>, transform_indices = @transform_10, window_bounds = array<i64: 1, 128, 1024>}, {pipeline_mode = #tpu.pipeline_mode<synchronous>, transform_indices = @transform_11, window_bounds = array<i64: 1, 128, 1024>}, {pipeline_mode = #tpu.pipeline_mode<synchronous>, transform_indices = @transform_12, window_bounds = array<i64: 1, 1024, 128>}, {pipeline_mode = #tpu.pipeline_mode<synchronous>, transform_indices = @transform_13, window_bounds = array<i64: 1, 1, 128>}, {pipeline_mode = #tpu.pipeline_mode<synchronous>, transform_indices = @transform_14, window_bounds = array<i64: 1, 1, 128>}, {pipeline_mode = #tpu.pipeline_mode<synchronous>, transform_indices = @transform_15, window_bounds = array<i64: 1, 1, 128>}, {pipeline_mode = #tpu.pipeline_mode<synchronous>, transform_indices = @transform_16, window_bounds = array<i64: 1, 128, 512>}, {pipeline_mode = #tpu.pipeline_mode<synchronous>, transform_indices = @transform_17, window_bounds = array<i64: 1, 1, 512>}, {pipeline_mode = #tpu.pipeline_mode<synchronous>, transform_indices = @transform_18, window_bounds = array<i64: 1, 512, 128>}, {pipeline_mode = #tpu.pipeline_mode<synchronous>, transform_indices = @transform_19, window_bounds = array<i64: 1, 1, 128>}, {pipeline_mode = #tpu.pipeline_mode<synchronous>, transform_indices = @transform_20, window_bounds = array<i64: 1, 1, 128>}, {pipeline_mode = #tpu.pipeline_mode<synchronous>, transform_indices = @transform_21, window_bounds = array<i64: 1, 1, 128>}, {transform_indices = @transform_22, window_bounds = array<i64: 8, 128>}]} {
    %c0 = arith.constant 0 : index
    %c0_0 = arith.constant 0 : index
    %0 = vector.load %arg1[%c0, %c0_0] : memref<8x128xf32, #tpu.memory_space<vmem>>, vector<8x128xf32>
    %c0_1 = arith.constant 0 : index
    %c0_2 = arith.constant 0 : index
    %1 = vector.load %arg2[%c0_1, %c0_2] : memref<16x128xf32, #tpu.memory_space<vmem>>, vector<16x128xf32>
    %c0_3 = arith.constant 0 : index
    %c0_4 = arith.constant 0 : index
    %c0_5 = arith.constant 0 : index
    %2 = vector.load %arg3[%c0_3, %c0_4, %c0_5] : memref<1x128x1024xf32, #tpu.memory_space<vmem>>, vector<1x128x1024xf32>
    %3 = vector.shape_cast %2 : vector<1x128x1024xf32> to vector<128x1024xf32>
    %c0_6 = arith.constant 0 : index
    %c0_7 = arith.constant 0 : index
    %c0_8 = arith.constant 0 : index
    %4 = vector.load %arg4[%c0_6, %c0_7, %c0_8] : memref<1x128x1024xf32, #tpu.memory_space<vmem>>, vector<1x128x1024xf32>
    %5 = vector.shape_cast %4 : vector<1x128x1024xf32> to vector<128x1024xf32>
    %c0_9 = arith.constant 0 : index
    %c0_10 = arith.constant 0 : index
    %c0_11 = arith.constant 0 : index
    %6 = vector.load %arg5[%c0_9, %c0_10, %c0_11] : memref<1x128x1024xf32, #tpu.memory_space<vmem>>, vector<1x128x1024xf32>
    %7 = vector.shape_cast %6 : vector<1x128x1024xf32> to vector<128x1024xf32>
    %c0_12 = arith.constant 0 : index
    %c0_13 = arith.constant 0 : index
    %c0_14 = arith.constant 0 : index
    %8 = vector.load %arg6[%c0_12, %c0_13, %c0_14] : memref<1x1024x128xf32, #tpu.memory_space<vmem>>, vector<1x1024x128xf32>
    %9 = vector.shape_cast %8 : vector<1x1024x128xf32> to vector<1024x128xf32>
    %c0_15 = arith.constant 0 : index
    %c0_16 = arith.constant 0 : index
    %c0_17 = arith.constant 0 : index
    %10 = vector.load %arg7[%c0_15, %c0_16, %c0_17] : memref<1x1x128xf32, #tpu.memory_space<vmem>>, vector<1x1x128xf32>
    %11 = vector.shape_cast %10 : vector<1x1x128xf32> to vector<1x128xf32>
    %c0_18 = arith.constant 0 : index
    %c0_19 = arith.constant 0 : index
    %c0_20 = arith.constant 0 : index
    %12 = vector.load %arg8[%c0_18, %c0_19, %c0_20] : memref<1x1x128xf32, #tpu.memory_space<vmem>>, vector<1x1x128xf32>
    %13 = vector.shape_cast %12 : vector<1x1x128xf32> to vector<1x128xf32>
    %c0_21 = arith.constant 0 : index
    %c0_22 = arith.constant 0 : index
    %c0_23 = arith.constant 0 : index
    %14 = vector.load %arg9[%c0_21, %c0_22, %c0_23] : memref<1x1x128xf32, #tpu.memory_space<vmem>>, vector<1x1x128xf32>
    %15 = vector.shape_cast %14 : vector<1x1x128xf32> to vector<1x128xf32>
    %cst = arith.constant dense<0.000000e+00> : vector<8x1024xf32>
    %16 = tpu.matmul %0, %3, %cst {dimension_numbers = #tpu.dot_dimension_numbers<[1], [0], [0], [1], [0, 0, 1, 1], [], []>} : vector<8x128xf32>, vector<128x1024xf32>, vector<8x1024xf32> -> vector<8x1024xf32>
    %cst_24 = arith.constant dense<0.000000e+00> : vector<8x1024xf32>
    %17 = tpu.matmul %0, %5, %cst_24 {dimension_numbers = #tpu.dot_dimension_numbers<[1], [0], [0], [1], [0, 0, 1, 1], [], []>} : vector<8x128xf32>, vector<128x1024xf32>, vector<8x1024xf32> -> vector<8x1024xf32>
    %cst_25 = arith.constant dense<0.000000e+00> : vector<8x1024xf32>
    %18 = tpu.matmul %0, %7, %cst_25 {dimension_numbers = #tpu.dot_dimension_numbers<[1], [0], [0], [1], [0, 0, 1, 1], [], []>} : vector<8x128xf32>, vector<128x1024xf32>, vector<8x1024xf32> -> vector<8x1024xf32>
    %19 = vector.broadcast %11 : vector<1x128xf32> to vector<8x128xf32>
    %20 = arith.addf %0, %19 : vector<8x128xf32>
    %21 = vector.extract_strided_slice %16 {offsets = [0, 0], sizes = [8, 128], strides = [1, 1]} : vector<8x1024xf32> to vector<8x128xf32>
    %22 = vector.shape_cast %21 : vector<8x128xf32> to vector<1x8x128xf32>
    %23 = vector.extract_strided_slice %17 {offsets = [0, 0], sizes = [8, 128], strides = [1, 1]} : vector<8x1024xf32> to vector<8x128xf32>
    %24 = vector.shape_cast %23 : vector<8x128xf32> to vector<1x8x128xf32>
    %25 = vector.extract_strided_slice %18 {offsets = [0, 0], sizes = [8, 128], strides = [1, 1]} : vector<8x1024xf32> to vector<8x128xf32>
    %26 = vector.shape_cast %25 : vector<8x128xf32> to vector<1x8x128xf32>
    "tpu.trace_start"() <{level = 10 : i32, message = "bqd,bkd->bqk"}> : () -> ()
    %cst_26 = arith.constant dense<0.000000e+00> : vector<1x8x8xf32>
    %27 = tpu.matmul %22, %24, %cst_26 {dimension_numbers = #tpu.dot_dimension_numbers<[2], [2], [1], [1], [0, 0, 0, 1, 1, 1], [0], [0]>} : vector<1x8x128xf32>, vector<1x8x128xf32>, vector<1x8x8xf32> -> vector<1x8x8xf32>
    "tpu.trace_stop"() : () -> ()
    %cst_27 = arith.constant 0.0883883461 : f32
    %28 = vector.broadcast %cst_27 : f32 to vector<1x8x8xf32>
    %29 = arith.mulf %27, %28 : vector<1x8x8xf32>
    %cst_28 = arith.constant dense<0xFF800000> : vector<1x8xf32>
    %30 = vector.multi_reduction <maximumf>, %29, %cst_28 [2] : vector<1x8x8xf32> to vector<1x8xf32>
    %31 = vector.shape_cast %30 : vector<1x8xf32> to vector<1x8x1xf32>
    %32 = vector.broadcast %31 : vector<1x8x1xf32> to vector<1x8x8xf32>
    %33 = arith.subf %29, %32 : vector<1x8x8xf32>
    %34 = math.exp %33 : vector<1x8x8xf32>
    %cst_29 = arith.constant dense<0.000000e+00> : vector<1x8xf32>
    %35 = vector.multi_reduction <add>, %34, %cst_29 [2] : vector<1x8x8xf32> to vector<1x8xf32>
    %36 = vector.shape_cast %35 : vector<1x8xf32> to vector<1x8x1xf32>
    %37 = tpu.reciprocal %36 : vector<1x8x1xf32> -> vector<1x8x1xf32>
    %38 = vector.broadcast %37 : vector<1x8x1xf32> to vector<1x8x8xf32>
    %39 = arith.mulf %34, %38 : vector<1x8x8xf32>
    "tpu.trace_start"() <{level = 10 : i32, message = "bqk,bkd->bqd"}> : () -> ()
    %cst_30 = arith.constant dense<0.000000e+00> : vector<1x8x128xf32>
    %40 = tpu.matmul %39, %26, %cst_30 {dimension_numbers = #tpu.dot_dimension_numbers<[2], [1], [1], [2], [0, 0, 0, 1, 1, 2], [0], [0]>} : vector<1x8x8xf32>, vector<1x8x128xf32>, vector<1x8x128xf32> -> vector<1x8x128xf32>
    "tpu.trace_stop"() : () -> ()
    %41 = vector.shape_cast %40 : vector<1x8x128xf32> to vector<8x128xf32>
    %42 = vector.extract_strided_slice %9 {offsets = [0, 0], sizes = [128, 128], strides = [1, 1]} : vector<1024x128xf32> to vector<128x128xf32>
    %cst_31 = arith.constant dense<0.000000e+00> : vector<8x128xf32>
    %43 = tpu.matmul %41, %42, %cst_31 {dimension_numbers = #tpu.dot_dimension_numbers<[1], [0], [0], [1], [0, 0, 1, 1], [], []>} : vector<8x128xf32>, vector<128x128xf32>, vector<8x128xf32> -> vector<8x128xf32>
    %44 = arith.addf %20, %43 : vector<8x128xf32>
    %45 = vector.extract_strided_slice %16 {offsets = [0, 128], sizes = [8, 128], strides = [1, 1]} : vector<8x1024xf32> to vector<8x128xf32>
    %46 = vector.shape_cast %45 : vector<8x128xf32> to vector<1x8x128xf32>
    %47 = vector.extract_strided_slice %17 {offsets = [0, 128], sizes = [8, 128], strides = [1, 1]} : vector<8x1024xf32> to vector<8x128xf32>
    %48 = vector.shape_cast %47 : vector<8x128xf32> to vector<1x8x128xf32>
    %49 = vector.extract_strided_slice %18 {offsets = [0, 128], sizes = [8, 128], strides = [1, 1]} : vector<8x1024xf32> to vector<8x128xf32>
    %50 = vector.shape_cast %49 : vector<8x128xf32> to vector<1x8x128xf32>
    "tpu.trace_start"() <{level = 10 : i32, message = "bqd,bkd->bqk"}> : () -> ()
    %cst_32 = arith.constant dense<0.000000e+00> : vector<1x8x8xf32>
    %51 = tpu.matmul %46, %48, %cst_32 {dimension_numbers = #tpu.dot_dimension_numbers<[2], [2], [1], [1], [0, 0, 0, 1, 1, 1], [0], [0]>} : vector<1x8x128xf32>, vector<1x8x128xf32>, vector<1x8x8xf32> -> vector<1x8x8xf32>
    "tpu.trace_stop"() : () -> ()
    %cst_33 = arith.constant 0.0883883461 : f32
    %52 = vector.broadcast %cst_33 : f32 to vector<1x8x8xf32>
    %53 = arith.mulf %51, %52 : vector<1x8x8xf32>
    %cst_34 = arith.constant dense<0xFF800000> : vector<1x8xf32>
    %54 = vector.multi_reduction <maximumf>, %53, %cst_34 [2] : vector<1x8x8xf32> to vector<1x8xf32>
    %55 = vector.shape_cast %54 : vector<1x8xf32> to vector<1x8x1xf32>
    %56 = vector.broadcast %55 : vector<1x8x1xf32> to vector<1x8x8xf32>
    %57 = arith.subf %53, %56 : vector<1x8x8xf32>
    %58 = math.exp %57 : vector<1x8x8xf32>
    %cst_35 = arith.constant dense<0.000000e+00> : vector<1x8xf32>
    %59 = vector.multi_reduction <add>, %58, %cst_35 [2] : vector<1x8x8xf32> to vector<1x8xf32>
    %60 = vector.shape_cast %59 : vector<1x8xf32> to vector<1x8x1xf32>
    %61 = tpu.reciprocal %60 : vector<1x8x1xf32> -> vector<1x8x1xf32>
    %62 = vector.broadcast %61 : vector<1x8x1xf32> to vector<1x8x8xf32>
    %63 = arith.mulf %58, %62 : vector<1x8x8xf32>
    "tpu.trace_start"() <{level = 10 : i32, message = "bqk,bkd->bqd"}> : () -> ()
    %cst_36 = arith.constant dense<0.000000e+00> : vector<1x8x128xf32>
    %64 = tpu.matmul %63, %50, %cst_36 {dimension_numbers = #tpu.dot_dimension_numbers<[2], [1], [1], [2], [0, 0, 0, 1, 1, 2], [0], [0]>} : vector<1x8x8xf32>, vector<1x8x128xf32>, vector<1x8x128xf32> -> vector<1x8x128xf32>
    "tpu.trace_stop"() : () -> ()
    %65 = vector.shape_cast %64 : vector<1x8x128xf32> to vector<8x128xf32>
    %66 = vector.extract_strided_slice %9 {offsets = [128, 0], sizes = [128, 128], strides = [1, 1]} : vector<1024x128xf32> to vector<128x128xf32>
    %cst_37 = arith.constant dense<0.000000e+00> : vector<8x128xf32>
    %67 = tpu.matmul %65, %66, %cst_37 {dimension_numbers = #tpu.dot_dimension_numbers<[1], [0], [0], [1], [0, 0, 1, 1], [], []>} : vector<8x128xf32>, vector<128x128xf32>, vector<8x128xf32> -> vector<8x128xf32>
    %68 = arith.addf %44, %67 : vector<8x128xf32>
    %69 = vector.extract_strided_slice %16 {offsets = [0, 256], sizes = [8, 128], strides = [1, 1]} : vector<8x1024xf32> to vector<8x128xf32>
    %70 = vector.shape_cast %69 : vector<8x128xf32> to vector<1x8x128xf32>
    %71 = vector.extract_strided_slice %17 {offsets = [0, 256], sizes = [8, 128], strides = [1, 1]} : vector<8x1024xf32> to vector<8x128xf32>
    %72 = vector.shape_cast %71 : vector<8x128xf32> to vector<1x8x128xf32>
    %73 = vector.extract_strided_slice %18 {offsets = [0, 256], sizes = [8, 128], strides = [1, 1]} : vector<8x1024xf32> to vector<8x128xf32>
    %74 = vector.shape_cast %73 : vector<8x128xf32> to vector<1x8x128xf32>
    "tpu.trace_start"() <{level = 10 : i32, message = "bqd,bkd->bqk"}> : () -> ()
    %cst_38 = arith.constant dense<0.000000e+00> : vector<1x8x8xf32>
    %75 = tpu.matmul %70, %72, %cst_38 {dimension_numbers = #tpu.dot_dimension_numbers<[2], [2], [1], [1], [0, 0, 0, 1, 1, 1], [0], [0]>} : vector<1x8x128xf32>, vector<1x8x128xf32>, vector<1x8x8xf32> -> vector<1x8x8xf32>
    "tpu.trace_stop"() : () -> ()
    %cst_39 = arith.constant 0.0883883461 : f32
    %76 = vector.broadcast %cst_39 : f32 to vector<1x8x8xf32>
    %77 = arith.mulf %75, %76 : vector<1x8x8xf32>
    %cst_40 = arith.constant dense<0xFF800000> : vector<1x8xf32>
    %78 = vector.multi_reduction <maximumf>, %77, %cst_40 [2] : vector<1x8x8xf32> to vector<1x8xf32>
    %79 = vector.shape_cast %78 : vector<1x8xf32> to vector<1x8x1xf32>
    %80 = vector.broadcast %79 : vector<1x8x1xf32> to vector<1x8x8xf32>
    %81 = arith.subf %77, %80 : vector<1x8x8xf32>
    %82 = math.exp %81 : vector<1x8x8xf32>
    %cst_41 = arith.constant dense<0.000000e+00> : vector<1x8xf32>
    %83 = vector.multi_reduction <add>, %82, %cst_41 [2] : vector<1x8x8xf32> to vector<1x8xf32>
    %84 = vector.shape_cast %83 : vector<1x8xf32> to vector<1x8x1xf32>
    %85 = tpu.reciprocal %84 : vector<1x8x1xf32> -> vector<1x8x1xf32>
    %86 = vector.broadcast %85 : vector<1x8x1xf32> to vector<1x8x8xf32>
    %87 = arith.mulf %82, %86 : vector<1x8x8xf32>
    "tpu.trace_start"() <{level = 10 : i32, message = "bqk,bkd->bqd"}> : () -> ()
    %cst_42 = arith.constant dense<0.000000e+00> : vector<1x8x128xf32>
    %88 = tpu.matmul %87, %74, %cst_42 {dimension_numbers = #tpu.dot_dimension_numbers<[2], [1], [1], [2], [0, 0, 0, 1, 1, 2], [0], [0]>} : vector<1x8x8xf32>, vector<1x8x128xf32>, vector<1x8x128xf32> -> vector<1x8x128xf32>
    "tpu.trace_stop"() : () -> ()
    %89 = vector.shape_cast %88 : vector<1x8x128xf32> to vector<8x128xf32>
    %90 = vector.extract_strided_slice %9 {offsets = [256, 0], sizes = [128, 128], strides = [1, 1]} : vector<1024x128xf32> to vector<128x128xf32>
    %cst_43 = arith.constant dense<0.000000e+00> : vector<8x128xf32>
    %91 = tpu.matmul %89, %90, %cst_43 {dimension_numbers = #tpu.dot_dimension_numbers<[1], [0], [0], [1], [0, 0, 1, 1], [], []>} : vector<8x128xf32>, vector<128x128xf32>, vector<8x128xf32> -> vector<8x128xf32>
    %92 = arith.addf %68, %91 : vector<8x128xf32>
    %93 = vector.extract_strided_slice %16 {offsets = [0, 384], sizes = [8, 128], strides = [1, 1]} : vector<8x1024xf32> to vector<8x128xf32>
    %94 = vector.shape_cast %93 : vector<8x128xf32> to vector<1x8x128xf32>
    %95 = vector.extract_strided_slice %17 {offsets = [0, 384], sizes = [8, 128], strides = [1, 1]} : vector<8x1024xf32> to vector<8x128xf32>
    %96 = vector.shape_cast %95 : vector<8x128xf32> to vector<1x8x128xf32>
    %97 = vector.extract_strided_slice %18 {offsets = [0, 384], sizes = [8, 128], strides = [1, 1]} : vector<8x1024xf32> to vector<8x128xf32>
    %98 = vector.shape_cast %97 : vector<8x128xf32> to vector<1x8x128xf32>
    "tpu.trace_start"() <{level = 10 : i32, message = "bqd,bkd->bqk"}> : () -> ()
    %cst_44 = arith.constant dense<0.000000e+00> : vector<1x8x8xf32>
    %99 = tpu.matmul %94, %96, %cst_44 {dimension_numbers = #tpu.dot_dimension_numbers<[2], [2], [1], [1], [0, 0, 0, 1, 1, 1], [0], [0]>} : vector<1x8x128xf32>, vector<1x8x128xf32>, vector<1x8x8xf32> -> vector<1x8x8xf32>
    "tpu.trace_stop"() : () -> ()
    %cst_45 = arith.constant 0.0883883461 : f32
    %100 = vector.broadcast %cst_45 : f32 to vector<1x8x8xf32>
    %101 = arith.mulf %99, %100 : vector<1x8x8xf32>
    %cst_46 = arith.constant dense<0xFF800000> : vector<1x8xf32>
    %102 = vector.multi_reduction <maximumf>, %101, %cst_46 [2] : vector<1x8x8xf32> to vector<1x8xf32>
    %103 = vector.shape_cast %102 : vector<1x8xf32> to vector<1x8x1xf32>
    %104 = vector.broadcast %103 : vector<1x8x1xf32> to vector<1x8x8xf32>
    %105 = arith.subf %101, %104 : vector<1x8x8xf32>
    %106 = math.exp %105 : vector<1x8x8xf32>
    %cst_47 = arith.constant dense<0.000000e+00> : vector<1x8xf32>
    %107 = vector.multi_reduction <add>, %106, %cst_47 [2] : vector<1x8x8xf32> to vector<1x8xf32>
    %108 = vector.shape_cast %107 : vector<1x8xf32> to vector<1x8x1xf32>
    %109 = tpu.reciprocal %108 : vector<1x8x1xf32> -> vector<1x8x1xf32>
    %110 = vector.broadcast %109 : vector<1x8x1xf32> to vector<1x8x8xf32>
    %111 = arith.mulf %106, %110 : vector<1x8x8xf32>
    "tpu.trace_start"() <{level = 10 : i32, message = "bqk,bkd->bqd"}> : () -> ()
    %cst_48 = arith.constant dense<0.000000e+00> : vector<1x8x128xf32>
    %112 = tpu.matmul %111, %98, %cst_48 {dimension_numbers = #tpu.dot_dimension_numbers<[2], [1], [1], [2], [0, 0, 0, 1, 1, 2], [0], [0]>} : vector<1x8x8xf32>, vector<1x8x128xf32>, vector<1x8x128xf32> -> vector<1x8x128xf32>
    "tpu.trace_stop"() : () -> ()
    %113 = vector.shape_cast %112 : vector<1x8x128xf32> to vector<8x128xf32>
    %114 = vector.extract_strided_slice %9 {offsets = [384, 0], sizes = [128, 128], strides = [1, 1]} : vector<1024x128xf32> to vector<128x128xf32>
    %cst_49 = arith.constant dense<0.000000e+00> : vector<8x128xf32>
    %115 = tpu.matmul %113, %114, %cst_49 {dimension_numbers = #tpu.dot_dimension_numbers<[1], [0], [0], [1], [0, 0, 1, 1], [], []>} : vector<8x128xf32>, vector<128x128xf32>, vector<8x128xf32> -> vector<8x128xf32>
    %116 = arith.addf %92, %115 : vector<8x128xf32>
    %117 = vector.extract_strided_slice %16 {offsets = [0, 512], sizes = [8, 128], strides = [1, 1]} : vector<8x1024xf32> to vector<8x128xf32>
    %118 = vector.shape_cast %117 : vector<8x128xf32> to vector<1x8x128xf32>
    %119 = vector.extract_strided_slice %17 {offsets = [0, 512], sizes = [8, 128], strides = [1, 1]} : vector<8x1024xf32> to vector<8x128xf32>
    %120 = vector.shape_cast %119 : vector<8x128xf32> to vector<1x8x128xf32>
    %121 = vector.extract_strided_slice %18 {offsets = [0, 512], sizes = [8, 128], strides = [1, 1]} : vector<8x1024xf32> to vector<8x128xf32>
    %122 = vector.shape_cast %121 : vector<8x128xf32> to vector<1x8x128xf32>
    "tpu.trace_start"() <{level = 10 : i32, message = "bqd,bkd->bqk"}> : () -> ()
    %cst_50 = arith.constant dense<0.000000e+00> : vector<1x8x8xf32>
    %123 = tpu.matmul %118, %120, %cst_50 {dimension_numbers = #tpu.dot_dimension_numbers<[2], [2], [1], [1], [0, 0, 0, 1, 1, 1], [0], [0]>} : vector<1x8x128xf32>, vector<1x8x128xf32>, vector<1x8x8xf32> -> vector<1x8x8xf32>
    "tpu.trace_stop"() : () -> ()
    %cst_51 = arith.constant 0.0883883461 : f32
    %124 = vector.broadcast %cst_51 : f32 to vector<1x8x8xf32>
    %125 = arith.mulf %123, %124 : vector<1x8x8xf32>
    %cst_52 = arith.constant dense<0xFF800000> : vector<1x8xf32>
    %126 = vector.multi_reduction <maximumf>, %125, %cst_52 [2] : vector<1x8x8xf32> to vector<1x8xf32>
    %127 = vector.shape_cast %126 : vector<1x8xf32> to vector<1x8x1xf32>
    %128 = vector.broadcast %127 : vector<1x8x1xf32> to vector<1x8x8xf32>
    %129 = arith.subf %125, %128 : vector<1x8x8xf32>
    %130 = math.exp %129 : vector<1x8x8xf32>
    %cst_53 = arith.constant dense<0.000000e+00> : vector<1x8xf32>
    %131 = vector.multi_reduction <add>, %130, %cst_53 [2] : vector<1x8x8xf32> to vector<1x8xf32>
    %132 = vector.shape_cast %131 : vector<1x8xf32> to vector<1x8x1xf32>
    %133 = tpu.reciprocal %132 : vector<1x8x1xf32> -> vector<1x8x1xf32>
    %134 = vector.broadcast %133 : vector<1x8x1xf32> to vector<1x8x8xf32>
    %135 = arith.mulf %130, %134 : vector<1x8x8xf32>
    "tpu.trace_start"() <{level = 10 : i32, message = "bqk,bkd->bqd"}> : () -> ()
    %cst_54 = arith.constant dense<0.000000e+00> : vector<1x8x128xf32>
    %136 = tpu.matmul %135, %122, %cst_54 {dimension_numbers = #tpu.dot_dimension_numbers<[2], [1], [1], [2], [0, 0, 0, 1, 1, 2], [0], [0]>} : vector<1x8x8xf32>, vector<1x8x128xf32>, vector<1x8x128xf32> -> vector<1x8x128xf32>
    "tpu.trace_stop"() : () -> ()
    %137 = vector.shape_cast %136 : vector<1x8x128xf32> to vector<8x128xf32>
    %138 = vector.extract_strided_slice %9 {offsets = [512, 0], sizes = [128, 128], strides = [1, 1]} : vector<1024x128xf32> to vector<128x128xf32>
    %cst_55 = arith.constant dense<0.000000e+00> : vector<8x128xf32>
    %139 = tpu.matmul %137, %138, %cst_55 {dimension_numbers = #tpu.dot_dimension_numbers<[1], [0], [0], [1], [0, 0, 1, 1], [], []>} : vector<8x128xf32>, vector<128x128xf32>, vector<8x128xf32> -> vector<8x128xf32>
    %140 = arith.addf %116, %139 : vector<8x128xf32>
    %141 = vector.extract_strided_slice %16 {offsets = [0, 640], sizes = [8, 128], strides = [1, 1]} : vector<8x1024xf32> to vector<8x128xf32>
    %142 = vector.shape_cast %141 : vector<8x128xf32> to vector<1x8x128xf32>
    %143 = vector.extract_strided_slice %17 {offsets = [0, 640], sizes = [8, 128], strides = [1, 1]} : vector<8x1024xf32> to vector<8x128xf32>
    %144 = vector.shape_cast %143 : vector<8x128xf32> to vector<1x8x128xf32>
    %145 = vector.extract_strided_slice %18 {offsets = [0, 640], sizes = [8, 128], strides = [1, 1]} : vector<8x1024xf32> to vector<8x128xf32>
    %146 = vector.shape_cast %145 : vector<8x128xf32> to vector<1x8x128xf32>
    "tpu.trace_start"() <{level = 10 : i32, message = "bqd,bkd->bqk"}> : () -> ()
    %cst_56 = arith.constant dense<0.000000e+00> : vector<1x8x8xf32>
    %147 = tpu.matmul %142, %144, %cst_56 {dimension_numbers = #tpu.dot_dimension_numbers<[2], [2], [1], [1], [0, 0, 0, 1, 1, 1], [0], [0]>} : vector<1x8x128xf32>, vector<1x8x128xf32>, vector<1x8x8xf32> -> vector<1x8x8xf32>
    "tpu.trace_stop"() : () -> ()
    %cst_57 = arith.constant 0.0883883461 : f32
    %148 = vector.broadcast %cst_57 : f32 to vector<1x8x8xf32>
    %149 = arith.mulf %147, %148 : vector<1x8x8xf32>
    %cst_58 = arith.constant dense<0xFF800000> : vector<1x8xf32>
    %150 = vector.multi_reduction <maximumf>, %149, %cst_58 [2] : vector<1x8x8xf32> to vector<1x8xf32>
    %151 = vector.shape_cast %150 : vector<1x8xf32> to vector<1x8x1xf32>
    %152 = vector.broadcast %151 : vector<1x8x1xf32> to vector<1x8x8xf32>
    %153 = arith.subf %149, %152 : vector<1x8x8xf32>
    %154 = math.exp %153 : vector<1x8x8xf32>
    %cst_59 = arith.constant dense<0.000000e+00> : vector<1x8xf32>
    %155 = vector.multi_reduction <add>, %154, %cst_59 [2] : vector<1x8x8xf32> to vector<1x8xf32>
    %156 = vector.shape_cast %155 : vector<1x8xf32> to vector<1x8x1xf32>
    %157 = tpu.reciprocal %156 : vector<1x8x1xf32> -> vector<1x8x1xf32>
    %158 = vector.broadcast %157 : vector<1x8x1xf32> to vector<1x8x8xf32>
    %159 = arith.mulf %154, %158 : vector<1x8x8xf32>
    "tpu.trace_start"() <{level = 10 : i32, message = "bqk,bkd->bqd"}> : () -> ()
    %cst_60 = arith.constant dense<0.000000e+00> : vector<1x8x128xf32>
    %160 = tpu.matmul %159, %146, %cst_60 {dimension_numbers = #tpu.dot_dimension_numbers<[2], [1], [1], [2], [0, 0, 0, 1, 1, 2], [0], [0]>} : vector<1x8x8xf32>, vector<1x8x128xf32>, vector<1x8x128xf32> -> vector<1x8x128xf32>
    "tpu.trace_stop"() : () -> ()
    %161 = vector.shape_cast %160 : vector<1x8x128xf32> to vector<8x128xf32>
    %162 = vector.extract_strided_slice %9 {offsets = [640, 0], sizes = [128, 128], strides = [1, 1]} : vector<1024x128xf32> to vector<128x128xf32>
    %cst_61 = arith.constant dense<0.000000e+00> : vector<8x128xf32>
    %163 = tpu.matmul %161, %162, %cst_61 {dimension_numbers = #tpu.dot_dimension_numbers<[1], [0], [0], [1], [0, 0, 1, 1], [], []>} : vector<8x128xf32>, vector<128x128xf32>, vector<8x128xf32> -> vector<8x128xf32>
    %164 = arith.addf %140, %163 : vector<8x128xf32>
    %165 = vector.extract_strided_slice %16 {offsets = [0, 768], sizes = [8, 128], strides = [1, 1]} : vector<8x1024xf32> to vector<8x128xf32>
    %166 = vector.shape_cast %165 : vector<8x128xf32> to vector<1x8x128xf32>
    %167 = vector.extract_strided_slice %17 {offsets = [0, 768], sizes = [8, 128], strides = [1, 1]} : vector<8x1024xf32> to vector<8x128xf32>
    %168 = vector.shape_cast %167 : vector<8x128xf32> to vector<1x8x128xf32>
    %169 = vector.extract_strided_slice %18 {offsets = [0, 768], sizes = [8, 128], strides = [1, 1]} : vector<8x1024xf32> to vector<8x128xf32>
    %170 = vector.shape_cast %169 : vector<8x128xf32> to vector<1x8x128xf32>
    "tpu.trace_start"() <{level = 10 : i32, message = "bqd,bkd->bqk"}> : () -> ()
    %cst_62 = arith.constant dense<0.000000e+00> : vector<1x8x8xf32>
    %171 = tpu.matmul %166, %168, %cst_62 {dimension_numbers = #tpu.dot_dimension_numbers<[2], [2], [1], [1], [0, 0, 0, 1, 1, 1], [0], [0]>} : vector<1x8x128xf32>, vector<1x8x128xf32>, vector<1x8x8xf32> -> vector<1x8x8xf32>
    "tpu.trace_stop"() : () -> ()
    %cst_63 = arith.constant 0.0883883461 : f32
    %172 = vector.broadcast %cst_63 : f32 to vector<1x8x8xf32>
    %173 = arith.mulf %171, %172 : vector<1x8x8xf32>
    %cst_64 = arith.constant dense<0xFF800000> : vector<1x8xf32>
    %174 = vector.multi_reduction <maximumf>, %173, %cst_64 [2] : vector<1x8x8xf32> to vector<1x8xf32>
    %175 = vector.shape_cast %174 : vector<1x8xf32> to vector<1x8x1xf32>
    %176 = vector.broadcast %175 : vector<1x8x1xf32> to vector<1x8x8xf32>
    %177 = arith.subf %173, %176 : vector<1x8x8xf32>
    %178 = math.exp %177 : vector<1x8x8xf32>
    %cst_65 = arith.constant dense<0.000000e+00> : vector<1x8xf32>
    %179 = vector.multi_reduction <add>, %178, %cst_65 [2] : vector<1x8x8xf32> to vector<1x8xf32>
    %180 = vector.shape_cast %179 : vector<1x8xf32> to vector<1x8x1xf32>
    %181 = tpu.reciprocal %180 : vector<1x8x1xf32> -> vector<1x8x1xf32>
    %182 = vector.broadcast %181 : vector<1x8x1xf32> to vector<1x8x8xf32>
    %183 = arith.mulf %178, %182 : vector<1x8x8xf32>
    "tpu.trace_start"() <{level = 10 : i32, message = "bqk,bkd->bqd"}> : () -> ()
    %cst_66 = arith.constant dense<0.000000e+00> : vector<1x8x128xf32>
    %184 = tpu.matmul %183, %170, %cst_66 {dimension_numbers = #tpu.dot_dimension_numbers<[2], [1], [1], [2], [0, 0, 0, 1, 1, 2], [0], [0]>} : vector<1x8x8xf32>, vector<1x8x128xf32>, vector<1x8x128xf32> -> vector<1x8x128xf32>
    "tpu.trace_stop"() : () -> ()
    %185 = vector.shape_cast %184 : vector<1x8x128xf32> to vector<8x128xf32>
    %186 = vector.extract_strided_slice %9 {offsets = [768, 0], sizes = [128, 128], strides = [1, 1]} : vector<1024x128xf32> to vector<128x128xf32>
    %cst_67 = arith.constant dense<0.000000e+00> : vector<8x128xf32>
    %187 = tpu.matmul %185, %186, %cst_67 {dimension_numbers = #tpu.dot_dimension_numbers<[1], [0], [0], [1], [0, 0, 1, 1], [], []>} : vector<8x128xf32>, vector<128x128xf32>, vector<8x128xf32> -> vector<8x128xf32>
    %188 = arith.addf %164, %187 : vector<8x128xf32>
    %189 = vector.extract_strided_slice %16 {offsets = [0, 896], sizes = [8, 128], strides = [1, 1]} : vector<8x1024xf32> to vector<8x128xf32>
    %190 = vector.shape_cast %189 : vector<8x128xf32> to vector<1x8x128xf32>
    %191 = vector.extract_strided_slice %17 {offsets = [0, 896], sizes = [8, 128], strides = [1, 1]} : vector<8x1024xf32> to vector<8x128xf32>
    %192 = vector.shape_cast %191 : vector<8x128xf32> to vector<1x8x128xf32>
    %193 = vector.extract_strided_slice %18 {offsets = [0, 896], sizes = [8, 128], strides = [1, 1]} : vector<8x1024xf32> to vector<8x128xf32>
    %194 = vector.shape_cast %193 : vector<8x128xf32> to vector<1x8x128xf32>
    "tpu.trace_start"() <{level = 10 : i32, message = "bqd,bkd->bqk"}> : () -> ()
    %cst_68 = arith.constant dense<0.000000e+00> : vector<1x8x8xf32>
    %195 = tpu.matmul %190, %192, %cst_68 {dimension_numbers = #tpu.dot_dimension_numbers<[2], [2], [1], [1], [0, 0, 0, 1, 1, 1], [0], [0]>} : vector<1x8x128xf32>, vector<1x8x128xf32>, vector<1x8x8xf32> -> vector<1x8x8xf32>
    "tpu.trace_stop"() : () -> ()
    %cst_69 = arith.constant 0.0883883461 : f32
    %196 = vector.broadcast %cst_69 : f32 to vector<1x8x8xf32>
    %197 = arith.mulf %195, %196 : vector<1x8x8xf32>
    %cst_70 = arith.constant dense<0xFF800000> : vector<1x8xf32>
    %198 = vector.multi_reduction <maximumf>, %197, %cst_70 [2] : vector<1x8x8xf32> to vector<1x8xf32>
    %199 = vector.shape_cast %198 : vector<1x8xf32> to vector<1x8x1xf32>
    %200 = vector.broadcast %199 : vector<1x8x1xf32> to vector<1x8x8xf32>
    %201 = arith.subf %197, %200 : vector<1x8x8xf32>
    %202 = math.exp %201 : vector<1x8x8xf32>
    %cst_71 = arith.constant dense<0.000000e+00> : vector<1x8xf32>
    %203 = vector.multi_reduction <add>, %202, %cst_71 [2] : vector<1x8x8xf32> to vector<1x8xf32>
    %204 = vector.shape_cast %203 : vector<1x8xf32> to vector<1x8x1xf32>
    %205 = tpu.reciprocal %204 : vector<1x8x1xf32> -> vector<1x8x1xf32>
    %206 = vector.broadcast %205 : vector<1x8x1xf32> to vector<1x8x8xf32>
    %207 = arith.mulf %202, %206 : vector<1x8x8xf32>
    "tpu.trace_start"() <{level = 10 : i32, message = "bqk,bkd->bqd"}> : () -> ()
    %cst_72 = arith.constant dense<0.000000e+00> : vector<1x8x128xf32>
    %208 = tpu.matmul %207, %194, %cst_72 {dimension_numbers = #tpu.dot_dimension_numbers<[2], [1], [1], [2], [0, 0, 0, 1, 1, 2], [0], [0]>} : vector<1x8x8xf32>, vector<1x8x128xf32>, vector<1x8x128xf32> -> vector<1x8x128xf32>
    "tpu.trace_stop"() : () -> ()
    %209 = vector.shape_cast %208 : vector<1x8x128xf32> to vector<8x128xf32>
    %210 = vector.extract_strided_slice %9 {offsets = [896, 0], sizes = [128, 128], strides = [1, 1]} : vector<1024x128xf32> to vector<128x128xf32>
    %cst_73 = arith.constant dense<0.000000e+00> : vector<8x128xf32>
    %211 = tpu.matmul %209, %210, %cst_73 {dimension_numbers = #tpu.dot_dimension_numbers<[1], [0], [0], [1], [0, 0, 1, 1], [], []>} : vector<8x128xf32>, vector<128x128xf32>, vector<8x128xf32> -> vector<8x128xf32>
    %212 = arith.addf %188, %211 : vector<8x128xf32>
    %cst_74 = arith.constant dense<0.000000e+00> : vector<8xf32>
    %213 = vector.multi_reduction <add>, %212, %cst_74 [1] : vector<8x128xf32> to vector<8xf32>
    %214 = vector.shape_cast %213 : vector<8xf32> to vector<8x1xf32>
    %cst_75 = arith.constant 1.280000e+02 : f32
    %215 = vector.broadcast %cst_75 : f32 to vector<8x1xf32>
    %216 = arith.divf %214, %215 : vector<8x1xf32>
    %217 = vector.broadcast %216 : vector<8x1xf32> to vector<8x128xf32>
    %218 = arith.subf %212, %217 : vector<8x128xf32>
    %219 = arith.mulf %218, %218 : vector<8x128xf32>
    %cst_76 = arith.constant dense<0.000000e+00> : vector<8xf32>
    %220 = vector.multi_reduction <add>, %219, %cst_76 [1] : vector<8x128xf32> to vector<8xf32>
    %221 = vector.shape_cast %220 : vector<8xf32> to vector<8x1xf32>
    %cst_77 = arith.constant 1.270000e+02 : f32
    %222 = vector.broadcast %cst_77 : f32 to vector<8x1xf32>
    %223 = arith.divf %221, %222 : vector<8x1xf32>
    %224 = math.sqrt %223 : vector<8x1xf32>
    %cst_78 = arith.constant 1.000000e-03 : f32
    %225 = vector.broadcast %cst_78 : f32 to vector<8x1xf32>
    %226 = arith.addf %224, %225 : vector<8x1xf32>
    %227 = tpu.reciprocal %226 : vector<8x1xf32> -> vector<8x1xf32>
    %228 = vector.broadcast %216 : vector<8x1xf32> to vector<8x128xf32>
    %229 = arith.subf %212, %228 : vector<8x128xf32>
    %230 = vector.broadcast %227 : vector<8x1xf32> to vector<8x128xf32>
    %231 = arith.mulf %229, %230 : vector<8x128xf32>
    %232 = vector.broadcast %13 : vector<1x128xf32> to vector<8x128xf32>
    %233 = arith.mulf %231, %232 : vector<8x128xf32>
    %234 = vector.broadcast %15 : vector<1x128xf32> to vector<8x128xf32>
    %235 = arith.addf %233, %234 : vector<8x128xf32>
    %c0_79 = arith.constant 0 : index
    %c0_80 = arith.constant 0 : index
    %c0_81 = arith.constant 0 : index
    %236 = vector.load %arg10[%c0_79, %c0_80, %c0_81] : memref<1x128x1024xf32, #tpu.memory_space<vmem>>, vector<1x128x1024xf32>
    %237 = vector.shape_cast %236 : vector<1x128x1024xf32> to vector<128x1024xf32>
    %c0_82 = arith.constant 0 : index
    %c0_83 = arith.constant 0 : index
    %c0_84 = arith.constant 0 : index
    %238 = vector.load %arg11[%c0_82, %c0_83, %c0_84] : memref<1x128x1024xf32, #tpu.memory_space<vmem>>, vector<1x128x1024xf32>
    %239 = vector.shape_cast %238 : vector<1x128x1024xf32> to vector<128x1024xf32>
    %c0_85 = arith.constant 0 : index
    %c0_86 = arith.constant 0 : index
    %c0_87 = arith.constant 0 : index
    %240 = vector.load %arg12[%c0_85, %c0_86, %c0_87] : memref<1x128x1024xf32, #tpu.memory_space<vmem>>, vector<1x128x1024xf32>
    %241 = vector.shape_cast %240 : vector<1x128x1024xf32> to vector<128x1024xf32>
    %c0_88 = arith.constant 0 : index
    %c0_89 = arith.constant 0 : index
    %c0_90 = arith.constant 0 : index
    %242 = vector.load %arg13[%c0_88, %c0_89, %c0_90] : memref<1x1024x128xf32, #tpu.memory_space<vmem>>, vector<1x1024x128xf32>
    %243 = vector.shape_cast %242 : vector<1x1024x128xf32> to vector<1024x128xf32>
    %c0_91 = arith.constant 0 : index
    %c0_92 = arith.constant 0 : index
    %c0_93 = arith.constant 0 : index
    %244 = vector.load %arg14[%c0_91, %c0_92, %c0_93] : memref<1x1x128xf32, #tpu.memory_space<vmem>>, vector<1x1x128xf32>
    %245 = vector.shape_cast %244 : vector<1x1x128xf32> to vector<1x128xf32>
    %c0_94 = arith.constant 0 : index
    %c0_95 = arith.constant 0 : index
    %c0_96 = arith.constant 0 : index
    %246 = vector.load %arg15[%c0_94, %c0_95, %c0_96] : memref<1x1x128xf32, #tpu.memory_space<vmem>>, vector<1x1x128xf32>
    %247 = vector.shape_cast %246 : vector<1x1x128xf32> to vector<1x128xf32>
    %c0_97 = arith.constant 0 : index
    %c0_98 = arith.constant 0 : index
    %c0_99 = arith.constant 0 : index
    %248 = vector.load %arg16[%c0_97, %c0_98, %c0_99] : memref<1x1x128xf32, #tpu.memory_space<vmem>>, vector<1x1x128xf32>
    %249 = vector.shape_cast %248 : vector<1x1x128xf32> to vector<1x128xf32>
    %cst_100 = arith.constant dense<0.000000e+00> : vector<8x1024xf32>
    %250 = tpu.matmul %235, %237, %cst_100 {dimension_numbers = #tpu.dot_dimension_numbers<[1], [0], [0], [1], [0, 0, 1, 1], [], []>} : vector<8x128xf32>, vector<128x1024xf32>, vector<8x1024xf32> -> vector<8x1024xf32>
    %cst_101 = arith.constant dense<0.000000e+00> : vector<16x1024xf32>
    %251 = tpu.matmul %1, %239, %cst_101 {dimension_numbers = #tpu.dot_dimension_numbers<[1], [0], [0], [1], [0, 0, 1, 1], [], []>} : vector<16x128xf32>, vector<128x1024xf32>, vector<16x1024xf32> -> vector<16x1024xf32>
    %cst_102 = arith.constant dense<0.000000e+00> : vector<16x1024xf32>
    %252 = tpu.matmul %1, %241, %cst_102 {dimension_numbers = #tpu.dot_dimension_numbers<[1], [0], [0], [1], [0, 0, 1, 1], [], []>} : vector<16x128xf32>, vector<128x1024xf32>, vector<16x1024xf32> -> vector<16x1024xf32>
    %253 = vector.broadcast %245 : vector<1x128xf32> to vector<8x128xf32>
    %254 = arith.addf %235, %253 : vector<8x128xf32>
    %255 = vector.extract_strided_slice %250 {offsets = [0, 0], sizes = [8, 128], strides = [1, 1]} : vector<8x1024xf32> to vector<8x128xf32>
    %256 = vector.shape_cast %255 : vector<8x128xf32> to vector<1x8x128xf32>
    %257 = vector.extract_strided_slice %251 {offsets = [0, 0], sizes = [16, 128], strides = [1, 1]} : vector<16x1024xf32> to vector<16x128xf32>
    %258 = vector.shape_cast %257 : vector<16x128xf32> to vector<1x16x128xf32>
    %259 = vector.extract_strided_slice %252 {offsets = [0, 0], sizes = [16, 128], strides = [1, 1]} : vector<16x1024xf32> to vector<16x128xf32>
    %260 = vector.shape_cast %259 : vector<16x128xf32> to vector<1x16x128xf32>
    "tpu.trace_start"() <{level = 10 : i32, message = "bqd,bkd->bqk"}> : () -> ()
    %cst_103 = arith.constant dense<0.000000e+00> : vector<1x8x16xf32>
    %261 = tpu.matmul %256, %258, %cst_103 {dimension_numbers = #tpu.dot_dimension_numbers<[2], [2], [1], [1], [0, 0, 0, 1, 1, 1], [0], [0]>} : vector<1x8x128xf32>, vector<1x16x128xf32>, vector<1x8x16xf32> -> vector<1x8x16xf32>
    "tpu.trace_stop"() : () -> ()
    %cst_104 = arith.constant 0.0883883461 : f32
    %262 = vector.broadcast %cst_104 : f32 to vector<1x8x16xf32>
    %263 = arith.mulf %261, %262 : vector<1x8x16xf32>
    %cst_105 = arith.constant dense<0xFF800000> : vector<1x8xf32>
    %264 = vector.multi_reduction <maximumf>, %263, %cst_105 [2] : vector<1x8x16xf32> to vector<1x8xf32>
    %265 = vector.shape_cast %264 : vector<1x8xf32> to vector<1x8x1xf32>
    %266 = vector.broadcast %265 : vector<1x8x1xf32> to vector<1x8x16xf32>
    %267 = arith.subf %263, %266 : vector<1x8x16xf32>
    %268 = math.exp %267 : vector<1x8x16xf32>
    %cst_106 = arith.constant dense<0.000000e+00> : vector<1x8xf32>
    %269 = vector.multi_reduction <add>, %268, %cst_106 [2] : vector<1x8x16xf32> to vector<1x8xf32>
    %270 = vector.shape_cast %269 : vector<1x8xf32> to vector<1x8x1xf32>
    %271 = tpu.reciprocal %270 : vector<1x8x1xf32> -> vector<1x8x1xf32>
    %272 = vector.broadcast %271 : vector<1x8x1xf32> to vector<1x8x16xf32>
    %273 = arith.mulf %268, %272 : vector<1x8x16xf32>
    "tpu.trace_start"() <{level = 10 : i32, message = "bqk,bkd->bqd"}> : () -> ()
    %cst_107 = arith.constant dense<0.000000e+00> : vector<1x8x128xf32>
    %274 = tpu.matmul %273, %260, %cst_107 {dimension_numbers = #tpu.dot_dimension_numbers<[2], [1], [1], [2], [0, 0, 0, 1, 1, 2], [0], [0]>} : vector<1x8x16xf32>, vector<1x16x128xf32>, vector<1x8x128xf32> -> vector<1x8x128xf32>
    "tpu.trace_stop"() : () -> ()
    %275 = vector.shape_cast %274 : vector<1x8x128xf32> to vector<8x128xf32>
    %276 = vector.extract_strided_slice %243 {offsets = [0, 0], sizes = [128, 128], strides = [1, 1]} : vector<1024x128xf32> to vector<128x128xf32>
    %cst_108 = arith.constant dense<0.000000e+00> : vector<8x128xf32>
    %277 = tpu.matmul %275, %276, %cst_108 {dimension_numbers = #tpu.dot_dimension_numbers<[1], [0], [0], [1], [0, 0, 1, 1], [], []>} : vector<8x128xf32>, vector<128x128xf32>, vector<8x128xf32> -> vector<8x128xf32>
    %278 = arith.addf %254, %277 : vector<8x128xf32>
    %279 = vector.extract_strided_slice %250 {offsets = [0, 128], sizes = [8, 128], strides = [1, 1]} : vector<8x1024xf32> to vector<8x128xf32>
    %280 = vector.shape_cast %279 : vector<8x128xf32> to vector<1x8x128xf32>
    %281 = vector.extract_strided_slice %251 {offsets = [0, 128], sizes = [16, 128], strides = [1, 1]} : vector<16x1024xf32> to vector<16x128xf32>
    %282 = vector.shape_cast %281 : vector<16x128xf32> to vector<1x16x128xf32>
    %283 = vector.extract_strided_slice %252 {offsets = [0, 128], sizes = [16, 128], strides = [1, 1]} : vector<16x1024xf32> to vector<16x128xf32>
    %284 = vector.shape_cast %283 : vector<16x128xf32> to vector<1x16x128xf32>
    "tpu.trace_start"() <{level = 10 : i32, message = "bqd,bkd->bqk"}> : () -> ()
    %cst_109 = arith.constant dense<0.000000e+00> : vector<1x8x16xf32>
    %285 = tpu.matmul %280, %282, %cst_109 {dimension_numbers = #tpu.dot_dimension_numbers<[2], [2], [1], [1], [0, 0, 0, 1, 1, 1], [0], [0]>} : vector<1x8x128xf32>, vector<1x16x128xf32>, vector<1x8x16xf32> -> vector<1x8x16xf32>
    "tpu.trace_stop"() : () -> ()
    %cst_110 = arith.constant 0.0883883461 : f32
    %286 = vector.broadcast %cst_110 : f32 to vector<1x8x16xf32>
    %287 = arith.mulf %285, %286 : vector<1x8x16xf32>
    %cst_111 = arith.constant dense<0xFF800000> : vector<1x8xf32>
    %288 = vector.multi_reduction <maximumf>, %287, %cst_111 [2] : vector<1x8x16xf32> to vector<1x8xf32>
    %289 = vector.shape_cast %288 : vector<1x8xf32> to vector<1x8x1xf32>
    %290 = vector.broadcast %289 : vector<1x8x1xf32> to vector<1x8x16xf32>
    %291 = arith.subf %287, %290 : vector<1x8x16xf32>
    %292 = math.exp %291 : vector<1x8x16xf32>
    %cst_112 = arith.constant dense<0.000000e+00> : vector<1x8xf32>
    %293 = vector.multi_reduction <add>, %292, %cst_112 [2] : vector<1x8x16xf32> to vector<1x8xf32>
    %294 = vector.shape_cast %293 : vector<1x8xf32> to vector<1x8x1xf32>
    %295 = tpu.reciprocal %294 : vector<1x8x1xf32> -> vector<1x8x1xf32>
    %296 = vector.broadcast %295 : vector<1x8x1xf32> to vector<1x8x16xf32>
    %297 = arith.mulf %292, %296 : vector<1x8x16xf32>
    "tpu.trace_start"() <{level = 10 : i32, message = "bqk,bkd->bqd"}> : () -> ()
    %cst_113 = arith.constant dense<0.000000e+00> : vector<1x8x128xf32>
    %298 = tpu.matmul %297, %284, %cst_113 {dimension_numbers = #tpu.dot_dimension_numbers<[2], [1], [1], [2], [0, 0, 0, 1, 1, 2], [0], [0]>} : vector<1x8x16xf32>, vector<1x16x128xf32>, vector<1x8x128xf32> -> vector<1x8x128xf32>
    "tpu.trace_stop"() : () -> ()
    %299 = vector.shape_cast %298 : vector<1x8x128xf32> to vector<8x128xf32>
    %300 = vector.extract_strided_slice %243 {offsets = [128, 0], sizes = [128, 128], strides = [1, 1]} : vector<1024x128xf32> to vector<128x128xf32>
    %cst_114 = arith.constant dense<0.000000e+00> : vector<8x128xf32>
    %301 = tpu.matmul %299, %300, %cst_114 {dimension_numbers = #tpu.dot_dimension_numbers<[1], [0], [0], [1], [0, 0, 1, 1], [], []>} : vector<8x128xf32>, vector<128x128xf32>, vector<8x128xf32> -> vector<8x128xf32>
    %302 = arith.addf %278, %301 : vector<8x128xf32>
    %303 = vector.extract_strided_slice %250 {offsets = [0, 256], sizes = [8, 128], strides = [1, 1]} : vector<8x1024xf32> to vector<8x128xf32>
    %304 = vector.shape_cast %303 : vector<8x128xf32> to vector<1x8x128xf32>
    %305 = vector.extract_strided_slice %251 {offsets = [0, 256], sizes = [16, 128], strides = [1, 1]} : vector<16x1024xf32> to vector<16x128xf32>
    %306 = vector.shape_cast %305 : vector<16x128xf32> to vector<1x16x128xf32>
    %307 = vector.extract_strided_slice %252 {offsets = [0, 256], sizes = [16, 128], strides = [1, 1]} : vector<16x1024xf32> to vector<16x128xf32>
    %308 = vector.shape_cast %307 : vector<16x128xf32> to vector<1x16x128xf32>
    "tpu.trace_start"() <{level = 10 : i32, message = "bqd,bkd->bqk"}> : () -> ()
    %cst_115 = arith.constant dense<0.000000e+00> : vector<1x8x16xf32>
    %309 = tpu.matmul %304, %306, %cst_115 {dimension_numbers = #tpu.dot_dimension_numbers<[2], [2], [1], [1], [0, 0, 0, 1, 1, 1], [0], [0]>} : vector<1x8x128xf32>, vector<1x16x128xf32>, vector<1x8x16xf32> -> vector<1x8x16xf32>
    "tpu.trace_stop"() : () -> ()
    %cst_116 = arith.constant 0.0883883461 : f32
    %310 = vector.broadcast %cst_116 : f32 to vector<1x8x16xf32>
    %311 = arith.mulf %309, %310 : vector<1x8x16xf32>
    %cst_117 = arith.constant dense<0xFF800000> : vector<1x8xf32>
    %312 = vector.multi_reduction <maximumf>, %311, %cst_117 [2] : vector<1x8x16xf32> to vector<1x8xf32>
    %313 = vector.shape_cast %312 : vector<1x8xf32> to vector<1x8x1xf32>
    %314 = vector.broadcast %313 : vector<1x8x1xf32> to vector<1x8x16xf32>
    %315 = arith.subf %311, %314 : vector<1x8x16xf32>
    %316 = math.exp %315 : vector<1x8x16xf32>
    %cst_118 = arith.constant dense<0.000000e+00> : vector<1x8xf32>
    %317 = vector.multi_reduction <add>, %316, %cst_118 [2] : vector<1x8x16xf32> to vector<1x8xf32>
    %318 = vector.shape_cast %317 : vector<1x8xf32> to vector<1x8x1xf32>
    %319 = tpu.reciprocal %318 : vector<1x8x1xf32> -> vector<1x8x1xf32>
    %320 = vector.broadcast %319 : vector<1x8x1xf32> to vector<1x8x16xf32>
    %321 = arith.mulf %316, %320 : vector<1x8x16xf32>
    "tpu.trace_start"() <{level = 10 : i32, message = "bqk,bkd->bqd"}> : () -> ()
    %cst_119 = arith.constant dense<0.000000e+00> : vector<1x8x128xf32>
    %322 = tpu.matmul %321, %308, %cst_119 {dimension_numbers = #tpu.dot_dimension_numbers<[2], [1], [1], [2], [0, 0, 0, 1, 1, 2], [0], [0]>} : vector<1x8x16xf32>, vector<1x16x128xf32>, vector<1x8x128xf32> -> vector<1x8x128xf32>
    "tpu.trace_stop"() : () -> ()
    %323 = vector.shape_cast %322 : vector<1x8x128xf32> to vector<8x128xf32>
    %324 = vector.extract_strided_slice %243 {offsets = [256, 0], sizes = [128, 128], strides = [1, 1]} : vector<1024x128xf32> to vector<128x128xf32>
    %cst_120 = arith.constant dense<0.000000e+00> : vector<8x128xf32>
    %325 = tpu.matmul %323, %324, %cst_120 {dimension_numbers = #tpu.dot_dimension_numbers<[1], [0], [0], [1], [0, 0, 1, 1], [], []>} : vector<8x128xf32>, vector<128x128xf32>, vector<8x128xf32> -> vector<8x128xf32>
    %326 = arith.addf %302, %325 : vector<8x128xf32>
    %327 = vector.extract_strided_slice %250 {offsets = [0, 384], sizes = [8, 128], strides = [1, 1]} : vector<8x1024xf32> to vector<8x128xf32>
    %328 = vector.shape_cast %327 : vector<8x128xf32> to vector<1x8x128xf32>
    %329 = vector.extract_strided_slice %251 {offsets = [0, 384], sizes = [16, 128], strides = [1, 1]} : vector<16x1024xf32> to vector<16x128xf32>
    %330 = vector.shape_cast %329 : vector<16x128xf32> to vector<1x16x128xf32>
    %331 = vector.extract_strided_slice %252 {offsets = [0, 384], sizes = [16, 128], strides = [1, 1]} : vector<16x1024xf32> to vector<16x128xf32>
    %332 = vector.shape_cast %331 : vector<16x128xf32> to vector<1x16x128xf32>
    "tpu.trace_start"() <{level = 10 : i32, message = "bqd,bkd->bqk"}> : () -> ()
    %cst_121 = arith.constant dense<0.000000e+00> : vector<1x8x16xf32>
    %333 = tpu.matmul %328, %330, %cst_121 {dimension_numbers = #tpu.dot_dimension_numbers<[2], [2], [1], [1], [0, 0, 0, 1, 1, 1], [0], [0]>} : vector<1x8x128xf32>, vector<1x16x128xf32>, vector<1x8x16xf32> -> vector<1x8x16xf32>
    "tpu.trace_stop"() : () -> ()
    %cst_122 = arith.constant 0.0883883461 : f32
    %334 = vector.broadcast %cst_122 : f32 to vector<1x8x16xf32>
    %335 = arith.mulf %333, %334 : vector<1x8x16xf32>
    %cst_123 = arith.constant dense<0xFF800000> : vector<1x8xf32>
    %336 = vector.multi_reduction <maximumf>, %335, %cst_123 [2] : vector<1x8x16xf32> to vector<1x8xf32>
    %337 = vector.shape_cast %336 : vector<1x8xf32> to vector<1x8x1xf32>
    %338 = vector.broadcast %337 : vector<1x8x1xf32> to vector<1x8x16xf32>
    %339 = arith.subf %335, %338 : vector<1x8x16xf32>
    %340 = math.exp %339 : vector<1x8x16xf32>
    %cst_124 = arith.constant dense<0.000000e+00> : vector<1x8xf32>
    %341 = vector.multi_reduction <add>, %340, %cst_124 [2] : vector<1x8x16xf32> to vector<1x8xf32>
    %342 = vector.shape_cast %341 : vector<1x8xf32> to vector<1x8x1xf32>
    %343 = tpu.reciprocal %342 : vector<1x8x1xf32> -> vector<1x8x1xf32>
    %344 = vector.broadcast %343 : vector<1x8x1xf32> to vector<1x8x16xf32>
    %345 = arith.mulf %340, %344 : vector<1x8x16xf32>
    "tpu.trace_start"() <{level = 10 : i32, message = "bqk,bkd->bqd"}> : () -> ()
    %cst_125 = arith.constant dense<0.000000e+00> : vector<1x8x128xf32>
    %346 = tpu.matmul %345, %332, %cst_125 {dimension_numbers = #tpu.dot_dimension_numbers<[2], [1], [1], [2], [0, 0, 0, 1, 1, 2], [0], [0]>} : vector<1x8x16xf32>, vector<1x16x128xf32>, vector<1x8x128xf32> -> vector<1x8x128xf32>
    "tpu.trace_stop"() : () -> ()
    %347 = vector.shape_cast %346 : vector<1x8x128xf32> to vector<8x128xf32>
    %348 = vector.extract_strided_slice %243 {offsets = [384, 0], sizes = [128, 128], strides = [1, 1]} : vector<1024x128xf32> to vector<128x128xf32>
    %cst_126 = arith.constant dense<0.000000e+00> : vector<8x128xf32>
    %349 = tpu.matmul %347, %348, %cst_126 {dimension_numbers = #tpu.dot_dimension_numbers<[1], [0], [0], [1], [0, 0, 1, 1], [], []>} : vector<8x128xf32>, vector<128x128xf32>, vector<8x128xf32> -> vector<8x128xf32>
    %350 = arith.addf %326, %349 : vector<8x128xf32>
    %351 = vector.extract_strided_slice %250 {offsets = [0, 512], sizes = [8, 128], strides = [1, 1]} : vector<8x1024xf32> to vector<8x128xf32>
    %352 = vector.shape_cast %351 : vector<8x128xf32> to vector<1x8x128xf32>
    %353 = vector.extract_strided_slice %251 {offsets = [0, 512], sizes = [16, 128], strides = [1, 1]} : vector<16x1024xf32> to vector<16x128xf32>
    %354 = vector.shape_cast %353 : vector<16x128xf32> to vector<1x16x128xf32>
    %355 = vector.extract_strided_slice %252 {offsets = [0, 512], sizes = [16, 128], strides = [1, 1]} : vector<16x1024xf32> to vector<16x128xf32>
    %356 = vector.shape_cast %355 : vector<16x128xf32> to vector<1x16x128xf32>
    "tpu.trace_start"() <{level = 10 : i32, message = "bqd,bkd->bqk"}> : () -> ()
    %cst_127 = arith.constant dense<0.000000e+00> : vector<1x8x16xf32>
    %357 = tpu.matmul %352, %354, %cst_127 {dimension_numbers = #tpu.dot_dimension_numbers<[2], [2], [1], [1], [0, 0, 0, 1, 1, 1], [0], [0]>} : vector<1x8x128xf32>, vector<1x16x128xf32>, vector<1x8x16xf32> -> vector<1x8x16xf32>
    "tpu.trace_stop"() : () -> ()
    %cst_128 = arith.constant 0.0883883461 : f32
    %358 = vector.broadcast %cst_128 : f32 to vector<1x8x16xf32>
    %359 = arith.mulf %357, %358 : vector<1x8x16xf32>
    %cst_129 = arith.constant dense<0xFF800000> : vector<1x8xf32>
    %360 = vector.multi_reduction <maximumf>, %359, %cst_129 [2] : vector<1x8x16xf32> to vector<1x8xf32>
    %361 = vector.shape_cast %360 : vector<1x8xf32> to vector<1x8x1xf32>
    %362 = vector.broadcast %361 : vector<1x8x1xf32> to vector<1x8x16xf32>
    %363 = arith.subf %359, %362 : vector<1x8x16xf32>
    %364 = math.exp %363 : vector<1x8x16xf32>
    %cst_130 = arith.constant dense<0.000000e+00> : vector<1x8xf32>
    %365 = vector.multi_reduction <add>, %364, %cst_130 [2] : vector<1x8x16xf32> to vector<1x8xf32>
    %366 = vector.shape_cast %365 : vector<1x8xf32> to vector<1x8x1xf32>
    %367 = tpu.reciprocal %366 : vector<1x8x1xf32> -> vector<1x8x1xf32>
    %368 = vector.broadcast %367 : vector<1x8x1xf32> to vector<1x8x16xf32>
    %369 = arith.mulf %364, %368 : vector<1x8x16xf32>
    "tpu.trace_start"() <{level = 10 : i32, message = "bqk,bkd->bqd"}> : () -> ()
    %cst_131 = arith.constant dense<0.000000e+00> : vector<1x8x128xf32>
    %370 = tpu.matmul %369, %356, %cst_131 {dimension_numbers = #tpu.dot_dimension_numbers<[2], [1], [1], [2], [0, 0, 0, 1, 1, 2], [0], [0]>} : vector<1x8x16xf32>, vector<1x16x128xf32>, vector<1x8x128xf32> -> vector<1x8x128xf32>
    "tpu.trace_stop"() : () -> ()
    %371 = vector.shape_cast %370 : vector<1x8x128xf32> to vector<8x128xf32>
    %372 = vector.extract_strided_slice %243 {offsets = [512, 0], sizes = [128, 128], strides = [1, 1]} : vector<1024x128xf32> to vector<128x128xf32>
    %cst_132 = arith.constant dense<0.000000e+00> : vector<8x128xf32>
    %373 = tpu.matmul %371, %372, %cst_132 {dimension_numbers = #tpu.dot_dimension_numbers<[1], [0], [0], [1], [0, 0, 1, 1], [], []>} : vector<8x128xf32>, vector<128x128xf32>, vector<8x128xf32> -> vector<8x128xf32>
    %374 = arith.addf %350, %373 : vector<8x128xf32>
    %375 = vector.extract_strided_slice %250 {offsets = [0, 640], sizes = [8, 128], strides = [1, 1]} : vector<8x1024xf32> to vector<8x128xf32>
    %376 = vector.shape_cast %375 : vector<8x128xf32> to vector<1x8x128xf32>
    %377 = vector.extract_strided_slice %251 {offsets = [0, 640], sizes = [16, 128], strides = [1, 1]} : vector<16x1024xf32> to vector<16x128xf32>
    %378 = vector.shape_cast %377 : vector<16x128xf32> to vector<1x16x128xf32>
    %379 = vector.extract_strided_slice %252 {offsets = [0, 640], sizes = [16, 128], strides = [1, 1]} : vector<16x1024xf32> to vector<16x128xf32>
    %380 = vector.shape_cast %379 : vector<16x128xf32> to vector<1x16x128xf32>
    "tpu.trace_start"() <{level = 10 : i32, message = "bqd,bkd->bqk"}> : () -> ()
    %cst_133 = arith.constant dense<0.000000e+00> : vector<1x8x16xf32>
    %381 = tpu.matmul %376, %378, %cst_133 {dimension_numbers = #tpu.dot_dimension_numbers<[2], [2], [1], [1], [0, 0, 0, 1, 1, 1], [0], [0]>} : vector<1x8x128xf32>, vector<1x16x128xf32>, vector<1x8x16xf32> -> vector<1x8x16xf32>
    "tpu.trace_stop"() : () -> ()
    %cst_134 = arith.constant 0.0883883461 : f32
    %382 = vector.broadcast %cst_134 : f32 to vector<1x8x16xf32>
    %383 = arith.mulf %381, %382 : vector<1x8x16xf32>
    %cst_135 = arith.constant dense<0xFF800000> : vector<1x8xf32>
    %384 = vector.multi_reduction <maximumf>, %383, %cst_135 [2] : vector<1x8x16xf32> to vector<1x8xf32>
    %385 = vector.shape_cast %384 : vector<1x8xf32> to vector<1x8x1xf32>
    %386 = vector.broadcast %385 : vector<1x8x1xf32> to vector<1x8x16xf32>
    %387 = arith.subf %383, %386 : vector<1x8x16xf32>
    %388 = math.exp %387 : vector<1x8x16xf32>
    %cst_136 = arith.constant dense<0.000000e+00> : vector<1x8xf32>
    %389 = vector.multi_reduction <add>, %388, %cst_136 [2] : vector<1x8x16xf32> to vector<1x8xf32>
    %390 = vector.shape_cast %389 : vector<1x8xf32> to vector<1x8x1xf32>
    %391 = tpu.reciprocal %390 : vector<1x8x1xf32> -> vector<1x8x1xf32>
    %392 = vector.broadcast %391 : vector<1x8x1xf32> to vector<1x8x16xf32>
    %393 = arith.mulf %388, %392 : vector<1x8x16xf32>
    "tpu.trace_start"() <{level = 10 : i32, message = "bqk,bkd->bqd"}> : () -> ()
    %cst_137 = arith.constant dense<0.000000e+00> : vector<1x8x128xf32>
    %394 = tpu.matmul %393, %380, %cst_137 {dimension_numbers = #tpu.dot_dimension_numbers<[2], [1], [1], [2], [0, 0, 0, 1, 1, 2], [0], [0]>} : vector<1x8x16xf32>, vector<1x16x128xf32>, vector<1x8x128xf32> -> vector<1x8x128xf32>
    "tpu.trace_stop"() : () -> ()
    %395 = vector.shape_cast %394 : vector<1x8x128xf32> to vector<8x128xf32>
    %396 = vector.extract_strided_slice %243 {offsets = [640, 0], sizes = [128, 128], strides = [1, 1]} : vector<1024x128xf32> to vector<128x128xf32>
    %cst_138 = arith.constant dense<0.000000e+00> : vector<8x128xf32>
    %397 = tpu.matmul %395, %396, %cst_138 {dimension_numbers = #tpu.dot_dimension_numbers<[1], [0], [0], [1], [0, 0, 1, 1], [], []>} : vector<8x128xf32>, vector<128x128xf32>, vector<8x128xf32> -> vector<8x128xf32>
    %398 = arith.addf %374, %397 : vector<8x128xf32>
    %399 = vector.extract_strided_slice %250 {offsets = [0, 768], sizes = [8, 128], strides = [1, 1]} : vector<8x1024xf32> to vector<8x128xf32>
    %400 = vector.shape_cast %399 : vector<8x128xf32> to vector<1x8x128xf32>
    %401 = vector.extract_strided_slice %251 {offsets = [0, 768], sizes = [16, 128], strides = [1, 1]} : vector<16x1024xf32> to vector<16x128xf32>
    %402 = vector.shape_cast %401 : vector<16x128xf32> to vector<1x16x128xf32>
    %403 = vector.extract_strided_slice %252 {offsets = [0, 768], sizes = [16, 128], strides = [1, 1]} : vector<16x1024xf32> to vector<16x128xf32>
    %404 = vector.shape_cast %403 : vector<16x128xf32> to vector<1x16x128xf32>
    "tpu.trace_start"() <{level = 10 : i32, message = "bqd,bkd->bqk"}> : () -> ()
    %cst_139 = arith.constant dense<0.000000e+00> : vector<1x8x16xf32>
    %405 = tpu.matmul %400, %402, %cst_139 {dimension_numbers = #tpu.dot_dimension_numbers<[2], [2], [1], [1], [0, 0, 0, 1, 1, 1], [0], [0]>} : vector<1x8x128xf32>, vector<1x16x128xf32>, vector<1x8x16xf32> -> vector<1x8x16xf32>
    "tpu.trace_stop"() : () -> ()
    %cst_140 = arith.constant 0.0883883461 : f32
    %406 = vector.broadcast %cst_140 : f32 to vector<1x8x16xf32>
    %407 = arith.mulf %405, %406 : vector<1x8x16xf32>
    %cst_141 = arith.constant dense<0xFF800000> : vector<1x8xf32>
    %408 = vector.multi_reduction <maximumf>, %407, %cst_141 [2] : vector<1x8x16xf32> to vector<1x8xf32>
    %409 = vector.shape_cast %408 : vector<1x8xf32> to vector<1x8x1xf32>
    %410 = vector.broadcast %409 : vector<1x8x1xf32> to vector<1x8x16xf32>
    %411 = arith.subf %407, %410 : vector<1x8x16xf32>
    %412 = math.exp %411 : vector<1x8x16xf32>
    %cst_142 = arith.constant dense<0.000000e+00> : vector<1x8xf32>
    %413 = vector.multi_reduction <add>, %412, %cst_142 [2] : vector<1x8x16xf32> to vector<1x8xf32>
    %414 = vector.shape_cast %413 : vector<1x8xf32> to vector<1x8x1xf32>
    %415 = tpu.reciprocal %414 : vector<1x8x1xf32> -> vector<1x8x1xf32>
    %416 = vector.broadcast %415 : vector<1x8x1xf32> to vector<1x8x16xf32>
    %417 = arith.mulf %412, %416 : vector<1x8x16xf32>
    "tpu.trace_start"() <{level = 10 : i32, message = "bqk,bkd->bqd"}> : () -> ()
    %cst_143 = arith.constant dense<0.000000e+00> : vector<1x8x128xf32>
    %418 = tpu.matmul %417, %404, %cst_143 {dimension_numbers = #tpu.dot_dimension_numbers<[2], [1], [1], [2], [0, 0, 0, 1, 1, 2], [0], [0]>} : vector<1x8x16xf32>, vector<1x16x128xf32>, vector<1x8x128xf32> -> vector<1x8x128xf32>
    "tpu.trace_stop"() : () -> ()
    %419 = vector.shape_cast %418 : vector<1x8x128xf32> to vector<8x128xf32>
    %420 = vector.extract_strided_slice %243 {offsets = [768, 0], sizes = [128, 128], strides = [1, 1]} : vector<1024x128xf32> to vector<128x128xf32>
    %cst_144 = arith.constant dense<0.000000e+00> : vector<8x128xf32>
    %421 = tpu.matmul %419, %420, %cst_144 {dimension_numbers = #tpu.dot_dimension_numbers<[1], [0], [0], [1], [0, 0, 1, 1], [], []>} : vector<8x128xf32>, vector<128x128xf32>, vector<8x128xf32> -> vector<8x128xf32>
    %422 = arith.addf %398, %421 : vector<8x128xf32>
    %423 = vector.extract_strided_slice %250 {offsets = [0, 896], sizes = [8, 128], strides = [1, 1]} : vector<8x1024xf32> to vector<8x128xf32>
    %424 = vector.shape_cast %423 : vector<8x128xf32> to vector<1x8x128xf32>
    %425 = vector.extract_strided_slice %251 {offsets = [0, 896], sizes = [16, 128], strides = [1, 1]} : vector<16x1024xf32> to vector<16x128xf32>
    %426 = vector.shape_cast %425 : vector<16x128xf32> to vector<1x16x128xf32>
    %427 = vector.extract_strided_slice %252 {offsets = [0, 896], sizes = [16, 128], strides = [1, 1]} : vector<16x1024xf32> to vector<16x128xf32>
    %428 = vector.shape_cast %427 : vector<16x128xf32> to vector<1x16x128xf32>
    "tpu.trace_start"() <{level = 10 : i32, message = "bqd,bkd->bqk"}> : () -> ()
    %cst_145 = arith.constant dense<0.000000e+00> : vector<1x8x16xf32>
    %429 = tpu.matmul %424, %426, %cst_145 {dimension_numbers = #tpu.dot_dimension_numbers<[2], [2], [1], [1], [0, 0, 0, 1, 1, 1], [0], [0]>} : vector<1x8x128xf32>, vector<1x16x128xf32>, vector<1x8x16xf32> -> vector<1x8x16xf32>
    "tpu.trace_stop"() : () -> ()
    %cst_146 = arith.constant 0.0883883461 : f32
    %430 = vector.broadcast %cst_146 : f32 to vector<1x8x16xf32>
    %431 = arith.mulf %429, %430 : vector<1x8x16xf32>
    %cst_147 = arith.constant dense<0xFF800000> : vector<1x8xf32>
    %432 = vector.multi_reduction <maximumf>, %431, %cst_147 [2] : vector<1x8x16xf32> to vector<1x8xf32>
    %433 = vector.shape_cast %432 : vector<1x8xf32> to vector<1x8x1xf32>
    %434 = vector.broadcast %433 : vector<1x8x1xf32> to vector<1x8x16xf32>
    %435 = arith.subf %431, %434 : vector<1x8x16xf32>
    %436 = math.exp %435 : vector<1x8x16xf32>
    %cst_148 = arith.constant dense<0.000000e+00> : vector<1x8xf32>
    %437 = vector.multi_reduction <add>, %436, %cst_148 [2] : vector<1x8x16xf32> to vector<1x8xf32>
    %438 = vector.shape_cast %437 : vector<1x8xf32> to vector<1x8x1xf32>
    %439 = tpu.reciprocal %438 : vector<1x8x1xf32> -> vector<1x8x1xf32>
    %440 = vector.broadcast %439 : vector<1x8x1xf32> to vector<1x8x16xf32>
    %441 = arith.mulf %436, %440 : vector<1x8x16xf32>
    "tpu.trace_start"() <{level = 10 : i32, message = "bqk,bkd->bqd"}> : () -> ()
    %cst_149 = arith.constant dense<0.000000e+00> : vector<1x8x128xf32>
    %442 = tpu.matmul %441, %428, %cst_149 {dimension_numbers = #tpu.dot_dimension_numbers<[2], [1], [1], [2], [0, 0, 0, 1, 1, 2], [0], [0]>} : vector<1x8x16xf32>, vector<1x16x128xf32>, vector<1x8x128xf32> -> vector<1x8x128xf32>
    "tpu.trace_stop"() : () -> ()
    %443 = vector.shape_cast %442 : vector<1x8x128xf32> to vector<8x128xf32>
    %444 = vector.extract_strided_slice %243 {offsets = [896, 0], sizes = [128, 128], strides = [1, 1]} : vector<1024x128xf32> to vector<128x128xf32>
    %cst_150 = arith.constant dense<0.000000e+00> : vector<8x128xf32>
    %445 = tpu.matmul %443, %444, %cst_150 {dimension_numbers = #tpu.dot_dimension_numbers<[1], [0], [0], [1], [0, 0, 1, 1], [], []>} : vector<8x128xf32>, vector<128x128xf32>, vector<8x128xf32> -> vector<8x128xf32>
    %446 = arith.addf %422, %445 : vector<8x128xf32>
    %cst_151 = arith.constant dense<0.000000e+00> : vector<8xf32>
    %447 = vector.multi_reduction <add>, %446, %cst_151 [1] : vector<8x128xf32> to vector<8xf32>
    %448 = vector.shape_cast %447 : vector<8xf32> to vector<8x1xf32>
    %cst_152 = arith.constant 1.280000e+02 : f32
    %449 = vector.broadcast %cst_152 : f32 to vector<8x1xf32>
    %450 = arith.divf %448, %449 : vector<8x1xf32>
    %451 = vector.broadcast %450 : vector<8x1xf32> to vector<8x128xf32>
    %452 = arith.subf %446, %451 : vector<8x128xf32>
    %453 = arith.mulf %452, %452 : vector<8x128xf32>
    %cst_153 = arith.constant dense<0.000000e+00> : vector<8xf32>
    %454 = vector.multi_reduction <add>, %453, %cst_153 [1] : vector<8x128xf32> to vector<8xf32>
    %455 = vector.shape_cast %454 : vector<8xf32> to vector<8x1xf32>
    %cst_154 = arith.constant 1.270000e+02 : f32
    %456 = vector.broadcast %cst_154 : f32 to vector<8x1xf32>
    %457 = arith.divf %455, %456 : vector<8x1xf32>
    %458 = math.sqrt %457 : vector<8x1xf32>
    %cst_155 = arith.constant 1.000000e-03 : f32
    %459 = vector.broadcast %cst_155 : f32 to vector<8x1xf32>
    %460 = arith.addf %458, %459 : vector<8x1xf32>
    %461 = tpu.reciprocal %460 : vector<8x1xf32> -> vector<8x1xf32>
    %462 = vector.broadcast %450 : vector<8x1xf32> to vector<8x128xf32>
    %463 = arith.subf %446, %462 : vector<8x128xf32>
    %464 = vector.broadcast %461 : vector<8x1xf32> to vector<8x128xf32>
    %465 = arith.mulf %463, %464 : vector<8x128xf32>
    %466 = vector.broadcast %247 : vector<1x128xf32> to vector<8x128xf32>
    %467 = arith.mulf %465, %466 : vector<8x128xf32>
    %468 = vector.broadcast %249 : vector<1x128xf32> to vector<8x128xf32>
    %469 = arith.addf %467, %468 : vector<8x128xf32>
    %c0_156 = arith.constant 0 : index
    %c0_157 = arith.constant 0 : index
    %c0_158 = arith.constant 0 : index
    %470 = vector.load %arg17[%c0_156, %c0_157, %c0_158] : memref<1x128x512xf32, #tpu.memory_space<vmem>>, vector<1x128x512xf32>
    %471 = vector.shape_cast %470 : vector<1x128x512xf32> to vector<128x512xf32>
    %c0_159 = arith.constant 0 : index
    %c0_160 = arith.constant 0 : index
    %c0_161 = arith.constant 0 : index
    %472 = vector.load %arg18[%c0_159, %c0_160, %c0_161] : memref<1x1x512xf32, #tpu.memory_space<vmem>>, vector<1x1x512xf32>
    %473 = vector.shape_cast %472 : vector<1x1x512xf32> to vector<1x512xf32>
    %c0_162 = arith.constant 0 : index
    %c0_163 = arith.constant 0 : index
    %c0_164 = arith.constant 0 : index
    %474 = vector.load %arg19[%c0_162, %c0_163, %c0_164] : memref<1x512x128xf32, #tpu.memory_space<vmem>>, vector<1x512x128xf32>
    %475 = vector.shape_cast %474 : vector<1x512x128xf32> to vector<512x128xf32>
    %c0_165 = arith.constant 0 : index
    %c0_166 = arith.constant 0 : index
    %c0_167 = arith.constant 0 : index
    %476 = vector.load %arg20[%c0_165, %c0_166, %c0_167] : memref<1x1x128xf32, #tpu.memory_space<vmem>>, vector<1x1x128xf32>
    %477 = vector.shape_cast %476 : vector<1x1x128xf32> to vector<1x128xf32>
    %c0_168 = arith.constant 0 : index
    %c0_169 = arith.constant 0 : index
    %c0_170 = arith.constant 0 : index
    %478 = vector.load %arg21[%c0_168, %c0_169, %c0_170] : memref<1x1x128xf32, #tpu.memory_space<vmem>>, vector<1x1x128xf32>
    %479 = vector.shape_cast %478 : vector<1x1x128xf32> to vector<1x128xf32>
    %c0_171 = arith.constant 0 : index
    %c0_172 = arith.constant 0 : index
    %c0_173 = arith.constant 0 : index
    %480 = vector.load %arg22[%c0_171, %c0_172, %c0_173] : memref<1x1x128xf32, #tpu.memory_space<vmem>>, vector<1x1x128xf32>
    %481 = vector.shape_cast %480 : vector<1x1x128xf32> to vector<1x128xf32>
    %cst_174 = arith.constant dense<0.000000e+00> : vector<8x512xf32>
    %482 = tpu.matmul %469, %471, %cst_174 {dimension_numbers = #tpu.dot_dimension_numbers<[1], [0], [0], [1], [0, 0, 1, 1], [], []>} : vector<8x128xf32>, vector<128x512xf32>, vector<8x512xf32> -> vector<8x512xf32>
    %483 = vector.broadcast %473 : vector<1x512xf32> to vector<8x512xf32>
    %484 = arith.addf %482, %483 : vector<8x512xf32>
    %cst_175 = arith.constant 0.000000e+00 : f32
    %485 = vector.broadcast %cst_175 : f32 to vector<8x512xf32>
    %486 = arith.maximumf %484, %485 : vector<8x512xf32>
    %cst_176 = arith.constant dense<0.000000e+00> : vector<8x128xf32>
    %487 = tpu.matmul %486, %475, %cst_176 {dimension_numbers = #tpu.dot_dimension_numbers<[1], [0], [0], [1], [0, 0, 1, 1], [], []>} : vector<8x512xf32>, vector<512x128xf32>, vector<8x128xf32> -> vector<8x128xf32>
    %488 = vector.broadcast %477 : vector<1x128xf32> to vector<8x128xf32>
    %489 = arith.addf %487, %488 : vector<8x128xf32>
    %490 = arith.addf %489, %469 : vector<8x128xf32>
    %cst_177 = arith.constant dense<0.000000e+00> : vector<8xf32>
    %491 = vector.multi_reduction <add>, %490, %cst_177 [1] : vector<8x128xf32> to vector<8xf32>
    %492 = vector.shape_cast %491 : vector<8xf32> to vector<8x1xf32>
    %cst_178 = arith.constant 1.280000e+02 : f32
    %493 = vector.broadcast %cst_178 : f32 to vector<8x1xf32>
    %494 = arith.divf %492, %493 : vector<8x1xf32>
    %495 = vector.broadcast %494 : vector<8x1xf32> to vector<8x128xf32>
    %496 = arith.subf %490, %495 : vector<8x128xf32>
    %497 = arith.mulf %496, %496 : vector<8x128xf32>
    %cst_179 = arith.constant dense<0.000000e+00> : vector<8xf32>
    %498 = vector.multi_reduction <add>, %497, %cst_179 [1] : vector<8x128xf32> to vector<8xf32>
    %499 = vector.shape_cast %498 : vector<8xf32> to vector<8x1xf32>
    %cst_180 = arith.constant 1.270000e+02 : f32
    %500 = vector.broadcast %cst_180 : f32 to vector<8x1xf32>
    %501 = arith.divf %499, %500 : vector<8x1xf32>
    %502 = math.sqrt %501 : vector<8x1xf32>
    %cst_181 = arith.constant 1.000000e-03 : f32
    %503 = vector.broadcast %cst_181 : f32 to vector<8x1xf32>
    %504 = arith.addf %502, %503 : vector<8x1xf32>
    %505 = tpu.reciprocal %504 : vector<8x1xf32> -> vector<8x1xf32>
    %506 = vector.broadcast %494 : vector<8x1xf32> to vector<8x128xf32>
    %507 = arith.subf %490, %506 : vector<8x128xf32>
    %508 = vector.broadcast %505 : vector<8x1xf32> to vector<8x128xf32>
    %509 = arith.mulf %507, %508 : vector<8x128xf32>
    %510 = vector.broadcast %479 : vector<1x128xf32> to vector<8x128xf32>
    %511 = arith.mulf %509, %510 : vector<8x128xf32>
    %512 = vector.broadcast %481 : vector<1x128xf32> to vector<8x128xf32>
    %513 = arith.addf %511, %512 : vector<8x128xf32>
    %c0_182 = arith.constant 0 : index
    %c0_183 = arith.constant 0 : index
    %514 = vector.load %arg23[%c0_182, %c0_183] : memref<8x128xf32, #tpu.memory_space<vmem>>, vector<8x128xf32>
    tpu.vector_store %arg23[%c0_182, %c0_183], %513 {strides = array<i32>} : memref<8x128xf32, #tpu.memory_space<vmem>>, vector<8x128xf32>,
    return
  }
  func.func @transform_0(%arg0: i32) -> (i32, i32) {
    %c0_i32 = arith.constant 0 : i32
    %c0_i32_0 = arith.constant 0 : i32
    return %arg0, %c0_i32 : i32, i32
  }
  func.func @transform_1(%arg0: i32) -> (i32, i32) {
    %c0_i32 = arith.constant 0 : i32
    %c0_i32_0 = arith.constant 0 : i32
    return %arg0, %c0_i32 : i32, i32
  }
  func.func @transform_2(%arg0: i32) -> (i32, i32, i32) {
    %c0_i32 = arith.constant 0 : i32
    %c0_i32_0 = arith.constant 0 : i32
    %c0_i32_1 = arith.constant 0 : i32
    %c0_i32_2 = arith.constant 0 : i32
    return %c0_i32, %c0_i32_0, %c0_i32_1 : i32, i32, i32
  }
  func.func @transform_3(%arg0: i32) -> (i32, i32, i32) {
    %c0_i32 = arith.constant 0 : i32
    %c0_i32_0 = arith.constant 0 : i32
    %c0_i32_1 = arith.constant 0 : i32
    %c0_i32_2 = arith.constant 0 : i32
    return %c0_i32, %c0_i32_0, %c0_i32_1 : i32, i32, i32
  }
  func.func @transform_4(%arg0: i32) -> (i32, i32, i32) {
    %c0_i32 = arith.constant 0 : i32
    %c0_i32_0 = arith.constant 0 : i32
    %c0_i32_1 = arith.constant 0 : i32
    %c0_i32_2 = arith.constant 0 : i32
    return %c0_i32, %c0_i32_0, %c0_i32_1 : i32, i32, i32
  }
  func.func @transform_5(%arg0: i32) -> (i32, i32, i32) {
    %c0_i32 = arith.constant 0 : i32
    %c0_i32_0 = arith.constant 0 : i32
    %c0_i32_1 = arith.constant 0 : i32
    %c0_i32_2 = arith.constant 0 : i32
    return %c0_i32, %c0_i32_0, %c0_i32_1 : i32, i32, i32
  }
  func.func @transform_6(%arg0: i32) -> (i32, i32, i32) {
    %c0_i32 = arith.constant 0 : i32
    %c0_i32_0 = arith.constant 0 : i32
    %c0_i32_1 = arith.constant 0 : i32
    %c0_i32_2 = arith.constant 0 : i32
    return %c0_i32, %c0_i32_0, %c0_i32_1 : i32, i32, i32
  }
  func.func @transform_7(%arg0: i32) -> (i32, i32, i32) {
    %c0_i32 = arith.constant 0 : i32
    %c0_i32_0 = arith.constant 0 : i32
    %c0_i32_1 = arith.constant 0 : i32
    %c0_i32_2 = arith.constant 0 : i32
    return %c0_i32, %c0_i32_0, %c0_i32_1 : i32, i32, i32
  }
  func.func @transform_8(%arg0: i32) -> (i32, i32, i32) {
    %c0_i32 = arith.constant 0 : i32
    %c0_i32_0 = arith.constant 0 : i32
    %c0_i32_1 = arith.constant 0 : i32
    %c0_i32_2 = arith.constant 0 : i32
    return %c0_i32, %c0_i32_0, %c0_i32_1 : i32, i32, i32
  }
  func.func @transform_9(%arg0: i32) -> (i32, i32, i32) {
    %c0_i32 = arith.constant 0 : i32
    %c0_i32_0 = arith.constant 0 : i32
    %c0_i32_1 = arith.constant 0 : i32
    %c0_i32_2 = arith.constant 0 : i32
    return %c0_i32, %c0_i32_0, %c0_i32_1 : i32, i32, i32
  }
  func.func @transform_10(%arg0: i32) -> (i32, i32, i32) {
    %c0_i32 = arith.constant 0 : i32
    %c0_i32_0 = arith.constant 0 : i32
    %c0_i32_1 = arith.constant 0 : i32
    %c0_i32_2 = arith.constant 0 : i32
    return %c0_i32, %c0_i32_0, %c0_i32_1 : i32, i32, i32
  }
  func.func @transform_11(%arg0: i32) -> (i32, i32, i32) {
    %c0_i32 = arith.constant 0 : i32
    %c0_i32_0 = arith.constant 0 : i32
    %c0_i32_1 = arith.constant 0 : i32
    %c0_i32_2 = arith.constant 0 : i32
    return %c0_i32, %c0_i32_0, %c0_i32_1 : i32, i32, i32
  }
  func.func @transform_12(%arg0: i32) -> (i32, i32, i32) {
    %c0_i32 = arith.constant 0 : i32
    %c0_i32_0 = arith.constant 0 : i32
    %c0_i32_1 = arith.constant 0 : i32
    %c0_i32_2 = arith.constant 0 : i32
    return %c0_i32, %c0_i32_0, %c0_i32_1 : i32, i32, i32
  }
  func.func @transform_13(%arg0: i32) -> (i32, i32, i32) {
    %c0_i32 = arith.constant 0 : i32
    %c0_i32_0 = arith.constant 0 : i32
    %c0_i32_1 = arith.constant 0 : i32
    %c0_i32_2 = arith.constant 0 : i32
    return %c0_i32, %c0_i32_0, %c0_i32_1 : i32, i32, i32
  }
  func.func @transform_14(%arg0: i32) -> (i32, i32, i32) {
    %c0_i32 = arith.constant 0 : i32
    %c0_i32_0 = arith.constant 0 : i32
    %c0_i32_1 = arith.constant 0 : i32
    %c0_i32_2 = arith.constant 0 : i32
    return %c0_i32, %c0_i32_0, %c0_i32_1 : i32, i32, i32
  }
  func.func @transform_15(%arg0: i32) -> (i32, i32, i32) {
    %c0_i32 = arith.constant 0 : i32
    %c0_i32_0 = arith.constant 0 : i32
    %c0_i32_1 = arith.constant 0 : i32
    %c0_i32_2 = arith.constant 0 : i32
    return %c0_i32, %c0_i32_0, %c0_i32_1 : i32, i32, i32
  }
  func.func @transform_16(%arg0: i32) -> (i32, i32, i32) {
    %c0_i32 = arith.constant 0 : i32
    %c0_i32_0 = arith.constant 0 : i32
    %c0_i32_1 = arith.constant 0 : i32
    %c0_i32_2 = arith.constant 0 : i32
    return %c0_i32, %c0_i32_0, %c0_i32_1 : i32, i32, i32
  }
  func.func @transform_17(%arg0: i32) -> (i32, i32, i32) {
    %c0_i32 = arith.constant 0 : i32
    %c0_i32_0 = arith.constant 0 : i32
    %c0_i32_1 = arith.constant 0 : i32
    %c0_i32_2 = arith.constant 0 : i32
    return %c0_i32, %c0_i32_0, %c0_i32_1 : i32, i32, i32
  }
  func.func @transform_18(%arg0: i32) -> (i32, i32, i32) {
    %c0_i32 = arith.constant 0 : i32
    %c0_i32_0 = arith.constant 0 : i32
    %c0_i32_1 = arith.constant 0 : i32
    %c0_i32_2 = arith.constant 0 : i32
    return %c0_i32, %c0_i32_0, %c0_i32_1 : i32, i32, i32
  }
  func.func @transform_19(%arg0: i32) -> (i32, i32, i32) {
    %c0_i32 = arith.constant 0 : i32
    %c0_i32_0 = arith.constant 0 : i32
    %c0_i32_1 = arith.constant 0 : i32
    %c0_i32_2 = arith.constant 0 : i32
    return %c0_i32, %c0_i32_0, %c0_i32_1 : i32, i32, i32
  }
  func.func @transform_20(%arg0: i32) -> (i32, i32, i32) {
    %c0_i32 = arith.constant 0 : i32
    %c0_i32_0 = arith.constant 0 : i32
    %c0_i32_1 = arith.constant 0 : i32
    %c0_i32_2 = arith.constant 0 : i32
    return %c0_i32, %c0_i32_0, %c0_i32_1 : i32, i32, i32
  }
  func.func @transform_21(%arg0: i32) -> (i32, i32, i32) {
    %c0_i32 = arith.constant 0 : i32
    %c0_i32_0 = arith.constant 0 : i32
    %c0_i32_1 = arith.constant 0 : i32
    %c0_i32_2 = arith.constant 0 : i32
    return %c0_i32, %c0_i32_0, %c0_i32_1 : i32, i32, i32
  }
  func.func @transform_22(%arg0: i32) -> (i32, i32) {
    %c0_i32 = arith.constant 0 : i32
    %c0_i32_0 = arith.constant 0 : i32
    return %arg0, %c0_i32 : i32, i32
  }
}

</mosaic_0001>

<llo_original>
// kernel: decoder_forward.1
$region0: #{decoder_forward.1}
  #allocation0 [shape = 'u32[]', space=smem, size = 0x4, offset = 0x4, fixed_abs, tag = 'smem constant byte address 0x4 - core index']
  #allocation1 [shape = 'u32[144,128]{1,0:T(1,128)}', space=vmem, size = 0x12000, scoped, tag = 'internal scratch']
  %s0 = inlined_call_operand.vmem [shape: f32[16,128], index: 0, kind: input, shape index: {}]
  %s1 = inlined_call_operand.vmem [shape: f32[32,128], index: 1, kind: input, shape index: {}]
  %s2 = inlined_call_operand.vmem [shape: f32[1,128,1024], index: 2, kind: input, shape index: {}]
  %s3 = inlined_call_operand.vmem [shape: f32[1,128,1024], index: 3, kind: input, shape index: {}]
  %s4 = inlined_call_operand.vmem [shape: f32[1,128,1024], index: 4, kind: input, shape index: {}]
  %s5 = inlined_call_operand.vmem [shape: f32[1,1024,128], index: 5, kind: input, shape index: {}]
  %s6 = inlined_call_operand.vmem [shape: f32[1,1,128], index: 6, kind: input, shape index: {}]
  %s7 = inlined_call_operand.vmem [shape: f32[1,1,128], index: 7, kind: input, shape index: {}]
  %s8 = inlined_call_operand.vmem [shape: f32[1,1,128], index: 8, kind: input, shape index: {}]
  %s9 = inlined_call_operand.vmem [shape: f32[1,128,1024], index: 9, kind: input, shape index: {}]
  %s10 = inlined_call_operand.vmem [shape: f32[1,128,1024], index: 10, kind: input, shape index: {}]
  %s11 = inlined_call_operand.vmem [shape: f32[1,128,1024], index: 11, kind: input, shape index: {}]
  %s12 = inlined_call_operand.vmem [shape: f32[1,1024,128], index: 12, kind: input, shape index: {}]
  %s13 = inlined_call_operand.vmem [shape: f32[1,1,128], index: 13, kind: input, shape index: {}]
  %s14 = inlined_call_operand.vmem [shape: f32[1,1,128], index: 14, kind: input, shape index: {}]
  %s15 = inlined_call_operand.vmem [shape: f32[1,1,128], index: 15, kind: input, shape index: {}]
  %s16 = inlined_call_operand.vmem [shape: f32[1,128,512], index: 16, kind: input, shape index: {}]
  %s17 = inlined_call_operand.vmem [shape: f32[1,1,512], index: 17, kind: input, shape index: {}]
  %s18 = inlined_call_operand.vmem [shape: f32[1,512,128], index: 18, kind: input, shape index: {}]
  %s19 = inlined_call_operand.vmem [shape: f32[1,1,128], index: 19, kind: input, shape index: {}]
  %s20 = inlined_call_operand.vmem [shape: f32[1,1,128], index: 20, kind: input, shape index: {}]
  %s21 = inlined_call_operand.vmem [shape: f32[1,1,128], index: 21, kind: input, shape index: {}]
  %s22 = inlined_call_operand.hbm [shape: f32[16,128], index: 22, kind: output, shape index: {}]
  %s23 = sld [smem:[#allocation0]]
  $region121: #{decoder_forward.1} parent=0
    _
  %s25 = ssub.s32 1, %s23
  %s26 = scalar_select 0, %s25, %s23
  $region1: #{decoder_forward.1} parent=0
    #allocation2 [shape = 'u8[8192]{0}', space=vmem, size = 0x2000, scoped, tag = 'output window, operand 0']
    #allocation3 [shape = 's32[2]{0}', space=sflag, size = 0x8, scoped, tag = 'scoped memory for decoder_forward.1']
    %27 = vsyncpa [#allocation3], 0
    %s28 = scalar_lea.sflag [#allocation3], 1
    %29 = vsyncpa %s28, 0
    loop: start=0, step=1, limit=4
    $region2: #{decoder_forward.1} parent=1 // loop_pre_header
      _
    $region3: #{decoder_forward.1} parent=1 // loop_header
      %s31 = sphi 0, %s35
      %p32 = scmp.ge.s32.totalorder %s31, 4
      %s41 = sphi 0, %s43
      %s44 = sphi 0, %s41
      %s45 = sphi 0, %s44
      %s61 = sphi 0, %s45
      %s67 = sphi 0, %s69
      %s70 = sphi 0, %s67
      %s71 = sphi 0, %s70
      %s87 = sphi 0, %s71
      %s91 = sphi 0, %s91
      %s93 = sphi 0, %s91
      %s94 = sphi 0, %s93
      %s108 = sphi 0, %s94
      %s112 = sphi 0, %s112
      %s114 = sphi 0, %s112
      %s115 = sphi 0, %s114
      %s129 = sphi 0, %s115
      %s133 = sphi 0, %s133
      %s135 = sphi 0, %s133
      %s136 = sphi 0, %s135
      %s150 = sphi 0, %s136
      %s154 = sphi 0, %s154
      %s156 = sphi 0, %s154
      %s157 = sphi 0, %s156
      %s171 = sphi 0, %s157
      %s175 = sphi 0, %s175
      %s177 = sphi 0, %s175
      %s178 = sphi 0, %s177
      %s192 = sphi 0, %s178
      %s196 = sphi 0, %s196
      %s198 = sphi 0, %s196
      %s199 = sphi 0, %s198
      %s213 = sphi 0, %s199
      %s217 = sphi 0, %s217
      %s219 = sphi 0, %s217
      %s220 = sphi 0, %s219
      %s234 = sphi 0, %s220
      %s238 = sphi 0, %s238
      %s240 = sphi 0, %s238
      %s241 = sphi 0, %s240
      %s255 = sphi 0, %s241
      %s259 = sphi 0, %s259
      %s261 = sphi 0, %s259
      %s262 = sphi 0, %s261
      %s276 = sphi 0, %s262
      %s280 = sphi 0, %s280
      %s282 = sphi 0, %s280
      %s283 = sphi 0, %s282
      %s297 = sphi 0, %s283
      %s301 = sphi 0, %s301
      %s303 = sphi 0, %s301
      %s304 = sphi 0, %s303
      %s318 = sphi 0, %s304
      %s322 = sphi 0, %s322
      %s324 = sphi 0, %s322
      %s325 = sphi 0, %s324
      %s339 = sphi 0, %s325
      %s343 = sphi 0, %s343
      %s345 = sphi 0, %s343
      %s346 = sphi 0, %s345
      %s360 = sphi 0, %s346
      %s364 = sphi 0, %s364
      %s366 = sphi 0, %s364
      %s367 = sphi 0, %s366
      %s381 = sphi 0, %s367
      %s385 = sphi 0, %s385
      %s387 = sphi 0, %s385
      %s388 = sphi 0, %s387
      %s402 = sphi 0, %s388
      %s406 = sphi 0, %s406
      %s408 = sphi 0, %s406
      %s409 = sphi 0, %s408
      %s423 = sphi 0, %s409
      %s427 = sphi 0, %s427
      %s429 = sphi 0, %s427
      %s430 = sphi 0, %s429
      %s444 = sphi 0, %s430
      %s448 = sphi 0, %s448
      %s450 = sphi 0, %s448
      %s451 = sphi 0, %s450
      %s465 = sphi 0, %s451
      %s469 = sphi 0, %s469
      %s471 = sphi 0, %s469
      %s472 = sphi 0, %s471
      %s486 = sphi 0, %s472
      %s490 = sphi 0, %s490
      %s492 = sphi 0, %s490
      %s493 = sphi 0, %s492
      %s507 = sphi 0, %s493
      %s513 = sphi 0, %s515
      %s516 = sphi 0, %s513
      %s517 = sphi 0, %s516
      %s533 = sphi 0, %s517
    $region4: #{decoder_forward.1} parent=1 // loop_header_branch
      %34 = sbr.rel (%p32) target = $region8
    $region5: #{decoder_forward.1} parent=1 // loop_body
      %s36 = ssub.s32 %s31, 1
      %s37 = ssub.s32 %s31, 2
      %s38 = sadd.s32 %s31, 1
      %s39 = ssub.s32 %s31, %s38
      %p40 = scmp.eq.s32.totalorder %s39, 0
      %s42 = sadd.s32 %s41, 1
      %s43 = scalar_select %p40, %s41, %s42
      %p46 = pneg %p40
      %p47 = scmp.eq.s32.totalorder %s31, 1
      %p48 = por %p46, %p47
      %p49 = scmp.ne.s32.totalorder %s41, %s44
      %p50 = scmp.eq.s32.totalorder %s31, 0
      %p51 = por %p49, %p50
      %p52 = scmp.ne.s32.totalorder %s41, %s44
      %p53 = scmp.eq.s32.totalorder %s36, 1
      %p54 = por %p52, %p53
      %p55 = scmp.ne.s32.totalorder %s44, %s45
      %p56 = scmp.eq.s32.totalorder %s36, 0
      %p57 = por %p55, %p56
      %p58 = scmp.ne.s32.totalorder %s44, %s45
      %p59 = scmp.eq.s32.totalorder %s37, 1
      %p60 = por %p58, %p59
      %p62 = scmp.ne.s32.totalorder %s45, %s61
      %p63 = scmp.eq.s32.totalorder %s37, 0
      %p64 = por %p62, %p63
      %s65 = ssub.s32 %s31, %s38
      %p66 = scmp.eq.s32.totalorder %s65, 0
      %s68 = sadd.s32 %s67, 1
      %s69 = scalar_select %p66, %s67, %s68
      %p72 = pneg %p66
      %p73 = scmp.eq.s32.totalorder %s31, 1
      %p74 = por %p72, %p73
      %p75 = scmp.ne.s32.totalorder %s67, %s70
      %p76 = scmp.eq.s32.totalorder %s31, 0
      %p77 = por %p75, %p76
      %p78 = scmp.ne.s32.totalorder %s67, %s70
      %p79 = scmp.eq.s32.totalorder %s36, 1
      %p80 = por %p78, %p79
      %p81 = scmp.ne.s32.totalorder %s70, %s71
      %p82 = scmp.eq.s32.totalorder %s36, 0
      %p83 = por %p81, %p82
      %p84 = scmp.ne.s32.totalorder %s70, %s71
      %p85 = scmp.eq.s32.totalorder %s37, 1
      %p86 = por %p84, %p85
      %p88 = scmp.ne.s32.totalorder %s71, %s87
      %p89 = scmp.eq.s32.totalorder %s37, 0
      %p90 = por %p88, %p89
      %s92 = sadd.s32 %s91, 1
      %p95 = scmp.eq.s32.totalorder %s31, 1
      %p96 = scmp.ne.s32.totalorder %s91, %s93
      %p97 = scmp.eq.s32.totalorder %s31, 0
      %p98 = por %p96, %p97
      %p99 = scmp.ne.s32.totalorder %s91, %s93
      %p100 = scmp.eq.s32.totalorder %s36, 1
      %p101 = por %p99, %p100
      %p102 = scmp.ne.s32.totalorder %s93, %s94
      %p103 = scmp.eq.s32.totalorder %s36, 0
      %p104 = por %p102, %p103
      %p105 = scmp.ne.s32.totalorder %s93, %s94
      %p106 = scmp.eq.s32.totalorder %s37, 1
      %p107 = por %p105, %p106
      %p109 = scmp.ne.s32.totalorder %s94, %s108
      %p110 = scmp.eq.s32.totalorder %s37, 0
      %p111 = por %p109, %p110
      %s113 = sadd.s32 %s112, 1
      %p116 = scmp.eq.s32.totalorder %s31, 1
      %p117 = scmp.ne.s32.totalorder %s112, %s114
      %p118 = scmp.eq.s32.totalorder %s31, 0
      %p119 = por %p117, %p118
      %p120 = scmp.ne.s32.totalorder %s112, %s114
      %p121 = scmp.eq.s32.totalorder %s36, 1
      %p122 = por %p120, %p121
      %p123 = scmp.ne.s32.totalorder %s114, %s115
      %p124 = scmp.eq.s32.totalorder %s36, 0
      %p125 = por %p123, %p124
      %p126 = scmp.ne.s32.totalorder %s114, %s115
      %p127 = scmp.eq.s32.totalorder %s37, 1
      %p128 = por %p126, %p127
      %p130 = scmp.ne.s32.totalorder %s115, %s129
      %p131 = scmp.eq.s32.totalorder %s37, 0
      %p132 = por %p130, %p131
      %s134 = sadd.s32 %s133, 1
      %p137 = scmp.eq.s32.totalorder %s31, 1
      %p138 = scmp.ne.s32.totalorder %s133, %s135
      %p139 = scmp.eq.s32.totalorder %s31, 0
      %p140 = por %p138, %p139
      %p141 = scmp.ne.s32.totalorder %s133, %s135
      %p142 = scmp.eq.s32.totalorder %s36, 1
      %p143 = por %p141, %p142
      %p144 = scmp.ne.s32.totalorder %s135, %s136
      %p145 = scmp.eq.s32.totalorder %s36, 0
      %p146 = por %p144, %p145
      %p147 = scmp.ne.s32.totalorder %s135, %s136
      %p148 = scmp.eq.s32.totalorder %s37, 1
      %p149 = por %p147, %p148
      %p151 = scmp.ne.s32.totalorder %s136, %s150
      %p152 = scmp.eq.s32.totalorder %s37, 0
      %p153 = por %p151, %p152
      %s155 = sadd.s32 %s154, 1
      %p158 = scmp.eq.s32.totalorder %s31, 1
      %p159 = scmp.ne.s32.totalorder %s154, %s156
      %p160 = scmp.eq.s32.totalorder %s31, 0
      %p161 = por %p159, %p160
      %p162 = scmp.ne.s32.totalorder %s154, %s156
      %p163 = scmp.eq.s32.totalorder %s36, 1
      %p164 = por %p162, %p163
      %p165 = scmp.ne.s32.totalorder %s156, %s157
      %p166 = scmp.eq.s32.totalorder %s36, 0
      %p167 = por %p165, %p166
      %p168 = scmp.ne.s32.totalorder %s156, %s157
      %p169 = scmp.eq.s32.totalorder %s37, 1
      %p170 = por %p168, %p169
      %p172 = scmp.ne.s32.totalorder %s157, %s171
      %p173 = scmp.eq.s32.totalorder %s37, 0
      %p174 = por %p172, %p173
      %s176 = sadd.s32 %s175, 1
      %p179 = scmp.eq.s32.totalorder %s31, 1
      %p180 = scmp.ne.s32.totalorder %s175, %s177
      %p181 = scmp.eq.s32.totalorder %s31, 0
      %p182 = por %p180, %p181
      %p183 = scmp.ne.s32.totalorder %s175, %s177
      %p184 = scmp.eq.s32.totalorder %s36, 1
      %p185 = por %p183, %p184
      %p186 = scmp.ne.s32.totalorder %s177, %s178
      %p187 = scmp.eq.s32.totalorder %s36, 0
      %p188 = por %p186, %p187
      %p189 = scmp.ne.s32.totalorder %s177, %s178
      %p190 = scmp.eq.s32.totalorder %s37, 1
      %p191 = por %p189, %p190
      %p193 = scmp.ne.s32.totalorder %s178, %s192
      %p194 = scmp.eq.s32.totalorder %s37, 0
      %p195 = por %p193, %p194
      %s197 = sadd.s32 %s196, 1
      %p200 = scmp.eq.s32.totalorder %s31, 1
      %p201 = scmp.ne.s32.totalorder %s196, %s198
      %p202 = scmp.eq.s32.totalorder %s31, 0
      %p203 = por %p201, %p202
      %p204 = scmp.ne.s32.totalorder %s196, %s198
      %p205 = scmp.eq.s32.totalorder %s36, 1
      %p206 = por %p204, %p205
      %p207 = scmp.ne.s32.totalorder %s198, %s199
      %p208 = scmp.eq.s32.totalorder %s36, 0
      %p209 = por %p207, %p208
      %p210 = scmp.ne.s32.totalorder %s198, %s199
      %p211 = scmp.eq.s32.totalorder %s37, 1
      %p212 = por %p210, %p211
      %p214 = scmp.ne.s32.totalorder %s199, %s213
      %p215 = scmp.eq.s32.totalorder %s37, 0
      %p216 = por %p214, %p215
      %s218 = sadd.s32 %s217, 1
      %p221 = scmp.eq.s32.totalorder %s31, 1
      %p222 = scmp.ne.s32.totalorder %s217, %s219
      %p223 = scmp.eq.s32.totalorder %s31, 0
      %p224 = por %p222, %p223
      %p225 = scmp.ne.s32.totalorder %s217, %s219
      %p226 = scmp.eq.s32.totalorder %s36, 1
      %p227 = por %p225, %p226
      %p228 = scmp.ne.s32.totalorder %s219, %s220
      %p229 = scmp.eq.s32.totalorder %s36, 0
      %p230 = por %p228, %p229
      %p231 = scmp.ne.s32.totalorder %s219, %s220
      %p232 = scmp.eq.s32.totalorder %s37, 1
      %p233 = por %p231, %p232
      %p235 = scmp.ne.s32.totalorder %s220, %s234
      %p236 = scmp.eq.s32.totalorder %s37, 0
      %p237 = por %p235, %p236
      %s239 = sadd.s32 %s238, 1
      %p242 = scmp.eq.s32.totalorder %s31, 1
      %p243 = scmp.ne.s32.totalorder %s238, %s240
      %p244 = scmp.eq.s32.totalorder %s31, 0
      %p245 = por %p243, %p244
      %p246 = scmp.ne.s32.totalorder %s238, %s240
      %p247 = scmp.eq.s32.totalorder %s36, 1
      %p248 = por %p246, %p247
      %p249 = scmp.ne.s32.totalorder %s240, %s241
      %p250 = scmp.eq.s32.totalorder %s36, 0
      %p251 = por %p249, %p250
      %p252 = scmp.ne.s32.totalorder %s240, %s241
      %p253 = scmp.eq.s32.totalorder %s37, 1
      %p254 = por %p252, %p253
      %p256 = scmp.ne.s32.totalorder %s241, %s255
      %p257 = scmp.eq.s32.totalorder %s37, 0
      %p258 = por %p256, %p257
      %s260 = sadd.s32 %s259, 1
      %p263 = scmp.eq.s32.totalorder %s31, 1
      %p264 = scmp.ne.s32.totalorder %s259, %s261
      %p265 = scmp.eq.s32.totalorder %s31, 0
      %p266 = por %p264, %p265
      %p267 = scmp.ne.s32.totalorder %s259, %s261
      %p268 = scmp.eq.s32.totalorder %s36, 1
      %p269 = por %p267, %p268
      %p270 = scmp.ne.s32.totalorder %s261, %s262
      %p271 = scmp.eq.s32.totalorder %s36, 0
      %p272 = por %p270, %p271
      %p273 = scmp.ne.s32.totalorder %s261, %s262
      %p274 = scmp.eq.s32.totalorder %s37, 1
      %p275 = por %p273, %p274
      %p277 = scmp.ne.s32.totalorder %s262, %s276
      %p278 = scmp.eq.s32.totalorder %s37, 0
      %p279 = por %p277, %p278
      %s281 = sadd.s32 %s280, 1
      %p284 = scmp.eq.s32.totalorder %s31, 1
      %p285 = scmp.ne.s32.totalorder %s280, %s282
      %p286 = scmp.eq.s32.totalorder %s31, 0
      %p287 = por %p285, %p286
      %p288 = scmp.ne.s32.totalorder %s280, %s282
      %p289 = scmp.eq.s32.totalorder %s36, 1
      %p290 = por %p288, %p289
      %p291 = scmp.ne.s32.totalorder %s282, %s283
      %p292 = scmp.eq.s32.totalorder %s36, 0
      %p293 = por %p291, %p292
      %p294 = scmp.ne.s32.totalorder %s282, %s283
      %p295 = scmp.eq.s32.totalorder %s37, 1
      %p296 = por %p294, %p295
      %p298 = scmp.ne.s32.totalorder %s283, %s297
      %p299 = scmp.eq.s32.totalorder %s37, 0
      %p300 = por %p298, %p299
      %s302 = sadd.s32 %s301, 1
      %p305 = scmp.eq.s32.totalorder %s31, 1
      %p306 = scmp.ne.s32.totalorder %s301, %s303
      %p307 = scmp.eq.s32.totalorder %s31, 0
      %p308 = por %p306, %p307
      %p309 = scmp.ne.s32.totalorder %s301, %s303
      %p310 = scmp.eq.s32.totalorder %s36, 1
      %p311 = por %p309, %p310
      %p312 = scmp.ne.s32.totalorder %s303, %s304
      %p313 = scmp.eq.s32.totalorder %s36, 0
      %p314 = por %p312, %p313
      %p315 = scmp.ne.s32.totalorder %s303, %s304
      %p316 = scmp.eq.s32.totalorder %s37, 1
      %p317 = por %p315, %p316
      %p319 = scmp.ne.s32.totalorder %s304, %s318
      %p320 = scmp.eq.s32.totalorder %s37, 0
      %p321 = por %p319, %p320
      %s323 = sadd.s32 %s322, 1
      %p326 = scmp.eq.s32.totalorder %s31, 1
      %p327 = scmp.ne.s32.totalorder %s322, %s324
      %p328 = scmp.eq.s32.totalorder %s31, 0
      %p329 = por %p327, %p328
      %p330 = scmp.ne.s32.totalorder %s322, %s324
      %p331 = scmp.eq.s32.totalorder %s36, 1
      %p332 = por %p330, %p331
      %p333 = scmp.ne.s32.totalorder %s324, %s325
      %p334 = scmp.eq.s32.totalorder %s36, 0
      %p335 = por %p333, %p334
      %p336 = scmp.ne.s32.totalorder %s324, %s325
      %p337 = scmp.eq.s32.totalorder %s37, 1
      %p338 = por %p336, %p337
      %p340 = scmp.ne.s32.totalorder %s325, %s339
      %p341 = scmp.eq.s32.totalorder %s37, 0
      %p342 = por %p340, %p341
      %s344 = sadd.s32 %s343, 1
      %p347 = scmp.eq.s32.totalorder %s31, 1
      %p348 = scmp.ne.s32.totalorder %s343, %s345
      %p349 = scmp.eq.s32.totalorder %s31, 0
      %p350 = por %p348, %p349
      %p351 = scmp.ne.s32.totalorder %s343, %s345
      %p352 = scmp.eq.s32.totalorder %s36, 1
      %p353 = por %p351, %p352
      %p354 = scmp.ne.s32.totalorder %s345, %s346
      %p355 = scmp.eq.s32.totalorder %s36, 0
      %p356 = por %p354, %p355
      %p357 = scmp.ne.s32.totalorder %s345, %s346
      %p358 = scmp.eq.s32.totalorder %s37, 1
      %p359 = por %p357, %p358
      %p361 = scmp.ne.s32.totalorder %s346, %s360
      %p362 = scmp.eq.s32.totalorder %s37, 0
      %p363 = por %p361, %p362
      %s365 = sadd.s32 %s364, 1
      %p368 = scmp.eq.s32.totalorder %s31, 1
      %p369 = scmp.ne.s32.totalorder %s364, %s366
      %p370 = scmp.eq.s32.totalorder %s31, 0
      %p371 = por %p369, %p370
      %p372 = scmp.ne.s32.totalorder %s364, %s366
      %p373 = scmp.eq.s32.totalorder %s36, 1
      %p374 = por %p372, %p373
      %p375 = scmp.ne.s32.totalorder %s366, %s367
      %p376 = scmp.eq.s32.totalorder %s36, 0
      %p377 = por %p375, %p376
      %p378 = scmp.ne.s32.totalorder %s366, %s367
      %p379 = scmp.eq.s32.totalorder %s37, 1
      %p380 = por %p378, %p379
      %p382 = scmp.ne.s32.totalorder %s367, %s381
      %p383 = scmp.eq.s32.totalorder %s37, 0
      %p384 = por %p382, %p383
      %s386 = sadd.s32 %s385, 1
      %p389 = scmp.eq.s32.totalorder %s31, 1
      %p390 = scmp.ne.s32.totalorder %s385, %s387
      %p391 = scmp.eq.s32.totalorder %s31, 0
      %p392 = por %p390, %p391
      %p393 = scmp.ne.s32.totalorder %s385, %s387
      %p394 = scmp.eq.s32.totalorder %s36, 1
      %p395 = por %p393, %p394
      %p396 = scmp.ne.s32.totalorder %s387, %s388
      %p397 = scmp.eq.s32.totalorder %s36, 0
      %p398 = por %p396, %p397
      %p399 = scmp.ne.s32.totalorder %s387, %s388
      %p400 = scmp.eq.s32.totalorder %s37, 1
      %p401 = por %p399, %p400
      %p403 = scmp.ne.s32.totalorder %s388, %s402
      %p404 = scmp.eq.s32.totalorder %s37, 0
      %p405 = por %p403, %p404
      %s407 = sadd.s32 %s406, 1
      %p410 = scmp.eq.s32.totalorder %s31, 1
      %p411 = scmp.ne.s32.totalorder %s406, %s408
      %p412 = scmp.eq.s32.totalorder %s31, 0
      %p413 = por %p411, %p412
      %p414 = scmp.ne.s32.totalorder %s406, %s408
      %p415 = scmp.eq.s32.totalorder %s36, 1
      %p416 = por %p414, %p415
      %p417 = scmp.ne.s32.totalorder %s408, %s409
      %p418 = scmp.eq.s32.totalorder %s36, 0
      %p419 = por %p417, %p418
      %p420 = scmp.ne.s32.totalorder %s408, %s409
      %p421 = scmp.eq.s32.totalorder %s37, 1
      %p422 = por %p420, %p421
      %p424 = scmp.ne.s32.totalorder %s409, %s423
      %p425 = scmp.eq.s32.totalorder %s37, 0
      %p426 = por %p424, %p425
      %s428 = sadd.s32 %s427, 1
      %p431 = scmp.eq.s32.totalorder %s31, 1
      %p432 = scmp.ne.s32.totalorder %s427, %s429
      %p433 = scmp.eq.s32.totalorder %s31, 0
      %p434 = por %p432, %p433
      %p435 = scmp.ne.s32.totalorder %s427, %s429
      %p436 = scmp.eq.s32.totalorder %s36, 1
      %p437 = por %p435, %p436
      %p438 = scmp.ne.s32.totalorder %s429, %s430
      %p439 = scmp.eq.s32.totalorder %s36, 0
      %p440 = por %p438, %p439
      %p441 = scmp.ne.s32.totalorder %s429, %s430
      %p442 = scmp.eq.s32.totalorder %s37, 1
      %p443 = por %p441, %p442
      %p445 = scmp.ne.s32.totalorder %s430, %s444
      %p446 = scmp.eq.s32.totalorder %s37, 0
      %p447 = por %p445, %p446
      %s449 = sadd.s32 %s448, 1
      %p452 = scmp.eq.s32.totalorder %s31, 1
      %p453 = scmp.ne.s32.totalorder %s448, %s450
      %p454 = scmp.eq.s32.totalorder %s31, 0
      %p455 = por %p453, %p454
      %p456 = scmp.ne.s32.totalorder %s448, %s450
      %p457 = scmp.eq.s32.totalorder %s36, 1
      %p458 = por %p456, %p457
      %p459 = scmp.ne.s32.totalorder %s450, %s451
      %p460 = scmp.eq.s32.totalorder %s36, 0
      %p461 = por %p459, %p460
      %p462 = scmp.ne.s32.totalorder %s450, %s451
      %p463 = scmp.eq.s32.totalorder %s37, 1
      %p464 = por %p462, %p463
      %p466 = scmp.ne.s32.totalorder %s451, %s465
      %p467 = scmp.eq.s32.totalorder %s37, 0
      %p468 = por %p466, %p467
      %s470 = sadd.s32 %s469, 1
      %p473 = scmp.eq.s32.totalorder %s31, 1
      %p474 = scmp.ne.s32.totalorder %s469, %s471
      %p475 = scmp.eq.s32.totalorder %s31, 0
      %p476 = por %p474, %p475
      %p477 = scmp.ne.s32.totalorder %s469, %s471
      %p478 = scmp.eq.s32.totalorder %s36, 1
      %p479 = por %p477, %p478
      %p480 = scmp.ne.s32.totalorder %s471, %s472
      %p481 = scmp.eq.s32.totalorder %s36, 0
      %p482 = por %p480, %p481
      %p483 = scmp.ne.s32.totalorder %s471, %s472
      %p484 = scmp.eq.s32.totalorder %s37, 1
      %p485 = por %p483, %p484
      %p487 = scmp.ne.s32.totalorder %s472, %s486
      %p488 = scmp.eq.s32.totalorder %s37, 0
      %p489 = por %p487, %p488
      %s491 = sadd.s32 %s490, 1
      %p494 = scmp.eq.s32.totalorder %s31, 1
      %p495 = scmp.ne.s32.totalorder %s490, %s492
      %p496 = scmp.eq.s32.totalorder %s31, 0
      %p497 = por %p495, %p496
      %p498 = scmp.ne.s32.totalorder %s490, %s492
      %p499 = scmp.eq.s32.totalorder %s36, 1
      %p500 = por %p498, %p499
      %p501 = scmp.ne.s32.totalorder %s492, %s493
      %p502 = scmp.eq.s32.totalorder %s36, 0
      %p503 = por %p501, %p502
      %p504 = scmp.ne.s32.totalorder %s492, %s493
      %p505 = scmp.eq.s32.totalorder %s37, 1
      %p506 = por %p504, %p505
      %p508 = scmp.ne.s32.totalorder %s493, %s507
      %p509 = scmp.eq.s32.totalorder %s37, 0
      %p510 = por %p508, %p509
      %s511 = ssub.s32 %s31, %s38
      %p512 = scmp.eq.s32.totalorder %s511, 0
      %s514 = sadd.s32 %s513, 1
      %s515 = scalar_select %p512, %s513, %s514
      %p518 = pneg %p512
      %p519 = scmp.eq.s32.totalorder %s31, 1
      %p520 = por %p518, %p519
      %p521 = scmp.ne.s32.totalorder %s513, %s516
      %p522 = scmp.eq.s32.totalorder %s31, 0
      %p523 = por %p521, %p522
      %p524 = scmp.ne.s32.totalorder %s513, %s516
      %p525 = scmp.eq.s32.totalorder %s36, 1
      %p526 = por %p524, %p525
      %p527 = scmp.ne.s32.totalorder %s516, %s517
      %p528 = scmp.eq.s32.totalorder %s36, 0
      %p529 = por %p527, %p528
      %p530 = scmp.ne.s32.totalorder %s516, %s517
      %p531 = scmp.eq.s32.totalorder %s37, 1
      %p532 = por %p530, %p531
      %p534 = scmp.ne.s32.totalorder %s517, %s533
      %p535 = scmp.eq.s32.totalorder %s37, 0
      %p536 = por %p534, %p535
      %p537 = scmp.le.s32.totalorder 1, %s31
      %p538 = scmp.lt.s32.totalorder %s31, 3
      %p539 = pnand %p537, %p538
      %p540 = pneg %p539
      // Predicated region
      $region9: #{decoder_forward.1} parent=5 // pred_check
        _
      $region10: #{decoder_forward.1} parent=5 // pred_check_branch
        %542 = sbr.rel (%p539) target = $region12
      $region11: #{decoder_forward.1} parent=5 // pred_region
        %s543 = ssub.s32 %s31, 1
        // Predicated region
        $region13: #{decoder_forward.1} parent=11 // pred_check
          %p544 = pneg %p104
        $region14: #{decoder_forward.1} parent=11 // pred_check_branch
          %546 = sbr.rel (%p544) target = $region16
        $region15: #{decoder_forward.1} parent=11 // pred_region
          _
        $region16: #{decoder_forward.1} parent=11 // pred_fallthru
          _
        // Predicated region
        $region17: #{decoder_forward.1} parent=11 // pred_check
          %p547 = pneg %p125
        $region18: #{decoder_forward.1} parent=11 // pred_check_branch
          %549 = sbr.rel (%p547) target = $region20
        $region19: #{decoder_forward.1} parent=11 // pred_region
          _
        $region20: #{decoder_forward.1} parent=11 // pred_fallthru
          _
        // Predicated region
        $region21: #{decoder_forward.1} parent=11 // pred_check
          %p550 = pneg %p146
        $region22: #{decoder_forward.1} parent=11 // pred_check_branch
          %552 = sbr.rel (%p550) target = $region24
        $region23: #{decoder_forward.1} parent=11 // pred_region
          _
        $region24: #{decoder_forward.1} parent=11 // pred_fallthru
          _
        // Predicated region
        $region25: #{decoder_forward.1} parent=11 // pred_check
          %p553 = pneg %p167
        $region26: #{decoder_forward.1} parent=11 // pred_check_branch
          %555 = sbr.rel (%p553) target = $region28
        $region27: #{decoder_forward.1} parent=11 // pred_region
          _
        $region28: #{decoder_forward.1} parent=11 // pred_fallthru
          _
        // Predicated region
        $region29: #{decoder_forward.1} parent=11 // pred_check
          %p556 = pneg %p188
        $region30: #{decoder_forward.1} parent=11 // pred_check_branch
          %558 = sbr.rel (%p556) target = $region32
        $region31: #{decoder_forward.1} parent=11 // pred_region
          _
        $region32: #{decoder_forward.1} parent=11 // pred_fallthru
          _
        // Predicated region
        $region33: #{decoder_forward.1} parent=11 // pred_check
          %p559 = pneg %p209
        $region34: #{decoder_forward.1} parent=11 // pred_check_branch
          %561 = sbr.rel (%p559) target = $region36
        $region35: #{decoder_forward.1} parent=11 // pred_region
          _
        $region36: #{decoder_forward.1} parent=11 // pred_fallthru
          _
        // Predicated region
        $region37: #{decoder_forward.1} parent=11 // pred_check
          %p562 = pneg %p230
        $region38: #{decoder_forward.1} parent=11 // pred_check_branch
          %564 = sbr.rel (%p562) target = $region40
        $region39: #{decoder_forward.1} parent=11 // pred_region
          _
        $region40: #{decoder_forward.1} parent=11 // pred_fallthru
          _
        // Predicated region
        $region41: #{decoder_forward.1} parent=11 // pred_check
          %p565 = pneg %p251
        $region42: #{decoder_forward.1} parent=11 // pred_check_branch
          %567 = sbr.rel (%p565) target = $region44
        $region43: #{decoder_forward.1} parent=11 // pred_region
          _
        $region44: #{decoder_forward.1} parent=11 // pred_fallthru
          _
        // Predicated region
        $region45: #{decoder_forward.1} parent=11 // pred_check
          %p568 = pneg %p272
        $region46: #{decoder_forward.1} parent=11 // pred_check_branch
          %570 = sbr.rel (%p568) target = $region48
        $region47: #{decoder_forward.1} parent=11 // pred_region
          _
        $region48: #{decoder_forward.1} parent=11 // pred_fallthru
          _
        // Predicated region
        $region49: #{decoder_forward.1} parent=11 // pred_check
          %p571 = pneg %p293
        $region50: #{decoder_forward.1} parent=11 // pred_check_branch
          %573 = sbr.rel (%p571) target = $region52
        $region51: #{decoder_forward.1} parent=11 // pred_region
          _
        $region52: #{decoder_forward.1} parent=11 // pred_fallthru
          _
        // Predicated region
        $region53: #{decoder_forward.1} parent=11 // pred_check
          %p574 = pneg %p314
        $region54: #{decoder_forward.1} parent=11 // pred_check_branch
          %576 = sbr.rel (%p574) target = $region56
        $region55: #{decoder_forward.1} parent=11 // pred_region
          _
        $region56: #{decoder_forward.1} parent=11 // pred_fallthru
          _
        // Predicated region
        $region57: #{decoder_forward.1} parent=11 // pred_check
          %p577 = pneg %p335
        $region58: #{decoder_forward.1} parent=11 // pred_check_branch
          %579 = sbr.rel (%p577) target = $region60
        $region59: #{decoder_forward.1} parent=11 // pred_region
          _
        $region60: #{decoder_forward.1} parent=11 // pred_fallthru
          _
        // Predicated region
        $region61: #{decoder_forward.1} parent=11 // pred_check
          %p580 = pneg %p356
        $region62: #{decoder_forward.1} parent=11 // pred_check_branch
          %582 = sbr.rel (%p580) target = $region64
        $region63: #{decoder_forward.1} parent=11 // pred_region
          _
        $region64: #{decoder_forward.1} parent=11 // pred_fallthru
          _
        // Predicated region
        $region65: #{decoder_forward.1} parent=11 // pred_check
          %p583 = pneg %p377
        $region66: #{decoder_forward.1} parent=11 // pred_check_branch
          %585 = sbr.rel (%p583) target = $region68
        $region67: #{decoder_forward.1} parent=11 // pred_region
          _
        $region68: #{decoder_forward.1} parent=11 // pred_fallthru
          _
        // Predicated region
        $region69: #{decoder_forward.1} parent=11 // pred_check
          %p586 = pneg %p398
        $region70: #{decoder_forward.1} parent=11 // pred_check_branch
          %588 = sbr.rel (%p586) target = $region72
        $region71: #{decoder_forward.1} parent=11 // pred_region
          _
        $region72: #{decoder_forward.1} parent=11 // pred_fallthru
          _
        // Predicated region
        $region73: #{decoder_forward.1} parent=11 // pred_check
          %p589 = pneg %p419
        $region74: #{decoder_forward.1} parent=11 // pred_check_branch
          %591 = sbr.rel (%p589) target = $region76
        $region75: #{decoder_forward.1} parent=11 // pred_region
          _
        $region76: #{decoder_forward.1} parent=11 // pred_fallthru
          _
        // Predicated region
        $region77: #{decoder_forward.1} parent=11 // pred_check
          %p592 = pneg %p440
        $region78: #{decoder_forward.1} parent=11 // pred_check_branch
          %594 = sbr.rel (%p592) target = $region80
        $region79: #{decoder_forward.1} parent=11 // pred_region
          _
        $region80: #{decoder_forward.1} parent=11 // pred_fallthru
          _
        // Predicated region
        $region81: #{decoder_forward.1} parent=11 // pred_check
          %p595 = pneg %p461
        $region82: #{decoder_forward.1} parent=11 // pred_check_branch
          %597 = sbr.rel (%p595) target = $region84
        $region83: #{decoder_forward.1} parent=11 // pred_region
          _
        $region84: #{decoder_forward.1} parent=11 // pred_fallthru
          _
        // Predicated region
        $region85: #{decoder_forward.1} parent=11 // pred_check
          %p598 = pneg %p482
        $region86: #{decoder_forward.1} parent=11 // pred_check_branch
          %600 = sbr.rel (%p598) target = $region88
        $region87: #{decoder_forward.1} parent=11 // pred_region
          _
        $region88: #{decoder_forward.1} parent=11 // pred_fallthru
          _
        // Predicated region
        $region89: #{decoder_forward.1} parent=11 // pred_check
          %p601 = pneg %p503
        $region90: #{decoder_forward.1} parent=11 // pred_check_branch
          %603 = sbr.rel (%p601) target = $region92
        $region91: #{decoder_forward.1} parent=11 // pred_region
          _
        $region92: #{decoder_forward.1} parent=11 // pred_fallthru
          _
      $region12: #{decoder_forward.1} parent=5 // pred_fallthru
        _
      %p604 = scmp.lt.s32.totalorder %s31, 2
      // Predicated region
      $region93: #{decoder_forward.1} parent=5 // pred_check
        %p605 = pneg %p604
      $region94: #{decoder_forward.1} parent=5 // pred_check_branch
        %607 = sbr.rel (%p605) target = $region96
      $region95: #{decoder_forward.1} parent=5 // pred_region
        // Predicated region
        $region97: #{decoder_forward.1} parent=95 // pred_check
          %p608 = pneg %p51
        $region98: #{decoder_forward.1} parent=95 // pred_check_branch
          %610 = sbr.rel (%p608) target = $region100
        $region99: #{decoder_forward.1} parent=95 // pred_region
          %p611 = scmp.lt.s32.totalorder %s31, 1
          %s612 = scalar_select %p611, %s31, 1
          %s613 = smul.addr %s612, 8
          %s614 = scalar_lea.vmem %s0, %s613
        $region100: #{decoder_forward.1} parent=95 // pred_fallthru
          _
        // Predicated region
        $region101: #{decoder_forward.1} parent=95 // pred_check
          %p615 = pneg %p77
        $region102: #{decoder_forward.1} parent=95 // pred_check_branch
          %617 = sbr.rel (%p615) target = $region104
        $region103: #{decoder_forward.1} parent=95 // pred_region
          %s618 = smul.u32 2, %s31
          %p619 = scmp.lt.s32.totalorder %s618, 3
          %s620 = scalar_select %p619, %s618, 3
          %s621 = smul.addr %s620, 8
          %s622 = scalar_lea.vmem %s1, %s621
          %s623 = smul.u32 2, %s31
        $region104: #{decoder_forward.1} parent=95 // pred_fallthru
          _
      $region96: #{decoder_forward.1} parent=5 // pred_fallthru
        _
      %p624 = scmp.le.s32.totalorder 1, %s31
      %p625 = scmp.lt.s32.totalorder %s31, 3
      %p626 = pnand %p624, %p625
      %p627 = pneg %p626
      // Predicated region
      $region105: #{decoder_forward.1} parent=5 // pred_check
        _
      $region106: #{decoder_forward.1} parent=5 // pred_check_branch
        %629 = sbr.rel (%p626) target = $region108
      $region107: #{decoder_forward.1} parent=5 // pred_region
        %s630 = ssub.s32 %s31, 1
        %p631 = scmp.lt.s32.totalorder %s36, 1
        %s632 = scalar_select %p631, %s36, 1
        %s633 = smul.addr %s632, 8
        %s634 = scalar_lea.vmem %s0, %s633
        %p635 = pneg %p57
        %p636 = pneg %p54
        %s637 = smul.u32 2, %s36
        %p638 = scmp.lt.s32.totalorder %s637, 3
        %s639 = scalar_select %p638, %s637, 3
        %s640 = smul.addr %s639, 8
        %s641 = scalar_lea.vmem %s1, %s640
        %p642 = pneg %p83
        %p643 = pneg %p80
        %p644 = pneg %p104
        %p645 = pneg %p101
        %p646 = pneg %p125
        %p647 = pneg %p122
        %p648 = pneg %p146
        %p649 = pneg %p143
        %p650 = pneg %p167
        %p651 = pneg %p164
        %p652 = pneg %p188
        %p653 = pneg %p185
        %p654 = pneg %p209
        %p655 = pneg %p206
        %p656 = pneg %p230
        %p657 = pneg %p227
        %p658 = pneg %p251
        %p659 = pneg %p248
        %p660 = pneg %p272
        %p661 = pneg %p269
        %p662 = pneg %p293
        %p663 = pneg %p290
        %p664 = pneg %p314
        %p665 = pneg %p311
        %p666 = pneg %p335
        %p667 = pneg %p332
        %p668 = pneg %p356
        %p669 = pneg %p353
        %p670 = pneg %p377
        %p671 = pneg %p374
        %p672 = pneg %p398
        %p673 = pneg %p395
        %p674 = pneg %p419
        %p675 = pneg %p416
        %p676 = pneg %p440
        %p677 = pneg %p437
        %p678 = pneg %p461
        %p679 = pneg %p458
        %p680 = pneg %p482
        %p681 = pneg %p479
        %p682 = pneg %p503
        %p683 = pneg %p500
        %p684 = pneg %p529
        %p685 = pneg %p526
        %s686 = sand.u32 %s516, 1
        %s687 = scalar_lea.sflag [#allocation3], %s686
        %s688 = sand.u32 %s516, 1
        %s689 = smul.addr %s688, 8
        %s690 = scalar_lea.vmem [#allocation2], %s689
        %p691 = scmp.lt.s32.totalorder %s36, 1
        %s692 = scalar_select %p691, %s36, 1
        %s693 = smul.addr %s692, 8
        %s694 = scalar_lea.vmem %s0, %s693
        %s695 = smul.u32 2, %s36
        %p696 = scmp.lt.s32.totalorder %s695, 3
        %s697 = scalar_select %p696, %s695, 3
        %s698 = smul.addr %s697, 8
        %s699 = scalar_lea.vmem %s1, %s698
        %s700 = smul.u32 2, %s36
        %v701 = vld [vmem:[%s694] sm:$0xff]
        %v702 = vld [vmem:[%s699] sm:$0xff]
        %v703 = vld [vmem:[%s699 + $0x8] sm:$0xff]
        %v704 = vld [vmem:[%s2] sm:$0xff]
        %v705 = vld [vmem:[%s2 + $0x8] sm:$0xff]
        %v706 = vld [vmem:[%s2 + $0x10] sm:$0xff]
        %v707 = vld [vmem:[%s2 + $0x18] sm:$0xff]
        %v708 = vld [vmem:[%s2 + $0x20] sm:$0xff]
        %v709 = vld [vmem:[%s2 + $0x28] sm:$0xff]
        %v710 = vld [vmem:[%s2 + $0x30] sm:$0xff]
        %v711 = vld [vmem:[%s2 + $0x38] sm:$0xff]
        %v712 = vld [vmem:[%s2 + $0x40] sm:$0xff]
        %v713 = vld [vmem:[%s2 + $0x48] sm:$0xff]
        %v714 = vld [vmem:[%s2 + $0x50] sm:$0xff]
        %v715 = vld [vmem:[%s2 + $0x58] sm:$0xff]
        %v716 = vld [vmem:[%s2 + $0x60] sm:$0xff]
        %v717 = vld [vmem:[%s2 + $0x68] sm:$0xff]
        %v718 = vld [vmem:[%s2 + $0x70] sm:$0xff]
        %v719 = vld [vmem:[%s2 + $0x78] sm:$0xff]
        %v720 = vld [vmem:[%s2 + $0x80] sm:$0xff]
        %v721 = vld [vmem:[%s2 + $0x88] sm:$0xff]
        %v722 = vld [vmem:[%s2 + $0x90] sm:$0xff]
        %v723 = vld [vmem:[%s2 + $0x98] sm:$0xff]
        %v724 = vld [vmem:[%s2 + $0xa0] sm:$0xff]
        %v725 = vld [vmem:[%s2 + $0xa8] sm:$0xff]
        %v726 = vld [vmem:[%s2 + $0xb0] sm:$0xff]
        %v727 = vld [vmem:[%s2 + $0xb8] sm:$0xff]
        %v728 = vld [vmem:[%s2 + $0xc0] sm:$0xff]
        %v729 = vld [vmem:[%s2 + $0xc8] sm:$0xff]
        %v730 = vld [vmem:[%s2 + $0xd0] sm:$0xff]
        %v731 = vld [vmem:[%s2 + $0xd8] sm:$0xff]
        %v732 = vld [vmem:[%s2 + $0xe0] sm:$0xff]
        %v733 = vld [vmem:[%s2 + $0xe8] sm:$0xff]
        %v734 = vld [vmem:[%s2 + $0xf0] sm:$0xff]
        %v735 = vld [vmem:[%s2 + $0xf8] sm:$0xff]
        %v736 = vld [vmem:[%s2 + $0x100] sm:$0xff]
        %v737 = vld [vmem:[%s2 + $0x108] sm:$0xff]
        %v738 = vld [vmem:[%s2 + $0x110] sm:$0xff]
        %v739 = vld [vmem:[%s2 + $0x118] sm:$0xff]
        %v740 = vld [vmem:[%s2 + $0x120] sm:$0xff]
        %v741 = vld [vmem:[%s2 + $0x128] sm:$0xff]
        %v742 = vld [vmem:[%s2 + $0x130] sm:$0xff]
        %v743 = vld [vmem:[%s2 + $0x138] sm:$0xff]
        %v744 = vld [vmem:[%s2 + $0x140] sm:$0xff]
        %v745 = vld [vmem:[%s2 + $0x148] sm:$0xff]
        %v746 = vld [vmem:[%s2 + $0x150] sm:$0xff]
        %v747 = vld [vmem:[%s2 + $0x158] sm:$0xff]
        %v748 = vld [vmem:[%s2 + $0x160] sm:$0xff]
        %v749 = vld [vmem:[%s2 + $0x168] sm:$0xff]
        %v750 = vld [vmem:[%s2 + $0x170] sm:$0xff]
        %v751 = vld [vmem:[%s2 + $0x178] sm:$0xff]
        %v752 = vld [vmem:[%s2 + $0x180] sm:$0xff]
        %v753 = vld [vmem:[%s2 + $0x188] sm:$0xff]
        %v754 = vld [vmem:[%s2 + $0x190] sm:$0xff]
        %v755 = vld [vmem:[%s2 + $0x198] sm:$0xff]
        %v756 = vld [vmem:[%s2 + $0x1a0] sm:$0xff]
        %v757 = vld [vmem:[%s2 + $0x1a8] sm:$0xff]
        %v758 = vld [vmem:[%s2 + $0x1b0] sm:$0xff]
        %v759 = vld [vmem:[%s2 + $0x1b8] sm:$0xff]
        %v760 = vld [vmem:[%s2 + $0x1c0] sm:$0xff]
        %v761 = vld [vmem:[%s2 + $0x1c8] sm:$0xff]
        %v762 = vld [vmem:[%s2 + $0x1d0] sm:$0xff]
        %v763 = vld [vmem:[%s2 + $0x1d8] sm:$0xff]
        %v764 = vld [vmem:[%s2 + $0x1e0] sm:$0xff]
        %v765 = vld [vmem:[%s2 + $0x1e8] sm:$0xff]
        %v766 = vld [vmem:[%s2 + $0x1f0] sm:$0xff]
        %v767 = vld [vmem:[%s2 + $0x1f8] sm:$0xff]
        %v768 = vld [vmem:[%s2 + $0x200] sm:$0xff]
        %v769 = vld [vmem:[%s2 + $0x208] sm:$0xff]
        %v770 = vld [vmem:[%s2 + $0x210] sm:$0xff]
        %v771 = vld [vmem:[%s2 + $0x218] sm:$0xff]
        %v772 = vld [vmem:[%s2 + $0x220] sm:$0xff]
        %v773 = vld [vmem:[%s2 + $0x228] sm:$0xff]
        %v774 = vld [vmem:[%s2 + $0x230] sm:$0xff]
        %v775 = vld [vmem:[%s2 + $0x238] sm:$0xff]
        %v776 = vld [vmem:[%s2 + $0x240] sm:$0xff]
        %v777 = vld [vmem:[%s2 + $0x248] sm:$0xff]
        %v778 = vld [vmem:[%s2 + $0x250] sm:$0xff]
        %v779 = vld [vmem:[%s2 + $0x258] sm:$0xff]
        %v780 = vld [vmem:[%s2 + $0x260] sm:$0xff]
        %v781 = vld [vmem:[%s2 + $0x268] sm:$0xff]
        %v782 = vld [vmem:[%s2 + $0x270] sm:$0xff]
        %v783 = vld [vmem:[%s2 + $0x278] sm:$0xff]
        %v784 = vld [vmem:[%s2 + $0x280] sm:$0xff]
        %v785 = vld [vmem:[%s2 + $0x288] sm:$0xff]
        %v786 = vld [vmem:[%s2 + $0x290] sm:$0xff]
        %v787 = vld [vmem:[%s2 + $0x298] sm:$0xff]
        %v788 = vld [vmem:[%s2 + $0x2a0] sm:$0xff]
        %v789 = vld [vmem:[%s2 + $0x2a8] sm:$0xff]
        %v790 = vld [vmem:[%s2 + $0x2b0] sm:$0xff]
        %v791 = vld [vmem:[%s2 + $0x2b8] sm:$0xff]
        %v792 = vld [vmem:[%s2 + $0x2c0] sm:$0xff]
        %v793 = vld [vmem:[%s2 + $0x2c8] sm:$0xff]
        %v794 = vld [vmem:[%s2 + $0x2d0] sm:$0xff]
        %v795 = vld [vmem:[%s2 + $0x2d8] sm:$0xff]
        %v796 = vld [vmem:[%s2 + $0x2e0] sm:$0xff]
        %v797 = vld [vmem:[%s2 + $0x2e8] sm:$0xff]
        %v798 = vld [vmem:[%s2 + $0x2f0] sm:$0xff]
        %v799 = vld [vmem:[%s2 + $0x2f8] sm:$0xff]
        %v800 = vld [vmem:[%s2 + $0x300] sm:$0xff]
        %v801 = vld [vmem:[%s2 + $0x308] sm:$0xff]
        %v802 = vld [vmem:[%s2 + $0x310] sm:$0xff]
        %v803 = vld [vmem:[%s2 + $0x318] sm:$0xff]
        %v804 = vld [vmem:[%s2 + $0x320] sm:$0xff]
        %v805 = vld [vmem:[%s2 + $0x328] sm:$0xff]
        %v806 = vld [vmem:[%s2 + $0x330] sm:$0xff]
        %v807 = vld [vmem:[%s2 + $0x338] sm:$0xff]
        %v808 = vld [vmem:[%s2 + $0x340] sm:$0xff]
        %v809 = vld [vmem:[%s2 + $0x348] sm:$0xff]
        %v810 = vld [vmem:[%s2 + $0x350] sm:$0xff]
        %v811 = vld [vmem:[%s2 + $0x358] sm:$0xff]
        %v812 = vld [vmem:[%s2 + $0x360] sm:$0xff]
        %v813 = vld [vmem:[%s2 + $0x368] sm:$0xff]
        %v814 = vld [vmem:[%s2 + $0x370] sm:$0xff]
        %v815 = vld [vmem:[%s2 + $0x378] sm:$0xff]
        %v816 = vld [vmem:[%s2 + $0x380] sm:$0xff]
        %v817 = vld [vmem:[%s2 + $0x388] sm:$0xff]
        %v818 = vld [vmem:[%s2 + $0x390] sm:$0xff]
        %v819 = vld [vmem:[%s2 + $0x398] sm:$0xff]
        %v820 = vld [vmem:[%s2 + $0x3a0] sm:$0xff]
        %v821 = vld [vmem:[%s2 + $0x3a8] sm:$0xff]
        %v822 = vld [vmem:[%s2 + $0x3b0] sm:$0xff]
        %v823 = vld [vmem:[%s2 + $0x3b8] sm:$0xff]
        %v824 = vld [vmem:[%s2 + $0x3c0] sm:$0xff]
        %v825 = vld [vmem:[%s2 + $0x3c8] sm:$0xff]
        %v826 = vld [vmem:[%s2 + $0x3d0] sm:$0xff]
        %v827 = vld [vmem:[%s2 + $0x3d8] sm:$0xff]
        %v828 = vld [vmem:[%s2 + $0x3e0] sm:$0xff]
        %v829 = vld [vmem:[%s2 + $0x3e8] sm:$0xff]
        %v830 = vld [vmem:[%s2 + $0x3f0] sm:$0xff]
        %v831 = vld [vmem:[%s2 + $0x3f8] sm:$0xff]
        %v832 = vld [vmem:[%s3] sm:$0xff]
        %v833 = vld [vmem:[%s3 + $0x8] sm:$0xff]
        %v834 = vld [vmem:[%s3 + $0x10] sm:$0xff]
        %v835 = vld [vmem:[%s3 + $0x18] sm:$0xff]
        %v836 = vld [vmem:[%s3 + $0x20] sm:$0xff]
        %v837 = vld [vmem:[%s3 + $0x28] sm:$0xff]
        %v838 = vld [vmem:[%s3 + $0x30] sm:$0xff]
        %v839 = vld [vmem:[%s3 + $0x38] sm:$0xff]
        %v840 = vld [vmem:[%s3 + $0x40] sm:$0xff]
        %v841 = vld [vmem:[%s3 + $0x48] sm:$0xff]
        %v842 = vld [vmem:[%s3 + $0x50] sm:$0xff]
        %v843 = vld [vmem:[%s3 + $0x58] sm:$0xff]
        %v844 = vld [vmem:[%s3 + $0x60] sm:$0xff]
        %v845 = vld [vmem:[%s3 + $0x68] sm:$0xff]
        %v846 = vld [vmem:[%s3 + $0x70] sm:$0xff]
        %v847 = vld [vmem:[%s3 + $0x78] sm:$0xff]
        %v848 = vld [vmem:[%s3 + $0x80] sm:$0xff]
        %v849 = vld [vmem:[%s3 + $0x88] sm:$0xff]
        %v850 = vld [vmem:[%s3 + $0x90] sm:$0xff]
        %v851 = vld [vmem:[%s3 + $0x98] sm:$0xff]
        %v852 = vld [vmem:[%s3 + $0xa0] sm:$0xff]
        %v853 = vld [vmem:[%s3 + $0xa8] sm:$0xff]
        %v854 = vld [vmem:[%s3 + $0xb0] sm:$0xff]
        %v855 = vld [vmem:[%s3 + $0xb8] sm:$0xff]
        %v856 = vld [vmem:[%s3 + $0xc0] sm:$0xff]
        %v857 = vld [vmem:[%s3 + $0xc8] sm:$0xff]
        %v858 = vld [vmem:[%s3 + $0xd0] sm:$0xff]
        %v859 = vld [vmem:[%s3 + $0xd8] sm:$0xff]
        %v860 = vld [vmem:[%s3 + $0xe0] sm:$0xff]
        %v861 = vld [vmem:[%s3 + $0xe8] sm:$0xff]
        %v862 = vld [vmem:[%s3 + $0xf0] sm:$0xff]
        %v863 = vld [vmem:[%s3 + $0xf8] sm:$0xff]
        %v864 = vld [vmem:[%s3 + $0x100] sm:$0xff]
        %v865 = vld [vmem:[%s3 + $0x108] sm:$0xff]
        %v866 = vld [vmem:[%s3 + $0x110] sm:$0xff]
        %v867 = vld [vmem:[%s3 + $0x118] sm:$0xff]
        %v868 = vld [vmem:[%s3 + $0x120] sm:$0xff]
        %v869 = vld [vmem:[%s3 + $0x128] sm:$0xff]
        %v870 = vld [vmem:[%s3 + $0x130] sm:$0xff]
        %v871 = vld [vmem:[%s3 + $0x138] sm:$0xff]
        %v872 = vld [vmem:[%s3 + $0x140] sm:$0xff]
        %v873 = vld [vmem:[%s3 + $0x148] sm:$0xff]
        %v874 = vld [vmem:[%s3 + $0x150] sm:$0xff]
        %v875 = vld [vmem:[%s3 + $0x158] sm:$0xff]
        %v876 = vld [vmem:[%s3 + $0x160] sm:$0xff]
        %v877 = vld [vmem:[%s3 + $0x168] sm:$0xff]
        %v878 = vld [vmem:[%s3 + $0x170] sm:$0xff]
        %v879 = vld [vmem:[%s3 + $0x178] sm:$0xff]
        %v880 = vld [vmem:[%s3 + $0x180] sm:$0xff]
        %v881 = vld [vmem:[%s3 + $0x188] sm:$0xff]
        %v882 = vld [vmem:[%s3 + $0x190] sm:$0xff]
        %v883 = vld [vmem:[%s3 + $0x198] sm:$0xff]
        %v884 = vld [vmem:[%s3 + $0x1a0] sm:$0xff]
        %v885 = vld [vmem:[%s3 + $0x1a8] sm:$0xff]
        %v886 = vld [vmem:[%s3 + $0x1b0] sm:$0xff]
        %v887 = vld [vmem:[%s3 + $0x1b8] sm:$0xff]
        %v888 = vld [vmem:[%s3 + $0x1c0] sm:$0xff]
        %v889 = vld [vmem:[%s3 + $0x1c8] sm:$0xff]
        %v890 = vld [vmem:[%s3 + $0x1d0] sm:$0xff]
        %v891 = vld [vmem:[%s3 + $0x1d8] sm:$0xff]
        %v892 = vld [vmem:[%s3 + $0x1e0] sm:$0xff]
        %v893 = vld [vmem:[%s3 + $0x1e8] sm:$0xff]
        %v894 = vld [vmem:[%s3 + $0x1f0] sm:$0xff]
        %v895 = vld [vmem:[%s3 + $0x1f8] sm:$0xff]
        %v896 = vld [vmem:[%s3 + $0x200] sm:$0xff]
        %v897 = vld [vmem:[%s3 + $0x208] sm:$0xff]
        %v898 = vld [vmem:[%s3 + $0x210] sm:$0xff]
        %v899 = vld [vmem:[%s3 + $0x218] sm:$0xff]
        %v900 = vld [vmem:[%s3 + $0x220] sm:$0xff]
        %v901 = vld [vmem:[%s3 + $0x228] sm:$0xff]
        %v902 = vld [vmem:[%s3 + $0x230] sm:$0xff]
        %v903 = vld [vmem:[%s3 + $0x238] sm:$0xff]
        %v904 = vld [vmem:[%s3 + $0x240] sm:$0xff]
        %v905 = vld [vmem:[%s3 + $0x248] sm:$0xff]
        %v906 = vld [vmem:[%s3 + $0x250] sm:$0xff]
        %v907 = vld [vmem:[%s3 + $0x258] sm:$0xff]
        %v908 = vld [vmem:[%s3 + $0x260] sm:$0xff]
        %v909 = vld [vmem:[%s3 + $0x268] sm:$0xff]
        %v910 = vld [vmem:[%s3 + $0x270] sm:$0xff]
        %v911 = vld [vmem:[%s3 + $0x278] sm:$0xff]
        %v912 = vld [vmem:[%s3 + $0x280] sm:$0xff]
        %v913 = vld [vmem:[%s3 + $0x288] sm:$0xff]
        %v914 = vld [vmem:[%s3 + $0x290] sm:$0xff]
        %v915 = vld [vmem:[%s3 + $0x298] sm:$0xff]
        %v916 = vld [vmem:[%s3 + $0x2a0] sm:$0xff]
        %v917 = vld [vmem:[%s3 + $0x2a8] sm:$0xff]
        %v918 = vld [vmem:[%s3 + $0x2b0] sm:$0xff]
        %v919 = vld [vmem:[%s3 + $0x2b8] sm:$0xff]
        %v920 = vld [vmem:[%s3 + $0x2c0] sm:$0xff]
        %v921 = vld [vmem:[%s3 + $0x2c8] sm:$0xff]
        %v922 = vld [vmem:[%s3 + $0x2d0] sm:$0xff]
        %v923 = vld [vmem:[%s3 + $0x2d8] sm:$0xff]
        %v924 = vld [vmem:[%s3 + $0x2e0] sm:$0xff]
        %v925 = vld [vmem:[%s3 + $0x2e8] sm:$0xff]
        %v926 = vld [vmem:[%s3 + $0x2f0] sm:$0xff]
        %v927 = vld [vmem:[%s3 + $0x2f8] sm:$0xff]
        %v928 = vld [vmem:[%s3 + $0x300] sm:$0xff]
        %v929 = vld [vmem:[%s3 + $0x308] sm:$0xff]
        %v930 = vld [vmem:[%s3 + $0x310] sm:$0xff]
        %v931 = vld [vmem:[%s3 + $0x318] sm:$0xff]
        %v932 = vld [vmem:[%s3 + $0x320] sm:$0xff]
        %v933 = vld [vmem:[%s3 + $0x328] sm:$0xff]
        %v934 = vld [vmem:[%s3 + $0x330] sm:$0xff]
        %v935 = vld [vmem:[%s3 + $0x338] sm:$0xff]
        %v936 = vld [vmem:[%s3 + $0x340] sm:$0xff]
        %v937 = vld [vmem:[%s3 + $0x348] sm:$0xff]
        %v938 = vld [vmem:[%s3 + $0x350] sm:$0xff]
        %v939 = vld [vmem:[%s3 + $0x358] sm:$0xff]
        %v940 = vld [vmem:[%s3 + $0x360] sm:$0xff]
        %v941 = vld [vmem:[%s3 + $0x368] sm:$0xff]
        %v942 = vld [vmem:[%s3 + $0x370] sm:$0xff]
        %v943 = vld [vmem:[%s3 + $0x378] sm:$0xff]
        %v944 = vld [vmem:[%s3 + $0x380] sm:$0xff]
        %v945 = vld [vmem:[%s3 + $0x388] sm:$0xff]
        %v946 = vld [vmem:[%s3 + $0x390] sm:$0xff]
        %v947 = vld [vmem:[%s3 + $0x398] sm:$0xff]
        %v948 = vld [vmem:[%s3 + $0x3a0] sm:$0xff]
        %v949 = vld [vmem:[%s3 + $0x3a8] sm:$0xff]
        %v950 = vld [vmem:[%s3 + $0x3b0] sm:$0xff]
        %v951 = vld [vmem:[%s3 + $0x3b8] sm:$0xff]
        %v952 = vld [vmem:[%s3 + $0x3c0] sm:$0xff]
        %v953 = vld [vmem:[%s3 + $0x3c8] sm:$0xff]
        %v954 = vld [vmem:[%s3 + $0x3d0] sm:$0xff]
        %v955 = vld [vmem:[%s3 + $0x3d8] sm:$0xff]
        %v956 = vld [vmem:[%s3 + $0x3e0] sm:$0xff]
        %v957 = vld [vmem:[%s3 + $0x3e8] sm:$0xff]
        %v958 = vld [vmem:[%s3 + $0x3f0] sm:$0xff]
        %v959 = vld [vmem:[%s3 + $0x3f8] sm:$0xff]
        %v960 = vld [vmem:[%s4] sm:$0xff]
        %v961 = vld [vmem:[%s4 + $0x8] sm:$0xff]
        %v962 = vld [vmem:[%s4 + $0x10] sm:$0xff]
        %v963 = vld [vmem:[%s4 + $0x18] sm:$0xff]
        %v964 = vld [vmem:[%s4 + $0x20] sm:$0xff]
        %v965 = vld [vmem:[%s4 + $0x28] sm:$0xff]
        %v966 = vld [vmem:[%s4 + $0x30] sm:$0xff]
        %v967 = vld [vmem:[%s4 + $0x38] sm:$0xff]
        %v968 = vld [vmem:[%s4 + $0x40] sm:$0xff]
        %v969 = vld [vmem:[%s4 + $0x48] sm:$0xff]
        %v970 = vld [vmem:[%s4 + $0x50] sm:$0xff]
        %v971 = vld [vmem:[%s4 + $0x58] sm:$0xff]
        %v972 = vld [vmem:[%s4 + $0x60] sm:$0xff]
        %v973 = vld [vmem:[%s4 + $0x68] sm:$0xff]
        %v974 = vld [vmem:[%s4 + $0x70] sm:$0xff]
        %v975 = vld [vmem:[%s4 + $0x78] sm:$0xff]
        %v976 = vld [vmem:[%s4 + $0x80] sm:$0xff]
        %v977 = vld [vmem:[%s4 + $0x88] sm:$0xff]
        %v978 = vld [vmem:[%s4 + $0x90] sm:$0xff]
        %v979 = vld [vmem:[%s4 + $0x98] sm:$0xff]
        %v980 = vld [vmem:[%s4 + $0xa0] sm:$0xff]
        %v981 = vld [vmem:[%s4 + $0xa8] sm:$0xff]
        %v982 = vld [vmem:[%s4 + $0xb0] sm:$0xff]
        %v983 = vld [vmem:[%s4 + $0xb8] sm:$0xff]
        %v984 = vld [vmem:[%s4 + $0xc0] sm:$0xff]
        %v985 = vld [vmem:[%s4 + $0xc8] sm:$0xff]
        %v986 = vld [vmem:[%s4 + $0xd0] sm:$0xff]
        %v987 = vld [vmem:[%s4 + $0xd8] sm:$0xff]
        %v988 = vld [vmem:[%s4 + $0xe0] sm:$0xff]
        %v989 = vld [vmem:[%s4 + $0xe8] sm:$0xff]
        %v990 = vld [vmem:[%s4 + $0xf0] sm:$0xff]
        %v991 = vld [vmem:[%s4 + $0xf8] sm:$0xff]
        %v992 = vld [vmem:[%s4 + $0x100] sm:$0xff]
        %v993 = vld [vmem:[%s4 + $0x108] sm:$0xff]
        %v994 = vld [vmem:[%s4 + $0x110] sm:$0xff]
        %v995 = vld [vmem:[%s4 + $0x118] sm:$0xff]
        %v996 = vld [vmem:[%s4 + $0x120] sm:$0xff]
        %v997 = vld [vmem:[%s4 + $0x128] sm:$0xff]
        %v998 = vld [vmem:[%s4 + $0x130] sm:$0xff]
        %v999 = vld [vmem:[%s4 + $0x138] sm:$0xff]
        %v1000 = vld [vmem:[%s4 + $0x140] sm:$0xff]
        %v1001 = vld [vmem:[%s4 + $0x148] sm:$0xff]
        %v1002 = vld [vmem:[%s4 + $0x150] sm:$0xff]
        %v1003 = vld [vmem:[%s4 + $0x158] sm:$0xff]
        %v1004 = vld [vmem:[%s4 + $0x160] sm:$0xff]
        %v1005 = vld [vmem:[%s4 + $0x168] sm:$0xff]
        %v1006 = vld [vmem:[%s4 + $0x170] sm:$0xff]
        %v1007 = vld [vmem:[%s4 + $0x178] sm:$0xff]
        %v1008 = vld [vmem:[%s4 + $0x180] sm:$0xff]
        %v1009 = vld [vmem:[%s4 + $0x188] sm:$0xff]
        %v1010 = vld [vmem:[%s4 + $0x190] sm:$0xff]
        %v1011 = vld [vmem:[%s4 + $0x198] sm:$0xff]
        %v1012 = vld [vmem:[%s4 + $0x1a0] sm:$0xff]
        %v1013 = vld [vmem:[%s4 + $0x1a8] sm:$0xff]
        %v1014 = vld [vmem:[%s4 + $0x1b0] sm:$0xff]
        %v1015 = vld [vmem:[%s4 + $0x1b8] sm:$0xff]
        %v1016 = vld [vmem:[%s4 + $0x1c0] sm:$0xff]
        %v1017 = vld [vmem:[%s4 + $0x1c8] sm:$0xff]
        %v1018 = vld [vmem:[%s4 + $0x1d0] sm:$0xff]
        %v1019 = vld [vmem:[%s4 + $0x1d8] sm:$0xff]
        %v1020 = vld [vmem:[%s4 + $0x1e0] sm:$0xff]
        %v1021 = vld [vmem:[%s4 + $0x1e8] sm:$0xff]
        %v1022 = vld [vmem:[%s4 + $0x1f0] sm:$0xff]
        %v1023 = vld [vmem:[%s4 + $0x1f8] sm:$0xff]
        %v1024 = vld [vmem:[%s4 + $0x200] sm:$0xff]
        %v1025 = vld [vmem:[%s4 + $0x208] sm:$0xff]
        %v1026 = vld [vmem:[%s4 + $0x210] sm:$0xff]
        %v1027 = vld [vmem:[%s4 + $0x218] sm:$0xff]
        %v1028 = vld [vmem:[%s4 + $0x220] sm:$0xff]
        %v1029 = vld [vmem:[%s4 + $0x228] sm:$0xff]
        %v1030 = vld [vmem:[%s4 + $0x230] sm:$0xff]
        %v1031 = vld [vmem:[%s4 + $0x238] sm:$0xff]
        %v1032 = vld [vmem:[%s4 + $0x240] sm:$0xff]
        %v1033 = vld [vmem:[%s4 + $0x248] sm:$0xff]
        %v1034 = vld [vmem:[%s4 + $0x250] sm:$0xff]
        %v1035 = vld [vmem:[%s4 + $0x258] sm:$0xff]
        %v1036 = vld [vmem:[%s4 + $0x260] sm:$0xff]
        %v1037 = vld [vmem:[%s4 + $0x268] sm:$0xff]
        %v1038 = vld [vmem:[%s4 + $0x270] sm:$0xff]
        %v1039 = vld [vmem:[%s4 + $0x278] sm:$0xff]
        %v1040 = vld [vmem:[%s4 + $0x280] sm:$0xff]
        %v1041 = vld [vmem:[%s4 + $0x288] sm:$0xff]
        %v1042 = vld [vmem:[%s4 + $0x290] sm:$0xff]
        %v1043 = vld [vmem:[%s4 + $0x298] sm:$0xff]
        %v1044 = vld [vmem:[%s4 + $0x2a0] sm:$0xff]
        %v1045 = vld [vmem:[%s4 + $0x2a8] sm:$0xff]
        %v1046 = vld [vmem:[%s4 + $0x2b0] sm:$0xff]
        %v1047 = vld [vmem:[%s4 + $0x2b8] sm:$0xff]
        %v1048 = vld [vmem:[%s4 + $0x2c0] sm:$0xff]
        %v1049 = vld [vmem:[%s4 + $0x2c8] sm:$0xff]
        %v1050 = vld [vmem:[%s4 + $0x2d0] sm:$0xff]
        %v1051 = vld [vmem:[%s4 + $0x2d8] sm:$0xff]
        %v1052 = vld [vmem:[%s4 + $0x2e0] sm:$0xff]
        %v1053 = vld [vmem:[%s4 + $0x2e8] sm:$0xff]
        %v1054 = vld [vmem:[%s4 + $0x2f0] sm:$0xff]
        %v1055 = vld [vmem:[%s4 + $0x2f8] sm:$0xff]
        %v1056 = vld [vmem:[%s4 + $0x300] sm:$0xff]
        %v1057 = vld [vmem:[%s4 + $0x308] sm:$0xff]
        %v1058 = vld [vmem:[%s4 + $0x310] sm:$0xff]
        %v1059 = vld [vmem:[%s4 + $0x318] sm:$0xff]
        %v1060 = vld [vmem:[%s4 + $0x320] sm:$0xff]
        %v1061 = vld [vmem:[%s4 + $0x328] sm:$0xff]
        %v1062 = vld [vmem:[%s4 + $0x330] sm:$0xff]
        %v1063 = vld [vmem:[%s4 + $0x338] sm:$0xff]
        %v1064 = vld [vmem:[%s4 + $0x340] sm:$0xff]
        %v1065 = vld [vmem:[%s4 + $0x348] sm:$0xff]
        %v1066 = vld [vmem:[%s4 + $0x350] sm:$0xff]
        %v1067 = vld [vmem:[%s4 + $0x358] sm:$0xff]
        %v1068 = vld [vmem:[%s4 + $0x360] sm:$0xff]
        %v1069 = vld [vmem:[%s4 + $0x368] sm:$0xff]
        %v1070 = vld [vmem:[%s4 + $0x370] sm:$0xff]
        %v1071 = vld [vmem:[%s4 + $0x378] sm:$0xff]
        %v1072 = vld [vmem:[%s4 + $0x380] sm:$0xff]
        %v1073 = vld [vmem:[%s4 + $0x388] sm:$0xff]
        %v1074 = vld [vmem:[%s4 + $0x390] sm:$0xff]
        %v1075 = vld [vmem:[%s4 + $0x398] sm:$0xff]
        %v1076 = vld [vmem:[%s4 + $0x3a0] sm:$0xff]
        %v1077 = vld [vmem:[%s4 + $0x3a8] sm:$0xff]
        %v1078 = vld [vmem:[%s4 + $0x3b0] sm:$0xff]
        %v1079 = vld [vmem:[%s4 + $0x3b8] sm:$0xff]
        %v1080 = vld [vmem:[%s4 + $0x3c0] sm:$0xff]
        %v1081 = vld [vmem:[%s4 + $0x3c8] sm:$0xff]
        %v1082 = vld [vmem:[%s4 + $0x3d0] sm:$0xff]
        %v1083 = vld [vmem:[%s4 + $0x3d8] sm:$0xff]
        %v1084 = vld [vmem:[%s4 + $0x3e0] sm:$0xff]
        %v1085 = vld [vmem:[%s4 + $0x3e8] sm:$0xff]
        %v1086 = vld [vmem:[%s4 + $0x3f0] sm:$0xff]
        %v1087 = vld [vmem:[%s4 + $0x3f8] sm:$0xff]
        %v1088 = vld [vmem:[%s5] sm:$0xff]
        %v1089 = vld [vmem:[%s5 + $0x8] sm:$0xff]
        %v1090 = vld [vmem:[%s5 + $0x10] sm:$0xff]
        %v1091 = vld [vmem:[%s5 + $0x18] sm:$0xff]
        %v1092 = vld [vmem:[%s5 + $0x20] sm:$0xff]
        %v1093 = vld [vmem:[%s5 + $0x28] sm:$0xff]
        %v1094 = vld [vmem:[%s5 + $0x30] sm:$0xff]
        %v1095 = vld [vmem:[%s5 + $0x38] sm:$0xff]
        %v1096 = vld [vmem:[%s5 + $0x40] sm:$0xff]
        %v1097 = vld [vmem:[%s5 + $0x48] sm:$0xff]
        %v1098 = vld [vmem:[%s5 + $0x50] sm:$0xff]
        %v1099 = vld [vmem:[%s5 + $0x58] sm:$0xff]
        %v1100 = vld [vmem:[%s5 + $0x60] sm:$0xff]
        %v1101 = vld [vmem:[%s5 + $0x68] sm:$0xff]
        %v1102 = vld [vmem:[%s5 + $0x70] sm:$0xff]
        %v1103 = vld [vmem:[%s5 + $0x78] sm:$0xff]
        %v1104 = vld [vmem:[%s5 + $0x80] sm:$0xff]
        %v1105 = vld [vmem:[%s5 + $0x88] sm:$0xff]
        %v1106 = vld [vmem:[%s5 + $0x90] sm:$0xff]
        %v1107 = vld [vmem:[%s5 + $0x98] sm:$0xff]
        %v1108 = vld [vmem:[%s5 + $0xa0] sm:$0xff]
        %v1109 = vld [vmem:[%s5 + $0xa8] sm:$0xff]
        %v1110 = vld [vmem:[%s5 + $0xb0] sm:$0xff]
        %v1111 = vld [vmem:[%s5 + $0xb8] sm:$0xff]
        %v1112 = vld [vmem:[%s5 + $0xc0] sm:$0xff]
        %v1113 = vld [vmem:[%s5 + $0xc8] sm:$0xff]
        %v1114 = vld [vmem:[%s5 + $0xd0] sm:$0xff]
        %v1115 = vld [vmem:[%s5 + $0xd8] sm:$0xff]
        %v1116 = vld [vmem:[%s5 + $0xe0] sm:$0xff]
        %v1117 = vld [vmem:[%s5 + $0xe8] sm:$0xff]
        %v1118 = vld [vmem:[%s5 + $0xf0] sm:$0xff]
        %v1119 = vld [vmem:[%s5 + $0xf8] sm:$0xff]
        %v1120 = vld [vmem:[%s5 + $0x100] sm:$0xff]
        %v1121 = vld [vmem:[%s5 + $0x108] sm:$0xff]
        %v1122 = vld [vmem:[%s5 + $0x110] sm:$0xff]
        %v1123 = vld [vmem:[%s5 + $0x118] sm:$0xff]
        %v1124 = vld [vmem:[%s5 + $0x120] sm:$0xff]
        %v1125 = vld [vmem:[%s5 + $0x128] sm:$0xff]
        %v1126 = vld [vmem:[%s5 + $0x130] sm:$0xff]
        %v1127 = vld [vmem:[%s5 + $0x138] sm:$0xff]
        %v1128 = vld [vmem:[%s5 + $0x140] sm:$0xff]
        %v1129 = vld [vmem:[%s5 + $0x148] sm:$0xff]
        %v1130 = vld [vmem:[%s5 + $0x150] sm:$0xff]
        %v1131 = vld [vmem:[%s5 + $0x158] sm:$0xff]
        %v1132 = vld [vmem:[%s5 + $0x160] sm:$0xff]
        %v1133 = vld [vmem:[%s5 + $0x168] sm:$0xff]
        %v1134 = vld [vmem:[%s5 + $0x170] sm:$0xff]
        %v1135 = vld [vmem:[%s5 + $0x178] sm:$0xff]
        %v1136 = vld [vmem:[%s5 + $0x180] sm:$0xff]
        %v1137 = vld [vmem:[%s5 + $0x188] sm:$0xff]
        %v1138 = vld [vmem:[%s5 + $0x190] sm:$0xff]
        %v1139 = vld [vmem:[%s5 + $0x198] sm:$0xff]
        %v1140 = vld [vmem:[%s5 + $0x1a0] sm:$0xff]
        %v1141 = vld [vmem:[%s5 + $0x1a8] sm:$0xff]
        %v1142 = vld [vmem:[%s5 + $0x1b0] sm:$0xff]
        %v1143 = vld [vmem:[%s5 + $0x1b8] sm:$0xff]
        %v1144 = vld [vmem:[%s5 + $0x1c0] sm:$0xff]
        %v1145 = vld [vmem:[%s5 + $0x1c8] sm:$0xff]
        %v1146 = vld [vmem:[%s5 + $0x1d0] sm:$0xff]
        %v1147 = vld [vmem:[%s5 + $0x1d8] sm:$0xff]
        %v1148 = vld [vmem:[%s5 + $0x1e0] sm:$0xff]
        %v1149 = vld [vmem:[%s5 + $0x1e8] sm:$0xff]
        %v1150 = vld [vmem:[%s5 + $0x1f0] sm:$0xff]
        %v1151 = vld [vmem:[%s5 + $0x1f8] sm:$0xff]
        %v1152 = vld [vmem:[%s5 + $0x200] sm:$0xff]
        %v1153 = vld [vmem:[%s5 + $0x208] sm:$0xff]
        %v1154 = vld [vmem:[%s5 + $0x210] sm:$0xff]
        %v1155 = vld [vmem:[%s5 + $0x218] sm:$0xff]
        %v1156 = vld [vmem:[%s5 + $0x220] sm:$0xff]
        %v1157 = vld [vmem:[%s5 + $0x228] sm:$0xff]
        %v1158 = vld [vmem:[%s5 + $0x230] sm:$0xff]
        %v1159 = vld [vmem:[%s5 + $0x238] sm:$0xff]
        %v1160 = vld [vmem:[%s5 + $0x240] sm:$0xff]
        %v1161 = vld [vmem:[%s5 + $0x248] sm:$0xff]
        %v1162 = vld [vmem:[%s5 + $0x250] sm:$0xff]
        %v1163 = vld [vmem:[%s5 + $0x258] sm:$0xff]
        %v1164 = vld [vmem:[%s5 + $0x260] sm:$0xff]
        %v1165 = vld [vmem:[%s5 + $0x268] sm:$0xff]
        %v1166 = vld [vmem:[%s5 + $0x270] sm:$0xff]
        %v1167 = vld [vmem:[%s5 + $0x278] sm:$0xff]
        %v1168 = vld [vmem:[%s5 + $0x280] sm:$0xff]
        %v1169 = vld [vmem:[%s5 + $0x288] sm:$0xff]
        %v1170 = vld [vmem:[%s5 + $0x290] sm:$0xff]
        %v1171 = vld [vmem:[%s5 + $0x298] sm:$0xff]
        %v1172 = vld [vmem:[%s5 + $0x2a0] sm:$0xff]
        %v1173 = vld [vmem:[%s5 + $0x2a8] sm:$0xff]
        %v1174 = vld [vmem:[%s5 + $0x2b0] sm:$0xff]
        %v1175 = vld [vmem:[%s5 + $0x2b8] sm:$0xff]
        %v1176 = vld [vmem:[%s5 + $0x2c0] sm:$0xff]
        %v1177 = vld [vmem:[%s5 + $0x2c8] sm:$0xff]
        %v1178 = vld [vmem:[%s5 + $0x2d0] sm:$0xff]
        %v1179 = vld [vmem:[%s5 + $0x2d8] sm:$0xff]
        %v1180 = vld [vmem:[%s5 + $0x2e0] sm:$0xff]
        %v1181 = vld [vmem:[%s5 + $0x2e8] sm:$0xff]
        %v1182 = vld [vmem:[%s5 + $0x2f0] sm:$0xff]
        %v1183 = vld [vmem:[%s5 + $0x2f8] sm:$0xff]
        %v1184 = vld [vmem:[%s5 + $0x300] sm:$0xff]
        %v1185 = vld [vmem:[%s5 + $0x308] sm:$0xff]
        %v1186 = vld [vmem:[%s5 + $0x310] sm:$0xff]
        %v1187 = vld [vmem:[%s5 + $0x318] sm:$0xff]
        %v1188 = vld [vmem:[%s5 + $0x320] sm:$0xff]
        %v1189 = vld [vmem:[%s5 + $0x328] sm:$0xff]
        %v1190 = vld [vmem:[%s5 + $0x330] sm:$0xff]
        %v1191 = vld [vmem:[%s5 + $0x338] sm:$0xff]
        %v1192 = vld [vmem:[%s5 + $0x340] sm:$0xff]
        %v1193 = vld [vmem:[%s5 + $0x348] sm:$0xff]
        %v1194 = vld [vmem:[%s5 + $0x350] sm:$0xff]
        %v1195 = vld [vmem:[%s5 + $0x358] sm:$0xff]
        %v1196 = vld [vmem:[%s5 + $0x360] sm:$0xff]
        %v1197 = vld [vmem:[%s5 + $0x368] sm:$0xff]
        %v1198 = vld [vmem:[%s5 + $0x370] sm:$0xff]
        %v1199 = vld [vmem:[%s5 + $0x378] sm:$0xff]
        %v1200 = vld [vmem:[%s5 + $0x380] sm:$0xff]
        %v1201 = vld [vmem:[%s5 + $0x388] sm:$0xff]
        %v1202 = vld [vmem:[%s5 + $0x390] sm:$0xff]
        %v1203 = vld [vmem:[%s5 + $0x398] sm:$0xff]
        %v1204 = vld [vmem:[%s5 + $0x3a0] sm:$0xff]
        %v1205 = vld [vmem:[%s5 + $0x3a8] sm:$0xff]
        %v1206 = vld [vmem:[%s5 + $0x3b0] sm:$0xff]
        %v1207 = vld [vmem:[%s5 + $0x3b8] sm:$0xff]
        %v1208 = vld [vmem:[%s5 + $0x3c0] sm:$0xff]
        %v1209 = vld [vmem:[%s5 + $0x3c8] sm:$0xff]
        %v1210 = vld [vmem:[%s5 + $0x3d0] sm:$0xff]
        %v1211 = vld [vmem:[%s5 + $0x3d8] sm:$0xff]
        %v1212 = vld [vmem:[%s5 + $0x3e0] sm:$0xff]
        %v1213 = vld [vmem:[%s5 + $0x3e8] sm:$0xff]
        %v1214 = vld [vmem:[%s5 + $0x3f0] sm:$0xff]
        %v1215 = vld [vmem:[%s5 + $0x3f8] sm:$0xff]
        %v1216 = vld [vmem:[%s6] sm:$0x1]
        %v1217 = vld [vmem:[%s7] sm:$0x1]
        %v1218 = vld [vmem:[%s8] sm:$0x1]
        %1219 = vmatprep.subr.mxu0 %v825
        %1220 = vmatpush1.msra.mxu0 %v824
        %1221 = vmatprep.subr.mxu0 %v817
        %1222 = vmatpush1.msra.mxu0 %v816
        %1223 = vmatprep.subr.mxu0 %v809
        %1224 = vmatpush1.msra.mxu0 %v808
        %1225 = vmatprep.subr.mxu0 %v801
        %1226 = vmatpush1.msra.mxu0 %v800
        %1227 = vmatprep.subr.mxu0 %v793
        %1228 = vmatpush1.msra.mxu0 %v792
        %1229 = vmatprep.subr.mxu0 %v785
        %1230 = vmatpush1.msra.mxu0 %v784
        %1231 = vmatprep.subr.mxu0 %v777
        %1232 = vmatpush1.msra.mxu0 %v776
        %1233 = vmatprep.subr.mxu0 %v769
        %1234 = vmatpush1.msra.mxu0 %v768
        %1235 = vmatprep.subr.mxu0 %v761
        %1236 = vmatpush1.msra.mxu0 %v760
        %1237 = vmatprep.subr.mxu0 %v753
        %1238 = vmatpush1.msra.mxu0 %v752
        %1239 = vmatprep.subr.mxu0 %v745
        %1240 = vmatpush1.msra.mxu0 %v744
        %1241 = vmatprep.subr.mxu0 %v737
        %1242 = vmatpush1.msra.mxu0 %v736
        %1243 = vmatprep.subr.mxu0 %v729
        %1244 = vmatpush1.msra.mxu0 %v728
        %1245 = vmatprep.subr.mxu0 %v721
        %1246 = vmatpush1.msra.mxu0 %v720
        %1247 = vmatprep.subr.mxu0 %v713
        %1248 = vmatpush1.msra.mxu0 %v712
        %1249 = vmatprep.subr.mxu0 %v705
        %1250 = vmatpush1.msra.mxu0 %v704
        %1251 = vmatprep.subr.mxu0 0.0
        %1252 = vmatpush2.msra.mxu0 0.0
        %1253 = vmatprep.subr.mxu0 0.0
        %1254 = vmatpush2.msra.mxu0 0.0
        %1255 = vmatprep.subr.mxu0 0.0
        %1256 = vmatpush2.msra.mxu0 0.0
        %1257 = vmatprep.subr.mxu0 0.0
        %1258 = vmatpush2.msra.mxu0 0.0
        %1259 = vmatprep.subr.mxu0 0.0
        %1260 = vmatpush2.msra.mxu0 0.0
        %1261 = vmatprep.subr.mxu0 0.0
        %1262 = vmatpush2.msra.mxu0 0.0
        %1263 = vmatprep.subr.mxu0 0.0
        %1264 = vmatpush2.msra.mxu0 0.0
        %1265 = vmatprep.subr.mxu0 0.0
        %1266 = vmatpush2.msra.mxu0 0.0
        %1267 = vmatprep.subr.mxu0 0.0
        %1268 = vmatpush2.msra.mxu0 0.0
        %1269 = vmatprep.subr.mxu0 0.0
        %1270 = vmatpush2.msra.mxu0 0.0
        %1271 = vmatprep.subr.mxu0 0.0
        %1272 = vmatpush2.msra.mxu0 0.0
        %1273 = vmatprep.subr.mxu0 0.0
        %1274 = vmatpush2.msra.mxu0 0.0
        %1275 = vmatprep.subr.mxu0 0.0
        %1276 = vmatpush2.msra.mxu0 0.0
        %1277 = vmatprep.subr.mxu0 0.0
        %1278 = vmatpush2.msra.mxu0 0.0
        %1279 = vmatprep.subr.mxu0 0.0
        %1280 = vmatpush2.msra.mxu0 0.0
        %1281 = vmatprep.subr.mxu0 0.0
        %1282 = vmatpush2.msra.mxu0 0.0
        %1283 = vmatprep.mubr.f32.mxu0 0.0
        %1284 = vmatmul.mubr.f32.gmra.mxu0 %v701
        %v1285 = vpop.f32.mrf.mxu0
        %v1286 = vadd.f32 0.0, %v1285
        %v1287 = vpop.f32.mrf.mxu0
        %v1288 = vadd.f32 0.0, %v1287
        %1289 = vdwg.mxu0
        %1290 = vmatprep.subr.mxu0 %v827
        %1291 = vmatpush1.msra.mxu0 %v826
        %1292 = vmatprep.subr.mxu0 %v819
        %1293 = vmatpush1.msra.mxu0 %v818
        %1294 = vmatprep.subr.mxu0 %v811
        %1295 = vmatpush1.msra.mxu0 %v810
        %1296 = vmatprep.subr.mxu0 %v803
        %1297 = vmatpush1.msra.mxu0 %v802
        %1298 = vmatprep.subr.mxu0 %v795
        %1299 = vmatpush1.msra.mxu0 %v794
        %1300 = vmatprep.subr.mxu0 %v787
        %1301 = vmatpush1.msra.mxu0 %v786
        %1302 = vmatprep.subr.mxu0 %v779
        %1303 = vmatpush1.msra.mxu0 %v778
        %1304 = vmatprep.subr.mxu0 %v771
        %1305 = vmatpush1.msra.mxu0 %v770
        %1306 = vmatprep.subr.mxu0 %v763
        %1307 = vmatpush1.msra.mxu0 %v762
        %1308 = vmatprep.subr.mxu0 %v755
        %1309 = vmatpush1.msra.mxu0 %v754
        %1310 = vmatprep.subr.mxu0 %v747
        %1311 = vmatpush1.msra.mxu0 %v746
        %1312 = vmatprep.subr.mxu0 %v739
        %1313 = vmatpush1.msra.mxu0 %v738
        %1314 = vmatprep.subr.mxu0 %v731
        %1315 = vmatpush1.msra.mxu0 %v730
        %1316 = vmatprep.subr.mxu0 %v723
        %1317 = vmatpush1.msra.mxu0 %v722
        %1318 = vmatprep.subr.mxu0 %v715
        %1319 = vmatpush1.msra.mxu0 %v714
        %1320 = vmatprep.subr.mxu0 %v707
        %1321 = vmatpush1.msra.mxu0 %v706
        %1322 = vmatprep.subr.mxu0 0.0
        %1323 = vmatpush2.msra.mxu0 0.0
        %1324 = vmatprep.subr.mxu0 0.0
        %1325 = vmatpush2.msra.mxu0 0.0
        %1326 = vmatprep.subr.mxu0 0.0
        %1327 = vmatpush2.msra.mxu0 0.0
        %1328 = vmatprep.subr.mxu0 0.0
        %1329 = vmatpush2.msra.mxu0 0.0
        %1330 = vmatprep.subr.mxu0 0.0
        %1331 = vmatpush2.msra.mxu0 0.0
        %1332 = vmatprep.subr.mxu0 0.0
        %1333 = vmatpush2.msra.mxu0 0.0
        %1334 = vmatprep.subr.mxu0 0.0
        %1335 = vmatpush2.msra.mxu0 0.0
        %1336 = vmatprep.subr.mxu0 0.0
        %1337 = vmatpush2.msra.mxu0 0.0
        %1338 = vmatprep.subr.mxu0 0.0
        %1339 = vmatpush2.msra.mxu0 0.0
        %1340 = vmatprep.subr.mxu0 0.0
        %1341 = vmatpush2.msra.mxu0 0.0
        %1342 = vmatprep.subr.mxu0 0.0
        %1343 = vmatpush2.msra.mxu0 0.0
        %1344 = vmatprep.subr.mxu0 0.0
        %1345 = vmatpush2.msra.mxu0 0.0
        %1346 = vmatprep.subr.mxu0 0.0
        %1347 = vmatpush2.msra.mxu0 0.0
        %1348 = vmatprep.subr.mxu0 0.0
        %1349 = vmatpush2.msra.mxu0 0.0
        %1350 = vmatprep.subr.mxu0 0.0
        %1351 = vmatpush2.msra.mxu0 0.0
        %1352 = vmatprep.subr.mxu0 0.0
        %1353 = vmatpush2.msra.mxu0 0.0
        %1354 = vmatprep.mubr.f32.mxu0 0.0
        %1355 = vmatmul.mubr.f32.gmra.mxu0 %v701
        %v1356 = vpop.f32.mrf.mxu0
        %v1357 = vadd.f32 0.0, %v1356
        %v1358 = vpop.f32.mrf.mxu0
        %v1359 = vadd.f32 0.0, %v1358
        %1360 = vdwg.mxu0
        %1361 = vmatprep.subr.mxu0 %v829
        %1362 = vmatpush1.msra.mxu0 %v828
        %1363 = vmatprep.subr.mxu0 %v821
        %1364 = vmatpush1.msra.mxu0 %v820
        %1365 = vmatprep.subr.mxu0 %v813
        %1366 = vmatpush1.msra.mxu0 %v812
        %1367 = vmatprep.subr.mxu0 %v805
        %1368 = vmatpush1.msra.mxu0 %v804
        %1369 = vmatprep.subr.mxu0 %v797
        %1370 = vmatpush1.msra.mxu0 %v796
        %1371 = vmatprep.subr.mxu0 %v789
        %1372 = vmatpush1.msra.mxu0 %v788
        %1373 = vmatprep.subr.mxu0 %v781
        %1374 = vmatpush1.msra.mxu0 %v780
        %1375 = vmatprep.subr.mxu0 %v773
        %1376 = vmatpush1.msra.mxu0 %v772
        %1377 = vmatprep.subr.mxu0 %v765
        %1378 = vmatpush1.msra.mxu0 %v764
        %1379 = vmatprep.subr.mxu0 %v757
        %1380 = vmatpush1.msra.mxu0 %v756
        %1381 = vmatprep.subr.mxu0 %v749
        %1382 = vmatpush1.msra.mxu0 %v748
        %1383 = vmatprep.subr.mxu0 %v741
        %1384 = vmatpush1.msra.mxu0 %v740
        %1385 = vmatprep.subr.mxu0 %v733
        %1386 = vmatpush1.msra.mxu0 %v732
        %1387 = vmatprep.subr.mxu0 %v725
        %1388 = vmatpush1.msra.mxu0 %v724
        %1389 = vmatprep.subr.mxu0 %v717
        %1390 = vmatpush1.msra.mxu0 %v716
        %1391 = vmatprep.subr.mxu0 %v709
        %1392 = vmatpush1.msra.mxu0 %v708
        %1393 = vmatprep.subr.mxu0 0.0
        %1394 = vmatpush2.msra.mxu0 0.0
        %1395 = vmatprep.subr.mxu0 0.0
        %1396 = vmatpush2.msra.mxu0 0.0
        %1397 = vmatprep.subr.mxu0 0.0
        %1398 = vmatpush2.msra.mxu0 0.0
        %1399 = vmatprep.subr.mxu0 0.0
        %1400 = vmatpush2.msra.mxu0 0.0
        %1401 = vmatprep.subr.mxu0 0.0
        %1402 = vmatpush2.msra.mxu0 0.0
        %1403 = vmatprep.subr.mxu0 0.0
        %1404 = vmatpush2.msra.mxu0 0.0
        %1405 = vmatprep.subr.mxu0 0.0
        %1406 = vmatpush2.msra.mxu0 0.0
        %1407 = vmatprep.subr.mxu0 0.0
        %1408 = vmatpush2.msra.mxu0 0.0
        %1409 = vmatprep.subr.mxu0 0.0
        %1410 = vmatpush2.msra.mxu0 0.0
        %1411 = vmatprep.subr.mxu0 0.0
        %1412 = vmatpush2.msra.mxu0 0.0
        %1413 = vmatprep.subr.mxu0 0.0
        %1414 = vmatpush2.msra.mxu0 0.0
        %1415 = vmatprep.subr.mxu0 0.0
        %1416 = vmatpush2.msra.mxu0 0.0
        %1417 = vmatprep.subr.mxu0 0.0
        %1418 = vmatpush2.msra.mxu0 0.0
        %1419 = vmatprep.subr.mxu0 0.0
        %1420 = vmatpush2.msra.mxu0 0.0
        %1421 = vmatprep.subr.mxu0 0.0
        %1422 = vmatpush2.msra.mxu0 0.0
        %1423 = vmatprep.subr.mxu0 0.0
        %1424 = vmatpush2.msra.mxu0 0.0
        %1425 = vmatprep.mubr.f32.mxu0 0.0
        %1426 = vmatmul.mubr.f32.gmra.mxu0 %v701
        %v1427 = vpop.f32.mrf.mxu0
        %v1428 = vadd.f32 0.0, %v1427
        %v1429 = vpop.f32.mrf.mxu0
        %v1430 = vadd.f32 0.0, %v1429
        %1431 = vdwg.mxu0
        %1432 = vmatprep.subr.mxu0 %v831
        %1433 = vmatpush1.msra.mxu0 %v830
        %1434 = vmatprep.subr.mxu0 %v823
        %1435 = vmatpush1.msra.mxu0 %v822
        %1436 = vmatprep.subr.mxu0 %v815
        %1437 = vmatpush1.msra.mxu0 %v814
        %1438 = vmatprep.subr.mxu0 %v807
        %1439 = vmatpush1.msra.mxu0 %v806
        %1440 = vmatprep.subr.mxu0 %v799
        %1441 = vmatpush1.msra.mxu0 %v798
        %1442 = vmatprep.subr.mxu0 %v791
        %1443 = vmatpush1.msra.mxu0 %v790
        %1444 = vmatprep.subr.mxu0 %v783
        %1445 = vmatpush1.msra.mxu0 %v782
        %1446 = vmatprep.subr.mxu0 %v775
        %1447 = vmatpush1.msra.mxu0 %v774
        %1448 = vmatprep.subr.mxu0 %v767
        %1449 = vmatpush1.msra.mxu0 %v766
        %1450 = vmatprep.subr.mxu0 %v759
        %1451 = vmatpush1.msra.mxu0 %v758
        %1452 = vmatprep.subr.mxu0 %v751
        %1453 = vmatpush1.msra.mxu0 %v750
        %1454 = vmatprep.subr.mxu0 %v743
        %1455 = vmatpush1.msra.mxu0 %v742
        %1456 = vmatprep.subr.mxu0 %v735
        %1457 = vmatpush1.msra.mxu0 %v734
        %1458 = vmatprep.subr.mxu0 %v727
        %1459 = vmatpush1.msra.mxu0 %v726
        %1460 = vmatprep.subr.mxu0 %v719
        %1461 = vmatpush1.msra.mxu0 %v718
        %1462 = vmatprep.subr.mxu0 %v711
        %1463 = vmatpush1.msra.mxu0 %v710
        %1464 = vmatprep.subr.mxu0 0.0
        %1465 = vmatpush2.msra.mxu0 0.0
        %1466 = vmatprep.subr.mxu0 0.0
        %1467 = vmatpush2.msra.mxu0 0.0
        %1468 = vmatprep.subr.mxu0 0.0
        %1469 = vmatpush2.msra.mxu0 0.0
        %1470 = vmatprep.subr.mxu0 0.0
        %1471 = vmatpush2.msra.mxu0 0.0
        %1472 = vmatprep.subr.mxu0 0.0
        %1473 = vmatpush2.msra.mxu0 0.0
        %1474 = vmatprep.subr.mxu0 0.0
        %1475 = vmatpush2.msra.mxu0 0.0
        %1476 = vmatprep.subr.mxu0 0.0
        %1477 = vmatpush2.msra.mxu0 0.0
        %1478 = vmatprep.subr.mxu0 0.0
        %1479 = vmatpush2.msra.mxu0 0.0
        %1480 = vmatprep.subr.mxu0 0.0
        %1481 = vmatpush2.msra.mxu0 0.0
        %1482 = vmatprep.subr.mxu0 0.0
        %1483 = vmatpush2.msra.mxu0 0.0
        %1484 = vmatprep.subr.mxu0 0.0
        %1485 = vmatpush2.msra.mxu0 0.0
        %1486 = vmatprep.subr.mxu0 0.0
        %1487 = vmatpush2.msra.mxu0 0.0
        %1488 = vmatprep.subr.mxu0 0.0
        %1489 = vmatpush2.msra.mxu0 0.0
        %1490 = vmatprep.subr.mxu0 0.0
        %1491 = vmatpush2.msra.mxu0 0.0
        %1492 = vmatprep.subr.mxu0 0.0
        %1493 = vmatpush2.msra.mxu0 0.0
        %1494 = vmatprep.subr.mxu0 0.0
        %1495 = vmatpush2.msra.mxu0 0.0
        %1496 = vmatprep.mubr.f32.mxu0 0.0
        %1497 = vmatmul.mubr.f32.gmra.mxu0 %v701
        %v1498 = vpop.f32.mrf.mxu0
        %v1499 = vadd.f32 0.0, %v1498
        %v1500 = vpop.f32.mrf.mxu0
        %v1501 = vadd.f32 0.0, %v1500
        %1502 = vdwg.mxu0
        %1503 = vmatprep.subr.mxu0 %v953
        %1504 = vmatpush1.msra.mxu0 %v952
        %1505 = vmatprep.subr.mxu0 %v945
        %1506 = vmatpush1.msra.mxu0 %v944
        %1507 = vmatprep.subr.mxu0 %v937
        %1508 = vmatpush1.msra.mxu0 %v936
        %1509 = vmatprep.subr.mxu0 %v929
        %1510 = vmatpush1.msra.mxu0 %v928
        %1511 = vmatprep.subr.mxu0 %v921
        %1512 = vmatpush1.msra.mxu0 %v920
        %1513 = vmatprep.subr.mxu0 %v913
        %1514 = vmatpush1.msra.mxu0 %v912
        %1515 = vmatprep.subr.mxu0 %v905
        %1516 = vmatpush1.msra.mxu0 %v904
        %1517 = vmatprep.subr.mxu0 %v897
        %1518 = vmatpush1.msra.mxu0 %v896
        %1519 = vmatprep.subr.mxu0 %v889
        %1520 = vmatpush1.msra.mxu0 %v888
        %1521 = vmatprep.subr.mxu0 %v881
        %1522 = vmatpush1.msra.mxu0 %v880
        %1523 = vmatprep.subr.mxu0 %v873
        %1524 = vmatpush1.msra.mxu0 %v872
        %1525 = vmatprep.subr.mxu0 %v865
        %1526 = vmatpush1.msra.mxu0 %v864
        %1527 = vmatprep.subr.mxu0 %v857
        %1528 = vmatpush1.msra.mxu0 %v856
        %1529 = vmatprep.subr.mxu0 %v849
        %1530 = vmatpush1.msra.mxu0 %v848
        %1531 = vmatprep.subr.mxu0 %v841
        %1532 = vmatpush1.msra.mxu0 %v840
        %1533 = vmatprep.subr.mxu0 %v833
        %1534 = vmatpush1.msra.mxu0 %v832
        %1535 = vmatprep.subr.mxu0 0.0
        %1536 = vmatpush2.msra.mxu0 0.0
        %1537 = vmatprep.subr.mxu0 0.0
        %1538 = vmatpush2.msra.mxu0 0.0
        %1539 = vmatprep.subr.mxu0 0.0
        %1540 = vmatpush2.msra.mxu0 0.0
        %1541 = vmatprep.subr.mxu0 0.0
        %1542 = vmatpush2.msra.mxu0 0.0
        %1543 = vmatprep.subr.mxu0 0.0
        %1544 = vmatpush2.msra.mxu0 0.0
        %1545 = vmatprep.subr.mxu0 0.0
        %1546 = vmatpush2.msra.mxu0 0.0
        %1547 = vmatprep.subr.mxu0 0.0
        %1548 = vmatpush2.msra.mxu0 0.0
        %1549 = vmatprep.subr.mxu0 0.0
        %1550 = vmatpush2.msra.mxu0 0.0
        %1551 = vmatprep.subr.mxu0 0.0
        %1552 = vmatpush2.msra.mxu0 0.0
        %1553 = vmatprep.subr.mxu0 0.0
        %1554 = vmatpush2.msra.mxu0 0.0
        %1555 = vmatprep.subr.mxu0 0.0
        %1556 = vmatpush2.msra.mxu0 0.0
        %1557 = vmatprep.subr.mxu0 0.0
        %1558 = vmatpush2.msra.mxu0 0.0
        %1559 = vmatprep.subr.mxu0 0.0
        %1560 = vmatpush2.msra.mxu0 0.0
        %1561 = vmatprep.subr.mxu0 0.0
        %1562 = vmatpush2.msra.mxu0 0.0
        %1563 = vmatprep.subr.mxu0 0.0
        %1564 = vmatpush2.msra.mxu0 0.0
        %1565 = vmatprep.subr.mxu0 0.0
        %1566 = vmatpush2.msra.mxu0 0.0
        %1567 = vmatprep.mubr.f32.mxu0 0.0
        %1568 = vmatmul.mubr.f32.gmra.mxu0 %v701
        %v1569 = vpop.f32.mrf.mxu0
        %v1570 = vadd.f32 0.0, %v1569
        %v1571 = vpop.f32.mrf.mxu0
        %v1572 = vadd.f32 0.0, %v1571
        %1573 = vdwg.mxu0
        %1574 = vmatprep.subr.mxu0 %v955
        %1575 = vmatpush1.msra.mxu0 %v954
        %1576 = vmatprep.subr.mxu0 %v947
        %1577 = vmatpush1.msra.mxu0 %v946
        %1578 = vmatprep.subr.mxu0 %v939
        %1579 = vmatpush1.msra.mxu0 %v938
        %1580 = vmatprep.subr.mxu0 %v931
        %1581 = vmatpush1.msra.mxu0 %v930
        %1582 = vmatprep.subr.mxu0 %v923
        %1583 = vmatpush1.msra.mxu0 %v922
        %1584 = vmatprep.subr.mxu0 %v915
        %1585 = vmatpush1.msra.mxu0 %v914
        %1586 = vmatprep.subr.mxu0 %v907
        %1587 = vmatpush1.msra.mxu0 %v906
        %1588 = vmatprep.subr.mxu0 %v899
        %1589 = vmatpush1.msra.mxu0 %v898
        %1590 = vmatprep.subr.mxu0 %v891
        %1591 = vmatpush1.msra.mxu0 %v890
        %1592 = vmatprep.subr.mxu0 %v883
        %1593 = vmatpush1.msra.mxu0 %v882
        %1594 = vmatprep.subr.mxu0 %v875
        %1595 = vmatpush1.msra.mxu0 %v874
        %1596 = vmatprep.subr.mxu0 %v867
        %1597 = vmatpush1.msra.mxu0 %v866
        %1598 = vmatprep.subr.mxu0 %v859
        %1599 = vmatpush1.msra.mxu0 %v858
        %1600 = vmatprep.subr.mxu0 %v851
        %1601 = vmatpush1.msra.mxu0 %v850
        %1602 = vmatprep.subr.mxu0 %v843
        %1603 = vmatpush1.msra.mxu0 %v842
        %1604 = vmatprep.subr.mxu0 %v835
        %1605 = vmatpush1.msra.mxu0 %v834
        %1606 = vmatprep.subr.mxu0 0.0
        %1607 = vmatpush2.msra.mxu0 0.0
        %1608 = vmatprep.subr.mxu0 0.0
        %1609 = vmatpush2.msra.mxu0 0.0
        %1610 = vmatprep.subr.mxu0 0.0
        %1611 = vmatpush2.msra.mxu0 0.0
        %1612 = vmatprep.subr.mxu0 0.0
        %1613 = vmatpush2.msra.mxu0 0.0
        %1614 = vmatprep.subr.mxu0 0.0
        %1615 = vmatpush2.msra.mxu0 0.0
        %1616 = vmatprep.subr.mxu0 0.0
        %1617 = vmatpush2.msra.mxu0 0.0
        %1618 = vmatprep.subr.mxu0 0.0
        %1619 = vmatpush2.msra.mxu0 0.0
        %1620 = vmatprep.subr.mxu0 0.0
        %1621 = vmatpush2.msra.mxu0 0.0
        %1622 = vmatprep.subr.mxu0 0.0
        %1623 = vmatpush2.msra.mxu0 0.0
        %1624 = vmatprep.subr.mxu0 0.0
        %1625 = vmatpush2.msra.mxu0 0.0
        %1626 = vmatprep.subr.mxu0 0.0
        %1627 = vmatpush2.msra.mxu0 0.0
        %1628 = vmatprep.subr.mxu0 0.0
        %1629 = vmatpush2.msra.mxu0 0.0
        %1630 = vmatprep.subr.mxu0 0.0
        %1631 = vmatpush2.msra.mxu0 0.0
        %1632 = vmatprep.subr.mxu0 0.0
        %1633 = vmatpush2.msra.mxu0 0.0
        %1634 = vmatprep.subr.mxu0 0.0
        %1635 = vmatpush2.msra.mxu0 0.0
        %1636 = vmatprep.subr.mxu0 0.0
        %1637 = vmatpush2.msra.mxu0 0.0
        %1638 = vmatprep.mubr.f32.mxu0 0.0
        %1639 = vmatmul.mubr.f32.gmra.mxu0 %v701
        %v1640 = vpop.f32.mrf.mxu0
        %v1641 = vadd.f32 0.0, %v1640
        %v1642 = vpop.f32.mrf.mxu0
        %v1643 = vadd.f32 0.0, %v1642
        %1644 = vdwg.mxu0
        %1645 = vmatprep.subr.mxu0 %v957
        %1646 = vmatpush1.msra.mxu0 %v956
        %1647 = vmatprep.subr.mxu0 %v949
        %1648 = vmatpush1.msra.mxu0 %v948
        %1649 = vmatprep.subr.mxu0 %v941
        %1650 = vmatpush1.msra.mxu0 %v940
        %1651 = vmatprep.subr.mxu0 %v933
        %1652 = vmatpush1.msra.mxu0 %v932
        %1653 = vmatprep.subr.mxu0 %v925
        %1654 = vmatpush1.msra.mxu0 %v924
        %1655 = vmatprep.subr.mxu0 %v917
        %1656 = vmatpush1.msra.mxu0 %v916
        %1657 = vmatprep.subr.mxu0 %v909
        %1658 = vmatpush1.msra.mxu0 %v908
        %1659 = vmatprep.subr.mxu0 %v901
        %1660 = vmatpush1.msra.mxu0 %v900
        %1661 = vmatprep.subr.mxu0 %v893
        %1662 = vmatpush1.msra.mxu0 %v892
        %1663 = vmatprep.subr.mxu0 %v885
        %1664 = vmatpush1.msra.mxu0 %v884
        %1665 = vmatprep.subr.mxu0 %v877
        %1666 = vmatpush1.msra.mxu0 %v876
        %1667 = vmatprep.subr.mxu0 %v869
        %1668 = vmatpush1.msra.mxu0 %v868
        %1669 = vmatprep.subr.mxu0 %v861
        %1670 = vmatpush1.msra.mxu0 %v860
        %1671 = vmatprep.subr.mxu0 %v853
        %1672 = vmatpush1.msra.mxu0 %v852
        %1673 = vmatprep.subr.mxu0 %v845
        %1674 = vmatpush1.msra.mxu0 %v844
        %1675 = vmatprep.subr.mxu0 %v837
        %1676 = vmatpush1.msra.mxu0 %v836
        %1677 = vmatprep.subr.mxu0 0.0
        %1678 = vmatpush2.msra.mxu0 0.0
        %1679 = vmatprep.subr.mxu0 0.0
        %1680 = vmatpush2.msra.mxu0 0.0
        %1681 = vmatprep.subr.mxu0 0.0
        %1682 = vmatpush2.msra.mxu0 0.0
        %1683 = vmatprep.subr.mxu0 0.0
        %1684 = vmatpush2.msra.mxu0 0.0
        %1685 = vmatprep.subr.mxu0 0.0
        %1686 = vmatpush2.msra.mxu0 0.0
        %1687 = vmatprep.subr.mxu0 0.0
        %1688 = vmatpush2.msra.mxu0 0.0
        %1689 = vmatprep.subr.mxu0 0.0
        %1690 = vmatpush2.msra.mxu0 0.0
        %1691 = vmatprep.subr.mxu0 0.0
        %1692 = vmatpush2.msra.mxu0 0.0
        %1693 = vmatprep.subr.mxu0 0.0
        %1694 = vmatpush2.msra.mxu0 0.0
        %1695 = vmatprep.subr.mxu0 0.0
        %1696 = vmatpush2.msra.mxu0 0.0
        %1697 = vmatprep.subr.mxu0 0.0
        %1698 = vmatpush2.msra.mxu0 0.0
        %1699 = vmatprep.subr.mxu0 0.0
        %1700 = vmatpush2.msra.mxu0 0.0
        %1701 = vmatprep.subr.mxu0 0.0
        %1702 = vmatpush2.msra.mxu0 0.0
        %1703 = vmatprep.subr.mxu0 0.0
        %1704 = vmatpush2.msra.mxu0 0.0
        %1705 = vmatprep.subr.mxu0 0.0
        %1706 = vmatpush2.msra.mxu0 0.0
        %1707 = vmatprep.subr.mxu0 0.0
        %1708 = vmatpush2.msra.mxu0 0.0
        %1709 = vmatprep.mubr.f32.mxu0 0.0
        %1710 = vmatmul.mubr.f32.gmra.mxu0 %v701
        %v1711 = vpop.f32.mrf.mxu0
        %v1712 = vadd.f32 0.0, %v1711
        %v1713 = vpop.f32.mrf.mxu0
        %v1714 = vadd.f32 0.0, %v1713
        %1715 = vdwg.mxu0
        %1716 = vmatprep.subr.mxu0 %v959
        %1717 = vmatpush1.msra.mxu0 %v958
        %1718 = vmatprep.subr.mxu0 %v951
        %1719 = vmatpush1.msra.mxu0 %v950
        %1720 = vmatprep.subr.mxu0 %v943
        %1721 = vmatpush1.msra.mxu0 %v942
        %1722 = vmatprep.subr.mxu0 %v935
        %1723 = vmatpush1.msra.mxu0 %v934
        %1724 = vmatprep.subr.mxu0 %v927
        %1725 = vmatpush1.msra.mxu0 %v926
        %1726 = vmatprep.subr.mxu0 %v919
        %1727 = vmatpush1.msra.mxu0 %v918
        %1728 = vmatprep.subr.mxu0 %v911
        %1729 = vmatpush1.msra.mxu0 %v910
        %1730 = vmatprep.subr.mxu0 %v903
        %1731 = vmatpush1.msra.mxu0 %v902
        %1732 = vmatprep.subr.mxu0 %v895
        %1733 = vmatpush1.msra.mxu0 %v894
        %1734 = vmatprep.subr.mxu0 %v887
        %1735 = vmatpush1.msra.mxu0 %v886
        %1736 = vmatprep.subr.mxu0 %v879
        %1737 = vmatpush1.msra.mxu0 %v878
        %1738 = vmatprep.subr.mxu0 %v871
        %1739 = vmatpush1.msra.mxu0 %v870
        %1740 = vmatprep.subr.mxu0 %v863
        %1741 = vmatpush1.msra.mxu0 %v862
        %1742 = vmatprep.subr.mxu0 %v855
        %1743 = vmatpush1.msra.mxu0 %v854
        %1744 = vmatprep.subr.mxu0 %v847
        %1745 = vmatpush1.msra.mxu0 %v846
        %1746 = vmatprep.subr.mxu0 %v839
        %1747 = vmatpush1.msra.mxu0 %v838
        %1748 = vmatprep.subr.mxu0 0.0
        %1749 = vmatpush2.msra.mxu0 0.0
        %1750 = vmatprep.subr.mxu0 0.0
        %1751 = vmatpush2.msra.mxu0 0.0
        %1752 = vmatprep.subr.mxu0 0.0
        %1753 = vmatpush2.msra.mxu0 0.0
        %1754 = vmatprep.subr.mxu0 0.0
        %1755 = vmatpush2.msra.mxu0 0.0
        %1756 = vmatprep.subr.mxu0 0.0
        %1757 = vmatpush2.msra.mxu0 0.0
        %1758 = vmatprep.subr.mxu0 0.0
        %1759 = vmatpush2.msra.mxu0 0.0
        %1760 = vmatprep.subr.mxu0 0.0
        %1761 = vmatpush2.msra.mxu0 0.0
        %1762 = vmatprep.subr.mxu0 0.0
        %1763 = vmatpush2.msra.mxu0 0.0
        %1764 = vmatprep.subr.mxu0 0.0
        %1765 = vmatpush2.msra.mxu0 0.0
        %1766 = vmatprep.subr.mxu0 0.0
        %1767 = vmatpush2.msra.mxu0 0.0
        %1768 = vmatprep.subr.mxu0 0.0
        %1769 = vmatpush2.msra.mxu0 0.0
        %1770 = vmatprep.subr.mxu0 0.0
        %1771 = vmatpush2.msra.mxu0 0.0
        %1772 = vmatprep.subr.mxu0 0.0
        %1773 = vmatpush2.msra.mxu0 0.0
        %1774 = vmatprep.subr.mxu0 0.0
        %1775 = vmatpush2.msra.mxu0 0.0
        %1776 = vmatprep.subr.mxu0 0.0
        %1777 = vmatpush2.msra.mxu0 0.0
        %1778 = vmatprep.subr.mxu0 0.0
        %1779 = vmatpush2.msra.mxu0 0.0
        %1780 = vmatprep.mubr.f32.mxu0 0.0
        %1781 = vmatmul.mubr.f32.gmra.mxu0 %v701
        %v1782 = vpop.f32.mrf.mxu0
        %v1783 = vadd.f32 0.0, %v1782
        %v1784 = vpop.f32.mrf.mxu0
        %v1785 = vadd.f32 0.0, %v1784
        %1786 = vdwg.mxu0
        %1787 = vmatprep.subr.mxu0 %v1081
        %1788 = vmatpush1.msra.mxu0 %v1080
        %1789 = vmatprep.subr.mxu0 %v1073
        %1790 = vmatpush1.msra.mxu0 %v1072
        %1791 = vmatprep.subr.mxu0 %v1065
        %1792 = vmatpush1.msra.mxu0 %v1064
        %1793 = vmatprep.subr.mxu0 %v1057
        %1794 = vmatpush1.msra.mxu0 %v1056
        %1795 = vmatprep.subr.mxu0 %v1049
        %1796 = vmatpush1.msra.mxu0 %v1048
        %1797 = vmatprep.subr.mxu0 %v1041
        %1798 = vmatpush1.msra.mxu0 %v1040
        %1799 = vmatprep.subr.mxu0 %v1033
        %1800 = vmatpush1.msra.mxu0 %v1032
        %1801 = vmatprep.subr.mxu0 %v1025
        %1802 = vmatpush1.msra.mxu0 %v1024
        %1803 = vmatprep.subr.mxu0 %v1017
        %1804 = vmatpush1.msra.mxu0 %v1016
        %1805 = vmatprep.subr.mxu0 %v1009
        %1806 = vmatpush1.msra.mxu0 %v1008
        %1807 = vmatprep.subr.mxu0 %v1001
        %1808 = vmatpush1.msra.mxu0 %v1000
        %1809 = vmatprep.subr.mxu0 %v993
        %1810 = vmatpush1.msra.mxu0 %v992
        %1811 = vmatprep.subr.mxu0 %v985
        %1812 = vmatpush1.msra.mxu0 %v984
        %1813 = vmatprep.subr.mxu0 %v977
        %1814 = vmatpush1.msra.mxu0 %v976
        %1815 = vmatprep.subr.mxu0 %v969
        %1816 = vmatpush1.msra.mxu0 %v968
        %1817 = vmatprep.subr.mxu0 %v961
        %1818 = vmatpush1.msra.mxu0 %v960
        %1819 = vmatprep.subr.mxu0 0.0
        %1820 = vmatpush2.msra.mxu0 0.0
        %1821 = vmatprep.subr.mxu0 0.0
        %1822 = vmatpush2.msra.mxu0 0.0
        %1823 = vmatprep.subr.mxu0 0.0
        %1824 = vmatpush2.msra.mxu0 0.0
        %1825 = vmatprep.subr.mxu0 0.0
        %1826 = vmatpush2.msra.mxu0 0.0
        %1827 = vmatprep.subr.mxu0 0.0
        %1828 = vmatpush2.msra.mxu0 0.0
        %1829 = vmatprep.subr.mxu0 0.0
        %1830 = vmatpush2.msra.mxu0 0.0
        %1831 = vmatprep.subr.mxu0 0.0
        %1832 = vmatpush2.msra.mxu0 0.0
        %1833 = vmatprep.subr.mxu0 0.0
        %1834 = vmatpush2.msra.mxu0 0.0
        %1835 = vmatprep.subr.mxu0 0.0
        %1836 = vmatpush2.msra.mxu0 0.0
        %1837 = vmatprep.subr.mxu0 0.0
        %1838 = vmatpush2.msra.mxu0 0.0
        %1839 = vmatprep.subr.mxu0 0.0
        %1840 = vmatpush2.msra.mxu0 0.0
        %1841 = vmatprep.subr.mxu0 0.0
        %1842 = vmatpush2.msra.mxu0 0.0
        %1843 = vmatprep.subr.mxu0 0.0
        %1844 = vmatpush2.msra.mxu0 0.0
        %1845 = vmatprep.subr.mxu0 0.0
        %1846 = vmatpush2.msra.mxu0 0.0
        %1847 = vmatprep.subr.mxu0 0.0
        %1848 = vmatpush2.msra.mxu0 0.0
        %1849 = vmatprep.subr.mxu0 0.0
        %1850 = vmatpush2.msra.mxu0 0.0
        %1851 = vmatprep.mubr.f32.mxu0 0.0
        %1852 = vmatmul.mubr.f32.gmra.mxu0 %v701
        %v1853 = vpop.f32.mrf.mxu0
        %v1854 = vadd.f32 0.0, %v1853
        %v1855 = vpop.f32.mrf.mxu0
        %v1856 = vadd.f32 0.0, %v1855
        %1857 = vdwg.mxu0
        %1858 = vmatprep.subr.mxu0 %v1083
        %1859 = vmatpush1.msra.mxu0 %v1082
        %1860 = vmatprep.subr.mxu0 %v1075
        %1861 = vmatpush1.msra.mxu0 %v1074
        %1862 = vmatprep.subr.mxu0 %v1067
        %1863 = vmatpush1.msra.mxu0 %v1066
        %1864 = vmatprep.subr.mxu0 %v1059
        %1865 = vmatpush1.msra.mxu0 %v1058
        %1866 = vmatprep.subr.mxu0 %v1051
        %1867 = vmatpush1.msra.mxu0 %v1050
        %1868 = vmatprep.subr.mxu0 %v1043
        %1869 = vmatpush1.msra.mxu0 %v1042
        %1870 = vmatprep.subr.mxu0 %v1035
        %1871 = vmatpush1.msra.mxu0 %v1034
        %1872 = vmatprep.subr.mxu0 %v1027
        %1873 = vmatpush1.msra.mxu0 %v1026
        %1874 = vmatprep.subr.mxu0 %v1019
        %1875 = vmatpush1.msra.mxu0 %v1018
        %1876 = vmatprep.subr.mxu0 %v1011
        %1877 = vmatpush1.msra.mxu0 %v1010
        %1878 = vmatprep.subr.mxu0 %v1003
        %1879 = vmatpush1.msra.mxu0 %v1002
        %1880 = vmatprep.subr.mxu0 %v995
        %1881 = vmatpush1.msra.mxu0 %v994
        %1882 = vmatprep.subr.mxu0 %v987
        %1883 = vmatpush1.msra.mxu0 %v986
        %1884 = vmatprep.subr.mxu0 %v979
        %1885 = vmatpush1.msra.mxu0 %v978
        %1886 = vmatprep.subr.mxu0 %v971
        %1887 = vmatpush1.msra.mxu0 %v970
        %1888 = vmatprep.subr.mxu0 %v963
        %1889 = vmatpush1.msra.mxu0 %v962
        %1890 = vmatprep.subr.mxu0 0.0
        %1891 = vmatpush2.msra.mxu0 0.0
        %1892 = vmatprep.subr.mxu0 0.0
        %1893 = vmatpush2.msra.mxu0 0.0
        %1894 = vmatprep.subr.mxu0 0.0
        %1895 = vmatpush2.msra.mxu0 0.0
        %1896 = vmatprep.subr.mxu0 0.0
        %1897 = vmatpush2.msra.mxu0 0.0
        %1898 = vmatprep.subr.mxu0 0.0
        %1899 = vmatpush2.msra.mxu0 0.0
        %1900 = vmatprep.subr.mxu0 0.0
        %1901 = vmatpush2.msra.mxu0 0.0
        %1902 = vmatprep.subr.mxu0 0.0
        %1903 = vmatpush2.msra.mxu0 0.0
        %1904 = vmatprep.subr.mxu0 0.0
        %1905 = vmatpush2.msra.mxu0 0.0
        %1906 = vmatprep.subr.mxu0 0.0
        %1907 = vmatpush2.msra.mxu0 0.0
        %1908 = vmatprep.subr.mxu0 0.0
        %1909 = vmatpush2.msra.mxu0 0.0
        %1910 = vmatprep.subr.mxu0 0.0
        %1911 = vmatpush2.msra.mxu0 0.0
        %1912 = vmatprep.subr.mxu0 0.0
        %1913 = vmatpush2.msra.mxu0 0.0
        %1914 = vmatprep.subr.mxu0 0.0
        %1915 = vmatpush2.msra.mxu0 0.0
        %1916 = vmatprep.subr.mxu0 0.0
        %1917 = vmatpush2.msra.mxu0 0.0
        %1918 = vmatprep.subr.mxu0 0.0
        %1919 = vmatpush2.msra.mxu0 0.0
        %1920 = vmatprep.subr.mxu0 0.0
        %1921 = vmatpush2.msra.mxu0 0.0
        %1922 = vmatprep.mubr.f32.mxu0 0.0
        %1923 = vmatmul.mubr.f32.gmra.mxu0 %v701
        %v1924 = vpop.f32.mrf.mxu0
        %v1925 = vadd.f32 0.0, %v1924
        %v1926 = vpop.f32.mrf.mxu0
        %v1927 = vadd.f32 0.0, %v1926
        %1928 = vdwg.mxu0
        %1929 = vmatprep.subr.mxu0 %v1085
        %1930 = vmatpush1.msra.mxu0 %v1084
        %1931 = vmatprep.subr.mxu0 %v1077
        %1932 = vmatpush1.msra.mxu0 %v1076
        %1933 = vmatprep.subr.mxu0 %v1069
        %1934 = vmatpush1.msra.mxu0 %v1068
        %1935 = vmatprep.subr.mxu0 %v1061
        %1936 = vmatpush1.msra.mxu0 %v1060
        %1937 = vmatprep.subr.mxu0 %v1053
        %1938 = vmatpush1.msra.mxu0 %v1052
        %1939 = vmatprep.subr.mxu0 %v1045
        %1940 = vmatpush1.msra.mxu0 %v1044
        %1941 = vmatprep.subr.mxu0 %v1037
        %1942 = vmatpush1.msra.mxu0 %v1036
        %1943 = vmatprep.subr.mxu0 %v1029
        %1944 = vmatpush1.msra.mxu0 %v1028
        %1945 = vmatprep.subr.mxu0 %v1021
        %1946 = vmatpush1.msra.mxu0 %v1020
        %1947 = vmatprep.subr.mxu0 %v1013
        %1948 = vmatpush1.msra.mxu0 %v1012
        %1949 = vmatprep.subr.mxu0 %v1005
        %1950 = vmatpush1.msra.mxu0 %v1004
        %1951 = vmatprep.subr.mxu0 %v997
        %1952 = vmatpush1.msra.mxu0 %v996
        %1953 = vmatprep.subr.mxu0 %v989
        %1954 = vmatpush1.msra.mxu0 %v988
        %1955 = vmatprep.subr.mxu0 %v981
        %1956 = vmatpush1.msra.mxu0 %v980
        %1957 = vmatprep.subr.mxu0 %v973
        %1958 = vmatpush1.msra.mxu0 %v972
        %1959 = vmatprep.subr.mxu0 %v965
        %1960 = vmatpush1.msra.mxu0 %v964
        %1961 = vmatprep.subr.mxu0 0.0
        %1962 = vmatpush2.msra.mxu0 0.0
        %1963 = vmatprep.subr.mxu0 0.0
        %1964 = vmatpush2.msra.mxu0 0.0
        %1965 = vmatprep.subr.mxu0 0.0
        %1966 = vmatpush2.msra.mxu0 0.0
        %1967 = vmatprep.subr.mxu0 0.0
        %1968 = vmatpush2.msra.mxu0 0.0
        %1969 = vmatprep.subr.mxu0 0.0
        %1970 = vmatpush2.msra.mxu0 0.0
        %1971 = vmatprep.subr.mxu0 0.0
        %1972 = vmatpush2.msra.mxu0 0.0
        %1973 = vmatprep.subr.mxu0 0.0
        %1974 = vmatpush2.msra.mxu0 0.0
        %1975 = vmatprep.subr.mxu0 0.0
        %1976 = vmatpush2.msra.mxu0 0.0
        %1977 = vmatprep.subr.mxu0 0.0
        %1978 = vmatpush2.msra.mxu0 0.0
        %1979 = vmatprep.subr.mxu0 0.0
        %1980 = vmatpush2.msra.mxu0 0.0
        %1981 = vmatprep.subr.mxu0 0.0
        %1982 = vmatpush2.msra.mxu0 0.0
        %1983 = vmatprep.subr.mxu0 0.0
        %1984 = vmatpush2.msra.mxu0 0.0
        %1985 = vmatprep.subr.mxu0 0.0
        %1986 = vmatpush2.msra.mxu0 0.0
        %1987 = vmatprep.subr.mxu0 0.0
        %1988 = vmatpush2.msra.mxu0 0.0
        %1989 = vmatprep.subr.mxu0 0.0
        %1990 = vmatpush2.msra.mxu0 0.0
        %1991 = vmatprep.subr.mxu0 0.0
        %1992 = vmatpush2.msra.mxu0 0.0
        %1993 = vmatprep.mubr.f32.mxu0 0.0
        %1994 = vmatmul.mubr.f32.gmra.mxu0 %v701
        %v1995 = vpop.f32.mrf.mxu0
        %v1996 = vadd.f32 0.0, %v1995
        %v1997 = vpop.f32.mrf.mxu0
        %v1998 = vadd.f32 0.0, %v1997
        %1999 = vdwg.mxu0
        %2000 = vmatprep.subr.mxu0 %v1087
        %2001 = vmatpush1.msra.mxu0 %v1086
        %2002 = vmatprep.subr.mxu0 %v1079
        %2003 = vmatpush1.msra.mxu0 %v1078
        %2004 = vmatprep.subr.mxu0 %v1071
        %2005 = vmatpush1.msra.mxu0 %v1070
        %2006 = vmatprep.subr.mxu0 %v1063
        %2007 = vmatpush1.msra.mxu0 %v1062
        %2008 = vmatprep.subr.mxu0 %v1055
        %2009 = vmatpush1.msra.mxu0 %v1054
        %2010 = vmatprep.subr.mxu0 %v1047
        %2011 = vmatpush1.msra.mxu0 %v1046
        %2012 = vmatprep.subr.mxu0 %v1039
        %2013 = vmatpush1.msra.mxu0 %v1038
        %2014 = vmatprep.subr.mxu0 %v1031
        %2015 = vmatpush1.msra.mxu0 %v1030
        %2016 = vmatprep.subr.mxu0 %v1023
        %2017 = vmatpush1.msra.mxu0 %v1022
        %2018 = vmatprep.subr.mxu0 %v1015
        %2019 = vmatpush1.msra.mxu0 %v1014
        %2020 = vmatprep.subr.mxu0 %v1007
        %2021 = vmatpush1.msra.mxu0 %v1006
        %2022 = vmatprep.subr.mxu0 %v999
        %2023 = vmatpush1.msra.mxu0 %v998
        %2024 = vmatprep.subr.mxu0 %v991
        %2025 = vmatpush1.msra.mxu0 %v990
        %2026 = vmatprep.subr.mxu0 %v983
        %2027 = vmatpush1.msra.mxu0 %v982
        %2028 = vmatprep.subr.mxu0 %v975
        %2029 = vmatpush1.msra.mxu0 %v974
        %2030 = vmatprep.subr.mxu0 %v967
        %2031 = vmatpush1.msra.mxu0 %v966
        %2032 = vmatprep.subr.mxu0 0.0
        %2033 = vmatpush2.msra.mxu0 0.0
        %2034 = vmatprep.subr.mxu0 0.0
        %2035 = vmatpush2.msra.mxu0 0.0
        %2036 = vmatprep.subr.mxu0 0.0
        %2037 = vmatpush2.msra.mxu0 0.0
        %2038 = vmatprep.subr.mxu0 0.0
        %2039 = vmatpush2.msra.mxu0 0.0
        %2040 = vmatprep.subr.mxu0 0.0
        %2041 = vmatpush2.msra.mxu0 0.0
        %2042 = vmatprep.subr.mxu0 0.0
        %2043 = vmatpush2.msra.mxu0 0.0
        %2044 = vmatprep.subr.mxu0 0.0
        %2045 = vmatpush2.msra.mxu0 0.0
        %2046 = vmatprep.subr.mxu0 0.0
        %2047 = vmatpush2.msra.mxu0 0.0
        %2048 = vmatprep.subr.mxu0 0.0
        %2049 = vmatpush2.msra.mxu0 0.0
        %2050 = vmatprep.subr.mxu0 0.0
        %2051 = vmatpush2.msra.mxu0 0.0
        %2052 = vmatprep.subr.mxu0 0.0
        %2053 = vmatpush2.msra.mxu0 0.0
        %2054 = vmatprep.subr.mxu0 0.0
        %2055 = vmatpush2.msra.mxu0 0.0
        %2056 = vmatprep.subr.mxu0 0.0
        %2057 = vmatpush2.msra.mxu0 0.0
        %2058 = vmatprep.subr.mxu0 0.0
        %2059 = vmatpush2.msra.mxu0 0.0
        %2060 = vmatprep.subr.mxu0 0.0
        %2061 = vmatpush2.msra.mxu0 0.0
        %2062 = vmatprep.subr.mxu0 0.0
        %2063 = vmatpush2.msra.mxu0 0.0
        %2064 = vmatprep.mubr.f32.mxu0 0.0
        %2065 = vmatmul.mubr.f32.gmra.mxu0 %v701
        %v2066 = vpop.f32.mrf.mxu0
        %v2067 = vadd.f32 0.0, %v2066
        %v2068 = vpop.f32.mrf.mxu0
        %v2069 = vadd.f32 0.0, %v2068
        %2070 = vdwg.mxu0
        %v2072 = vlaneseq
        %v2073 = vshrl.u32 %v2072, 7
        %v2074 = vsub.s32 0, %v2073
        %v2075 = vrot.slane %v1216, %v2074
        %v2077 = vadd.f32 %v701, %v2075
        %2078 = vmatprep.subr.mxu0 0.0
        %2079 = vmatpush1.xpose.msra.mxu0 0.0
        %2080 = vmatprep.subr.mxu0 0.0
        %2081 = vmatpush1.xpose.msra.mxu0 0.0
        %2082 = vmatprep.subr.mxu0 0.0
        %2083 = vmatpush1.xpose.msra.mxu0 0.0
        %2084 = vmatprep.subr.mxu0 0.0
        %2085 = vmatpush1.xpose.msra.mxu0 0.0
        %2086 = vmatprep.subr.mxu0 0.0
        %2087 = vmatpush1.xpose.msra.mxu0 0.0
        %2088 = vmatprep.subr.mxu0 0.0
        %2089 = vmatpush1.xpose.msra.mxu0 0.0
        %2090 = vmatprep.subr.mxu0 0.0
        %2091 = vmatpush1.xpose.msra.mxu0 0.0
        %2092 = vmatprep.subr.mxu0 0.0
        %2093 = vmatpush1.xpose.msra.mxu0 0.0
        %2094 = vmatprep.subr.mxu0 0.0
        %2095 = vmatpush1.xpose.msra.mxu0 0.0
        %2096 = vmatprep.subr.mxu0 0.0
        %2097 = vmatpush1.xpose.msra.mxu0 0.0
        %2098 = vmatprep.subr.mxu0 0.0
        %2099 = vmatpush1.xpose.msra.mxu0 0.0
        %2100 = vmatprep.subr.mxu0 0.0
        %2101 = vmatpush1.xpose.msra.mxu0 0.0
        %2102 = vmatprep.subr.mxu0 0.0
        %2103 = vmatpush1.xpose.msra.mxu0 0.0
        %2104 = vmatprep.subr.mxu0 0.0
        %2105 = vmatpush1.xpose.msra.mxu0 0.0
        %2106 = vmatprep.subr.mxu0 0.0
        %2107 = vmatpush1.xpose.msra.mxu0 0.0
        %2108 = vmatprep.subr.mxu0 0.0
        %2109 = vmatpush1.xpose.msra.mxu0 %v1570
        %2110 = vmatprep.subr.mxu0 0.0
        %2111 = vmatpush2.xpose.msra.mxu0 0.0
        %2112 = vmatprep.subr.mxu0 0.0
        %2113 = vmatpush2.xpose.msra.mxu0 0.0
        %2114 = vmatprep.subr.mxu0 0.0
        %2115 = vmatpush2.xpose.msra.mxu0 0.0
        %2116 = vmatprep.subr.mxu0 0.0
        %2117 = vmatpush2.xpose.msra.mxu0 0.0
        %2118 = vmatprep.subr.mxu0 0.0
        %2119 = vmatpush2.xpose.msra.mxu0 0.0
        %2120 = vmatprep.subr.mxu0 0.0
        %2121 = vmatpush2.xpose.msra.mxu0 0.0
        %2122 = vmatprep.subr.mxu0 0.0
        %2123 = vmatpush2.xpose.msra.mxu0 0.0
        %2124 = vmatprep.subr.mxu0 0.0
        %2125 = vmatpush2.xpose.msra.mxu0 0.0
        %2126 = vmatprep.subr.mxu0 0.0
        %2127 = vmatpush2.xpose.msra.mxu0 0.0
        %2128 = vmatprep.subr.mxu0 0.0
        %2129 = vmatpush2.xpose.msra.mxu0 0.0
        %2130 = vmatprep.subr.mxu0 0.0
        %2131 = vmatpush2.xpose.msra.mxu0 0.0
        %2132 = vmatprep.subr.mxu0 0.0
        %2133 = vmatpush2.xpose.msra.mxu0 0.0
        %2134 = vmatprep.subr.mxu0 0.0
        %2135 = vmatpush2.xpose.msra.mxu0 0.0
        %2136 = vmatprep.subr.mxu0 0.0
        %2137 = vmatpush2.xpose.msra.mxu0 0.0
        %2138 = vmatprep.subr.mxu0 0.0
        %2139 = vmatpush2.xpose.msra.mxu0 0.0
        %2140 = vmatprep.subr.mxu0 0.0
        %2141 = vmatpush2.xpose.msra.mxu0 0.0
        %2142 = vmatprep.mubr.f32.mxu0 0.0
        %2143 = vmatmul.mubr.f32.gmra.mxu0 %v1286
        %v2144 = vpop.f32.mrf.mxu0
        %v2145 = vadd.f32 0.0, %v2144
        %v2146 = vpop.f32.mrf.mxu0
        %2147 = vdwg.mxu0
        %v2148 = vmul.f32 %v2145, 0.088388346
        %vm2149 = vcmask 64512
        %v2150 = vsel %vm2149, %v2148, -inf
        %2151 = vmax.xlane.f32.xlu0 %v2150
        %v2152 = vpop.xlane.xlu0 %2151
        %v2153 = vsub.f32 %v2148, %v2152
        %v2154 = vmul.f32 %v2153, 1.442695
        %v2155 = vpow.pop %v2154
        %v2156 = vsel %vm2149, %v2155, 0.0
        %2157 = vadd.xlane.f32.xlu0 %v2156
        %v2158 = vpop.xlane.xlu0 %2157
        %v2159 = vrcp.pop %v2158
        %v2160 = vmul.f32 %v2155, %v2159
        %v2162 = vsel %vm2149, %v2160, 0
        %2164 = vmatprep.subr.mxu0 0.0
        %2165 = vmatpush1.msra.mxu0 0.0
        %2166 = vmatprep.subr.mxu0 0.0
        %2167 = vmatpush1.msra.mxu0 0.0
        %2168 = vmatprep.subr.mxu0 0.0
        %2169 = vmatpush1.msra.mxu0 0.0
        %2170 = vmatprep.subr.mxu0 0.0
        %2171 = vmatpush1.msra.mxu0 0.0
        %2172 = vmatprep.subr.mxu0 0.0
        %2173 = vmatpush1.msra.mxu0 0.0
        %2174 = vmatprep.subr.mxu0 0.0
        %2175 = vmatpush1.msra.mxu0 0.0
        %2176 = vmatprep.subr.mxu0 0.0
        %2177 = vmatpush1.msra.mxu0 0.0
        %2178 = vmatprep.subr.mxu0 0.0
        %2179 = vmatpush1.msra.mxu0 0.0
        %2180 = vmatprep.subr.mxu0 0.0
        %2181 = vmatpush1.msra.mxu0 0.0
        %2182 = vmatprep.subr.mxu0 0.0
        %2183 = vmatpush1.msra.mxu0 0.0
        %2184 = vmatprep.subr.mxu0 0.0
        %2185 = vmatpush1.msra.mxu0 0.0
        %2186 = vmatprep.subr.mxu0 0.0
        %2187 = vmatpush1.msra.mxu0 0.0
        %2188 = vmatprep.subr.mxu0 0.0
        %2189 = vmatpush1.msra.mxu0 0.0
        %2190 = vmatprep.subr.mxu0 0.0
        %2191 = vmatpush1.msra.mxu0 0.0
        %2192 = vmatprep.subr.mxu0 0.0
        %2193 = vmatpush1.msra.mxu0 0.0
        %2194 = vmatprep.subr.mxu0 0.0
        %2195 = vmatpush1.msra.mxu0 %v1854
        %2196 = vmatprep.subr.mxu0 0.0
        %2197 = vmatpush2.msra.mxu0 0.0
        %2198 = vmatprep.subr.mxu0 0.0
        %2199 = vmatpush2.msra.mxu0 0.0
        %2200 = vmatprep.subr.mxu0 0.0
        %2201 = vmatpush2.msra.mxu0 0.0
        %2202 = vmatprep.subr.mxu0 0.0
        %2203 = vmatpush2.msra.mxu0 0.0
        %2204 = vmatprep.subr.mxu0 0.0
        %2205 = vmatpush2.msra.mxu0 0.0
        %2206 = vmatprep.subr.mxu0 0.0
        %2207 = vmatpush2.msra.mxu0 0.0
        %2208 = vmatprep.subr.mxu0 0.0
        %2209 = vmatpush2.msra.mxu0 0.0
        %2210 = vmatprep.subr.mxu0 0.0
        %2211 = vmatpush2.msra.mxu0 0.0
        %2212 = vmatprep.subr.mxu0 0.0
        %2213 = vmatpush2.msra.mxu0 0.0
        %2214 = vmatprep.subr.mxu0 0.0
        %2215 = vmatpush2.msra.mxu0 0.0
        %2216 = vmatprep.subr.mxu0 0.0
        %2217 = vmatpush2.msra.mxu0 0.0
        %2218 = vmatprep.subr.mxu0 0.0
        %2219 = vmatpush2.msra.mxu0 0.0
        %2220 = vmatprep.subr.mxu0 0.0
        %2221 = vmatpush2.msra.mxu0 0.0
        %2222 = vmatprep.subr.mxu0 0.0
        %2223 = vmatpush2.msra.mxu0 0.0
        %2224 = vmatprep.subr.mxu0 0.0
        %2225 = vmatpush2.msra.mxu0 0.0
        %2226 = vmatprep.subr.mxu0 0.0
        %2227 = vmatpush2.msra.mxu0 0.0
        %2228 = vmatprep.mubr.f32.mxu0 0.0
        %2229 = vmatmul.mubr.f32.gmra.mxu0 %v2162
        %v2230 = vpop.f32.mrf.mxu0
        %v2231 = vadd.f32 0.0, %v2230
        %v2232 = vpop.f32.mrf.mxu0
        %2233 = vdwg.mxu0
        %2234 = vmatprep.subr.mxu0 0.0
        %2235 = vmatpush1.msra.mxu0 %v1103
        %2236 = vmatprep.subr.mxu0 0.0
        %2237 = vmatpush1.msra.mxu0 %v1102
        %2238 = vmatprep.subr.mxu0 0.0
        %2239 = vmatpush1.msra.mxu0 %v1101
        %2240 = vmatprep.subr.mxu0 0.0
        %2241 = vmatpush1.msra.mxu0 %v1100
        %2242 = vmatprep.subr.mxu0 0.0
        %2243 = vmatpush1.msra.mxu0 %v1099
        %2244 = vmatprep.subr.mxu0 0.0
        %2245 = vmatpush1.msra.mxu0 %v1098
        %2246 = vmatprep.subr.mxu0 0.0
        %2247 = vmatpush1.msra.mxu0 %v1097
        %2248 = vmatprep.subr.mxu0 0.0
        %2249 = vmatpush1.msra.mxu0 %v1096
        %2250 = vmatprep.subr.mxu0 0.0
        %2251 = vmatpush1.msra.mxu0 %v1095
        %2252 = vmatprep.subr.mxu0 0.0
        %2253 = vmatpush1.msra.mxu0 %v1094
        %2254 = vmatprep.subr.mxu0 0.0
        %2255 = vmatpush1.msra.mxu0 %v1093
        %2256 = vmatprep.subr.mxu0 0.0
        %2257 = vmatpush1.msra.mxu0 %v1092
        %2258 = vmatprep.subr.mxu0 0.0
        %2259 = vmatpush1.msra.mxu0 %v1091
        %2260 = vmatprep.subr.mxu0 0.0
        %2261 = vmatpush1.msra.mxu0 %v1090
        %2262 = vmatprep.subr.mxu0 0.0
        %2263 = vmatpush1.msra.mxu0 %v1089
        %2264 = vmatprep.subr.mxu0 0.0
        %2265 = vmatpush1.msra.mxu0 %v1088
        %2266 = vmatprep.subr.mxu0 0.0
        %2267 = vmatpush2.msra.mxu0 0.0
        %2268 = vmatprep.subr.mxu0 0.0
        %2269 = vmatpush2.msra.mxu0 0.0
        %2270 = vmatprep.subr.mxu0 0.0
        %2271 = vmatpush2.msra.mxu0 0.0
        %2272 = vmatprep.subr.mxu0 0.0
        %2273 = vmatpush2.msra.mxu0 0.0
        %2274 = vmatprep.subr.mxu0 0.0
        %2275 = vmatpush2.msra.mxu0 0.0
        %2276 = vmatprep.subr.mxu0 0.0
        %2277 = vmatpush2.msra.mxu0 0.0
        %2278 = vmatprep.subr.mxu0 0.0
        %2279 = vmatpush2.msra.mxu0 0.0
        %2280 = vmatprep.subr.mxu0 0.0
        %2281 = vmatpush2.msra.mxu0 0.0
        %2282 = vmatprep.subr.mxu0 0.0
        %2283 = vmatpush2.msra.mxu0 0.0
        %2284 = vmatprep.subr.mxu0 0.0
        %2285 = vmatpush2.msra.mxu0 0.0
        %2286 = vmatprep.subr.mxu0 0.0
        %2287 = vmatpush2.msra.mxu0 0.0
        %2288 = vmatprep.subr.mxu0 0.0
        %2289 = vmatpush2.msra.mxu0 0.0
        %2290 = vmatprep.subr.mxu0 0.0
        %2291 = vmatpush2.msra.mxu0 0.0
        %2292 = vmatprep.subr.mxu0 0.0
        %2293 = vmatpush2.msra.mxu0 0.0
        %2294 = vmatprep.subr.mxu0 0.0
        %2295 = vmatpush2.msra.mxu0 0.0
        %2296 = vmatprep.subr.mxu0 0.0
        %2297 = vmatpush2.msra.mxu0 0.0
        %2298 = vmatprep.mubr.f32.mxu0 0.0
        %2299 = vmatmul.mubr.f32.gmra.mxu0 %v2231
        %v2300 = vpop.f32.mrf.mxu0
        %v2301 = vadd.f32 0.0, %v2300
        %v2302 = vpop.f32.mrf.mxu0
        %2303 = vdwg.mxu0
        %v2304 = vadd.f32 %v2077, %v2301
        %2305 = vmatprep.subr.mxu0 0.0
        %2306 = vmatpush1.xpose.msra.mxu0 0.0
        %2307 = vmatprep.subr.mxu0 0.0
        %2308 = vmatpush1.xpose.msra.mxu0 0.0
        %2309 = vmatprep.subr.mxu0 0.0
        %2310 = vmatpush1.xpose.msra.mxu0 0.0
        %2311 = vmatprep.subr.mxu0 0.0
        %2312 = vmatpush1.xpose.msra.mxu0 0.0
        %2313 = vmatprep.subr.mxu0 0.0
        %2314 = vmatpush1.xpose.msra.mxu0 0.0
        %2315 = vmatprep.subr.mxu0 0.0
        %2316 = vmatpush1.xpose.msra.mxu0 0.0
        %2317 = vmatprep.subr.mxu0 0.0
        %2318 = vmatpush1.xpose.msra.mxu0 0.0
        %2319 = vmatprep.subr.mxu0 0.0
        %2320 = vmatpush1.xpose.msra.mxu0 0.0
        %2321 = vmatprep.subr.mxu0 0.0
        %2322 = vmatpush1.xpose.msra.mxu0 0.0
        %2323 = vmatprep.subr.mxu0 0.0
        %2324 = vmatpush1.xpose.msra.mxu0 0.0
        %2325 = vmatprep.subr.mxu0 0.0
        %2326 = vmatpush1.xpose.msra.mxu0 0.0
        %2327 = vmatprep.subr.mxu0 0.0
        %2328 = vmatpush1.xpose.msra.mxu0 0.0
        %2329 = vmatprep.subr.mxu0 0.0
        %2330 = vmatpush1.xpose.msra.mxu0 0.0
        %2331 = vmatprep.subr.mxu0 0.0
        %2332 = vmatpush1.xpose.msra.mxu0 0.0
        %2333 = vmatprep.subr.mxu0 0.0
        %2334 = vmatpush1.xpose.msra.mxu0 0.0
        %2335 = vmatprep.subr.mxu0 0.0
        %2336 = vmatpush1.xpose.msra.mxu0 %v1572
        %2337 = vmatprep.subr.mxu0 0.0
        %2338 = vmatpush2.xpose.msra.mxu0 0.0
        %2339 = vmatprep.subr.mxu0 0.0
        %2340 = vmatpush2.xpose.msra.mxu0 0.0
        %2341 = vmatprep.subr.mxu0 0.0
        %2342 = vmatpush2.xpose.msra.mxu0 0.0
        %2343 = vmatprep.subr.mxu0 0.0
        %2344 = vmatpush2.xpose.msra.mxu0 0.0
        %2345 = vmatprep.subr.mxu0 0.0
        %2346 = vmatpush2.xpose.msra.mxu0 0.0
        %2347 = vmatprep.subr.mxu0 0.0
        %2348 = vmatpush2.xpose.msra.mxu0 0.0
        %2349 = vmatprep.subr.mxu0 0.0
        %2350 = vmatpush2.xpose.msra.mxu0 0.0
        %2351 = vmatprep.subr.mxu0 0.0
        %2352 = vmatpush2.xpose.msra.mxu0 0.0
        %2353 = vmatprep.subr.mxu0 0.0
        %2354 = vmatpush2.xpose.msra.mxu0 0.0
        %2355 = vmatprep.subr.mxu0 0.0
        %2356 = vmatpush2.xpose.msra.mxu0 0.0
        %2357 = vmatprep.subr.mxu0 0.0
        %2358 = vmatpush2.xpose.msra.mxu0 0.0
        %2359 = vmatprep.subr.mxu0 0.0
        %2360 = vmatpush2.xpose.msra.mxu0 0.0
        %2361 = vmatprep.subr.mxu0 0.0
        %2362 = vmatpush2.xpose.msra.mxu0 0.0
        %2363 = vmatprep.subr.mxu0 0.0
        %2364 = vmatpush2.xpose.msra.mxu0 0.0
        %2365 = vmatprep.subr.mxu0 0.0
        %2366 = vmatpush2.xpose.msra.mxu0 0.0
        %2367 = vmatprep.subr.mxu0 0.0
        %2368 = vmatpush2.xpose.msra.mxu0 0.0
        %2369 = vmatprep.mubr.f32.mxu0 0.0
        %2370 = vmatmul.mubr.f32.gmra.mxu0 %v1288
        %v2371 = vpop.f32.mrf.mxu0
        %v2372 = vadd.f32 0.0, %v2371
        %v2373 = vpop.f32.mrf.mxu0
        %2374 = vdwg.mxu0
        %v2375 = vmul.f32 %v2372, 0.088388346
        %v2376 = vsel %vm2149, %v2375, -inf
        %2377 = vmax.xlane.f32.xlu0 %v2376
        %v2378 = vpop.xlane.xlu0 %2377
        %v2379 = vsub.f32 %v2375, %v2378
        %v2380 = vmul.f32 %v2379, 1.442695
        %v2381 = vpow.pop %v2380
        %v2382 = vsel %vm2149, %v2381, 0.0
        %2383 = vadd.xlane.f32.xlu0 %v2382
        %v2384 = vpop.xlane.xlu0 %2383
        %v2385 = vrcp.pop %v2384
        %v2386 = vmul.f32 %v2381, %v2385
        %v2388 = vsel %vm2149, %v2386, 0
        %2390 = vmatprep.subr.mxu0 0.0
        %2391 = vmatpush1.msra.mxu0 0.0
        %2392 = vmatprep.subr.mxu0 0.0
        %2393 = vmatpush1.msra.mxu0 0.0
        %2394 = vmatprep.subr.mxu0 0.0
        %2395 = vmatpush1.msra.mxu0 0.0
        %2396 = vmatprep.subr.mxu0 0.0
        %2397 = vmatpush1.msra.mxu0 0.0
        %2398 = vmatprep.subr.mxu0 0.0
        %2399 = vmatpush1.msra.mxu0 0.0
        %2400 = vmatprep.subr.mxu0 0.0
        %2401 = vmatpush1.msra.mxu0 0.0
        %2402 = vmatprep.subr.mxu0 0.0
        %2403 = vmatpush1.msra.mxu0 0.0
        %2404 = vmatprep.subr.mxu0 0.0
        %2405 = vmatpush1.msra.mxu0 0.0
        %2406 = vmatprep.subr.mxu0 0.0
        %2407 = vmatpush1.msra.mxu0 0.0
        %2408 = vmatprep.subr.mxu0 0.0
        %2409 = vmatpush1.msra.mxu0 0.0
        %2410 = vmatprep.subr.mxu0 0.0
        %2411 = vmatpush1.msra.mxu0 0.0
        %2412 = vmatprep.subr.mxu0 0.0
        %2413 = vmatpush1.msra.mxu0 0.0
        %2414 = vmatprep.subr.mxu0 0.0
        %2415 = vmatpush1.msra.mxu0 0.0
        %2416 = vmatprep.subr.mxu0 0.0
        %2417 = vmatpush1.msra.mxu0 0.0
        %2418 = vmatprep.subr.mxu0 0.0
        %2419 = vmatpush1.msra.mxu0 0.0
        %2420 = vmatprep.subr.mxu0 0.0
        %2421 = vmatpush1.msra.mxu0 %v1856
        %2422 = vmatprep.subr.mxu0 0.0
        %2423 = vmatpush2.msra.mxu0 0.0
        %2424 = vmatprep.subr.mxu0 0.0
        %2425 = vmatpush2.msra.mxu0 0.0
        %2426 = vmatprep.subr.mxu0 0.0
        %2427 = vmatpush2.msra.mxu0 0.0
        %2428 = vmatprep.subr.mxu0 0.0
        %2429 = vmatpush2.msra.mxu0 0.0
        %2430 = vmatprep.subr.mxu0 0.0
        %2431 = vmatpush2.msra.mxu0 0.0
        %2432 = vmatprep.subr.mxu0 0.0
        %2433 = vmatpush2.msra.mxu0 0.0
        %2434 = vmatprep.subr.mxu0 0.0
        %2435 = vmatpush2.msra.mxu0 0.0
        %2436 = vmatprep.subr.mxu0 0.0
        %2437 = vmatpush2.msra.mxu0 0.0
        %2438 = vmatprep.subr.mxu0 0.0
        %2439 = vmatpush2.msra.mxu0 0.0
        %2440 = vmatprep.subr.mxu0 0.0
        %2441 = vmatpush2.msra.mxu0 0.0
        %2442 = vmatprep.subr.mxu0 0.0
        %2443 = vmatpush2.msra.mxu0 0.0
        %2444 = vmatprep.subr.mxu0 0.0
        %2445 = vmatpush2.msra.mxu0 0.0
        %2446 = vmatprep.subr.mxu0 0.0
        %2447 = vmatpush2.msra.mxu0 0.0
        %2448 = vmatprep.subr.mxu0 0.0
        %2449 = vmatpush2.msra.mxu0 0.0
        %2450 = vmatprep.subr.mxu0 0.0
        %2451 = vmatpush2.msra.mxu0 0.0
        %2452 = vmatprep.subr.mxu0 0.0
        %2453 = vmatpush2.msra.mxu0 0.0
        %2454 = vmatprep.mubr.f32.mxu0 0.0
        %2455 = vmatmul.mubr.f32.gmra.mxu0 %v2388
        %v2456 = vpop.f32.mrf.mxu0
        %v2457 = vadd.f32 0.0, %v2456
        %v2458 = vpop.f32.mrf.mxu0
        %2459 = vdwg.mxu0
        %2460 = vmatprep.subr.mxu0 0.0
        %2461 = vmatpush1.msra.mxu0 %v1119
        %2462 = vmatprep.subr.mxu0 0.0
        %2463 = vmatpush1.msra.mxu0 %v1118
        %2464 = vmatprep.subr.mxu0 0.0
        %2465 = vmatpush1.msra.mxu0 %v1117
        %2466 = vmatprep.subr.mxu0 0.0
        %2467 = vmatpush1.msra.mxu0 %v1116
        %2468 = vmatprep.subr.mxu0 0.0
        %2469 = vmatpush1.msra.mxu0 %v1115
        %2470 = vmatprep.subr.mxu0 0.0
        %2471 = vmatpush1.msra.mxu0 %v1114
        %2472 = vmatprep.subr.mxu0 0.0
        %2473 = vmatpush1.msra.mxu0 %v1113
        %2474 = vmatprep.subr.mxu0 0.0
        %2475 = vmatpush1.msra.mxu0 %v1112
        %2476 = vmatprep.subr.mxu0 0.0
        %2477 = vmatpush1.msra.mxu0 %v1111
        %2478 = vmatprep.subr.mxu0 0.0
        %2479 = vmatpush1.msra.mxu0 %v1110
        %2480 = vmatprep.subr.mxu0 0.0
        %2481 = vmatpush1.msra.mxu0 %v1109
        %2482 = vmatprep.subr.mxu0 0.0
        %2483 = vmatpush1.msra.mxu0 %v1108
        %2484 = vmatprep.subr.mxu0 0.0
        %2485 = vmatpush1.msra.mxu0 %v1107
        %2486 = vmatprep.subr.mxu0 0.0
        %2487 = vmatpush1.msra.mxu0 %v1106
        %2488 = vmatprep.subr.mxu0 0.0
        %2489 = vmatpush1.msra.mxu0 %v1105
        %2490 = vmatprep.subr.mxu0 0.0
        %2491 = vmatpush1.msra.mxu0 %v1104
        %2492 = vmatprep.subr.mxu0 0.0
        %2493 = vmatpush2.msra.mxu0 0.0
        %2494 = vmatprep.subr.mxu0 0.0
        %2495 = vmatpush2.msra.mxu0 0.0
        %2496 = vmatprep.subr.mxu0 0.0
        %2497 = vmatpush2.msra.mxu0 0.0
        %2498 = vmatprep.subr.mxu0 0.0
        %2499 = vmatpush2.msra.mxu0 0.0
        %2500 = vmatprep.subr.mxu0 0.0
        %2501 = vmatpush2.msra.mxu0 0.0
        %2502 = vmatprep.subr.mxu0 0.0
        %2503 = vmatpush2.msra.mxu0 0.0
        %2504 = vmatprep.subr.mxu0 0.0
        %2505 = vmatpush2.msra.mxu0 0.0
        %2506 = vmatprep.subr.mxu0 0.0
        %2507 = vmatpush2.msra.mxu0 0.0
        %2508 = vmatprep.subr.mxu0 0.0
        %2509 = vmatpush2.msra.mxu0 0.0
        %2510 = vmatprep.subr.mxu0 0.0
        %2511 = vmatpush2.msra.mxu0 0.0
        %2512 = vmatprep.subr.mxu0 0.0
        %2513 = vmatpush2.msra.mxu0 0.0
        %2514 = vmatprep.subr.mxu0 0.0
        %2515 = vmatpush2.msra.mxu0 0.0
        %2516 = vmatprep.subr.mxu0 0.0
        %2517 = vmatpush2.msra.mxu0 0.0
        %2518 = vmatprep.subr.mxu0 0.0
        %2519 = vmatpush2.msra.mxu0 0.0
        %2520 = vmatprep.subr.mxu0 0.0
        %2521 = vmatpush2.msra.mxu0 0.0
        %2522 = vmatprep.subr.mxu0 0.0
        %2523 = vmatpush2.msra.mxu0 0.0
        %2524 = vmatprep.mubr.f32.mxu0 0.0
        %2525 = vmatmul.mubr.f32.gmra.mxu0 %v2457
        %v2526 = vpop.f32.mrf.mxu0
        %v2527 = vadd.f32 0.0, %v2526
        %v2528 = vpop.f32.mrf.mxu0
        %2529 = vdwg.mxu0
        %v2530 = vadd.f32 %v2304, %v2527
        %2531 = vmatprep.subr.mxu0 0.0
        %2532 = vmatpush1.xpose.msra.mxu0 0.0
        %2533 = vmatprep.subr.mxu0 0.0
        %2534 = vmatpush1.xpose.msra.mxu0 0.0
        %2535 = vmatprep.subr.mxu0 0.0
        %2536 = vmatpush1.xpose.msra.mxu0 0.0
        %2537 = vmatprep.subr.mxu0 0.0
        %2538 = vmatpush1.xpose.msra.mxu0 0.0
        %2539 = vmatprep.subr.mxu0 0.0
        %2540 = vmatpush1.xpose.msra.mxu0 0.0
        %2541 = vmatprep.subr.mxu0 0.0
        %2542 = vmatpush1.xpose.msra.mxu0 0.0
        %2543 = vmatprep.subr.mxu0 0.0
        %2544 = vmatpush1.xpose.msra.mxu0 0.0
        %2545 = vmatprep.subr.mxu0 0.0
        %2546 = vmatpush1.xpose.msra.mxu0 0.0
        %2547 = vmatprep.subr.mxu0 0.0
        %2548 = vmatpush1.xpose.msra.mxu0 0.0
        %2549 = vmatprep.subr.mxu0 0.0
        %2550 = vmatpush1.xpose.msra.mxu0 0.0
        %2551 = vmatprep.subr.mxu0 0.0
        %2552 = vmatpush1.xpose.msra.mxu0 0.0
        %2553 = vmatprep.subr.mxu0 0.0
        %2554 = vmatpush1.xpose.msra.mxu0 0.0
        %2555 = vmatprep.subr.mxu0 0.0
        %2556 = vmatpush1.xpose.msra.mxu0 0.0
        %2557 = vmatprep.subr.mxu0 0.0
        %2558 = vmatpush1.xpose.msra.mxu0 0.0
        %2559 = vmatprep.subr.mxu0 0.0
        %2560 = vmatpush1.xpose.msra.mxu0 0.0
        %2561 = vmatprep.subr.mxu0 0.0
        %2562 = vmatpush1.xpose.msra.mxu0 %v1641
        %2563 = vmatprep.subr.mxu0 0.0
        %2564 = vmatpush2.xpose.msra.mxu0 0.0
        %2565 = vmatprep.subr.mxu0 0.0
        %2566 = vmatpush2.xpose.msra.mxu0 0.0
        %2567 = vmatprep.subr.mxu0 0.0
        %2568 = vmatpush2.xpose.msra.mxu0 0.0
        %2569 = vmatprep.subr.mxu0 0.0
        %2570 = vmatpush2.xpose.msra.mxu0 0.0
        %2571 = vmatprep.subr.mxu0 0.0
        %2572 = vmatpush2.xpose.msra.mxu0 0.0
        %2573 = vmatprep.subr.mxu0 0.0
        %2574 = vmatpush2.xpose.msra.mxu0 0.0
        %2575 = vmatprep.subr.mxu0 0.0
        %2576 = vmatpush2.xpose.msra.mxu0 0.0
        %2577 = vmatprep.subr.mxu0 0.0
        %2578 = vmatpush2.xpose.msra.mxu0 0.0
        %2579 = vmatprep.subr.mxu0 0.0
        %2580 = vmatpush2.xpose.msra.mxu0 0.0
        %2581 = vmatprep.subr.mxu0 0.0
        %2582 = vmatpush2.xpose.msra.mxu0 0.0
        %2583 = vmatprep.subr.mxu0 0.0
        %2584 = vmatpush2.xpose.msra.mxu0 0.0
        %2585 = vmatprep.subr.mxu0 0.0
        %2586 = vmatpush2.xpose.msra.mxu0 0.0
        %2587 = vmatprep.subr.mxu0 0.0
        %2588 = vmatpush2.xpose.msra.mxu0 0.0
        %2589 = vmatprep.subr.mxu0 0.0
        %2590 = vmatpush2.xpose.msra.mxu0 0.0
        %2591 = vmatprep.subr.mxu0 0.0
        %2592 = vmatpush2.xpose.msra.mxu0 0.0
        %2593 = vmatprep.subr.mxu0 0.0
        %2594 = vmatpush2.xpose.msra.mxu0 0.0
        %2595 = vmatprep.mubr.f32.mxu0 0.0
        %2596 = vmatmul.mubr.f32.gmra.mxu0 %v1357
        %v2597 = vpop.f32.mrf.mxu0
        %v2598 = vadd.f32 0.0, %v2597
        %v2599 = vpop.f32.mrf.mxu0
        %2600 = vdwg.mxu0
        %v2601 = vmul.f32 %v2598, 0.088388346
        %v2602 = vsel %vm2149, %v2601, -inf
        %2603 = vmax.xlane.f32.xlu0 %v2602
        %v2604 = vpop.xlane.xlu0 %2603
        %v2605 = vsub.f32 %v2601, %v2604
        %v2606 = vmul.f32 %v2605, 1.442695
        %v2607 = vpow.pop %v2606
        %v2608 = vsel %vm2149, %v2607, 0.0
        %2609 = vadd.xlane.f32.xlu0 %v2608
        %v2610 = vpop.xlane.xlu0 %2609
        %v2611 = vrcp.pop %v2610
        %v2612 = vmul.f32 %v2607, %v2611
        %v2614 = vsel %vm2149, %v2612, 0
        %2616 = vmatprep.subr.mxu0 0.0
        %2617 = vmatpush1.msra.mxu0 0.0
        %2618 = vmatprep.subr.mxu0 0.0
        %2619 = vmatpush1.msra.mxu0 0.0
        %2620 = vmatprep.subr.mxu0 0.0
        %2621 = vmatpush1.msra.mxu0 0.0
        %2622 = vmatprep.subr.mxu0 0.0
        %2623 = vmatpush1.msra.mxu0 0.0
        %2624 = vmatprep.subr.mxu0 0.0
        %2625 = vmatpush1.msra.mxu0 0.0
        %2626 = vmatprep.subr.mxu0 0.0
        %2627 = vmatpush1.msra.mxu0 0.0
        %2628 = vmatprep.subr.mxu0 0.0
        %2629 = vmatpush1.msra.mxu0 0.0
        %2630 = vmatprep.subr.mxu0 0.0
        %2631 = vmatpush1.msra.mxu0 0.0
        %2632 = vmatprep.subr.mxu0 0.0
        %2633 = vmatpush1.msra.mxu0 0.0
        %2634 = vmatprep.subr.mxu0 0.0
        %2635 = vmatpush1.msra.mxu0 0.0
        %2636 = vmatprep.subr.mxu0 0.0
        %2637 = vmatpush1.msra.mxu0 0.0
        %2638 = vmatprep.subr.mxu0 0.0
        %2639 = vmatpush1.msra.mxu0 0.0
        %2640 = vmatprep.subr.mxu0 0.0
        %2641 = vmatpush1.msra.mxu0 0.0
        %2642 = vmatprep.subr.mxu0 0.0
        %2643 = vmatpush1.msra.mxu0 0.0
        %2644 = vmatprep.subr.mxu0 0.0
        %2645 = vmatpush1.msra.mxu0 0.0
        %2646 = vmatprep.subr.mxu0 0.0
        %2647 = vmatpush1.msra.mxu0 %v1925
        %2648 = vmatprep.subr.mxu0 0.0
        %2649 = vmatpush2.msra.mxu0 0.0
        %2650 = vmatprep.subr.mxu0 0.0
        %2651 = vmatpush2.msra.mxu0 0.0
        %2652 = vmatprep.subr.mxu0 0.0
        %2653 = vmatpush2.msra.mxu0 0.0
        %2654 = vmatprep.subr.mxu0 0.0
        %2655 = vmatpush2.msra.mxu0 0.0
        %2656 = vmatprep.subr.mxu0 0.0
        %2657 = vmatpush2.msra.mxu0 0.0
        %2658 = vmatprep.subr.mxu0 0.0
        %2659 = vmatpush2.msra.mxu0 0.0
        %2660 = vmatprep.subr.mxu0 0.0
        %2661 = vmatpush2.msra.mxu0 0.0
        %2662 = vmatprep.subr.mxu0 0.0
        %2663 = vmatpush2.msra.mxu0 0.0
        %2664 = vmatprep.subr.mxu0 0.0
        %2665 = vmatpush2.msra.mxu0 0.0
        %2666 = vmatprep.subr.mxu0 0.0
        %2667 = vmatpush2.msra.mxu0 0.0
        %2668 = vmatprep.subr.mxu0 0.0
        %2669 = vmatpush2.msra.mxu0 0.0
        %2670 = vmatprep.subr.mxu0 0.0
        %2671 = vmatpush2.msra.mxu0 0.0
        %2672 = vmatprep.subr.mxu0 0.0
        %2673 = vmatpush2.msra.mxu0 0.0
        %2674 = vmatprep.subr.mxu0 0.0
        %2675 = vmatpush2.msra.mxu0 0.0
        %2676 = vmatprep.subr.mxu0 0.0
        %2677 = vmatpush2.msra.mxu0 0.0
        %2678 = vmatprep.subr.mxu0 0.0
        %2679 = vmatpush2.msra.mxu0 0.0
        %2680 = vmatprep.mubr.f32.mxu0 0.0
        %2681 = vmatmul.mubr.f32.gmra.mxu0 %v2614
        %v2682 = vpop.f32.mrf.mxu0
        %v2683 = vadd.f32 0.0, %v2682
        %v2684 = vpop.f32.mrf.mxu0
        %2685 = vdwg.mxu0
        %2686 = vmatprep.subr.mxu0 0.0
        %2687 = vmatpush1.msra.mxu0 %v1135
        %2688 = vmatprep.subr.mxu0 0.0
        %2689 = vmatpush1.msra.mxu0 %v1134
        %2690 = vmatprep.subr.mxu0 0.0
        %2691 = vmatpush1.msra.mxu0 %v1133
        %2692 = vmatprep.subr.mxu0 0.0
        %2693 = vmatpush1.msra.mxu0 %v1132
        %2694 = vmatprep.subr.mxu0 0.0
        %2695 = vmatpush1.msra.mxu0 %v1131
        %2696 = vmatprep.subr.mxu0 0.0
        %2697 = vmatpush1.msra.mxu0 %v1130
        %2698 = vmatprep.subr.mxu0 0.0
        %2699 = vmatpush1.msra.mxu0 %v1129
        %2700 = vmatprep.subr.mxu0 0.0
        %2701 = vmatpush1.msra.mxu0 %v1128
        %2702 = vmatprep.subr.mxu0 0.0
        %2703 = vmatpush1.msra.mxu0 %v1127
        %2704 = vmatprep.subr.mxu0 0.0
        %2705 = vmatpush1.msra.mxu0 %v1126
        %2706 = vmatprep.subr.mxu0 0.0
        %2707 = vmatpush1.msra.mxu0 %v1125
        %2708 = vmatprep.subr.mxu0 0.0
        %2709 = vmatpush1.msra.mxu0 %v1124
        %2710 = vmatprep.subr.mxu0 0.0
        %2711 = vmatpush1.msra.mxu0 %v1123
        %2712 = vmatprep.subr.mxu0 0.0
        %2713 = vmatpush1.msra.mxu0 %v1122
        %2714 = vmatprep.subr.mxu0 0.0
        %2715 = vmatpush1.msra.mxu0 %v1121
        %2716 = vmatprep.subr.mxu0 0.0
        %2717 = vmatpush1.msra.mxu0 %v1120
        %2718 = vmatprep.subr.mxu0 0.0
        %2719 = vmatpush2.msra.mxu0 0.0
        %2720 = vmatprep.subr.mxu0 0.0
        %2721 = vmatpush2.msra.mxu0 0.0
        %2722 = vmatprep.subr.mxu0 0.0
        %2723 = vmatpush2.msra.mxu0 0.0
        %2724 = vmatprep.subr.mxu0 0.0
        %2725 = vmatpush2.msra.mxu0 0.0
        %2726 = vmatprep.subr.mxu0 0.0
        %2727 = vmatpush2.msra.mxu0 0.0
        %2728 = vmatprep.subr.mxu0 0.0
        %2729 = vmatpush2.msra.mxu0 0.0
        %2730 = vmatprep.subr.mxu0 0.0
        %2731 = vmatpush2.msra.mxu0 0.0
        %2732 = vmatprep.subr.mxu0 0.0
        %2733 = vmatpush2.msra.mxu0 0.0
        %2734 = vmatprep.subr.mxu0 0.0
        %2735 = vmatpush2.msra.mxu0 0.0
        %2736 = vmatprep.subr.mxu0 0.0
        %2737 = vmatpush2.msra.mxu0 0.0
        %2738 = vmatprep.subr.mxu0 0.0
        %2739 = vmatpush2.msra.mxu0 0.0
        %2740 = vmatprep.subr.mxu0 0.0
        %2741 = vmatpush2.msra.mxu0 0.0
        %2742 = vmatprep.subr.mxu0 0.0
        %2743 = vmatpush2.msra.mxu0 0.0
        %2744 = vmatprep.subr.mxu0 0.0
        %2745 = vmatpush2.msra.mxu0 0.0
        %2746 = vmatprep.subr.mxu0 0.0
        %2747 = vmatpush2.msra.mxu0 0.0
        %2748 = vmatprep.subr.mxu0 0.0
        %2749 = vmatpush2.msra.mxu0 0.0
        %2750 = vmatprep.mubr.f32.mxu0 0.0
        %2751 = vmatmul.mubr.f32.gmra.mxu0 %v2683
        %v2752 = vpop.f32.mrf.mxu0
        %v2753 = vadd.f32 0.0, %v2752
        %v2754 = vpop.f32.mrf.mxu0
        %2755 = vdwg.mxu0
        %v2756 = vadd.f32 %v2530, %v2753
        %2757 = vmatprep.subr.mxu0 0.0
        %2758 = vmatpush1.xpose.msra.mxu0 0.0
        %2759 = vmatprep.subr.mxu0 0.0
        %2760 = vmatpush1.xpose.msra.mxu0 0.0
        %2761 = vmatprep.subr.mxu0 0.0
        %2762 = vmatpush1.xpose.msra.mxu0 0.0
        %2763 = vmatprep.subr.mxu0 0.0
        %2764 = vmatpush1.xpose.msra.mxu0 0.0
        %2765 = vmatprep.subr.mxu0 0.0
        %2766 = vmatpush1.xpose.msra.mxu0 0.0
        %2767 = vmatprep.subr.mxu0 0.0
        %2768 = vmatpush1.xpose.msra.mxu0 0.0
        %2769 = vmatprep.subr.mxu0 0.0
        %2770 = vmatpush1.xpose.msra.mxu0 0.0
        %2771 = vmatprep.subr.mxu0 0.0
        %2772 = vmatpush1.xpose.msra.mxu0 0.0
        %2773 = vmatprep.subr.mxu0 0.0
        %2774 = vmatpush1.xpose.msra.mxu0 0.0
        %2775 = vmatprep.subr.mxu0 0.0
        %2776 = vmatpush1.xpose.msra.mxu0 0.0
        %2777 = vmatprep.subr.mxu0 0.0
        %2778 = vmatpush1.xpose.msra.mxu0 0.0
        %2779 = vmatprep.subr.mxu0 0.0
        %2780 = vmatpush1.xpose.msra.mxu0 0.0
        %2781 = vmatprep.subr.mxu0 0.0
        %2782 = vmatpush1.xpose.msra.mxu0 0.0
        %2783 = vmatprep.subr.mxu0 0.0
        %2784 = vmatpush1.xpose.msra.mxu0 0.0
        %2785 = vmatprep.subr.mxu0 0.0
        %2786 = vmatpush1.xpose.msra.mxu0 0.0
        %2787 = vmatprep.subr.mxu0 0.0
        %2788 = vmatpush1.xpose.msra.mxu0 %v1643
        %2789 = vmatprep.subr.mxu0 0.0
        %2790 = vmatpush2.xpose.msra.mxu0 0.0
        %2791 = vmatprep.subr.mxu0 0.0
        %2792 = vmatpush2.xpose.msra.mxu0 0.0
        %2793 = vmatprep.subr.mxu0 0.0
        %2794 = vmatpush2.xpose.msra.mxu0 0.0
        %2795 = vmatprep.subr.mxu0 0.0
        %2796 = vmatpush2.xpose.msra.mxu0 0.0
        %2797 = vmatprep.subr.mxu0 0.0
        %2798 = vmatpush2.xpose.msra.mxu0 0.0
        %2799 = vmatprep.subr.mxu0 0.0
        %2800 = vmatpush2.xpose.msra.mxu0 0.0
        %2801 = vmatprep.subr.mxu0 0.0
        %2802 = vmatpush2.xpose.msra.mxu0 0.0
        %2803 = vmatprep.subr.mxu0 0.0
        %2804 = vmatpush2.xpose.msra.mxu0 0.0
        %2805 = vmatprep.subr.mxu0 0.0
        %2806 = vmatpush2.xpose.msra.mxu0 0.0
        %2807 = vmatprep.subr.mxu0 0.0
        %2808 = vmatpush2.xpose.msra.mxu0 0.0
        %2809 = vmatprep.subr.mxu0 0.0
        %2810 = vmatpush2.xpose.msra.mxu0 0.0
        %2811 = vmatprep.subr.mxu0 0.0
        %2812 = vmatpush2.xpose.msra.mxu0 0.0
        %2813 = vmatprep.subr.mxu0 0.0
        %2814 = vmatpush2.xpose.msra.mxu0 0.0
        %2815 = vmatprep.subr.mxu0 0.0
        %2816 = vmatpush2.xpose.msra.mxu0 0.0
        %2817 = vmatprep.subr.mxu0 0.0
        %2818 = vmatpush2.xpose.msra.mxu0 0.0
        %2819 = vmatprep.subr.mxu0 0.0
        %2820 = vmatpush2.xpose.msra.mxu0 0.0
        %2821 = vmatprep.mubr.f32.mxu0 0.0
        %2822 = vmatmul.mubr.f32.gmra.mxu0 %v1359
        %v2823 = vpop.f32.mrf.mxu0
        %v2824 = vadd.f32 0.0, %v2823
        %v2825 = vpop.f32.mrf.mxu0
        %2826 = vdwg.mxu0
        %v2827 = vmul.f32 %v2824, 0.088388346
        %v2828 = vsel %vm2149, %v2827, -inf
        %2829 = vmax.xlane.f32.xlu0 %v2828
        %v2830 = vpop.xlane.xlu0 %2829
        %v2831 = vsub.f32 %v2827, %v2830
        %v2832 = vmul.f32 %v2831, 1.442695
        %v2833 = vpow.pop %v2832
        %v2834 = vsel %vm2149, %v2833, 0.0
        %2835 = vadd.xlane.f32.xlu0 %v2834
        %v2836 = vpop.xlane.xlu0 %2835
        %v2837 = vrcp.pop %v2836
        %v2838 = vmul.f32 %v2833, %v2837
        %v2840 = vsel %vm2149, %v2838, 0
        %2842 = vmatprep.subr.mxu0 0.0
        %2843 = vmatpush1.msra.mxu0 0.0
        %2844 = vmatprep.subr.mxu0 0.0
        %2845 = vmatpush1.msra.mxu0 0.0
        %2846 = vmatprep.subr.mxu0 0.0
        %2847 = vmatpush1.msra.mxu0 0.0
        %2848 = vmatprep.subr.mxu0 0.0
        %2849 = vmatpush1.msra.mxu0 0.0
        %2850 = vmatprep.subr.mxu0 0.0
        %2851 = vmatpush1.msra.mxu0 0.0
        %2852 = vmatprep.subr.mxu0 0.0
        %2853 = vmatpush1.msra.mxu0 0.0
        %2854 = vmatprep.subr.mxu0 0.0
        %2855 = vmatpush1.msra.mxu0 0.0
        %2856 = vmatprep.subr.mxu0 0.0
        %2857 = vmatpush1.msra.mxu0 0.0
        %2858 = vmatprep.subr.mxu0 0.0
        %2859 = vmatpush1.msra.mxu0 0.0
        %2860 = vmatprep.subr.mxu0 0.0
        %2861 = vmatpush1.msra.mxu0 0.0
        %2862 = vmatprep.subr.mxu0 0.0
        %2863 = vmatpush1.msra.mxu0 0.0
        %2864 = vmatprep.subr.mxu0 0.0
        %2865 = vmatpush1.msra.mxu0 0.0
        %2866 = vmatprep.subr.mxu0 0.0
        %2867 = vmatpush1.msra.mxu0 0.0
        %2868 = vmatprep.subr.mxu0 0.0
        %2869 = vmatpush1.msra.mxu0 0.0
        %2870 = vmatprep.subr.mxu0 0.0
        %2871 = vmatpush1.msra.mxu0 0.0
        %2872 = vmatprep.subr.mxu0 0.0
        %2873 = vmatpush1.msra.mxu0 %v1927
        %2874 = vmatprep.subr.mxu0 0.0
        %2875 = vmatpush2.msra.mxu0 0.0
        %2876 = vmatprep.subr.mxu0 0.0
        %2877 = vmatpush2.msra.mxu0 0.0
        %2878 = vmatprep.subr.mxu0 0.0
        %2879 = vmatpush2.msra.mxu0 0.0
        %2880 = vmatprep.subr.mxu0 0.0
        %2881 = vmatpush2.msra.mxu0 0.0
        %2882 = vmatprep.subr.mxu0 0.0
        %2883 = vmatpush2.msra.mxu0 0.0
        %2884 = vmatprep.subr.mxu0 0.0
        %2885 = vmatpush2.msra.mxu0 0.0
        %2886 = vmatprep.subr.mxu0 0.0
        %2887 = vmatpush2.msra.mxu0 0.0
        %2888 = vmatprep.subr.mxu0 0.0
        %2889 = vmatpush2.msra.mxu0 0.0
        %2890 = vmatprep.subr.mxu0 0.0
        %2891 = vmatpush2.msra.mxu0 0.0
        %2892 = vmatprep.subr.mxu0 0.0
        %2893 = vmatpush2.msra.mxu0 0.0
        %2894 = vmatprep.subr.mxu0 0.0
        %2895 = vmatpush2.msra.mxu0 0.0
        %2896 = vmatprep.subr.mxu0 0.0
        %2897 = vmatpush2.msra.mxu0 0.0
        %2898 = vmatprep.subr.mxu0 0.0
        %2899 = vmatpush2.msra.mxu0 0.0
        %2900 = vmatprep.subr.mxu0 0.0
        %2901 = vmatpush2.msra.mxu0 0.0
        %2902 = vmatprep.subr.mxu0 0.0
        %2903 = vmatpush2.msra.mxu0 0.0
        %2904 = vmatprep.subr.mxu0 0.0
        %2905 = vmatpush2.msra.mxu0 0.0
        %2906 = vmatprep.mubr.f32.mxu0 0.0
        %2907 = vmatmul.mubr.f32.gmra.mxu0 %v2840
        %v2908 = vpop.f32.mrf.mxu0
        %v2909 = vadd.f32 0.0, %v2908
        %v2910 = vpop.f32.mrf.mxu0
        %2911 = vdwg.mxu0
        %2912 = vmatprep.subr.mxu0 0.0
        %2913 = vmatpush1.msra.mxu0 %v1151
        %2914 = vmatprep.subr.mxu0 0.0
        %2915 = vmatpush1.msra.mxu0 %v1150
        %2916 = vmatprep.subr.mxu0 0.0
        %2917 = vmatpush1.msra.mxu0 %v1149
        %2918 = vmatprep.subr.mxu0 0.0
        %2919 = vmatpush1.msra.mxu0 %v1148
        %2920 = vmatprep.subr.mxu0 0.0
        %2921 = vmatpush1.msra.mxu0 %v1147
        %2922 = vmatprep.subr.mxu0 0.0
        %2923 = vmatpush1.msra.mxu0 %v1146
        %2924 = vmatprep.subr.mxu0 0.0
        %2925 = vmatpush1.msra.mxu0 %v1145
        %2926 = vmatprep.subr.mxu0 0.0
        %2927 = vmatpush1.msra.mxu0 %v1144
        %2928 = vmatprep.subr.mxu0 0.0
        %2929 = vmatpush1.msra.mxu0 %v1143
        %2930 = vmatprep.subr.mxu0 0.0
        %2931 = vmatpush1.msra.mxu0 %v1142
        %2932 = vmatprep.subr.mxu0 0.0
        %2933 = vmatpush1.msra.mxu0 %v1141
        %2934 = vmatprep.subr.mxu0 0.0
        %2935 = vmatpush1.msra.mxu0 %v1140
        %2936 = vmatprep.subr.mxu0 0.0
        %2937 = vmatpush1.msra.mxu0 %v1139
        %2938 = vmatprep.subr.mxu0 0.0
        %2939 = vmatpush1.msra.mxu0 %v1138
        %2940 = vmatprep.subr.mxu0 0.0
        %2941 = vmatpush1.msra.mxu0 %v1137
        %2942 = vmatprep.subr.mxu0 0.0
        %2943 = vmatpush1.msra.mxu0 %v1136
        %2944 = vmatprep.subr.mxu0 0.0
        %2945 = vmatpush2.msra.mxu0 0.0
        %2946 = vmatprep.subr.mxu0 0.0
        %2947 = vmatpush2.msra.mxu0 0.0
        %2948 = vmatprep.subr.mxu0 0.0
        %2949 = vmatpush2.msra.mxu0 0.0
        %2950 = vmatprep.subr.mxu0 0.0
        %2951 = vmatpush2.msra.mxu0 0.0
        %2952 = vmatprep.subr.mxu0 0.0
        %2953 = vmatpush2.msra.mxu0 0.0
        %2954 = vmatprep.subr.mxu0 0.0
        %2955 = vmatpush2.msra.mxu0 0.0
        %2956 = vmatprep.subr.mxu0 0.0
        %2957 = vmatpush2.msra.mxu0 0.0
        %2958 = vmatprep.subr.mxu0 0.0
        %2959 = vmatpush2.msra.mxu0 0.0
        %2960 = vmatprep.subr.mxu0 0.0
        %2961 = vmatpush2.msra.mxu0 0.0
        %2962 = vmatprep.subr.mxu0 0.0
        %2963 = vmatpush2.msra.mxu0 0.0
        %2964 = vmatprep.subr.mxu0 0.0
        %2965 = vmatpush2.msra.mxu0 0.0
        %2966 = vmatprep.subr.mxu0 0.0
        %2967 = vmatpush2.msra.mxu0 0.0
        %2968 = vmatprep.subr.mxu0 0.0
        %2969 = vmatpush2.msra.mxu0 0.0
        %2970 = vmatprep.subr.mxu0 0.0
        %2971 = vmatpush2.msra.mxu0 0.0
        %2972 = vmatprep.subr.mxu0 0.0
        %2973 = vmatpush2.msra.mxu0 0.0
        %2974 = vmatprep.subr.mxu0 0.0
        %2975 = vmatpush2.msra.mxu0 0.0
        %2976 = vmatprep.mubr.f32.mxu0 0.0
        %2977 = vmatmul.mubr.f32.gmra.mxu0 %v2909
        %v2978 = vpop.f32.mrf.mxu0
        %v2979 = vadd.f32 0.0, %v2978
        %v2980 = vpop.f32.mrf.mxu0
        %2981 = vdwg.mxu0
        %v2982 = vadd.f32 %v2756, %v2979
        %2983 = vmatprep.subr.mxu0 0.0
        %2984 = vmatpush1.xpose.msra.mxu0 0.0
        %2985 = vmatprep.subr.mxu0 0.0
        %2986 = vmatpush1.xpose.msra.mxu0 0.0
        %2987 = vmatprep.subr.mxu0 0.0
        %2988 = vmatpush1.xpose.msra.mxu0 0.0
        %2989 = vmatprep.subr.mxu0 0.0
        %2990 = vmatpush1.xpose.msra.mxu0 0.0
        %2991 = vmatprep.subr.mxu0 0.0
        %2992 = vmatpush1.xpose.msra.mxu0 0.0
        %2993 = vmatprep.subr.mxu0 0.0
        %2994 = vmatpush1.xpose.msra.mxu0 0.0
        %2995 = vmatprep.subr.mxu0 0.0
        %2996 = vmatpush1.xpose.msra.mxu0 0.0
        %2997 = vmatprep.subr.mxu0 0.0
        %2998 = vmatpush1.xpose.msra.mxu0 0.0
        %2999 = vmatprep.subr.mxu0 0.0
        %3000 = vmatpush1.xpose.msra.mxu0 0.0
        %3001 = vmatprep.subr.mxu0 0.0
        %3002 = vmatpush1.xpose.msra.mxu0 0.0
        %3003 = vmatprep.subr.mxu0 0.0
        %3004 = vmatpush1.xpose.msra.mxu0 0.0
        %3005 = vmatprep.subr.mxu0 0.0
        %3006 = vmatpush1.xpose.msra.mxu0 0.0
        %3007 = vmatprep.subr.mxu0 0.0
        %3008 = vmatpush1.xpose.msra.mxu0 0.0
        %3009 = vmatprep.subr.mxu0 0.0
        %3010 = vmatpush1.xpose.msra.mxu0 0.0
        %3011 = vmatprep.subr.mxu0 0.0
        %3012 = vmatpush1.xpose.msra.mxu0 0.0
        %3013 = vmatprep.subr.mxu0 0.0
        %3014 = vmatpush1.xpose.msra.mxu0 %v1712
        %3015 = vmatprep.subr.mxu0 0.0
        %3016 = vmatpush2.xpose.msra.mxu0 0.0
        %3017 = vmatprep.subr.mxu0 0.0
        %3018 = vmatpush2.xpose.msra.mxu0 0.0
        %3019 = vmatprep.subr.mxu0 0.0
        %3020 = vmatpush2.xpose.msra.mxu0 0.0
        %3021 = vmatprep.subr.mxu0 0.0
        %3022 = vmatpush2.xpose.msra.mxu0 0.0
        %3023 = vmatprep.subr.mxu0 0.0
        %3024 = vmatpush2.xpose.msra.mxu0 0.0
        %3025 = vmatprep.subr.mxu0 0.0
        %3026 = vmatpush2.xpose.msra.mxu0 0.0
        %3027 = vmatprep.subr.mxu0 0.0
        %3028 = vmatpush2.xpose.msra.mxu0 0.0
        %3029 = vmatprep.subr.mxu0 0.0
        %3030 = vmatpush2.xpose.msra.mxu0 0.0
        %3031 = vmatprep.subr.mxu0 0.0
        %3032 = vmatpush2.xpose.msra.mxu0 0.0
        %3033 = vmatprep.subr.mxu0 0.0
        %3034 = vmatpush2.xpose.msra.mxu0 0.0
        %3035 = vmatprep.subr.mxu0 0.0
        %3036 = vmatpush2.xpose.msra.mxu0 0.0
        %3037 = vmatprep.subr.mxu0 0.0
        %3038 = vmatpush2.xpose.msra.mxu0 0.0
        %3039 = vmatprep.subr.mxu0 0.0
        %3040 = vmatpush2.xpose.msra.mxu0 0.0
        %3041 = vmatprep.subr.mxu0 0.0
        %3042 = vmatpush2.xpose.msra.mxu0 0.0
        %3043 = vmatprep.subr.mxu0 0.0
        %3044 = vmatpush2.xpose.msra.mxu0 0.0
        %3045 = vmatprep.subr.mxu0 0.0
        %3046 = vmatpush2.xpose.msra.mxu0 0.0
        %3047 = vmatprep.mubr.f32.mxu0 0.0
        %3048 = vmatmul.mubr.f32.gmra.mxu0 %v1428
        %v3049 = vpop.f32.mrf.mxu0
        %v3050 = vadd.f32 0.0, %v3049
        %v3051 = vpop.f32.mrf.mxu0
        %3052 = vdwg.mxu0
        %v3053 = vmul.f32 %v3050, 0.088388346
        %v3054 = vsel %vm2149, %v3053, -inf
        %3055 = vmax.xlane.f32.xlu0 %v3054
        %v3056 = vpop.xlane.xlu0 %3055
        %v3057 = vsub.f32 %v3053, %v3056
        %v3058 = vmul.f32 %v3057, 1.442695
        %v3059 = vpow.pop %v3058
        %v3060 = vsel %vm2149, %v3059, 0.0
        %3061 = vadd.xlane.f32.xlu0 %v3060
        %v3062 = vpop.xlane.xlu0 %3061
        %v3063 = vrcp.pop %v3062
        %v3064 = vmul.f32 %v3059, %v3063
        %v3066 = vsel %vm2149, %v3064, 0
        %3068 = vmatprep.subr.mxu0 0.0
        %3069 = vmatpush1.msra.mxu0 0.0
        %3070 = vmatprep.subr.mxu0 0.0
        %3071 = vmatpush1.msra.mxu0 0.0
        %3072 = vmatprep.subr.mxu0 0.0
        %3073 = vmatpush1.msra.mxu0 0.0
        %3074 = vmatprep.subr.mxu0 0.0
        %3075 = vmatpush1.msra.mxu0 0.0
        %3076 = vmatprep.subr.mxu0 0.0
        %3077 = vmatpush1.msra.mxu0 0.0
        %3078 = vmatprep.subr.mxu0 0.0
        %3079 = vmatpush1.msra.mxu0 0.0
        %3080 = vmatprep.subr.mxu0 0.0
        %3081 = vmatpush1.msra.mxu0 0.0
        %3082 = vmatprep.subr.mxu0 0.0
        %3083 = vmatpush1.msra.mxu0 0.0
        %3084 = vmatprep.subr.mxu0 0.0
        %3085 = vmatpush1.msra.mxu0 0.0
        %3086 = vmatprep.subr.mxu0 0.0
        %3087 = vmatpush1.msra.mxu0 0.0
        %3088 = vmatprep.subr.mxu0 0.0
        %3089 = vmatpush1.msra.mxu0 0.0
        %3090 = vmatprep.subr.mxu0 0.0
        %3091 = vmatpush1.msra.mxu0 0.0
        %3092 = vmatprep.subr.mxu0 0.0
        %3093 = vmatpush1.msra.mxu0 0.0
        %3094 = vmatprep.subr.mxu0 0.0
        %3095 = vmatpush1.msra.mxu0 0.0
        %3096 = vmatprep.subr.mxu0 0.0
        %3097 = vmatpush1.msra.mxu0 0.0
        %3098 = vmatprep.subr.mxu0 0.0
        %3099 = vmatpush1.msra.mxu0 %v1996
        %3100 = vmatprep.subr.mxu0 0.0
        %3101 = vmatpush2.msra.mxu0 0.0
        %3102 = vmatprep.subr.mxu0 0.0
        %3103 = vmatpush2.msra.mxu0 0.0
        %3104 = vmatprep.subr.mxu0 0.0
        %3105 = vmatpush2.msra.mxu0 0.0
        %3106 = vmatprep.subr.mxu0 0.0
        %3107 = vmatpush2.msra.mxu0 0.0
        %3108 = vmatprep.subr.mxu0 0.0
        %3109 = vmatpush2.msra.mxu0 0.0
        %3110 = vmatprep.subr.mxu0 0.0
        %3111 = vmatpush2.msra.mxu0 0.0
        %3112 = vmatprep.subr.mxu0 0.0
        %3113 = vmatpush2.msra.mxu0 0.0
        %3114 = vmatprep.subr.mxu0 0.0
        %3115 = vmatpush2.msra.mxu0 0.0
        %3116 = vmatprep.subr.mxu0 0.0
        %3117 = vmatpush2.msra.mxu0 0.0
        %3118 = vmatprep.subr.mxu0 0.0
        %3119 = vmatpush2.msra.mxu0 0.0
        %3120 = vmatprep.subr.mxu0 0.0
        %3121 = vmatpush2.msra.mxu0 0.0
        %3122 = vmatprep.subr.mxu0 0.0
        %3123 = vmatpush2.msra.mxu0 0.0
        %3124 = vmatprep.subr.mxu0 0.0
        %3125 = vmatpush2.msra.mxu0 0.0
        %3126 = vmatprep.subr.mxu0 0.0
        %3127 = vmatpush2.msra.mxu0 0.0
        %3128 = vmatprep.subr.mxu0 0.0
        %3129 = vmatpush2.msra.mxu0 0.0
        %3130 = vmatprep.subr.mxu0 0.0
        %3131 = vmatpush2.msra.mxu0 0.0
        %3132 = vmatprep.mubr.f32.mxu0 0.0
        %3133 = vmatmul.mubr.f32.gmra.mxu0 %v3066
        %v3134 = vpop.f32.mrf.mxu0
        %v3135 = vadd.f32 0.0, %v3134
        %v3136 = vpop.f32.mrf.mxu0
        %3137 = vdwg.mxu0
        %3138 = vmatprep.subr.mxu0 0.0
        %3139 = vmatpush1.msra.mxu0 %v1167
        %3140 = vmatprep.subr.mxu0 0.0
        %3141 = vmatpush1.msra.mxu0 %v1166
        %3142 = vmatprep.subr.mxu0 0.0
        %3143 = vmatpush1.msra.mxu0 %v1165
        %3144 = vmatprep.subr.mxu0 0.0
        %3145 = vmatpush1.msra.mxu0 %v1164
        %3146 = vmatprep.subr.mxu0 0.0
        %3147 = vmatpush1.msra.mxu0 %v1163
        %3148 = vmatprep.subr.mxu0 0.0
        %3149 = vmatpush1.msra.mxu0 %v1162
        %3150 = vmatprep.subr.mxu0 0.0
        %3151 = vmatpush1.msra.mxu0 %v1161
        %3152 = vmatprep.subr.mxu0 0.0
        %3153 = vmatpush1.msra.mxu0 %v1160
        %3154 = vmatprep.subr.mxu0 0.0
        %3155 = vmatpush1.msra.mxu0 %v1159
        %3156 = vmatprep.subr.mxu0 0.0
        %3157 = vmatpush1.msra.mxu0 %v1158
        %3158 = vmatprep.subr.mxu0 0.0
        %3159 = vmatpush1.msra.mxu0 %v1157
        %3160 = vmatprep.subr.mxu0 0.0
        %3161 = vmatpush1.msra.mxu0 %v1156
        %3162 = vmatprep.subr.mxu0 0.0
        %3163 = vmatpush1.msra.mxu0 %v1155
        %3164 = vmatprep.subr.mxu0 0.0
        %3165 = vmatpush1.msra.mxu0 %v1154
        %3166 = vmatprep.subr.mxu0 0.0
        %3167 = vmatpush1.msra.mxu0 %v1153
        %3168 = vmatprep.subr.mxu0 0.0
        %3169 = vmatpush1.msra.mxu0 %v1152
        %3170 = vmatprep.subr.mxu0 0.0
        %3171 = vmatpush2.msra.mxu0 0.0
        %3172 = vmatprep.subr.mxu0 0.0
        %3173 = vmatpush2.msra.mxu0 0.0
        %3174 = vmatprep.subr.mxu0 0.0
        %3175 = vmatpush2.msra.mxu0 0.0
        %3176 = vmatprep.subr.mxu0 0.0
        %3177 = vmatpush2.msra.mxu0 0.0
        %3178 = vmatprep.subr.mxu0 0.0
        %3179 = vmatpush2.msra.mxu0 0.0
        %3180 = vmatprep.subr.mxu0 0.0
        %3181 = vmatpush2.msra.mxu0 0.0
        %3182 = vmatprep.subr.mxu0 0.0
        %3183 = vmatpush2.msra.mxu0 0.0
        %3184 = vmatprep.subr.mxu0 0.0
        %3185 = vmatpush2.msra.mxu0 0.0
        %3186 = vmatprep.subr.mxu0 0.0
        %3187 = vmatpush2.msra.mxu0 0.0
        %3188 = vmatprep.subr.mxu0 0.0
        %3189 = vmatpush2.msra.mxu0 0.0
        %3190 = vmatprep.subr.mxu0 0.0
        %3191 = vmatpush2.msra.mxu0 0.0
        %3192 = vmatprep.subr.mxu0 0.0
        %3193 = vmatpush2.msra.mxu0 0.0
        %3194 = vmatprep.subr.mxu0 0.0
        %3195 = vmatpush2.msra.mxu0 0.0
        %3196 = vmatprep.subr.mxu0 0.0
        %3197 = vmatpush2.msra.mxu0 0.0
        %3198 = vmatprep.subr.mxu0 0.0
        %3199 = vmatpush2.msra.mxu0 0.0
        %3200 = vmatprep.subr.mxu0 0.0
        %3201 = vmatpush2.msra.mxu0 0.0
        %3202 = vmatprep.mubr.f32.mxu0 0.0
        %3203 = vmatmul.mubr.f32.gmra.mxu0 %v3135
        %v3204 = vpop.f32.mrf.mxu0
        %v3205 = vadd.f32 0.0, %v3204
        %v3206 = vpop.f32.mrf.mxu0
        %3207 = vdwg.mxu0
        %v3208 = vadd.f32 %v2982, %v3205
        %3209 = vmatprep.subr.mxu0 0.0
        %3210 = vmatpush1.xpose.msra.mxu0 0.0
        %3211 = vmatprep.subr.mxu0 0.0
        %3212 = vmatpush1.xpose.msra.mxu0 0.0
        %3213 = vmatprep.subr.mxu0 0.0
        %3214 = vmatpush1.xpose.msra.mxu0 0.0
        %3215 = vmatprep.subr.mxu0 0.0
        %3216 = vmatpush1.xpose.msra.mxu0 0.0
        %3217 = vmatprep.subr.mxu0 0.0
        %3218 = vmatpush1.xpose.msra.mxu0 0.0
        %3219 = vmatprep.subr.mxu0 0.0
        %3220 = vmatpush1.xpose.msra.mxu0 0.0
        %3221 = vmatprep.subr.mxu0 0.0
        %3222 = vmatpush1.xpose.msra.mxu0 0.0
        %3223 = vmatprep.subr.mxu0 0.0
        %3224 = vmatpush1.xpose.msra.mxu0 0.0
        %3225 = vmatprep.subr.mxu0 0.0
        %3226 = vmatpush1.xpose.msra.mxu0 0.0
        %3227 = vmatprep.subr.mxu0 0.0
        %3228 = vmatpush1.xpose.msra.mxu0 0.0
        %3229 = vmatprep.subr.mxu0 0.0
        %3230 = vmatpush1.xpose.msra.mxu0 0.0
        %3231 = vmatprep.subr.mxu0 0.0
        %3232 = vmatpush1.xpose.msra.mxu0 0.0
        %3233 = vmatprep.subr.mxu0 0.0
        %3234 = vmatpush1.xpose.msra.mxu0 0.0
        %3235 = vmatprep.subr.mxu0 0.0
        %3236 = vmatpush1.xpose.msra.mxu0 0.0
        %3237 = vmatprep.subr.mxu0 0.0
        %3238 = vmatpush1.xpose.msra.mxu0 0.0
        %3239 = vmatprep.subr.mxu0 0.0
        %3240 = vmatpush1.xpose.msra.mxu0 %v1714
        %3241 = vmatprep.subr.mxu0 0.0
        %3242 = vmatpush2.xpose.msra.mxu0 0.0
        %3243 = vmatprep.subr.mxu0 0.0
        %3244 = vmatpush2.xpose.msra.mxu0 0.0
        %3245 = vmatprep.subr.mxu0 0.0
        %3246 = vmatpush2.xpose.msra.mxu0 0.0
        %3247 = vmatprep.subr.mxu0 0.0
        %3248 = vmatpush2.xpose.msra.mxu0 0.0
        %3249 = vmatprep.subr.mxu0 0.0
        %3250 = vmatpush2.xpose.msra.mxu0 0.0
        %3251 = vmatprep.subr.mxu0 0.0
        %3252 = vmatpush2.xpose.msra.mxu0 0.0
        %3253 = vmatprep.subr.mxu0 0.0
        %3254 = vmatpush2.xpose.msra.mxu0 0.0
        %3255 = vmatprep.subr.mxu0 0.0
        %3256 = vmatpush2.xpose.msra.mxu0 0.0
        %3257 = vmatprep.subr.mxu0 0.0
        %3258 = vmatpush2.xpose.msra.mxu0 0.0
        %3259 = vmatprep.subr.mxu0 0.0
        %3260 = vmatpush2.xpose.msra.mxu0 0.0
        %3261 = vmatprep.subr.mxu0 0.0
        %3262 = vmatpush2.xpose.msra.mxu0 0.0
        %3263 = vmatprep.subr.mxu0 0.0
        %3264 = vmatpush2.xpose.msra.mxu0 0.0
        %3265 = vmatprep.subr.mxu0 0.0
        %3266 = vmatpush2.xpose.msra.mxu0 0.0
        %3267 = vmatprep.subr.mxu0 0.0
        %3268 = vmatpush2.xpose.msra.mxu0 0.0
        %3269 = vmatprep.subr.mxu0 0.0
        %3270 = vmatpush2.xpose.msra.mxu0 0.0
        %3271 = vmatprep.subr.mxu0 0.0
        %3272 = vmatpush2.xpose.msra.mxu0 0.0
        %3273 = vmatprep.mubr.f32.mxu0 0.0
        %3274 = vmatmul.mubr.f32.gmra.mxu0 %v1430
        %v3275 = vpop.f32.mrf.mxu0
        %v3276 = vadd.f32 0.0, %v3275
        %v3277 = vpop.f32.mrf.mxu0
        %3278 = vdwg.mxu0
        %v3279 = vmul.f32 %v3276, 0.088388346
        %v3280 = vsel %vm2149, %v3279, -inf
        %3281 = vmax.xlane.f32.xlu0 %v3280
        %v3282 = vpop.xlane.xlu0 %3281
        %v3283 = vsub.f32 %v3279, %v3282
        %v3284 = vmul.f32 %v3283, 1.442695
        %v3285 = vpow.pop %v3284
        %v3286 = vsel %vm2149, %v3285, 0.0
        %3287 = vadd.xlane.f32.xlu0 %v3286
        %v3288 = vpop.xlane.xlu0 %3287
        %v3289 = vrcp.pop %v3288
        %v3290 = vmul.f32 %v3285, %v3289
        %v3292 = vsel %vm2149, %v3290, 0
        %3294 = vmatprep.subr.mxu0 0.0
        %3295 = vmatpush1.msra.mxu0 0.0
        %3296 = vmatprep.subr.mxu0 0.0
        %3297 = vmatpush1.msra.mxu0 0.0
        %3298 = vmatprep.subr.mxu0 0.0
        %3299 = vmatpush1.msra.mxu0 0.0
        %3300 = vmatprep.subr.mxu0 0.0
        %3301 = vmatpush1.msra.mxu0 0.0
        %3302 = vmatprep.subr.mxu0 0.0
        %3303 = vmatpush1.msra.mxu0 0.0
        %3304 = vmatprep.subr.mxu0 0.0
        %3305 = vmatpush1.msra.mxu0 0.0
        %3306 = vmatprep.subr.mxu0 0.0
        %3307 = vmatpush1.msra.mxu0 0.0
        %3308 = vmatprep.subr.mxu0 0.0
        %3309 = vmatpush1.msra.mxu0 0.0
        %3310 = vmatprep.subr.mxu0 0.0
        %3311 = vmatpush1.msra.mxu0 0.0
        %3312 = vmatprep.subr.mxu0 0.0
        %3313 = vmatpush1.msra.mxu0 0.0
        %3314 = vmatprep.subr.mxu0 0.0
        %3315 = vmatpush1.msra.mxu0 0.0
        %3316 = vmatprep.subr.mxu0 0.0
        %3317 = vmatpush1.msra.mxu0 0.0
        %3318 = vmatprep.subr.mxu0 0.0
        %3319 = vmatpush1.msra.mxu0 0.0
        %3320 = vmatprep.subr.mxu0 0.0
        %3321 = vmatpush1.msra.mxu0 0.0
        %3322 = vmatprep.subr.mxu0 0.0
        %3323 = vmatpush1.msra.mxu0 0.0
        %3324 = vmatprep.subr.mxu0 0.0
        %3325 = vmatpush1.msra.mxu0 %v1998
        %3326 = vmatprep.subr.mxu0 0.0
        %3327 = vmatpush2.msra.mxu0 0.0
        %3328 = vmatprep.subr.mxu0 0.0
        %3329 = vmatpush2.msra.mxu0 0.0
        %3330 = vmatprep.subr.mxu0 0.0
        %3331 = vmatpush2.msra.mxu0 0.0
        %3332 = vmatprep.subr.mxu0 0.0
        %3333 = vmatpush2.msra.mxu0 0.0
        %3334 = vmatprep.subr.mxu0 0.0
        %3335 = vmatpush2.msra.mxu0 0.0
        %3336 = vmatprep.subr.mxu0 0.0
        %3337 = vmatpush2.msra.mxu0 0.0
        %3338 = vmatprep.subr.mxu0 0.0
        %3339 = vmatpush2.msra.mxu0 0.0
        %3340 = vmatprep.subr.mxu0 0.0
        %3341 = vmatpush2.msra.mxu0 0.0
        %3342 = vmatprep.subr.mxu0 0.0
        %3343 = vmatpush2.msra.mxu0 0.0
        %3344 = vmatprep.subr.mxu0 0.0
        %3345 = vmatpush2.msra.mxu0 0.0
        %3346 = vmatprep.subr.mxu0 0.0
        %3347 = vmatpush2.msra.mxu0 0.0
        %3348 = vmatprep.subr.mxu0 0.0
        %3349 = vmatpush2.msra.mxu0 0.0
        %3350 = vmatprep.subr.mxu0 0.0
        %3351 = vmatpush2.msra.mxu0 0.0
        %3352 = vmatprep.subr.mxu0 0.0
        %3353 = vmatpush2.msra.mxu0 0.0
        %3354 = vmatprep.subr.mxu0 0.0
        %3355 = vmatpush2.msra.mxu0 0.0
        %3356 = vmatprep.subr.mxu0 0.0
        %3357 = vmatpush2.msra.mxu0 0.0
        %3358 = vmatprep.mubr.f32.mxu0 0.0
        %3359 = vmatmul.mubr.f32.gmra.mxu0 %v3292
        %v3360 = vpop.f32.mrf.mxu0
        %v3361 = vadd.f32 0.0, %v3360
        %v3362 = vpop.f32.mrf.mxu0
        %3363 = vdwg.mxu0
        %3364 = vmatprep.subr.mxu0 0.0
        %3365 = vmatpush1.msra.mxu0 %v1183
        %3366 = vmatprep.subr.mxu0 0.0
        %3367 = vmatpush1.msra.mxu0 %v1182
        %3368 = vmatprep.subr.mxu0 0.0
        %3369 = vmatpush1.msra.mxu0 %v1181
        %3370 = vmatprep.subr.mxu0 0.0
        %3371 = vmatpush1.msra.mxu0 %v1180
        %3372 = vmatprep.subr.mxu0 0.0
        %3373 = vmatpush1.msra.mxu0 %v1179
        %3374 = vmatprep.subr.mxu0 0.0
        %3375 = vmatpush1.msra.mxu0 %v1178
        %3376 = vmatprep.subr.mxu0 0.0
        %3377 = vmatpush1.msra.mxu0 %v1177
        %3378 = vmatprep.subr.mxu0 0.0
        %3379 = vmatpush1.msra.mxu0 %v1176
        %3380 = vmatprep.subr.mxu0 0.0
        %3381 = vmatpush1.msra.mxu0 %v1175
        %3382 = vmatprep.subr.mxu0 0.0
        %3383 = vmatpush1.msra.mxu0 %v1174
        %3384 = vmatprep.subr.mxu0 0.0
        %3385 = vmatpush1.msra.mxu0 %v1173
        %3386 = vmatprep.subr.mxu0 0.0
        %3387 = vmatpush1.msra.mxu0 %v1172
        %3388 = vmatprep.subr.mxu0 0.0
        %3389 = vmatpush1.msra.mxu0 %v1171
        %3390 = vmatprep.subr.mxu0 0.0
        %3391 = vmatpush1.msra.mxu0 %v1170
        %3392 = vmatprep.subr.mxu0 0.0
        %3393 = vmatpush1.msra.mxu0 %v1169
        %3394 = vmatprep.subr.mxu0 0.0
        %3395 = vmatpush1.msra.mxu0 %v1168
        %3396 = vmatprep.subr.mxu0 0.0
        %3397 = vmatpush2.msra.mxu0 0.0
        %3398 = vmatprep.subr.mxu0 0.0
        %3399 = vmatpush2.msra.mxu0 0.0
        %3400 = vmatprep.subr.mxu0 0.0
        %3401 = vmatpush2.msra.mxu0 0.0
        %3402 = vmatprep.subr.mxu0 0.0
        %3403 = vmatpush2.msra.mxu0 0.0
        %3404 = vmatprep.subr.mxu0 0.0
        %3405 = vmatpush2.msra.mxu0 0.0
        %3406 = vmatprep.subr.mxu0 0.0
        %3407 = vmatpush2.msra.mxu0 0.0
        %3408 = vmatprep.subr.mxu0 0.0
        %3409 = vmatpush2.msra.mxu0 0.0
        %3410 = vmatprep.subr.mxu0 0.0
        %3411 = vmatpush2.msra.mxu0 0.0
        %3412 = vmatprep.subr.mxu0 0.0
        %3413 = vmatpush2.msra.mxu0 0.0
        %3414 = vmatprep.subr.mxu0 0.0
        %3415 = vmatpush2.msra.mxu0 0.0
        %3416 = vmatprep.subr.mxu0 0.0
        %3417 = vmatpush2.msra.mxu0 0.0
        %3418 = vmatprep.subr.mxu0 0.0
        %3419 = vmatpush2.msra.mxu0 0.0
        %3420 = vmatprep.subr.mxu0 0.0
        %3421 = vmatpush2.msra.mxu0 0.0
        %3422 = vmatprep.subr.mxu0 0.0
        %3423 = vmatpush2.msra.mxu0 0.0
        %3424 = vmatprep.subr.mxu0 0.0
        %3425 = vmatpush2.msra.mxu0 0.0
        %3426 = vmatprep.subr.mxu0 0.0
        %3427 = vmatpush2.msra.mxu0 0.0
        %3428 = vmatprep.mubr.f32.mxu0 0.0
        %3429 = vmatmul.mubr.f32.gmra.mxu0 %v3361
        %v3430 = vpop.f32.mrf.mxu0
        %v3431 = vadd.f32 0.0, %v3430
        %v3432 = vpop.f32.mrf.mxu0
        %3433 = vdwg.mxu0
        %v3434 = vadd.f32 %v3208, %v3431
        %3435 = vmatprep.subr.mxu0 0.0
        %3436 = vmatpush1.xpose.msra.mxu0 0.0
        %3437 = vmatprep.subr.mxu0 0.0
        %3438 = vmatpush1.xpose.msra.mxu0 0.0
        %3439 = vmatprep.subr.mxu0 0.0
        %3440 = vmatpush1.xpose.msra.mxu0 0.0
        %3441 = vmatprep.subr.mxu0 0.0
        %3442 = vmatpush1.xpose.msra.mxu0 0.0
        %3443 = vmatprep.subr.mxu0 0.0
        %3444 = vmatpush1.xpose.msra.mxu0 0.0
        %3445 = vmatprep.subr.mxu0 0.0
        %3446 = vmatpush1.xpose.msra.mxu0 0.0
        %3447 = vmatprep.subr.mxu0 0.0
        %3448 = vmatpush1.xpose.msra.mxu0 0.0
        %3449 = vmatprep.subr.mxu0 0.0
        %3450 = vmatpush1.xpose.msra.mxu0 0.0
        %3451 = vmatprep.subr.mxu0 0.0
        %3452 = vmatpush1.xpose.msra.mxu0 0.0
        %3453 = vmatprep.subr.mxu0 0.0
        %3454 = vmatpush1.xpose.msra.mxu0 0.0
        %3455 = vmatprep.subr.mxu0 0.0
        %3456 = vmatpush1.xpose.msra.mxu0 0.0
        %3457 = vmatprep.subr.mxu0 0.0
        %3458 = vmatpush1.xpose.msra.mxu0 0.0
        %3459 = vmatprep.subr.mxu0 0.0
        %3460 = vmatpush1.xpose.msra.mxu0 0.0
        %3461 = vmatprep.subr.mxu0 0.0
        %3462 = vmatpush1.xpose.msra.mxu0 0.0
        %3463 = vmatprep.subr.mxu0 0.0
        %3464 = vmatpush1.xpose.msra.mxu0 0.0
        %3465 = vmatprep.subr.mxu0 0.0
        %3466 = vmatpush1.xpose.msra.mxu0 %v1783
        %3467 = vmatprep.subr.mxu0 0.0
        %3468 = vmatpush2.xpose.msra.mxu0 0.0
        %3469 = vmatprep.subr.mxu0 0.0
        %3470 = vmatpush2.xpose.msra.mxu0 0.0
        %3471 = vmatprep.subr.mxu0 0.0
        %3472 = vmatpush2.xpose.msra.mxu0 0.0
        %3473 = vmatprep.subr.mxu0 0.0
        %3474 = vmatpush2.xpose.msra.mxu0 0.0
        %3475 = vmatprep.subr.mxu0 0.0
        %3476 = vmatpush2.xpose.msra.mxu0 0.0
        %3477 = vmatprep.subr.mxu0 0.0
        %3478 = vmatpush2.xpose.msra.mxu0 0.0
        %3479 = vmatprep.subr.mxu0 0.0
        %3480 = vmatpush2.xpose.msra.mxu0 0.0
        %3481 = vmatprep.subr.mxu0 0.0
        %3482 = vmatpush2.xpose.msra.mxu0 0.0
        %3483 = vmatprep.subr.mxu0 0.0
        %3484 = vmatpush2.xpose.msra.mxu0 0.0
        %3485 = vmatprep.subr.mxu0 0.0
        %3486 = vmatpush2.xpose.msra.mxu0 0.0
        %3487 = vmatprep.subr.mxu0 0.0
        %3488 = vmatpush2.xpose.msra.mxu0 0.0
        %3489 = vmatprep.subr.mxu0 0.0
        %3490 = vmatpush2.xpose.msra.mxu0 0.0
        %3491 = vmatprep.subr.mxu0 0.0
        %3492 = vmatpush2.xpose.msra.mxu0 0.0
        %3493 = vmatprep.subr.mxu0 0.0
        %3494 = vmatpush2.xpose.msra.mxu0 0.0
        %3495 = vmatprep.subr.mxu0 0.0
        %3496 = vmatpush2.xpose.msra.mxu0 0.0
        %3497 = vmatprep.subr.mxu0 0.0
        %3498 = vmatpush2.xpose.msra.mxu0 0.0
        %3499 = vmatprep.mubr.f32.mxu0 0.0
        %3500 = vmatmul.mubr.f32.gmra.mxu0 %v1499
        %v3501 = vpop.f32.mrf.mxu0
        %v3502 = vadd.f32 0.0, %v3501
        %v3503 = vpop.f32.mrf.mxu0
        %3504 = vdwg.mxu0
        %v3505 = vmul.f32 %v3502, 0.088388346
        %v3506 = vsel %vm2149, %v3505, -inf
        %3507 = vmax.xlane.f32.xlu0 %v3506
        %v3508 = vpop.xlane.xlu0 %3507
        %v3509 = vsub.f32 %v3505, %v3508
        %v3510 = vmul.f32 %v3509, 1.442695
        %v3511 = vpow.pop %v3510
        %v3512 = vsel %vm2149, %v3511, 0.0
        %3513 = vadd.xlane.f32.xlu0 %v3512
        %v3514 = vpop.xlane.xlu0 %3513
        %v3515 = vrcp.pop %v3514
        %v3516 = vmul.f32 %v3511, %v3515
        %v3518 = vsel %vm2149, %v3516, 0
        %3520 = vmatprep.subr.mxu0 0.0
        %3521 = vmatpush1.msra.mxu0 0.0
        %3522 = vmatprep.subr.mxu0 0.0
        %3523 = vmatpush1.msra.mxu0 0.0
        %3524 = vmatprep.subr.mxu0 0.0
        %3525 = vmatpush1.msra.mxu0 0.0
        %3526 = vmatprep.subr.mxu0 0.0
        %3527 = vmatpush1.msra.mxu0 0.0
        %3528 = vmatprep.subr.mxu0 0.0
        %3529 = vmatpush1.msra.mxu0 0.0
        %3530 = vmatprep.subr.mxu0 0.0
        %3531 = vmatpush1.msra.mxu0 0.0
        %3532 = vmatprep.subr.mxu0 0.0
        %3533 = vmatpush1.msra.mxu0 0.0
        %3534 = vmatprep.subr.mxu0 0.0
        %3535 = vmatpush1.msra.mxu0 0.0
        %3536 = vmatprep.subr.mxu0 0.0
        %3537 = vmatpush1.msra.mxu0 0.0
        %3538 = vmatprep.subr.mxu0 0.0
        %3539 = vmatpush1.msra.mxu0 0.0
        %3540 = vmatprep.subr.mxu0 0.0
        %3541 = vmatpush1.msra.mxu0 0.0
        %3542 = vmatprep.subr.mxu0 0.0
        %3543 = vmatpush1.msra.mxu0 0.0
        %3544 = vmatprep.subr.mxu0 0.0
        %3545 = vmatpush1.msra.mxu0 0.0
        %3546 = vmatprep.subr.mxu0 0.0
        %3547 = vmatpush1.msra.mxu0 0.0
        %3548 = vmatprep.subr.mxu0 0.0
        %3549 = vmatpush1.msra.mxu0 0.0
        %3550 = vmatprep.subr.mxu0 0.0
        %3551 = vmatpush1.msra.mxu0 %v2067
        %3552 = vmatprep.subr.mxu0 0.0
        %3553 = vmatpush2.msra.mxu0 0.0
        %3554 = vmatprep.subr.mxu0 0.0
        %3555 = vmatpush2.msra.mxu0 0.0
        %3556 = vmatprep.subr.mxu0 0.0
        %3557 = vmatpush2.msra.mxu0 0.0
        %3558 = vmatprep.subr.mxu0 0.0
        %3559 = vmatpush2.msra.mxu0 0.0
        %3560 = vmatprep.subr.mxu0 0.0
        %3561 = vmatpush2.msra.mxu0 0.0
        %3562 = vmatprep.subr.mxu0 0.0
        %3563 = vmatpush2.msra.mxu0 0.0
        %3564 = vmatprep.subr.mxu0 0.0
        %3565 = vmatpush2.msra.mxu0 0.0
        %3566 = vmatprep.subr.mxu0 0.0
        %3567 = vmatpush2.msra.mxu0 0.0
        %3568 = vmatprep.subr.mxu0 0.0
        %3569 = vmatpush2.msra.mxu0 0.0
        %3570 = vmatprep.subr.mxu0 0.0
        %3571 = vmatpush2.msra.mxu0 0.0
        %3572 = vmatprep.subr.mxu0 0.0
        %3573 = vmatpush2.msra.mxu0 0.0
        %3574 = vmatprep.subr.mxu0 0.0
        %3575 = vmatpush2.msra.mxu0 0.0
        %3576 = vmatprep.subr.mxu0 0.0
        %3577 = vmatpush2.msra.mxu0 0.0
        %3578 = vmatprep.subr.mxu0 0.0
        %3579 = vmatpush2.msra.mxu0 0.0
        %3580 = vmatprep.subr.mxu0 0.0
        %3581 = vmatpush2.msra.mxu0 0.0
        %3582 = vmatprep.subr.mxu0 0.0
        %3583 = vmatpush2.msra.mxu0 0.0
        %3584 = vmatprep.mubr.f32.mxu0 0.0
        %3585 = vmatmul.mubr.f32.gmra.mxu0 %v3518
        %v3586 = vpop.f32.mrf.mxu0
        %v3587 = vadd.f32 0.0, %v3586
        %v3588 = vpop.f32.mrf.mxu0
        %3589 = vdwg.mxu0
        %3590 = vmatprep.subr.mxu0 0.0
        %3591 = vmatpush1.msra.mxu0 %v1199
        %3592 = vmatprep.subr.mxu0 0.0
        %3593 = vmatpush1.msra.mxu0 %v1198
        %3594 = vmatprep.subr.mxu0 0.0
        %3595 = vmatpush1.msra.mxu0 %v1197
        %3596 = vmatprep.subr.mxu0 0.0
        %3597 = vmatpush1.msra.mxu0 %v1196
        %3598 = vmatprep.subr.mxu0 0.0
        %3599 = vmatpush1.msra.mxu0 %v1195
        %3600 = vmatprep.subr.mxu0 0.0
        %3601 = vmatpush1.msra.mxu0 %v1194
        %3602 = vmatprep.subr.mxu0 0.0
        %3603 = vmatpush1.msra.mxu0 %v1193
        %3604 = vmatprep.subr.mxu0 0.0
        %3605 = vmatpush1.msra.mxu0 %v1192
        %3606 = vmatprep.subr.mxu0 0.0
        %3607 = vmatpush1.msra.mxu0 %v1191
        %3608 = vmatprep.subr.mxu0 0.0
        %3609 = vmatpush1.msra.mxu0 %v1190
        %3610 = vmatprep.subr.mxu0 0.0
        %3611 = vmatpush1.msra.mxu0 %v1189
        %3612 = vmatprep.subr.mxu0 0.0
        %3613 = vmatpush1.msra.mxu0 %v1188
        %3614 = vmatprep.subr.mxu0 0.0
        %3615 = vmatpush1.msra.mxu0 %v1187
        %3616 = vmatprep.subr.mxu0 0.0
        %3617 = vmatpush1.msra.mxu0 %v1186
        %3618 = vmatprep.subr.mxu0 0.0
        %3619 = vmatpush1.msra.mxu0 %v1185
        %3620 = vmatprep.subr.mxu0 0.0
        %3621 = vmatpush1.msra.mxu0 %v1184
        %3622 = vmatprep.subr.mxu0 0.0
        %3623 = vmatpush2.msra.mxu0 0.0
        %3624 = vmatprep.subr.mxu0 0.0
        %3625 = vmatpush2.msra.mxu0 0.0
        %3626 = vmatprep.subr.mxu0 0.0
        %3627 = vmatpush2.msra.mxu0 0.0
        %3628 = vmatprep.subr.mxu0 0.0
        %3629 = vmatpush2.msra.mxu0 0.0
        %3630 = vmatprep.subr.mxu0 0.0
        %3631 = vmatpush2.msra.mxu0 0.0
        %3632 = vmatprep.subr.mxu0 0.0
        %3633 = vmatpush2.msra.mxu0 0.0
        %3634 = vmatprep.subr.mxu0 0.0
        %3635 = vmatpush2.msra.mxu0 0.0
        %3636 = vmatprep.subr.mxu0 0.0
        %3637 = vmatpush2.msra.mxu0 0.0
        %3638 = vmatprep.subr.mxu0 0.0
        %3639 = vmatpush2.msra.mxu0 0.0
        %3640 = vmatprep.subr.mxu0 0.0
        %3641 = vmatpush2.msra.mxu0 0.0
        %3642 = vmatprep.subr.mxu0 0.0
        %3643 = vmatpush2.msra.mxu0 0.0
        %3644 = vmatprep.subr.mxu0 0.0
        %3645 = vmatpush2.msra.mxu0 0.0
        %3646 = vmatprep.subr.mxu0 0.0
        %3647 = vmatpush2.msra.mxu0 0.0
        %3648 = vmatprep.subr.mxu0 0.0
        %3649 = vmatpush2.msra.mxu0 0.0
        %3650 = vmatprep.subr.mxu0 0.0
        %3651 = vmatpush2.msra.mxu0 0.0
        %3652 = vmatprep.subr.mxu0 0.0
        %3653 = vmatpush2.msra.mxu0 0.0
        %3654 = vmatprep.mubr.f32.mxu0 0.0
        %3655 = vmatmul.mubr.f32.gmra.mxu0 %v3587
        %v3656 = vpop.f32.mrf.mxu0
        %v3657 = vadd.f32 0.0, %v3656
        %v3658 = vpop.f32.mrf.mxu0
        %3659 = vdwg.mxu0
        %v3660 = vadd.f32 %v3434, %v3657
        %3661 = vmatprep.subr.mxu0 0.0
        %3662 = vmatpush1.xpose.msra.mxu0 0.0
        %3663 = vmatprep.subr.mxu0 0.0
        %3664 = vmatpush1.xpose.msra.mxu0 0.0
        %3665 = vmatprep.subr.mxu0 0.0
        %3666 = vmatpush1.xpose.msra.mxu0 0.0
        %3667 = vmatprep.subr.mxu0 0.0
        %3668 = vmatpush1.xpose.msra.mxu0 0.0
        %3669 = vmatprep.subr.mxu0 0.0
        %3670 = vmatpush1.xpose.msra.mxu0 0.0
        %3671 = vmatprep.subr.mxu0 0.0
        %3672 = vmatpush1.xpose.msra.mxu0 0.0
        %3673 = vmatprep.subr.mxu0 0.0
        %3674 = vmatpush1.xpose.msra.mxu0 0.0
        %3675 = vmatprep.subr.mxu0 0.0
        %3676 = vmatpush1.xpose.msra.mxu0 0.0
        %3677 = vmatprep.subr.mxu0 0.0
        %3678 = vmatpush1.xpose.msra.mxu0 0.0
        %3679 = vmatprep.subr.mxu0 0.0
        %3680 = vmatpush1.xpose.msra.mxu0 0.0
        %3681 = vmatprep.subr.mxu0 0.0
        %3682 = vmatpush1.xpose.msra.mxu0 0.0
        %3683 = vmatprep.subr.mxu0 0.0
        %3684 = vmatpush1.xpose.msra.mxu0 0.0
        %3685 = vmatprep.subr.mxu0 0.0
        %3686 = vmatpush1.xpose.msra.mxu0 0.0
        %3687 = vmatprep.subr.mxu0 0.0
        %3688 = vmatpush1.xpose.msra.mxu0 0.0
        %3689 = vmatprep.subr.mxu0 0.0
        %3690 = vmatpush1.xpose.msra.mxu0 0.0
        %3691 = vmatprep.subr.mxu0 0.0
        %3692 = vmatpush1.xpose.msra.mxu0 %v1785
        %3693 = vmatprep.subr.mxu0 0.0
        %3694 = vmatpush2.xpose.msra.mxu0 0.0
        %3695 = vmatprep.subr.mxu0 0.0
        %3696 = vmatpush2.xpose.msra.mxu0 0.0
        %3697 = vmatprep.subr.mxu0 0.0
        %3698 = vmatpush2.xpose.msra.mxu0 0.0
        %3699 = vmatprep.subr.mxu0 0.0
        %3700 = vmatpush2.xpose.msra.mxu0 0.0
        %3701 = vmatprep.subr.mxu0 0.0
        %3702 = vmatpush2.xpose.msra.mxu0 0.0
        %3703 = vmatprep.subr.mxu0 0.0
        %3704 = vmatpush2.xpose.msra.mxu0 0.0
        %3705 = vmatprep.subr.mxu0 0.0
        %3706 = vmatpush2.xpose.msra.mxu0 0.0
        %3707 = vmatprep.subr.mxu0 0.0
        %3708 = vmatpush2.xpose.msra.mxu0 0.0
        %3709 = vmatprep.subr.mxu0 0.0
        %3710 = vmatpush2.xpose.msra.mxu0 0.0
        %3711 = vmatprep.subr.mxu0 0.0
        %3712 = vmatpush2.xpose.msra.mxu0 0.0
        %3713 = vmatprep.subr.mxu0 0.0
        %3714 = vmatpush2.xpose.msra.mxu0 0.0
        %3715 = vmatprep.subr.mxu0 0.0
        %3716 = vmatpush2.xpose.msra.mxu0 0.0
        %3717 = vmatprep.subr.mxu0 0.0
        %3718 = vmatpush2.xpose.msra.mxu0 0.0
        %3719 = vmatprep.subr.mxu0 0.0
        %3720 = vmatpush2.xpose.msra.mxu0 0.0
        %3721 = vmatprep.subr.mxu0 0.0
        %3722 = vmatpush2.xpose.msra.mxu0 0.0
        %3723 = vmatprep.subr.mxu0 0.0
        %3724 = vmatpush2.xpose.msra.mxu0 0.0
        %3725 = vmatprep.mubr.f32.mxu0 0.0
        %3726 = vmatmul.mubr.f32.gmra.mxu0 %v1501
        %v3727 = vpop.f32.mrf.mxu0
        %v3728 = vadd.f32 0.0, %v3727
        %v3729 = vpop.f32.mrf.mxu0
        %3730 = vdwg.mxu0
        %v3731 = vmul.f32 %v3728, 0.088388346
        %v3732 = vsel %vm2149, %v3731, -inf
        %3733 = vmax.xlane.f32.xlu0 %v3732
        %v3734 = vpop.xlane.xlu0 %3733
        %v3735 = vsub.f32 %v3731, %v3734
        %v3736 = vmul.f32 %v3735, 1.442695
        %v3737 = vpow.pop %v3736
        %v3738 = vsel %vm2149, %v3737, 0.0
        %3739 = vadd.xlane.f32.xlu0 %v3738
        %v3740 = vpop.xlane.xlu0 %3739
        %v3741 = vrcp.pop %v3740
        %v3742 = vmul.f32 %v3737, %v3741
        %v3744 = vsel %vm2149, %v3742, 0
        %3746 = vmatprep.subr.mxu0 0.0
        %3747 = vmatpush1.msra.mxu0 0.0
        %3748 = vmatprep.subr.mxu0 0.0
        %3749 = vmatpush1.msra.mxu0 0.0
        %3750 = vmatprep.subr.mxu0 0.0
        %3751 = vmatpush1.msra.mxu0 0.0
        %3752 = vmatprep.subr.mxu0 0.0
        %3753 = vmatpush1.msra.mxu0 0.0
        %3754 = vmatprep.subr.mxu0 0.0
        %3755 = vmatpush1.msra.mxu0 0.0
        %3756 = vmatprep.subr.mxu0 0.0
        %3757 = vmatpush1.msra.mxu0 0.0
        %3758 = vmatprep.subr.mxu0 0.0
        %3759 = vmatpush1.msra.mxu0 0.0
        %3760 = vmatprep.subr.mxu0 0.0
        %3761 = vmatpush1.msra.mxu0 0.0
        %3762 = vmatprep.subr.mxu0 0.0
        %3763 = vmatpush1.msra.mxu0 0.0
        %3764 = vmatprep.subr.mxu0 0.0
        %3765 = vmatpush1.msra.mxu0 0.0
        %3766 = vmatprep.subr.mxu0 0.0
        %3767 = vmatpush1.msra.mxu0 0.0
        %3768 = vmatprep.subr.mxu0 0.0
        %3769 = vmatpush1.msra.mxu0 0.0
        %3770 = vmatprep.subr.mxu0 0.0
        %3771 = vmatpush1.msra.mxu0 0.0
        %3772 = vmatprep.subr.mxu0 0.0
        %3773 = vmatpush1.msra.mxu0 0.0
        %3774 = vmatprep.subr.mxu0 0.0
        %3775 = vmatpush1.msra.mxu0 0.0
        %3776 = vmatprep.subr.mxu0 0.0
        %3777 = vmatpush1.msra.mxu0 %v2069
        %3778 = vmatprep.subr.mxu0 0.0
        %3779 = vmatpush2.msra.mxu0 0.0
        %3780 = vmatprep.subr.mxu0 0.0
        %3781 = vmatpush2.msra.mxu0 0.0
        %3782 = vmatprep.subr.mxu0 0.0
        %3783 = vmatpush2.msra.mxu0 0.0
        %3784 = vmatprep.subr.mxu0 0.0
        %3785 = vmatpush2.msra.mxu0 0.0
        %3786 = vmatprep.subr.mxu0 0.0
        %3787 = vmatpush2.msra.mxu0 0.0
        %3788 = vmatprep.subr.mxu0 0.0
        %3789 = vmatpush2.msra.mxu0 0.0
        %3790 = vmatprep.subr.mxu0 0.0
        %3791 = vmatpush2.msra.mxu0 0.0
        %3792 = vmatprep.subr.mxu0 0.0
        %3793 = vmatpush2.msra.mxu0 0.0
        %3794 = vmatprep.subr.mxu0 0.0
        %3795 = vmatpush2.msra.mxu0 0.0
        %3796 = vmatprep.subr.mxu0 0.0
        %3797 = vmatpush2.msra.mxu0 0.0
        %3798 = vmatprep.subr.mxu0 0.0
        %3799 = vmatpush2.msra.mxu0 0.0
        %3800 = vmatprep.subr.mxu0 0.0
        %3801 = vmatpush2.msra.mxu0 0.0
        %3802 = vmatprep.subr.mxu0 0.0
        %3803 = vmatpush2.msra.mxu0 0.0
        %3804 = vmatprep.subr.mxu0 0.0
        %3805 = vmatpush2.msra.mxu0 0.0
        %3806 = vmatprep.subr.mxu0 0.0
        %3807 = vmatpush2.msra.mxu0 0.0
        %3808 = vmatprep.subr.mxu0 0.0
        %3809 = vmatpush2.msra.mxu0 0.0
        %3810 = vmatprep.mubr.f32.mxu0 0.0
        %3811 = vmatmul.mubr.f32.gmra.mxu0 %v3744
        %v3812 = vpop.f32.mrf.mxu0
        %v3813 = vadd.f32 0.0, %v3812
        %v3814 = vpop.f32.mrf.mxu0
        %3815 = vdwg.mxu0
        %3816 = vmatprep.subr.mxu0 0.0
        %3817 = vmatpush1.msra.mxu0 %v1215
        %3818 = vmatprep.subr.mxu0 0.0
        %3819 = vmatpush1.msra.mxu0 %v1214
        %3820 = vmatprep.subr.mxu0 0.0
        %3821 = vmatpush1.msra.mxu0 %v1213
        %3822 = vmatprep.subr.mxu0 0.0
        %3823 = vmatpush1.msra.mxu0 %v1212
        %3824 = vmatprep.subr.mxu0 0.0
        %3825 = vmatpush1.msra.mxu0 %v1211
        %3826 = vmatprep.subr.mxu0 0.0
        %3827 = vmatpush1.msra.mxu0 %v1210
        %3828 = vmatprep.subr.mxu0 0.0
        %3829 = vmatpush1.msra.mxu0 %v1209
        %3830 = vmatprep.subr.mxu0 0.0
        %3831 = vmatpush1.msra.mxu0 %v1208
        %3832 = vmatprep.subr.mxu0 0.0
        %3833 = vmatpush1.msra.mxu0 %v1207
        %3834 = vmatprep.subr.mxu0 0.0
        %3835 = vmatpush1.msra.mxu0 %v1206
        %3836 = vmatprep.subr.mxu0 0.0
        %3837 = vmatpush1.msra.mxu0 %v1205
        %3838 = vmatprep.subr.mxu0 0.0
        %3839 = vmatpush1.msra.mxu0 %v1204
        %3840 = vmatprep.subr.mxu0 0.0
        %3841 = vmatpush1.msra.mxu0 %v1203
        %3842 = vmatprep.subr.mxu0 0.0
        %3843 = vmatpush1.msra.mxu0 %v1202
        %3844 = vmatprep.subr.mxu0 0.0
        %3845 = vmatpush1.msra.mxu0 %v1201
        %3846 = vmatprep.subr.mxu0 0.0
        %3847 = vmatpush1.msra.mxu0 %v1200
        %3848 = vmatprep.subr.mxu0 0.0
        %3849 = vmatpush2.msra.mxu0 0.0
        %3850 = vmatprep.subr.mxu0 0.0
        %3851 = vmatpush2.msra.mxu0 0.0
        %3852 = vmatprep.subr.mxu0 0.0
        %3853 = vmatpush2.msra.mxu0 0.0
        %3854 = vmatprep.subr.mxu0 0.0
        %3855 = vmatpush2.msra.mxu0 0.0
        %3856 = vmatprep.subr.mxu0 0.0
        %3857 = vmatpush2.msra.mxu0 0.0
        %3858 = vmatprep.subr.mxu0 0.0
        %3859 = vmatpush2.msra.mxu0 0.0
        %3860 = vmatprep.subr.mxu0 0.0
        %3861 = vmatpush2.msra.mxu0 0.0
        %3862 = vmatprep.subr.mxu0 0.0
        %3863 = vmatpush2.msra.mxu0 0.0
        %3864 = vmatprep.subr.mxu0 0.0
        %3865 = vmatpush2.msra.mxu0 0.0
        %3866 = vmatprep.subr.mxu0 0.0
        %3867 = vmatpush2.msra.mxu0 0.0
        %3868 = vmatprep.subr.mxu0 0.0
        %3869 = vmatpush2.msra.mxu0 0.0
        %3870 = vmatprep.subr.mxu0 0.0
        %3871 = vmatpush2.msra.mxu0 0.0
        %3872 = vmatprep.subr.mxu0 0.0
        %3873 = vmatpush2.msra.mxu0 0.0
        %3874 = vmatprep.subr.mxu0 0.0
        %3875 = vmatpush2.msra.mxu0 0.0
        %3876 = vmatprep.subr.mxu0 0.0
        %3877 = vmatpush2.msra.mxu0 0.0
        %3878 = vmatprep.subr.mxu0 0.0
        %3879 = vmatpush2.msra.mxu0 0.0
        %3880 = vmatprep.mubr.f32.mxu0 0.0
        %3881 = vmatmul.mubr.f32.gmra.mxu0 %v3813
        %v3882 = vpop.f32.mrf.mxu0
        %v3883 = vadd.f32 0.0, %v3882
        %v3884 = vpop.f32.mrf.mxu0
        %3885 = vdwg.mxu0
        %v3886 = vadd.f32 %v3660, %v3883
        %3887 = vadd.xlane.f32.xlu0 %v3886
        %v3888 = vpop.xlane.xlu0 %3887
        %v3889 = vrcp.pop 128.0
        %v3890 = vmul.f32 %v3888, %v3889
        %v3891 = vsub.f32 %v3886, %v3890
        %v3892 = vmul.f32 %v3891, %v3891
        %3893 = vadd.xlane.f32.xlu0 %v3892
        %v3894 = vpop.xlane.xlu0 %3893
        %v3895 = vrcp.pop 127.0
        %v3896 = vmul.f32 %v3894, %v3895
        %v3897 = vrsqrt.pop %v3896
        %v3898 = vmul.f32 %v3896, %v3897
        %vm3899 = vcmp.eq.f32.partialorder %v3896, inf
        %v3900 = vsel %vm3899, %v3896, %v3898
        %vm3901 = vcmp.eq.f32.partialorder %v3896, 0.0
        %v3902 = vand.u32 %v3896, 2147483648
        %v3903 = vsel %vm3901, %v3902, %v3900
        %v3904 = vadd.f32 %v3903, 0.001
        %v3905 = vrcp.pop %v3904
        %v3906 = vmul.f32 %v3891, %v3905
        %v3908 = vlaneseq
        %v3909 = vshrl.u32 %v3908, 7
        %v3910 = vsub.s32 0, %v3909
        %v3911 = vrot.slane %v1217, %v3910
        %v3913 = vmul.f32 %v3906, %v3911
        %v3915 = vlaneseq
        %v3916 = vshrl.u32 %v3915, 7
        %v3917 = vsub.s32 0, %v3916
        %v3918 = vrot.slane %v1218, %v3917
        %v3920 = vadd.f32 %v3913, %v3918
        %v3921 = vld [vmem:[%s9] sm:$0xff]
        %v3922 = vld [vmem:[%s9 + $0x8] sm:$0xff]
        %v3923 = vld [vmem:[%s9 + $0x10] sm:$0xff]
        %v3924 = vld [vmem:[%s9 + $0x18] sm:$0xff]
        %v3925 = vld [vmem:[%s9 + $0x20] sm:$0xff]
        %v3926 = vld [vmem:[%s9 + $0x28] sm:$0xff]
        %v3927 = vld [vmem:[%s9 + $0x30] sm:$0xff]
        %v3928 = vld [vmem:[%s9 + $0x38] sm:$0xff]
        %v3929 = vld [vmem:[%s9 + $0x40] sm:$0xff]
        %v3930 = vld [vmem:[%s9 + $0x48] sm:$0xff]
        %v3931 = vld [vmem:[%s9 + $0x50] sm:$0xff]
        %v3932 = vld [vmem:[%s9 + $0x58] sm:$0xff]
        %v3933 = vld [vmem:[%s9 + $0x60] sm:$0xff]
        %v3934 = vld [vmem:[%s9 + $0x68] sm:$0xff]
        %v3935 = vld [vmem:[%s9 + $0x70] sm:$0xff]
        %v3936 = vld [vmem:[%s9 + $0x78] sm:$0xff]
        %v3937 = vld [vmem:[%s9 + $0x80] sm:$0xff]
        %v3938 = vld [vmem:[%s9 + $0x88] sm:$0xff]
        %v3939 = vld [vmem:[%s9 + $0x90] sm:$0xff]
        %v3940 = vld [vmem:[%s9 + $0x98] sm:$0xff]
        %v3941 = vld [vmem:[%s9 + $0xa0] sm:$0xff]
        %v3942 = vld [vmem:[%s9 + $0xa8] sm:$0xff]
        %v3943 = vld [vmem:[%s9 + $0xb0] sm:$0xff]
        %v3944 = vld [vmem:[%s9 + $0xb8] sm:$0xff]
        %v3945 = vld [vmem:[%s9 + $0xc0] sm:$0xff]
        %v3946 = vld [vmem:[%s9 + $0xc8] sm:$0xff]
        %v3947 = vld [vmem:[%s9 + $0xd0] sm:$0xff]
        %v3948 = vld [vmem:[%s9 + $0xd8] sm:$0xff]
        %v3949 = vld [vmem:[%s9 + $0xe0] sm:$0xff]
        %v3950 = vld [vmem:[%s9 + $0xe8] sm:$0xff]
        %v3951 = vld [vmem:[%s9 + $0xf0] sm:$0xff]
        %v3952 = vld [vmem:[%s9 + $0xf8] sm:$0xff]
        %v3953 = vld [vmem:[%s9 + $0x100] sm:$0xff]
        %v3954 = vld [vmem:[%s9 + $0x108] sm:$0xff]
        %v3955 = vld [vmem:[%s9 + $0x110] sm:$0xff]
        %v3956 = vld [vmem:[%s9 + $0x118] sm:$0xff]
        %v3957 = vld [vmem:[%s9 + $0x120] sm:$0xff]
        %v3958 = vld [vmem:[%s9 + $0x128] sm:$0xff]
        %v3959 = vld [vmem:[%s9 + $0x130] sm:$0xff]
        %v3960 = vld [vmem:[%s9 + $0x138] sm:$0xff]
        %v3961 = vld [vmem:[%s9 + $0x140] sm:$0xff]
        %v3962 = vld [vmem:[%s9 + $0x148] sm:$0xff]
        %v3963 = vld [vmem:[%s9 + $0x150] sm:$0xff]
        %v3964 = vld [vmem:[%s9 + $0x158] sm:$0xff]
        %v3965 = vld [vmem:[%s9 + $0x160] sm:$0xff]
        %v3966 = vld [vmem:[%s9 + $0x168] sm:$0xff]
        %v3967 = vld [vmem:[%s9 + $0x170] sm:$0xff]
        %v3968 = vld [vmem:[%s9 + $0x178] sm:$0xff]
        %v3969 = vld [vmem:[%s9 + $0x180] sm:$0xff]
        %v3970 = vld [vmem:[%s9 + $0x188] sm:$0xff]
        %v3971 = vld [vmem:[%s9 + $0x190] sm:$0xff]
        %v3972 = vld [vmem:[%s9 + $0x198] sm:$0xff]
        %v3973 = vld [vmem:[%s9 + $0x1a0] sm:$0xff]
        %v3974 = vld [vmem:[%s9 + $0x1a8] sm:$0xff]
        %v3975 = vld [vmem:[%s9 + $0x1b0] sm:$0xff]
        %v3976 = vld [vmem:[%s9 + $0x1b8] sm:$0xff]
        %v3977 = vld [vmem:[%s9 + $0x1c0] sm:$0xff]
        %v3978 = vld [vmem:[%s9 + $0x1c8] sm:$0xff]
        %v3979 = vld [vmem:[%s9 + $0x1d0] sm:$0xff]
        %v3980 = vld [vmem:[%s9 + $0x1d8] sm:$0xff]
        %v3981 = vld [vmem:[%s9 + $0x1e0] sm:$0xff]
        %v3982 = vld [vmem:[%s9 + $0x1e8] sm:$0xff]
        %v3983 = vld [vmem:[%s9 + $0x1f0] sm:$0xff]
        %v3984 = vld [vmem:[%s9 + $0x1f8] sm:$0xff]
        %v3985 = vld [vmem:[%s9 + $0x200] sm:$0xff]
        %v3986 = vld [vmem:[%s9 + $0x208] sm:$0xff]
        %v3987 = vld [vmem:[%s9 + $0x210] sm:$0xff]
        %v3988 = vld [vmem:[%s9 + $0x218] sm:$0xff]
        %v3989 = vld [vmem:[%s9 + $0x220] sm:$0xff]
        %v3990 = vld [vmem:[%s9 + $0x228] sm:$0xff]
        %v3991 = vld [vmem:[%s9 + $0x230] sm:$0xff]
        %v3992 = vld [vmem:[%s9 + $0x238] sm:$0xff]
        %v3993 = vld [vmem:[%s9 + $0x240] sm:$0xff]
        %v3994 = vld [vmem:[%s9 + $0x248] sm:$0xff]
        %v3995 = vld [vmem:[%s9 + $0x250] sm:$0xff]
        %v3996 = vld [vmem:[%s9 + $0x258] sm:$0xff]
        %v3997 = vld [vmem:[%s9 + $0x260] sm:$0xff]
        %v3998 = vld [vmem:[%s9 + $0x268] sm:$0xff]
        %v3999 = vld [vmem:[%s9 + $0x270] sm:$0xff]
        %v4000 = vld [vmem:[%s9 + $0x278] sm:$0xff]
        %v4001 = vld [vmem:[%s9 + $0x280] sm:$0xff]
        %v4002 = vld [vmem:[%s9 + $0x288] sm:$0xff]
        %v4003 = vld [vmem:[%s9 + $0x290] sm:$0xff]
        %v4004 = vld [vmem:[%s9 + $0x298] sm:$0xff]
        %v4005 = vld [vmem:[%s9 + $0x2a0] sm:$0xff]
        %v4006 = vld [vmem:[%s9 + $0x2a8] sm:$0xff]
        %v4007 = vld [vmem:[%s9 + $0x2b0] sm:$0xff]
        %v4008 = vld [vmem:[%s9 + $0x2b8] sm:$0xff]
        %v4009 = vld [vmem:[%s9 + $0x2c0] sm:$0xff]
        %v4010 = vld [vmem:[%s9 + $0x2c8] sm:$0xff]
        %v4011 = vld [vmem:[%s9 + $0x2d0] sm:$0xff]
        %v4012 = vld [vmem:[%s9 + $0x2d8] sm:$0xff]
        %v4013 = vld [vmem:[%s9 + $0x2e0] sm:$0xff]
        %v4014 = vld [vmem:[%s9 + $0x2e8] sm:$0xff]
        %v4015 = vld [vmem:[%s9 + $0x2f0] sm:$0xff]
        %v4016 = vld [vmem:[%s9 + $0x2f8] sm:$0xff]
        %v4017 = vld [vmem:[%s9 + $0x300] sm:$0xff]
        %v4018 = vld [vmem:[%s9 + $0x308] sm:$0xff]
        %v4019 = vld [vmem:[%s9 + $0x310] sm:$0xff]
        %v4020 = vld [vmem:[%s9 + $0x318] sm:$0xff]
        %v4021 = vld [vmem:[%s9 + $0x320] sm:$0xff]
        %v4022 = vld [vmem:[%s9 + $0x328] sm:$0xff]
        %v4023 = vld [vmem:[%s9 + $0x330] sm:$0xff]
        %v4024 = vld [vmem:[%s9 + $0x338] sm:$0xff]
        %v4025 = vld [vmem:[%s9 + $0x340] sm:$0xff]
        %v4026 = vld [vmem:[%s9 + $0x348] sm:$0xff]
        %v4027 = vld [vmem:[%s9 + $0x350] sm:$0xff]
        %v4028 = vld [vmem:[%s9 + $0x358] sm:$0xff]
        %v4029 = vld [vmem:[%s9 + $0x360] sm:$0xff]
        %v4030 = vld [vmem:[%s9 + $0x368] sm:$0xff]
        %v4031 = vld [vmem:[%s9 + $0x370] sm:$0xff]
        %v4032 = vld [vmem:[%s9 + $0x378] sm:$0xff]
        %v4033 = vld [vmem:[%s9 + $0x380] sm:$0xff]
        %v4034 = vld [vmem:[%s9 + $0x388] sm:$0xff]
        %v4035 = vld [vmem:[%s9 + $0x390] sm:$0xff]
        %v4036 = vld [vmem:[%s9 + $0x398] sm:$0xff]
        %v4037 = vld [vmem:[%s9 + $0x3a0] sm:$0xff]
        %v4038 = vld [vmem:[%s9 + $0x3a8] sm:$0xff]
        %v4039 = vld [vmem:[%s9 + $0x3b0] sm:$0xff]
        %v4040 = vld [vmem:[%s9 + $0x3b8] sm:$0xff]
        %v4041 = vld [vmem:[%s9 + $0x3c0] sm:$0xff]
        %v4042 = vld [vmem:[%s9 + $0x3c8] sm:$0xff]
        %v4043 = vld [vmem:[%s9 + $0x3d0] sm:$0xff]
        %v4044 = vld [vmem:[%s9 + $0x3d8] sm:$0xff]
        %v4045 = vld [vmem:[%s9 + $0x3e0] sm:$0xff]
        %v4046 = vld [vmem:[%s9 + $0x3e8] sm:$0xff]
        %v4047 = vld [vmem:[%s9 + $0x3f0] sm:$0xff]
        %v4048 = vld [vmem:[%s9 + $0x3f8] sm:$0xff]
        %v4049 = vld [vmem:[%s10] sm:$0xff]
        %v4050 = vld [vmem:[%s10 + $0x8] sm:$0xff]
        %v4051 = vld [vmem:[%s10 + $0x10] sm:$0xff]
        %v4052 = vld [vmem:[%s10 + $0x18] sm:$0xff]
        %v4053 = vld [vmem:[%s10 + $0x20] sm:$0xff]
        %v4054 = vld [vmem:[%s10 + $0x28] sm:$0xff]
        %v4055 = vld [vmem:[%s10 + $0x30] sm:$0xff]
        %v4056 = vld [vmem:[%s10 + $0x38] sm:$0xff]
        %v4057 = vld [vmem:[%s10 + $0x40] sm:$0xff]
        %v4058 = vld [vmem:[%s10 + $0x48] sm:$0xff]
        %v4059 = vld [vmem:[%s10 + $0x50] sm:$0xff]
        %v4060 = vld [vmem:[%s10 + $0x58] sm:$0xff]
        %v4061 = vld [vmem:[%s10 + $0x60] sm:$0xff]
        %v4062 = vld [vmem:[%s10 + $0x68] sm:$0xff]
        %v4063 = vld [vmem:[%s10 + $0x70] sm:$0xff]
        %v4064 = vld [vmem:[%s10 + $0x78] sm:$0xff]
        %v4065 = vld [vmem:[%s10 + $0x80] sm:$0xff]
        %v4066 = vld [vmem:[%s10 + $0x88] sm:$0xff]
        %v4067 = vld [vmem:[%s10 + $0x90] sm:$0xff]
        %v4068 = vld [vmem:[%s10 + $0x98] sm:$0xff]
        %v4069 = vld [vmem:[%s10 + $0xa0] sm:$0xff]
        %v4070 = vld [vmem:[%s10 + $0xa8] sm:$0xff]
        %v4071 = vld [vmem:[%s10 + $0xb0] sm:$0xff]
        %v4072 = vld [vmem:[%s10 + $0xb8] sm:$0xff]
        %v4073 = vld [vmem:[%s10 + $0xc0] sm:$0xff]
        %v4074 = vld [vmem:[%s10 + $0xc8] sm:$0xff]
        %v4075 = vld [vmem:[%s10 + $0xd0] sm:$0xff]
        %v4076 = vld [vmem:[%s10 + $0xd8] sm:$0xff]
        %v4077 = vld [vmem:[%s10 + $0xe0] sm:$0xff]
        %v4078 = vld [vmem:[%s10 + $0xe8] sm:$0xff]
        %v4079 = vld [vmem:[%s10 + $0xf0] sm:$0xff]
        %v4080 = vld [vmem:[%s10 + $0xf8] sm:$0xff]
        %v4081 = vld [vmem:[%s10 + $0x100] sm:$0xff]
        %v4082 = vld [vmem:[%s10 + $0x108] sm:$0xff]
        %v4083 = vld [vmem:[%s10 + $0x110] sm:$0xff]
        %v4084 = vld [vmem:[%s10 + $0x118] sm:$0xff]
        %v4085 = vld [vmem:[%s10 + $0x120] sm:$0xff]
        %v4086 = vld [vmem:[%s10 + $0x128] sm:$0xff]
        %v4087 = vld [vmem:[%s10 + $0x130] sm:$0xff]
        %v4088 = vld [vmem:[%s10 + $0x138] sm:$0xff]
        %v4089 = vld [vmem:[%s10 + $0x140] sm:$0xff]
        %v4090 = vld [vmem:[%s10 + $0x148] sm:$0xff]
        %v4091 = vld [vmem:[%s10 + $0x150] sm:$0xff]
        %v4092 = vld [vmem:[%s10 + $0x158] sm:$0xff]
        %v4093 = vld [vmem:[%s10 + $0x160] sm:$0xff]
        %v4094 = vld [vmem:[%s10 + $0x168] sm:$0xff]
        %v4095 = vld [vmem:[%s10 + $0x170] sm:$0xff]
        %v4096 = vld [vmem:[%s10 + $0x178] sm:$0xff]
        %v4097 = vld [vmem:[%s10 + $0x180] sm:$0xff]
        %v4098 = vld [vmem:[%s10 + $0x188] sm:$0xff]
        %v4099 = vld [vmem:[%s10 + $0x190] sm:$0xff]
        %v4100 = vld [vmem:[%s10 + $0x198] sm:$0xff]
        %v4101 = vld [vmem:[%s10 + $0x1a0] sm:$0xff]
        %v4102 = vld [vmem:[%s10 + $0x1a8] sm:$0xff]
        %v4103 = vld [vmem:[%s10 + $0x1b0] sm:$0xff]
        %v4104 = vld [vmem:[%s10 + $0x1b8] sm:$0xff]
        %v4105 = vld [vmem:[%s10 + $0x1c0] sm:$0xff]
        %v4106 = vld [vmem:[%s10 + $0x1c8] sm:$0xff]
        %v4107 = vld [vmem:[%s10 + $0x1d0] sm:$0xff]
        %v4108 = vld [vmem:[%s10 + $0x1d8] sm:$0xff]
        %v4109 = vld [vmem:[%s10 + $0x1e0] sm:$0xff]
        %v4110 = vld [vmem:[%s10 + $0x1e8] sm:$0xff]
        %v4111 = vld [vmem:[%s10 + $0x1f0] sm:$0xff]
        %v4112 = vld [vmem:[%s10 + $0x1f8] sm:$0xff]
        %v4113 = vld [vmem:[%s10 + $0x200] sm:$0xff]
        %v4114 = vld [vmem:[%s10 + $0x208] sm:$0xff]
        %v4115 = vld [vmem:[%s10 + $0x210] sm:$0xff]
        %v4116 = vld [vmem:[%s10 + $0x218] sm:$0xff]
        %v4117 = vld [vmem:[%s10 + $0x220] sm:$0xff]
        %v4118 = vld [vmem:[%s10 + $0x228] sm:$0xff]
        %v4119 = vld [vmem:[%s10 + $0x230] sm:$0xff]
        %v4120 = vld [vmem:[%s10 + $0x238] sm:$0xff]
        %v4121 = vld [vmem:[%s10 + $0x240] sm:$0xff]
        %v4122 = vld [vmem:[%s10 + $0x248] sm:$0xff]
        %v4123 = vld [vmem:[%s10 + $0x250] sm:$0xff]
        %v4124 = vld [vmem:[%s10 + $0x258] sm:$0xff]
        %v4125 = vld [vmem:[%s10 + $0x260] sm:$0xff]
        %v4126 = vld [vmem:[%s10 + $0x268] sm:$0xff]
        %v4127 = vld [vmem:[%s10 + $0x270] sm:$0xff]
        %v4128 = vld [vmem:[%s10 + $0x278] sm:$0xff]
        %v4129 = vld [vmem:[%s10 + $0x280] sm:$0xff]
        %v4130 = vld [vmem:[%s10 + $0x288] sm:$0xff]
        %v4131 = vld [vmem:[%s10 + $0x290] sm:$0xff]
        %v4132 = vld [vmem:[%s10 + $0x298] sm:$0xff]
        %v4133 = vld [vmem:[%s10 + $0x2a0] sm:$0xff]
        %v4134 = vld [vmem:[%s10 + $0x2a8] sm:$0xff]
        %v4135 = vld [vmem:[%s10 + $0x2b0] sm:$0xff]
        %v4136 = vld [vmem:[%s10 + $0x2b8] sm:$0xff]
        %v4137 = vld [vmem:[%s10 + $0x2c0] sm:$0xff]
        %v4138 = vld [vmem:[%s10 + $0x2c8] sm:$0xff]
        %v4139 = vld [vmem:[%s10 + $0x2d0] sm:$0xff]
        %v4140 = vld [vmem:[%s10 + $0x2d8] sm:$0xff]
        %v4141 = vld [vmem:[%s10 + $0x2e0] sm:$0xff]
        %v4142 = vld [vmem:[%s10 + $0x2e8] sm:$0xff]
        %v4143 = vld [vmem:[%s10 + $0x2f0] sm:$0xff]
        %v4144 = vld [vmem:[%s10 + $0x2f8] sm:$0xff]
        %v4145 = vld [vmem:[%s10 + $0x300] sm:$0xff]
        %v4146 = vld [vmem:[%s10 + $0x308] sm:$0xff]
        %v4147 = vld [vmem:[%s10 + $0x310] sm:$0xff]
        %v4148 = vld [vmem:[%s10 + $0x318] sm:$0xff]
        %v4149 = vld [vmem:[%s10 + $0x320] sm:$0xff]
        %v4150 = vld [vmem:[%s10 + $0x328] sm:$0xff]
        %v4151 = vld [vmem:[%s10 + $0x330] sm:$0xff]
        %v4152 = vld [vmem:[%s10 + $0x338] sm:$0xff]
        %v4153 = vld [vmem:[%s10 + $0x340] sm:$0xff]
        %v4154 = vld [vmem:[%s10 + $0x348] sm:$0xff]
        %v4155 = vld [vmem:[%s10 + $0x350] sm:$0xff]
        %v4156 = vld [vmem:[%s10 + $0x358] sm:$0xff]
        %v4157 = vld [vmem:[%s10 + $0x360] sm:$0xff]
        %v4158 = vld [vmem:[%s10 + $0x368] sm:$0xff]
        %v4159 = vld [vmem:[%s10 + $0x370] sm:$0xff]
        %v4160 = vld [vmem:[%s10 + $0x378] sm:$0xff]
        %v4161 = vld [vmem:[%s10 + $0x380] sm:$0xff]
        %v4162 = vld [vmem:[%s10 + $0x388] sm:$0xff]
        %v4163 = vld [vmem:[%s10 + $0x390] sm:$0xff]
        %v4164 = vld [vmem:[%s10 + $0x398] sm:$0xff]
        %v4165 = vld [vmem:[%s10 + $0x3a0] sm:$0xff]
        %v4166 = vld [vmem:[%s10 + $0x3a8] sm:$0xff]
        %v4167 = vld [vmem:[%s10 + $0x3b0] sm:$0xff]
        %v4168 = vld [vmem:[%s10 + $0x3b8] sm:$0xff]
        %v4169 = vld [vmem:[%s10 + $0x3c0] sm:$0xff]
        %v4170 = vld [vmem:[%s10 + $0x3c8] sm:$0xff]
        %v4171 = vld [vmem:[%s10 + $0x3d0] sm:$0xff]
        %v4172 = vld [vmem:[%s10 + $0x3d8] sm:$0xff]
        %v4173 = vld [vmem:[%s10 + $0x3e0] sm:$0xff]
        %v4174 = vld [vmem:[%s10 + $0x3e8] sm:$0xff]
        %v4175 = vld [vmem:[%s10 + $0x3f0] sm:$0xff]
        %v4176 = vld [vmem:[%s10 + $0x3f8] sm:$0xff]
        %v4177 = vld [vmem:[%s11] sm:$0xff]
        %v4178 = vld [vmem:[%s11 + $0x8] sm:$0xff]
        %v4179 = vld [vmem:[%s11 + $0x10] sm:$0xff]
        %v4180 = vld [vmem:[%s11 + $0x18] sm:$0xff]
        %v4181 = vld [vmem:[%s11 + $0x20] sm:$0xff]
        %v4182 = vld [vmem:[%s11 + $0x28] sm:$0xff]
        %v4183 = vld [vmem:[%s11 + $0x30] sm:$0xff]
        %v4184 = vld [vmem:[%s11 + $0x38] sm:$0xff]
        %v4185 = vld [vmem:[%s11 + $0x40] sm:$0xff]
        %v4186 = vld [vmem:[%s11 + $0x48] sm:$0xff]
        %v4187 = vld [vmem:[%s11 + $0x50] sm:$0xff]
        %v4188 = vld [vmem:[%s11 + $0x58] sm:$0xff]
        %v4189 = vld [vmem:[%s11 + $0x60] sm:$0xff]
        %v4190 = vld [vmem:[%s11 + $0x68] sm:$0xff]
        %v4191 = vld [vmem:[%s11 + $0x70] sm:$0xff]
        %v4192 = vld [vmem:[%s11 + $0x78] sm:$0xff]
        %v4193 = vld [vmem:[%s11 + $0x80] sm:$0xff]
        %v4194 = vld [vmem:[%s11 + $0x88] sm:$0xff]
        %v4195 = vld [vmem:[%s11 + $0x90] sm:$0xff]
        %v4196 = vld [vmem:[%s11 + $0x98] sm:$0xff]
        %v4197 = vld [vmem:[%s11 + $0xa0] sm:$0xff]
        %v4198 = vld [vmem:[%s11 + $0xa8] sm:$0xff]
        %v4199 = vld [vmem:[%s11 + $0xb0] sm:$0xff]
        %v4200 = vld [vmem:[%s11 + $0xb8] sm:$0xff]
        %v4201 = vld [vmem:[%s11 + $0xc0] sm:$0xff]
        %v4202 = vld [vmem:[%s11 + $0xc8] sm:$0xff]
        %v4203 = vld [vmem:[%s11 + $0xd0] sm:$0xff]
        %v4204 = vld [vmem:[%s11 + $0xd8] sm:$0xff]
        %v4205 = vld [vmem:[%s11 + $0xe0] sm:$0xff]
        %v4206 = vld [vmem:[%s11 + $0xe8] sm:$0xff]
        %v4207 = vld [vmem:[%s11 + $0xf0] sm:$0xff]
        %v4208 = vld [vmem:[%s11 + $0xf8] sm:$0xff]
        %v4209 = vld [vmem:[%s11 + $0x100] sm:$0xff]
        %v4210 = vld [vmem:[%s11 + $0x108] sm:$0xff]
        %v4211 = vld [vmem:[%s11 + $0x110] sm:$0xff]
        %v4212 = vld [vmem:[%s11 + $0x118] sm:$0xff]
        %v4213 = vld [vmem:[%s11 + $0x120] sm:$0xff]
        %v4214 = vld [vmem:[%s11 + $0x128] sm:$0xff]
        %v4215 = vld [vmem:[%s11 + $0x130] sm:$0xff]
        %v4216 = vld [vmem:[%s11 + $0x138] sm:$0xff]
        %v4217 = vld [vmem:[%s11 + $0x140] sm:$0xff]
        %v4218 = vld [vmem:[%s11 + $0x148] sm:$0xff]
        %v4219 = vld [vmem:[%s11 + $0x150] sm:$0xff]
        %v4220 = vld [vmem:[%s11 + $0x158] sm:$0xff]
        %v4221 = vld [vmem:[%s11 + $0x160] sm:$0xff]
        %v4222 = vld [vmem:[%s11 + $0x168] sm:$0xff]
        %v4223 = vld [vmem:[%s11 + $0x170] sm:$0xff]
        %v4224 = vld [vmem:[%s11 + $0x178] sm:$0xff]
        %v4225 = vld [vmem:[%s11 + $0x180] sm:$0xff]
        %v4226 = vld [vmem:[%s11 + $0x188] sm:$0xff]
        %v4227 = vld [vmem:[%s11 + $0x190] sm:$0xff]
        %v4228 = vld [vmem:[%s11 + $0x198] sm:$0xff]
        %v4229 = vld [vmem:[%s11 + $0x1a0] sm:$0xff]
        %v4230 = vld [vmem:[%s11 + $0x1a8] sm:$0xff]
        %v4231 = vld [vmem:[%s11 + $0x1b0] sm:$0xff]
        %v4232 = vld [vmem:[%s11 + $0x1b8] sm:$0xff]
        %v4233 = vld [vmem:[%s11 + $0x1c0] sm:$0xff]
        %v4234 = vld [vmem:[%s11 + $0x1c8] sm:$0xff]
        %v4235 = vld [vmem:[%s11 + $0x1d0] sm:$0xff]
        %v4236 = vld [vmem:[%s11 + $0x1d8] sm:$0xff]
        %v4237 = vld [vmem:[%s11 + $0x1e0] sm:$0xff]
        %v4238 = vld [vmem:[%s11 + $0x1e8] sm:$0xff]
        %v4239 = vld [vmem:[%s11 + $0x1f0] sm:$0xff]
        %v4240 = vld [vmem:[%s11 + $0x1f8] sm:$0xff]
        %v4241 = vld [vmem:[%s11 + $0x200] sm:$0xff]
        %v4242 = vld [vmem:[%s11 + $0x208] sm:$0xff]
        %v4243 = vld [vmem:[%s11 + $0x210] sm:$0xff]
        %v4244 = vld [vmem:[%s11 + $0x218] sm:$0xff]
        %v4245 = vld [vmem:[%s11 + $0x220] sm:$0xff]
        %v4246 = vld [vmem:[%s11 + $0x228] sm:$0xff]
        %v4247 = vld [vmem:[%s11 + $0x230] sm:$0xff]
        %v4248 = vld [vmem:[%s11 + $0x238] sm:$0xff]
        %v4249 = vld [vmem:[%s11 + $0x240] sm:$0xff]
        %v4250 = vld [vmem:[%s11 + $0x248] sm:$0xff]
        %v4251 = vld [vmem:[%s11 + $0x250] sm:$0xff]
        %v4252 = vld [vmem:[%s11 + $0x258] sm:$0xff]
        %v4253 = vld [vmem:[%s11 + $0x260] sm:$0xff]
        %v4254 = vld [vmem:[%s11 + $0x268] sm:$0xff]
        %v4255 = vld [vmem:[%s11 + $0x270] sm:$0xff]
        %v4256 = vld [vmem:[%s11 + $0x278] sm:$0xff]
        %v4257 = vld [vmem:[%s11 + $0x280] sm:$0xff]
        %v4258 = vld [vmem:[%s11 + $0x288] sm:$0xff]
        %v4259 = vld [vmem:[%s11 + $0x290] sm:$0xff]
        %v4260 = vld [vmem:[%s11 + $0x298] sm:$0xff]
        %v4261 = vld [vmem:[%s11 + $0x2a0] sm:$0xff]
        %v4262 = vld [vmem:[%s11 + $0x2a8] sm:$0xff]
        %v4263 = vld [vmem:[%s11 + $0x2b0] sm:$0xff]
        %v4264 = vld [vmem:[%s11 + $0x2b8] sm:$0xff]
        %v4265 = vld [vmem:[%s11 + $0x2c0] sm:$0xff]
        %v4266 = vld [vmem:[%s11 + $0x2c8] sm:$0xff]
        %v4267 = vld [vmem:[%s11 + $0x2d0] sm:$0xff]
        %v4268 = vld [vmem:[%s11 + $0x2d8] sm:$0xff]
        %v4269 = vld [vmem:[%s11 + $0x2e0] sm:$0xff]
        %v4270 = vld [vmem:[%s11 + $0x2e8] sm:$0xff]
        %v4271 = vld [vmem:[%s11 + $0x2f0] sm:$0xff]
        %v4272 = vld [vmem:[%s11 + $0x2f8] sm:$0xff]
        %v4273 = vld [vmem:[%s11 + $0x300] sm:$0xff]
        %v4274 = vld [vmem:[%s11 + $0x308] sm:$0xff]
        %v4275 = vld [vmem:[%s11 + $0x310] sm:$0xff]
        %v4276 = vld [vmem:[%s11 + $0x318] sm:$0xff]
        %v4277 = vld [vmem:[%s11 + $0x320] sm:$0xff]
        %v4278 = vld [vmem:[%s11 + $0x328] sm:$0xff]
        %v4279 = vld [vmem:[%s11 + $0x330] sm:$0xff]
        %v4280 = vld [vmem:[%s11 + $0x338] sm:$0xff]
        %v4281 = vld [vmem:[%s11 + $0x340] sm:$0xff]
        %v4282 = vld [vmem:[%s11 + $0x348] sm:$0xff]
        %v4283 = vld [vmem:[%s11 + $0x350] sm:$0xff]
        %v4284 = vld [vmem:[%s11 + $0x358] sm:$0xff]
        %v4285 = vld [vmem:[%s11 + $0x360] sm:$0xff]
        %v4286 = vld [vmem:[%s11 + $0x368] sm:$0xff]
        %v4287 = vld [vmem:[%s11 + $0x370] sm:$0xff]
        %v4288 = vld [vmem:[%s11 + $0x378] sm:$0xff]
        %v4289 = vld [vmem:[%s11 + $0x380] sm:$0xff]
        %v4290 = vld [vmem:[%s11 + $0x388] sm:$0xff]
        %v4291 = vld [vmem:[%s11 + $0x390] sm:$0xff]
        %v4292 = vld [vmem:[%s11 + $0x398] sm:$0xff]
        %v4293 = vld [vmem:[%s11 + $0x3a0] sm:$0xff]
        %v4294 = vld [vmem:[%s11 + $0x3a8] sm:$0xff]
        %v4295 = vld [vmem:[%s11 + $0x3b0] sm:$0xff]
        %v4296 = vld [vmem:[%s11 + $0x3b8] sm:$0xff]
        %v4297 = vld [vmem:[%s11 + $0x3c0] sm:$0xff]
        %v4298 = vld [vmem:[%s11 + $0x3c8] sm:$0xff]
        %v4299 = vld [vmem:[%s11 + $0x3d0] sm:$0xff]
        %v4300 = vld [vmem:[%s11 + $0x3d8] sm:$0xff]
        %v4301 = vld [vmem:[%s11 + $0x3e0] sm:$0xff]
        %v4302 = vld [vmem:[%s11 + $0x3e8] sm:$0xff]
        %v4303 = vld [vmem:[%s11 + $0x3f0] sm:$0xff]
        %v4304 = vld [vmem:[%s11 + $0x3f8] sm:$0xff]
        %v4305 = vld [vmem:[%s12] sm:$0xff]
        %v4306 = vld [vmem:[%s12 + $0x8] sm:$0xff]
        %v4307 = vld [vmem:[%s12 + $0x10] sm:$0xff]
        %v4308 = vld [vmem:[%s12 + $0x18] sm:$0xff]
        %v4309 = vld [vmem:[%s12 + $0x20] sm:$0xff]
        %v4310 = vld [vmem:[%s12 + $0x28] sm:$0xff]
        %v4311 = vld [vmem:[%s12 + $0x30] sm:$0xff]
        %v4312 = vld [vmem:[%s12 + $0x38] sm:$0xff]
        %v4313 = vld [vmem:[%s12 + $0x40] sm:$0xff]
        %v4314 = vld [vmem:[%s12 + $0x48] sm:$0xff]
        %v4315 = vld [vmem:[%s12 + $0x50] sm:$0xff]
        %v4316 = vld [vmem:[%s12 + $0x58] sm:$0xff]
        %v4317 = vld [vmem:[%s12 + $0x60] sm:$0xff]
        %v4318 = vld [vmem:[%s12 + $0x68] sm:$0xff]
        %v4319 = vld [vmem:[%s12 + $0x70] sm:$0xff]
        %v4320 = vld [vmem:[%s12 + $0x78] sm:$0xff]
        %v4321 = vld [vmem:[%s12 + $0x80] sm:$0xff]
        %v4322 = vld [vmem:[%s12 + $0x88] sm:$0xff]
        %v4323 = vld [vmem:[%s12 + $0x90] sm:$0xff]
        %v4324 = vld [vmem:[%s12 + $0x98] sm:$0xff]
        %v4325 = vld [vmem:[%s12 + $0xa0] sm:$0xff]
        %v4326 = vld [vmem:[%s12 + $0xa8] sm:$0xff]
        %v4327 = vld [vmem:[%s12 + $0xb0] sm:$0xff]
        %v4328 = vld [vmem:[%s12 + $0xb8] sm:$0xff]
        %v4329 = vld [vmem:[%s12 + $0xc0] sm:$0xff]
        %v4330 = vld [vmem:[%s12 + $0xc8] sm:$0xff]
        %v4331 = vld [vmem:[%s12 + $0xd0] sm:$0xff]
        %v4332 = vld [vmem:[%s12 + $0xd8] sm:$0xff]
        %v4333 = vld [vmem:[%s12 + $0xe0] sm:$0xff]
        %v4334 = vld [vmem:[%s12 + $0xe8] sm:$0xff]
        %v4335 = vld [vmem:[%s12 + $0xf0] sm:$0xff]
        %v4336 = vld [vmem:[%s12 + $0xf8] sm:$0xff]
        %v4337 = vld [vmem:[%s12 + $0x100] sm:$0xff]
        %v4338 = vld [vmem:[%s12 + $0x108] sm:$0xff]
        %v4339 = vld [vmem:[%s12 + $0x110] sm:$0xff]
        %v4340 = vld [vmem:[%s12 + $0x118] sm:$0xff]
        %v4341 = vld [vmem:[%s12 + $0x120] sm:$0xff]
        %v4342 = vld [vmem:[%s12 + $0x128] sm:$0xff]
        %v4343 = vld [vmem:[%s12 + $0x130] sm:$0xff]
        %v4344 = vld [vmem:[%s12 + $0x138] sm:$0xff]
        %v4345 = vld [vmem:[%s12 + $0x140] sm:$0xff]
        %v4346 = vld [vmem:[%s12 + $0x148] sm:$0xff]
        %v4347 = vld [vmem:[%s12 + $0x150] sm:$0xff]
        %v4348 = vld [vmem:[%s12 + $0x158] sm:$0xff]
        %v4349 = vld [vmem:[%s12 + $0x160] sm:$0xff]
        %v4350 = vld [vmem:[%s12 + $0x168] sm:$0xff]
        %v4351 = vld [vmem:[%s12 + $0x170] sm:$0xff]
        %v4352 = vld [vmem:[%s12 + $0x178] sm:$0xff]
        %v4353 = vld [vmem:[%s12 + $0x180] sm:$0xff]
        %v4354 = vld [vmem:[%s12 + $0x188] sm:$0xff]
        %v4355 = vld [vmem:[%s12 + $0x190] sm:$0xff]
        %v4356 = vld [vmem:[%s12 + $0x198] sm:$0xff]
        %v4357 = vld [vmem:[%s12 + $0x1a0] sm:$0xff]
        %v4358 = vld [vmem:[%s12 + $0x1a8] sm:$0xff]
        %v4359 = vld [vmem:[%s12 + $0x1b0] sm:$0xff]
        %v4360 = vld [vmem:[%s12 + $0x1b8] sm:$0xff]
        %v4361 = vld [vmem:[%s12 + $0x1c0] sm:$0xff]
        %v4362 = vld [vmem:[%s12 + $0x1c8] sm:$0xff]
        %v4363 = vld [vmem:[%s12 + $0x1d0] sm:$0xff]
        %v4364 = vld [vmem:[%s12 + $0x1d8] sm:$0xff]
        %v4365 = vld [vmem:[%s12 + $0x1e0] sm:$0xff]
        %v4366 = vld [vmem:[%s12 + $0x1e8] sm:$0xff]
        %v4367 = vld [vmem:[%s12 + $0x1f0] sm:$0xff]
        %v4368 = vld [vmem:[%s12 + $0x1f8] sm:$0xff]
        %v4369 = vld [vmem:[%s12 + $0x200] sm:$0xff]
        %v4370 = vld [vmem:[%s12 + $0x208] sm:$0xff]
        %v4371 = vld [vmem:[%s12 + $0x210] sm:$0xff]
        %v4372 = vld [vmem:[%s12 + $0x218] sm:$0xff]
        %v4373 = vld [vmem:[%s12 + $0x220] sm:$0xff]
        %v4374 = vld [vmem:[%s12 + $0x228] sm:$0xff]
        %v4375 = vld [vmem:[%s12 + $0x230] sm:$0xff]
        %v4376 = vld [vmem:[%s12 + $0x238] sm:$0xff]
        %v4377 = vld [vmem:[%s12 + $0x240] sm:$0xff]
        %v4378 = vld [vmem:[%s12 + $0x248] sm:$0xff]
        %v4379 = vld [vmem:[%s12 + $0x250] sm:$0xff]
        %v4380 = vld [vmem:[%s12 + $0x258] sm:$0xff]
        %v4381 = vld [vmem:[%s12 + $0x260] sm:$0xff]
        %v4382 = vld [vmem:[%s12 + $0x268] sm:$0xff]
        %v4383 = vld [vmem:[%s12 + $0x270] sm:$0xff]
        %v4384 = vld [vmem:[%s12 + $0x278] sm:$0xff]
        %v4385 = vld [vmem:[%s12 + $0x280] sm:$0xff]
        %v4386 = vld [vmem:[%s12 + $0x288] sm:$0xff]
        %v4387 = vld [vmem:[%s12 + $0x290] sm:$0xff]
        %v4388 = vld [vmem:[%s12 + $0x298] sm:$0xff]
        %v4389 = vld [vmem:[%s12 + $0x2a0] sm:$0xff]
        %v4390 = vld [vmem:[%s12 + $0x2a8] sm:$0xff]
        %v4391 = vld [vmem:[%s12 + $0x2b0] sm:$0xff]
        %v4392 = vld [vmem:[%s12 + $0x2b8] sm:$0xff]
        %v4393 = vld [vmem:[%s12 + $0x2c0] sm:$0xff]
        %v4394 = vld [vmem:[%s12 + $0x2c8] sm:$0xff]
        %v4395 = vld [vmem:[%s12 + $0x2d0] sm:$0xff]
        %v4396 = vld [vmem:[%s12 + $0x2d8] sm:$0xff]
        %v4397 = vld [vmem:[%s12 + $0x2e0] sm:$0xff]
        %v4398 = vld [vmem:[%s12 + $0x2e8] sm:$0xff]
        %v4399 = vld [vmem:[%s12 + $0x2f0] sm:$0xff]
        %v4400 = vld [vmem:[%s12 + $0x2f8] sm:$0xff]
        %v4401 = vld [vmem:[%s12 + $0x300] sm:$0xff]
        %v4402 = vld [vmem:[%s12 + $0x308] sm:$0xff]
        %v4403 = vld [vmem:[%s12 + $0x310] sm:$0xff]
        %v4404 = vld [vmem:[%s12 + $0x318] sm:$0xff]
        %v4405 = vld [vmem:[%s12 + $0x320] sm:$0xff]
        %v4406 = vld [vmem:[%s12 + $0x328] sm:$0xff]
        %v4407 = vld [vmem:[%s12 + $0x330] sm:$0xff]
        %v4408 = vld [vmem:[%s12 + $0x338] sm:$0xff]
        %v4409 = vld [vmem:[%s12 + $0x340] sm:$0xff]
        %v4410 = vld [vmem:[%s12 + $0x348] sm:$0xff]
        %v4411 = vld [vmem:[%s12 + $0x350] sm:$0xff]
        %v4412 = vld [vmem:[%s12 + $0x358] sm:$0xff]
        %v4413 = vld [vmem:[%s12 + $0x360] sm:$0xff]
        %v4414 = vld [vmem:[%s12 + $0x368] sm:$0xff]
        %v4415 = vld [vmem:[%s12 + $0x370] sm:$0xff]
        %v4416 = vld [vmem:[%s12 + $0x378] sm:$0xff]
        %v4417 = vld [vmem:[%s12 + $0x380] sm:$0xff]
        %v4418 = vld [vmem:[%s12 + $0x388] sm:$0xff]
        %v4419 = vld [vmem:[%s12 + $0x390] sm:$0xff]
        %v4420 = vld [vmem:[%s12 + $0x398] sm:$0xff]
        %v4421 = vld [vmem:[%s12 + $0x3a0] sm:$0xff]
        %v4422 = vld [vmem:[%s12 + $0x3a8] sm:$0xff]
        %v4423 = vld [vmem:[%s12 + $0x3b0] sm:$0xff]
        %v4424 = vld [vmem:[%s12 + $0x3b8] sm:$0xff]
        %v4425 = vld [vmem:[%s12 + $0x3c0] sm:$0xff]
        %v4426 = vld [vmem:[%s12 + $0x3c8] sm:$0xff]
        %v4427 = vld [vmem:[%s12 + $0x3d0] sm:$0xff]
        %v4428 = vld [vmem:[%s12 + $0x3d8] sm:$0xff]
        %v4429 = vld [vmem:[%s12 + $0x3e0] sm:$0xff]
        %v4430 = vld [vmem:[%s12 + $0x3e8] sm:$0xff]
        %v4431 = vld [vmem:[%s12 + $0x3f0] sm:$0xff]
        %v4432 = vld [vmem:[%s12 + $0x3f8] sm:$0xff]
        %v4433 = vld [vmem:[%s13] sm:$0x1]
        %v4434 = vld [vmem:[%s14] sm:$0x1]
        %v4435 = vld [vmem:[%s15] sm:$0x1]
        %4436 = vmatprep.subr.mxu0 %v4042
        %4437 = vmatpush1.msra.mxu0 %v4041
        %4438 = vmatprep.subr.mxu0 %v4034
        %4439 = vmatpush1.msra.mxu0 %v4033
        %4440 = vmatprep.subr.mxu0 %v4026
        %4441 = vmatpush1.msra.mxu0 %v4025
        %4442 = vmatprep.subr.mxu0 %v4018
        %4443 = vmatpush1.msra.mxu0 %v4017
        %4444 = vmatprep.subr.mxu0 %v4010
        %4445 = vmatpush1.msra.mxu0 %v4009
        %4446 = vmatprep.subr.mxu0 %v4002
        %4447 = vmatpush1.msra.mxu0 %v4001
        %4448 = vmatprep.subr.mxu0 %v3994
        %4449 = vmatpush1.msra.mxu0 %v3993
        %4450 = vmatprep.subr.mxu0 %v3986
        %4451 = vmatpush1.msra.mxu0 %v3985
        %4452 = vmatprep.subr.mxu0 %v3978
        %4453 = vmatpush1.msra.mxu0 %v3977
        %4454 = vmatprep.subr.mxu0 %v3970
        %4455 = vmatpush1.msra.mxu0 %v3969
        %4456 = vmatprep.subr.mxu0 %v3962
        %4457 = vmatpush1.msra.mxu0 %v3961
        %4458 = vmatprep.subr.mxu0 %v3954
        %4459 = vmatpush1.msra.mxu0 %v3953
        %4460 = vmatprep.subr.mxu0 %v3946
        %4461 = vmatpush1.msra.mxu0 %v3945
        %4462 = vmatprep.subr.mxu0 %v3938
        %4463 = vmatpush1.msra.mxu0 %v3937
        %4464 = vmatprep.subr.mxu0 %v3930
        %4465 = vmatpush1.msra.mxu0 %v3929
        %4466 = vmatprep.subr.mxu0 %v3922
        %4467 = vmatpush1.msra.mxu0 %v3921
        %4468 = vmatprep.subr.mxu0 0.0
        %4469 = vmatpush2.msra.mxu0 0.0
        %4470 = vmatprep.subr.mxu0 0.0
        %4471 = vmatpush2.msra.mxu0 0.0
        %4472 = vmatprep.subr.mxu0 0.0
        %4473 = vmatpush2.msra.mxu0 0.0
        %4474 = vmatprep.subr.mxu0 0.0
        %4475 = vmatpush2.msra.mxu0 0.0
        %4476 = vmatprep.subr.mxu0 0.0
        %4477 = vmatpush2.msra.mxu0 0.0
        %4478 = vmatprep.subr.mxu0 0.0
        %4479 = vmatpush2.msra.mxu0 0.0
        %4480 = vmatprep.subr.mxu0 0.0
        %4481 = vmatpush2.msra.mxu0 0.0
        %4482 = vmatprep.subr.mxu0 0.0
        %4483 = vmatpush2.msra.mxu0 0.0
        %4484 = vmatprep.subr.mxu0 0.0
        %4485 = vmatpush2.msra.mxu0 0.0
        %4486 = vmatprep.subr.mxu0 0.0
        %4487 = vmatpush2.msra.mxu0 0.0
        %4488 = vmatprep.subr.mxu0 0.0
        %4489 = vmatpush2.msra.mxu0 0.0
        %4490 = vmatprep.subr.mxu0 0.0
        %4491 = vmatpush2.msra.mxu0 0.0
        %4492 = vmatprep.subr.mxu0 0.0
        %4493 = vmatpush2.msra.mxu0 0.0
        %4494 = vmatprep.subr.mxu0 0.0
        %4495 = vmatpush2.msra.mxu0 0.0
        %4496 = vmatprep.subr.mxu0 0.0
        %4497 = vmatpush2.msra.mxu0 0.0
        %4498 = vmatprep.subr.mxu0 0.0
        %4499 = vmatpush2.msra.mxu0 0.0
        %4500 = vmatprep.mubr.f32.mxu0 0.0
        %4501 = vmatmul.mubr.f32.gmra.mxu0 %v3920
        %v4502 = vpop.f32.mrf.mxu0
        %v4503 = vadd.f32 0.0, %v4502
        %v4504 = vpop.f32.mrf.mxu0
        %v4505 = vadd.f32 0.0, %v4504
        %4506 = vdwg.mxu0
        %4507 = vmatprep.subr.mxu0 %v4044
        %4508 = vmatpush1.msra.mxu0 %v4043
        %4509 = vmatprep.subr.mxu0 %v4036
        %4510 = vmatpush1.msra.mxu0 %v4035
        %4511 = vmatprep.subr.mxu0 %v4028
        %4512 = vmatpush1.msra.mxu0 %v4027
        %4513 = vmatprep.subr.mxu0 %v4020
        %4514 = vmatpush1.msra.mxu0 %v4019
        %4515 = vmatprep.subr.mxu0 %v4012
        %4516 = vmatpush1.msra.mxu0 %v4011
        %4517 = vmatprep.subr.mxu0 %v4004
        %4518 = vmatpush1.msra.mxu0 %v4003
        %4519 = vmatprep.subr.mxu0 %v3996
        %4520 = vmatpush1.msra.mxu0 %v3995
        %4521 = vmatprep.subr.mxu0 %v3988
        %4522 = vmatpush1.msra.mxu0 %v3987
        %4523 = vmatprep.subr.mxu0 %v3980
        %4524 = vmatpush1.msra.mxu0 %v3979
        %4525 = vmatprep.subr.mxu0 %v3972
        %4526 = vmatpush1.msra.mxu0 %v3971
        %4527 = vmatprep.subr.mxu0 %v3964
        %4528 = vmatpush1.msra.mxu0 %v3963
        %4529 = vmatprep.subr.mxu0 %v3956
        %4530 = vmatpush1.msra.mxu0 %v3955
        %4531 = vmatprep.subr.mxu0 %v3948
        %4532 = vmatpush1.msra.mxu0 %v3947
        %4533 = vmatprep.subr.mxu0 %v3940
        %4534 = vmatpush1.msra.mxu0 %v3939
        %4535 = vmatprep.subr.mxu0 %v3932
        %4536 = vmatpush1.msra.mxu0 %v3931
        %4537 = vmatprep.subr.mxu0 %v3924
        %4538 = vmatpush1.msra.mxu0 %v3923
        %4539 = vmatprep.subr.mxu0 0.0
        %4540 = vmatpush2.msra.mxu0 0.0
        %4541 = vmatprep.subr.mxu0 0.0
        %4542 = vmatpush2.msra.mxu0 0.0
        %4543 = vmatprep.subr.mxu0 0.0
        %4544 = vmatpush2.msra.mxu0 0.0
        %4545 = vmatprep.subr.mxu0 0.0
        %4546 = vmatpush2.msra.mxu0 0.0
        %4547 = vmatprep.subr.mxu0 0.0
        %4548 = vmatpush2.msra.mxu0 0.0
        %4549 = vmatprep.subr.mxu0 0.0
        %4550 = vmatpush2.msra.mxu0 0.0
        %4551 = vmatprep.subr.mxu0 0.0
        %4552 = vmatpush2.msra.mxu0 0.0
        %4553 = vmatprep.subr.mxu0 0.0
        %4554 = vmatpush2.msra.mxu0 0.0
        %4555 = vmatprep.subr.mxu0 0.0
        %4556 = vmatpush2.msra.mxu0 0.0
        %4557 = vmatprep.subr.mxu0 0.0
        %4558 = vmatpush2.msra.mxu0 0.0
        %4559 = vmatprep.subr.mxu0 0.0
        %4560 = vmatpush2.msra.mxu0 0.0
        %4561 = vmatprep.subr.mxu0 0.0
        %4562 = vmatpush2.msra.mxu0 0.0
        %4563 = vmatprep.subr.mxu0 0.0
        %4564 = vmatpush2.msra.mxu0 0.0
        %4565 = vmatprep.subr.mxu0 0.0
        %4566 = vmatpush2.msra.mxu0 0.0
        %4567 = vmatprep.subr.mxu0 0.0
        %4568 = vmatpush2.msra.mxu0 0.0
        %4569 = vmatprep.subr.mxu0 0.0
        %4570 = vmatpush2.msra.mxu0 0.0
        %4571 = vmatprep.mubr.f32.mxu0 0.0
        %4572 = vmatmul.mubr.f32.gmra.mxu0 %v3920
        %v4573 = vpop.f32.mrf.mxu0
        %v4574 = vadd.f32 0.0, %v4573
        %v4575 = vpop.f32.mrf.mxu0
        %v4576 = vadd.f32 0.0, %v4575
        %4577 = vdwg.mxu0
        %4578 = vmatprep.subr.mxu0 %v4046
        %4579 = vmatpush1.msra.mxu0 %v4045
        %4580 = vmatprep.subr.mxu0 %v4038
        %4581 = vmatpush1.msra.mxu0 %v4037
        %4582 = vmatprep.subr.mxu0 %v4030
        %4583 = vmatpush1.msra.mxu0 %v4029
        %4584 = vmatprep.subr.mxu0 %v4022
        %4585 = vmatpush1.msra.mxu0 %v4021
        %4586 = vmatprep.subr.mxu0 %v4014
        %4587 = vmatpush1.msra.mxu0 %v4013
        %4588 = vmatprep.subr.mxu0 %v4006
        %4589 = vmatpush1.msra.mxu0 %v4005
        %4590 = vmatprep.subr.mxu0 %v3998
        %4591 = vmatpush1.msra.mxu0 %v3997
        %4592 = vmatprep.subr.mxu0 %v3990
        %4593 = vmatpush1.msra.mxu0 %v3989
        %4594 = vmatprep.subr.mxu0 %v3982
        %4595 = vmatpush1.msra.mxu0 %v3981
        %4596 = vmatprep.subr.mxu0 %v3974
        %4597 = vmatpush1.msra.mxu0 %v3973
        %4598 = vmatprep.subr.mxu0 %v3966
        %4599 = vmatpush1.msra.mxu0 %v3965
        %4600 = vmatprep.subr.mxu0 %v3958
        %4601 = vmatpush1.msra.mxu0 %v3957
        %4602 = vmatprep.subr.mxu0 %v3950
        %4603 = vmatpush1.msra.mxu0 %v3949
        %4604 = vmatprep.subr.mxu0 %v3942
        %4605 = vmatpush1.msra.mxu0 %v3941
        %4606 = vmatprep.subr.mxu0 %v3934
        %4607 = vmatpush1.msra.mxu0 %v3933
        %4608 = vmatprep.subr.mxu0 %v3926
        %4609 = vmatpush1.msra.mxu0 %v3925
        %4610 = vmatprep.subr.mxu0 0.0
        %4611 = vmatpush2.msra.mxu0 0.0
        %4612 = vmatprep.subr.mxu0 0.0
        %4613 = vmatpush2.msra.mxu0 0.0
        %4614 = vmatprep.subr.mxu0 0.0
        %4615 = vmatpush2.msra.mxu0 0.0
        %4616 = vmatprep.subr.mxu0 0.0
        %4617 = vmatpush2.msra.mxu0 0.0
        %4618 = vmatprep.subr.mxu0 0.0
        %4619 = vmatpush2.msra.mxu0 0.0
        %4620 = vmatprep.subr.mxu0 0.0
        %4621 = vmatpush2.msra.mxu0 0.0
        %4622 = vmatprep.subr.mxu0 0.0
        %4623 = vmatpush2.msra.mxu0 0.0
        %4624 = vmatprep.subr.mxu0 0.0
        %4625 = vmatpush2.msra.mxu0 0.0
        %4626 = vmatprep.subr.mxu0 0.0
        %4627 = vmatpush2.msra.mxu0 0.0
        %4628 = vmatprep.subr.mxu0 0.0
        %4629 = vmatpush2.msra.mxu0 0.0
        %4630 = vmatprep.subr.mxu0 0.0
        %4631 = vmatpush2.msra.mxu0 0.0
        %4632 = vmatprep.subr.mxu0 0.0
        %4633 = vmatpush2.msra.mxu0 0.0
        %4634 = vmatprep.subr.mxu0 0.0
        %4635 = vmatpush2.msra.mxu0 0.0
        %4636 = vmatprep.subr.mxu0 0.0
        %4637 = vmatpush2.msra.mxu0 0.0
        %4638 = vmatprep.subr.mxu0 0.0
        %4639 = vmatpush2.msra.mxu0 0.0
        %4640 = vmatprep.subr.mxu0 0.0
        %4641 = vmatpush2.msra.mxu0 0.0
        %4642 = vmatprep.mubr.f32.mxu0 0.0
        %4643 = vmatmul.mubr.f32.gmra.mxu0 %v3920
        %v4644 = vpop.f32.mrf.mxu0
        %v4645 = vadd.f32 0.0, %v4644
        %v4646 = vpop.f32.mrf.mxu0
        %v4647 = vadd.f32 0.0, %v4646
        %4648 = vdwg.mxu0
        %4649 = vmatprep.subr.mxu0 %v4048
        %4650 = vmatpush1.msra.mxu0 %v4047
        %4651 = vmatprep.subr.mxu0 %v4040
        %4652 = vmatpush1.msra.mxu0 %v4039
        %4653 = vmatprep.subr.mxu0 %v4032
        %4654 = vmatpush1.msra.mxu0 %v4031
        %4655 = vmatprep.subr.mxu0 %v4024
        %4656 = vmatpush1.msra.mxu0 %v4023
        %4657 = vmatprep.subr.mxu0 %v4016
        %4658 = vmatpush1.msra.mxu0 %v4015
        %4659 = vmatprep.subr.mxu0 %v4008
        %4660 = vmatpush1.msra.mxu0 %v4007
        %4661 = vmatprep.subr.mxu0 %v4000
        %4662 = vmatpush1.msra.mxu0 %v3999
        %4663 = vmatprep.subr.mxu0 %v3992
        %4664 = vmatpush1.msra.mxu0 %v3991
        %4665 = vmatprep.subr.mxu0 %v3984
        %4666 = vmatpush1.msra.mxu0 %v3983
        %4667 = vmatprep.subr.mxu0 %v3976
        %4668 = vmatpush1.msra.mxu0 %v3975
        %4669 = vmatprep.subr.mxu0 %v3968
        %4670 = vmatpush1.msra.mxu0 %v3967
        %4671 = vmatprep.subr.mxu0 %v3960
        %4672 = vmatpush1.msra.mxu0 %v3959
        %4673 = vmatprep.subr.mxu0 %v3952
        %4674 = vmatpush1.msra.mxu0 %v3951
        %4675 = vmatprep.subr.mxu0 %v3944
        %4676 = vmatpush1.msra.mxu0 %v3943
        %4677 = vmatprep.subr.mxu0 %v3936
        %4678 = vmatpush1.msra.mxu0 %v3935
        %4679 = vmatprep.subr.mxu0 %v3928
        %4680 = vmatpush1.msra.mxu0 %v3927
        %4681 = vmatprep.subr.mxu0 0.0
        %4682 = vmatpush2.msra.mxu0 0.0
        %4683 = vmatprep.subr.mxu0 0.0
        %4684 = vmatpush2.msra.mxu0 0.0
        %4685 = vmatprep.subr.mxu0 0.0
        %4686 = vmatpush2.msra.mxu0 0.0
        %4687 = vmatprep.subr.mxu0 0.0
        %4688 = vmatpush2.msra.mxu0 0.0
        %4689 = vmatprep.subr.mxu0 0.0
        %4690 = vmatpush2.msra.mxu0 0.0
        %4691 = vmatprep.subr.mxu0 0.0
        %4692 = vmatpush2.msra.mxu0 0.0
        %4693 = vmatprep.subr.mxu0 0.0
        %4694 = vmatpush2.msra.mxu0 0.0
        %4695 = vmatprep.subr.mxu0 0.0
        %4696 = vmatpush2.msra.mxu0 0.0
        %4697 = vmatprep.subr.mxu0 0.0
        %4698 = vmatpush2.msra.mxu0 0.0
        %4699 = vmatprep.subr.mxu0 0.0
        %4700 = vmatpush2.msra.mxu0 0.0
        %4701 = vmatprep.subr.mxu0 0.0
        %4702 = vmatpush2.msra.mxu0 0.0
        %4703 = vmatprep.subr.mxu0 0.0
        %4704 = vmatpush2.msra.mxu0 0.0
        %4705 = vmatprep.subr.mxu0 0.0
        %4706 = vmatpush2.msra.mxu0 0.0
        %4707 = vmatprep.subr.mxu0 0.0
        %4708 = vmatpush2.msra.mxu0 0.0
        %4709 = vmatprep.subr.mxu0 0.0
        %4710 = vmatpush2.msra.mxu0 0.0
        %4711 = vmatprep.subr.mxu0 0.0
        %4712 = vmatpush2.msra.mxu0 0.0
        %4713 = vmatprep.mubr.f32.mxu0 0.0
        %4714 = vmatmul.mubr.f32.gmra.mxu0 %v3920
        %v4715 = vpop.f32.mrf.mxu0
        %v4716 = vadd.f32 0.0, %v4715
        %v4717 = vpop.f32.mrf.mxu0
        %v4718 = vadd.f32 0.0, %v4717
        %4719 = vdwg.mxu0
        %4720 = vmatprep.subr.mxu0 %v4170
        %4721 = vmatpush1.msra.mxu0 %v4169
        %4722 = vmatprep.subr.mxu0 %v4162
        %4723 = vmatpush1.msra.mxu0 %v4161
        %4724 = vmatprep.subr.mxu0 %v4154
        %4725 = vmatpush1.msra.mxu0 %v4153
        %4726 = vmatprep.subr.mxu0 %v4146
        %4727 = vmatpush1.msra.mxu0 %v4145
        %4728 = vmatprep.subr.mxu0 %v4138
        %4729 = vmatpush1.msra.mxu0 %v4137
        %4730 = vmatprep.subr.mxu0 %v4130
        %4731 = vmatpush1.msra.mxu0 %v4129
        %4732 = vmatprep.subr.mxu0 %v4122
        %4733 = vmatpush1.msra.mxu0 %v4121
        %4734 = vmatprep.subr.mxu0 %v4114
        %4735 = vmatpush1.msra.mxu0 %v4113
        %4736 = vmatprep.subr.mxu0 %v4106
        %4737 = vmatpush1.msra.mxu0 %v4105
        %4738 = vmatprep.subr.mxu0 %v4098
        %4739 = vmatpush1.msra.mxu0 %v4097
        %4740 = vmatprep.subr.mxu0 %v4090
        %4741 = vmatpush1.msra.mxu0 %v4089
        %4742 = vmatprep.subr.mxu0 %v4082
        %4743 = vmatpush1.msra.mxu0 %v4081
        %4744 = vmatprep.subr.mxu0 %v4074
        %4745 = vmatpush1.msra.mxu0 %v4073
        %4746 = vmatprep.subr.mxu0 %v4066
        %4747 = vmatpush1.msra.mxu0 %v4065
        %4748 = vmatprep.subr.mxu0 %v4058
        %4749 = vmatpush1.msra.mxu0 %v4057
        %4750 = vmatprep.subr.mxu0 %v4050
        %4751 = vmatpush1.msra.mxu0 %v4049
        %4752 = vmatprep.subr.mxu0 0.0
        %4753 = vmatpush2.msra.mxu0 0.0
        %4754 = vmatprep.subr.mxu0 0.0
        %4755 = vmatpush2.msra.mxu0 0.0
        %4756 = vmatprep.subr.mxu0 0.0
        %4757 = vmatpush2.msra.mxu0 0.0
        %4758 = vmatprep.subr.mxu0 0.0
        %4759 = vmatpush2.msra.mxu0 0.0
        %4760 = vmatprep.subr.mxu0 0.0
        %4761 = vmatpush2.msra.mxu0 0.0
        %4762 = vmatprep.subr.mxu0 0.0
        %4763 = vmatpush2.msra.mxu0 0.0
        %4764 = vmatprep.subr.mxu0 0.0
        %4765 = vmatpush2.msra.mxu0 0.0
        %4766 = vmatprep.subr.mxu0 0.0
        %4767 = vmatpush2.msra.mxu0 0.0
        %4768 = vmatprep.subr.mxu0 0.0
        %4769 = vmatpush2.msra.mxu0 0.0
        %4770 = vmatprep.subr.mxu0 0.0
        %4771 = vmatpush2.msra.mxu0 0.0
        %4772 = vmatprep.subr.mxu0 0.0
        %4773 = vmatpush2.msra.mxu0 0.0
        %4774 = vmatprep.subr.mxu0 0.0
        %4775 = vmatpush2.msra.mxu0 0.0
        %4776 = vmatprep.subr.mxu0 0.0
        %4777 = vmatpush2.msra.mxu0 0.0
        %4778 = vmatprep.subr.mxu0 0.0
        %4779 = vmatpush2.msra.mxu0 0.0
        %4780 = vmatprep.subr.mxu0 0.0
        %4781 = vmatpush2.msra.mxu0 0.0
        %4782 = vmatprep.subr.mxu0 0.0
        %4783 = vmatpush2.msra.mxu0 0.0
        %4784 = vmatprep.mubr.f32.mxu0 0.0
        %4785 = vmatmul.mubr.f32.gmra.mxu0 %v702
        %v4786 = vpop.f32.mrf.mxu0
        %v4787 = vadd.f32 0.0, %v4786
        %v4788 = vpop.f32.mrf.mxu0
        %v4789 = vadd.f32 0.0, %v4788
        %4790 = vmatprep.mubr.f32.mxu0 0.0
        %4791 = vmatmul.mubr.f32.gmra.mxu0 %v703
        %v4792 = vpop.f32.mrf.mxu0
        %v4793 = vadd.f32 0.0, %v4792
        %v4794 = vpop.f32.mrf.mxu0
        %v4795 = vadd.f32 0.0, %v4794
        %4796 = vdwg.mxu0
        %4797 = vmatprep.subr.mxu0 %v4172
        %4798 = vmatpush1.msra.mxu0 %v4171
        %4799 = vmatprep.subr.mxu0 %v4164
        %4800 = vmatpush1.msra.mxu0 %v4163
        %4801 = vmatprep.subr.mxu0 %v4156
        %4802 = vmatpush1.msra.mxu0 %v4155
        %4803 = vmatprep.subr.mxu0 %v4148
        %4804 = vmatpush1.msra.mxu0 %v4147
        %4805 = vmatprep.subr.mxu0 %v4140
        %4806 = vmatpush1.msra.mxu0 %v4139
        %4807 = vmatprep.subr.mxu0 %v4132
        %4808 = vmatpush1.msra.mxu0 %v4131
        %4809 = vmatprep.subr.mxu0 %v4124
        %4810 = vmatpush1.msra.mxu0 %v4123
        %4811 = vmatprep.subr.mxu0 %v4116
        %4812 = vmatpush1.msra.mxu0 %v4115
        %4813 = vmatprep.subr.mxu0 %v4108
        %4814 = vmatpush1.msra.mxu0 %v4107
        %4815 = vmatprep.subr.mxu0 %v4100
        %4816 = vmatpush1.msra.mxu0 %v4099
        %4817 = vmatprep.subr.mxu0 %v4092
        %4818 = vmatpush1.msra.mxu0 %v4091
        %4819 = vmatprep.subr.mxu0 %v4084
        %4820 = vmatpush1.msra.mxu0 %v4083
        %4821 = vmatprep.subr.mxu0 %v4076
        %4822 = vmatpush1.msra.mxu0 %v4075
        %4823 = vmatprep.subr.mxu0 %v4068
        %4824 = vmatpush1.msra.mxu0 %v4067
        %4825 = vmatprep.subr.mxu0 %v4060
        %4826 = vmatpush1.msra.mxu0 %v4059
        %4827 = vmatprep.subr.mxu0 %v4052
        %4828 = vmatpush1.msra.mxu0 %v4051
        %4829 = vmatprep.subr.mxu0 0.0
        %4830 = vmatpush2.msra.mxu0 0.0
        %4831 = vmatprep.subr.mxu0 0.0
        %4832 = vmatpush2.msra.mxu0 0.0
        %4833 = vmatprep.subr.mxu0 0.0
        %4834 = vmatpush2.msra.mxu0 0.0
        %4835 = vmatprep.subr.mxu0 0.0
        %4836 = vmatpush2.msra.mxu0 0.0
        %4837 = vmatprep.subr.mxu0 0.0
        %4838 = vmatpush2.msra.mxu0 0.0
        %4839 = vmatprep.subr.mxu0 0.0
        %4840 = vmatpush2.msra.mxu0 0.0
        %4841 = vmatprep.subr.mxu0 0.0
        %4842 = vmatpush2.msra.mxu0 0.0
        %4843 = vmatprep.subr.mxu0 0.0
        %4844 = vmatpush2.msra.mxu0 0.0
        %4845 = vmatprep.subr.mxu0 0.0
        %4846 = vmatpush2.msra.mxu0 0.0
        %4847 = vmatprep.subr.mxu0 0.0
        %4848 = vmatpush2.msra.mxu0 0.0
        %4849 = vmatprep.subr.mxu0 0.0
        %4850 = vmatpush2.msra.mxu0 0.0
        %4851 = vmatprep.subr.mxu0 0.0
        %4852 = vmatpush2.msra.mxu0 0.0
        %4853 = vmatprep.subr.mxu0 0.0
        %4854 = vmatpush2.msra.mxu0 0.0
        %4855 = vmatprep.subr.mxu0 0.0
        %4856 = vmatpush2.msra.mxu0 0.0
        %4857 = vmatprep.subr.mxu0 0.0
        %4858 = vmatpush2.msra.mxu0 0.0
        %4859 = vmatprep.subr.mxu0 0.0
        %4860 = vmatpush2.msra.mxu0 0.0
        %4861 = vmatprep.mubr.f32.mxu0 0.0
        %4862 = vmatmul.mubr.f32.gmra.mxu0 %v702
        %v4863 = vpop.f32.mrf.mxu0
        %v4864 = vadd.f32 0.0, %v4863
        %v4865 = vpop.f32.mrf.mxu0
        %v4866 = vadd.f32 0.0, %v4865
        %4867 = vmatprep.mubr.f32.mxu0 0.0
        %4868 = vmatmul.mubr.f32.gmra.mxu0 %v703
        %v4869 = vpop.f32.mrf.mxu0
        %v4870 = vadd.f32 0.0, %v4869
        %v4871 = vpop.f32.mrf.mxu0
        %v4872 = vadd.f32 0.0, %v4871
        %4873 = vdwg.mxu0
        %4874 = vmatprep.subr.mxu0 %v4174
        %4875 = vmatpush1.msra.mxu0 %v4173
        %4876 = vmatprep.subr.mxu0 %v4166
        %4877 = vmatpush1.msra.mxu0 %v4165
        %4878 = vmatprep.subr.mxu0 %v4158
        %4879 = vmatpush1.msra.mxu0 %v4157
        %4880 = vmatprep.subr.mxu0 %v4150
        %4881 = vmatpush1.msra.mxu0 %v4149
        %4882 = vmatprep.subr.mxu0 %v4142
        %4883 = vmatpush1.msra.mxu0 %v4141
        %4884 = vmatprep.subr.mxu0 %v4134
        %4885 = vmatpush1.msra.mxu0 %v4133
        %4886 = vmatprep.subr.mxu0 %v4126
        %4887 = vmatpush1.msra.mxu0 %v4125
        %4888 = vmatprep.subr.mxu0 %v4118
        %4889 = vmatpush1.msra.mxu0 %v4117
        %4890 = vmatprep.subr.mxu0 %v4110
        %4891 = vmatpush1.msra.mxu0 %v4109
        %4892 = vmatprep.subr.mxu0 %v4102
        %4893 = vmatpush1.msra.mxu0 %v4101
        %4894 = vmatprep.subr.mxu0 %v4094
        %4895 = vmatpush1.msra.mxu0 %v4093
        %4896 = vmatprep.subr.mxu0 %v4086
        %4897 = vmatpush1.msra.mxu0 %v4085
        %4898 = vmatprep.subr.mxu0 %v4078
        %4899 = vmatpush1.msra.mxu0 %v4077
        %4900 = vmatprep.subr.mxu0 %v4070
        %4901 = vmatpush1.msra.mxu0 %v4069
        %4902 = vmatprep.subr.mxu0 %v4062
        %4903 = vmatpush1.msra.mxu0 %v4061
        %4904 = vmatprep.subr.mxu0 %v4054
        %4905 = vmatpush1.msra.mxu0 %v4053
        %4906 = vmatprep.subr.mxu0 0.0
        %4907 = vmatpush2.msra.mxu0 0.0
        %4908 = vmatprep.subr.mxu0 0.0
        %4909 = vmatpush2.msra.mxu0 0.0
        %4910 = vmatprep.subr.mxu0 0.0
        %4911 = vmatpush2.msra.mxu0 0.0
        %4912 = vmatprep.subr.mxu0 0.0
        %4913 = vmatpush2.msra.mxu0 0.0
        %4914 = vmatprep.subr.mxu0 0.0
        %4915 = vmatpush2.msra.mxu0 0.0
        %4916 = vmatprep.subr.mxu0 0.0
        %4917 = vmatpush2.msra.mxu0 0.0
        %4918 = vmatprep.subr.mxu0 0.0
        %4919 = vmatpush2.msra.mxu0 0.0
        %4920 = vmatprep.subr.mxu0 0.0
        %4921 = vmatpush2.msra.mxu0 0.0
        %4922 = vmatprep.subr.mxu0 0.0
        %4923 = vmatpush2.msra.mxu0 0.0
        %4924 = vmatprep.subr.mxu0 0.0
        %4925 = vmatpush2.msra.mxu0 0.0
        %4926 = vmatprep.subr.mxu0 0.0
        %4927 = vmatpush2.msra.mxu0 0.0
        %4928 = vmatprep.subr.mxu0 0.0
        %4929 = vmatpush2.msra.mxu0 0.0
        %4930 = vmatprep.subr.mxu0 0.0
        %4931 = vmatpush2.msra.mxu0 0.0
        %4932 = vmatprep.subr.mxu0 0.0
        %4933 = vmatpush2.msra.mxu0 0.0
        %4934 = vmatprep.subr.mxu0 0.0
        %4935 = vmatpush2.msra.mxu0 0.0
        %4936 = vmatprep.subr.mxu0 0.0
        %4937 = vmatpush2.msra.mxu0 0.0
        %4938 = vmatprep.mubr.f32.mxu0 0.0
        %4939 = vmatmul.mubr.f32.gmra.mxu0 %v702
        %v4940 = vpop.f32.mrf.mxu0
        %v4941 = vadd.f32 0.0, %v4940
        %v4942 = vpop.f32.mrf.mxu0
        %v4943 = vadd.f32 0.0, %v4942
        %4944 = vmatprep.mubr.f32.mxu0 0.0
        %4945 = vmatmul.mubr.f32.gmra.mxu0 %v703
        %v4946 = vpop.f32.mrf.mxu0
        %v4947 = vadd.f32 0.0, %v4946
        %v4948 = vpop.f32.mrf.mxu0
        %v4949 = vadd.f32 0.0, %v4948
        %4950 = vdwg.mxu0
        %4951 = vmatprep.subr.mxu0 %v4176
        %4952 = vmatpush1.msra.mxu0 %v4175
        %4953 = vmatprep.subr.mxu0 %v4168
        %4954 = vmatpush1.msra.mxu0 %v4167
        %4955 = vmatprep.subr.mxu0 %v4160
        %4956 = vmatpush1.msra.mxu0 %v4159
        %4957 = vmatprep.subr.mxu0 %v4152
        %4958 = vmatpush1.msra.mxu0 %v4151
        %4959 = vmatprep.subr.mxu0 %v4144
        %4960 = vmatpush1.msra.mxu0 %v4143
        %4961 = vmatprep.subr.mxu0 %v4136
        %4962 = vmatpush1.msra.mxu0 %v4135
        %4963 = vmatprep.subr.mxu0 %v4128
        %4964 = vmatpush1.msra.mxu0 %v4127
        %4965 = vmatprep.subr.mxu0 %v4120
        %4966 = vmatpush1.msra.mxu0 %v4119
        %4967 = vmatprep.subr.mxu0 %v4112
        %4968 = vmatpush1.msra.mxu0 %v4111
        %4969 = vmatprep.subr.mxu0 %v4104
        %4970 = vmatpush1.msra.mxu0 %v4103
        %4971 = vmatprep.subr.mxu0 %v4096
        %4972 = vmatpush1.msra.mxu0 %v4095
        %4973 = vmatprep.subr.mxu0 %v4088
        %4974 = vmatpush1.msra.mxu0 %v4087
        %4975 = vmatprep.subr.mxu0 %v4080
        %4976 = vmatpush1.msra.mxu0 %v4079
        %4977 = vmatprep.subr.mxu0 %v4072
        %4978 = vmatpush1.msra.mxu0 %v4071
        %4979 = vmatprep.subr.mxu0 %v4064
        %4980 = vmatpush1.msra.mxu0 %v4063
        %4981 = vmatprep.subr.mxu0 %v4056
        %4982 = vmatpush1.msra.mxu0 %v4055
        %4983 = vmatprep.subr.mxu0 0.0
        %4984 = vmatpush2.msra.mxu0 0.0
        %4985 = vmatprep.subr.mxu0 0.0
        %4986 = vmatpush2.msra.mxu0 0.0
        %4987 = vmatprep.subr.mxu0 0.0
        %4988 = vmatpush2.msra.mxu0 0.0
        %4989 = vmatprep.subr.mxu0 0.0
        %4990 = vmatpush2.msra.mxu0 0.0
        %4991 = vmatprep.subr.mxu0 0.0
        %4992 = vmatpush2.msra.mxu0 0.0
        %4993 = vmatprep.subr.mxu0 0.0
        %4994 = vmatpush2.msra.mxu0 0.0
        %4995 = vmatprep.subr.mxu0 0.0
        %4996 = vmatpush2.msra.mxu0 0.0
        %4997 = vmatprep.subr.mxu0 0.0
        %4998 = vmatpush2.msra.mxu0 0.0
        %4999 = vmatprep.subr.mxu0 0.0
        %5000 = vmatpush2.msra.mxu0 0.0
        %5001 = vmatprep.subr.mxu0 0.0
        %5002 = vmatpush2.msra.mxu0 0.0
        %5003 = vmatprep.subr.mxu0 0.0
        %5004 = vmatpush2.msra.mxu0 0.0
        %5005 = vmatprep.subr.mxu0 0.0
        %5006 = vmatpush2.msra.mxu0 0.0
        %5007 = vmatprep.subr.mxu0 0.0
        %5008 = vmatpush2.msra.mxu0 0.0
        %5009 = vmatprep.subr.mxu0 0.0
        %5010 = vmatpush2.msra.mxu0 0.0
        %5011 = vmatprep.subr.mxu0 0.0
        %5012 = vmatpush2.msra.mxu0 0.0
        %5013 = vmatprep.subr.mxu0 0.0
        %5014 = vmatpush2.msra.mxu0 0.0
        %5015 = vmatprep.mubr.f32.mxu0 0.0
        %5016 = vmatmul.mubr.f32.gmra.mxu0 %v702
        %v5017 = vpop.f32.mrf.mxu0
        %v5018 = vadd.f32 0.0, %v5017
        %v5019 = vpop.f32.mrf.mxu0
        %v5020 = vadd.f32 0.0, %v5019
        %5021 = vmatprep.mubr.f32.mxu0 0.0
        %5022 = vmatmul.mubr.f32.gmra.mxu0 %v703
        %v5023 = vpop.f32.mrf.mxu0
        %v5024 = vadd.f32 0.0, %v5023
        %v5025 = vpop.f32.mrf.mxu0
        %v5026 = vadd.f32 0.0, %v5025
        %5027 = vdwg.mxu0
        %5028 = vmatprep.subr.mxu0 %v4298
        %5029 = vmatpush1.msra.mxu0 %v4297
        %5030 = vmatprep.subr.mxu0 %v4290
        %5031 = vmatpush1.msra.mxu0 %v4289
        %5032 = vmatprep.subr.mxu0 %v4282
        %5033 = vmatpush1.msra.mxu0 %v4281
        %5034 = vmatprep.subr.mxu0 %v4274
        %5035 = vmatpush1.msra.mxu0 %v4273
        %5036 = vmatprep.subr.mxu0 %v4266
        %5037 = vmatpush1.msra.mxu0 %v4265
        %5038 = vmatprep.subr.mxu0 %v4258
        %5039 = vmatpush1.msra.mxu0 %v4257
        %5040 = vmatprep.subr.mxu0 %v4250
        %5041 = vmatpush1.msra.mxu0 %v4249
        %5042 = vmatprep.subr.mxu0 %v4242
        %5043 = vmatpush1.msra.mxu0 %v4241
        %5044 = vmatprep.subr.mxu0 %v4234
        %5045 = vmatpush1.msra.mxu0 %v4233
        %5046 = vmatprep.subr.mxu0 %v4226
        %5047 = vmatpush1.msra.mxu0 %v4225
        %5048 = vmatprep.subr.mxu0 %v4218
        %5049 = vmatpush1.msra.mxu0 %v4217
        %5050 = vmatprep.subr.mxu0 %v4210
        %5051 = vmatpush1.msra.mxu0 %v4209
        %5052 = vmatprep.subr.mxu0 %v4202
        %5053 = vmatpush1.msra.mxu0 %v4201
        %5054 = vmatprep.subr.mxu0 %v4194
        %5055 = vmatpush1.msra.mxu0 %v4193
        %5056 = vmatprep.subr.mxu0 %v4186
        %5057 = vmatpush1.msra.mxu0 %v4185
        %5058 = vmatprep.subr.mxu0 %v4178
        %5059 = vmatpush1.msra.mxu0 %v4177
        %5060 = vmatprep.subr.mxu0 0.0
        %5061 = vmatpush2.msra.mxu0 0.0
        %5062 = vmatprep.subr.mxu0 0.0
        %5063 = vmatpush2.msra.mxu0 0.0
        %5064 = vmatprep.subr.mxu0 0.0
        %5065 = vmatpush2.msra.mxu0 0.0
        %5066 = vmatprep.subr.mxu0 0.0
        %5067 = vmatpush2.msra.mxu0 0.0
        %5068 = vmatprep.subr.mxu0 0.0
        %5069 = vmatpush2.msra.mxu0 0.0
        %5070 = vmatprep.subr.mxu0 0.0
        %5071 = vmatpush2.msra.mxu0 0.0
        %5072 = vmatprep.subr.mxu0 0.0
        %5073 = vmatpush2.msra.mxu0 0.0
        %5074 = vmatprep.subr.mxu0 0.0
        %5075 = vmatpush2.msra.mxu0 0.0
        %5076 = vmatprep.subr.mxu0 0.0
        %5077 = vmatpush2.msra.mxu0 0.0
        %5078 = vmatprep.subr.mxu0 0.0
        %5079 = vmatpush2.msra.mxu0 0.0
        %5080 = vmatprep.subr.mxu0 0.0
        %5081 = vmatpush2.msra.mxu0 0.0
        %5082 = vmatprep.subr.mxu0 0.0
        %5083 = vmatpush2.msra.mxu0 0.0
        %5084 = vmatprep.subr.mxu0 0.0
        %5085 = vmatpush2.msra.mxu0 0.0
        %5086 = vmatprep.subr.mxu0 0.0
        %5087 = vmatpush2.msra.mxu0 0.0
        %5088 = vmatprep.subr.mxu0 0.0
        %5089 = vmatpush2.msra.mxu0 0.0
        %5090 = vmatprep.subr.mxu0 0.0
        %5091 = vmatpush2.msra.mxu0 0.0
        %5092 = vmatprep.mubr.f32.mxu0 0.0
        %5093 = vmatmul.mubr.f32.gmra.mxu0 %v702
        %v5094 = vpop.f32.mrf.mxu0
        %v5095 = vadd.f32 0.0, %v5094
        %v5096 = vpop.f32.mrf.mxu0
        %v5097 = vadd.f32 0.0, %v5096
        %5098 = vmatprep.mubr.f32.mxu0 0.0
        %5099 = vmatmul.mubr.f32.gmra.mxu0 %v703
        %v5100 = vpop.f32.mrf.mxu0
        %v5101 = vadd.f32 0.0, %v5100
        %v5102 = vpop.f32.mrf.mxu0
        %v5103 = vadd.f32 0.0, %v5102
        %5104 = vdwg.mxu0
        %5105 = vmatprep.subr.mxu0 %v4300
        %5106 = vmatpush1.msra.mxu0 %v4299
        %5107 = vmatprep.subr.mxu0 %v4292
        %5108 = vmatpush1.msra.mxu0 %v4291
        %5109 = vmatprep.subr.mxu0 %v4284
        %5110 = vmatpush1.msra.mxu0 %v4283
        %5111 = vmatprep.subr.mxu0 %v4276
        %5112 = vmatpush1.msra.mxu0 %v4275
        %5113 = vmatprep.subr.mxu0 %v4268
        %5114 = vmatpush1.msra.mxu0 %v4267
        %5115 = vmatprep.subr.mxu0 %v4260
        %5116 = vmatpush1.msra.mxu0 %v4259
        %5117 = vmatprep.subr.mxu0 %v4252
        %5118 = vmatpush1.msra.mxu0 %v4251
        %5119 = vmatprep.subr.mxu0 %v4244
        %5120 = vmatpush1.msra.mxu0 %v4243
        %5121 = vmatprep.subr.mxu0 %v4236
        %5122 = vmatpush1.msra.mxu0 %v4235
        %5123 = vmatprep.subr.mxu0 %v4228
        %5124 = vmatpush1.msra.mxu0 %v4227
        %5125 = vmatprep.subr.mxu0 %v4220
        %5126 = vmatpush1.msra.mxu0 %v4219
        %5127 = vmatprep.subr.mxu0 %v4212
        %5128 = vmatpush1.msra.mxu0 %v4211
        %5129 = vmatprep.subr.mxu0 %v4204
        %5130 = vmatpush1.msra.mxu0 %v4203
        %5131 = vmatprep.subr.mxu0 %v4196
        %5132 = vmatpush1.msra.mxu0 %v4195
        %5133 = vmatprep.subr.mxu0 %v4188
        %5134 = vmatpush1.msra.mxu0 %v4187
        %5135 = vmatprep.subr.mxu0 %v4180
        %5136 = vmatpush1.msra.mxu0 %v4179
        %5137 = vmatprep.subr.mxu0 0.0
        %5138 = vmatpush2.msra.mxu0 0.0
        %5139 = vmatprep.subr.mxu0 0.0
        %5140 = vmatpush2.msra.mxu0 0.0
        %5141 = vmatprep.subr.mxu0 0.0
        %5142 = vmatpush2.msra.mxu0 0.0
        %5143 = vmatprep.subr.mxu0 0.0
        %5144 = vmatpush2.msra.mxu0 0.0
        %5145 = vmatprep.subr.mxu0 0.0
        %5146 = vmatpush2.msra.mxu0 0.0
        %5147 = vmatprep.subr.mxu0 0.0
        %5148 = vmatpush2.msra.mxu0 0.0
        %5149 = vmatprep.subr.mxu0 0.0
        %5150 = vmatpush2.msra.mxu0 0.0
        %5151 = vmatprep.subr.mxu0 0.0
        %5152 = vmatpush2.msra.mxu0 0.0
        %5153 = vmatprep.subr.mxu0 0.0
        %5154 = vmatpush2.msra.mxu0 0.0
        %5155 = vmatprep.subr.mxu0 0.0
        %5156 = vmatpush2.msra.mxu0 0.0
        %5157 = vmatprep.subr.mxu0 0.0
        %5158 = vmatpush2.msra.mxu0 0.0
        %5159 = vmatprep.subr.mxu0 0.0
        %5160 = vmatpush2.msra.mxu0 0.0
        %5161 = vmatprep.subr.mxu0 0.0
        %5162 = vmatpush2.msra.mxu0 0.0
        %5163 = vmatprep.subr.mxu0 0.0
        %5164 = vmatpush2.msra.mxu0 0.0
        %5165 = vmatprep.subr.mxu0 0.0
        %5166 = vmatpush2.msra.mxu0 0.0
        %5167 = vmatprep.subr.mxu0 0.0
        %5168 = vmatpush2.msra.mxu0 0.0
        %5169 = vmatprep.mubr.f32.mxu0 0.0
        %5170 = vmatmul.mubr.f32.gmra.mxu0 %v702
        %v5171 = vpop.f32.mrf.mxu0
        %v5172 = vadd.f32 0.0, %v5171
        %v5173 = vpop.f32.mrf.mxu0
        %v5174 = vadd.f32 0.0, %v5173
        %5175 = vmatprep.mubr.f32.mxu0 0.0
        %5176 = vmatmul.mubr.f32.gmra.mxu0 %v703
        %v5177 = vpop.f32.mrf.mxu0
        %v5178 = vadd.f32 0.0, %v5177
        %v5179 = vpop.f32.mrf.mxu0
        %v5180 = vadd.f32 0.0, %v5179
        %5181 = vdwg.mxu0
        %5182 = vmatprep.subr.mxu0 %v4302
        %5183 = vmatpush1.msra.mxu0 %v4301
        %5184 = vmatprep.subr.mxu0 %v4294
        %5185 = vmatpush1.msra.mxu0 %v4293
        %5186 = vmatprep.subr.mxu0 %v4286
        %5187 = vmatpush1.msra.mxu0 %v4285
        %5188 = vmatprep.subr.mxu0 %v4278
        %5189 = vmatpush1.msra.mxu0 %v4277
        %5190 = vmatprep.subr.mxu0 %v4270
        %5191 = vmatpush1.msra.mxu0 %v4269
        %5192 = vmatprep.subr.mxu0 %v4262
        %5193 = vmatpush1.msra.mxu0 %v4261
        %5194 = vmatprep.subr.mxu0 %v4254
        %5195 = vmatpush1.msra.mxu0 %v4253
        %5196 = vmatprep.subr.mxu0 %v4246
        %5197 = vmatpush1.msra.mxu0 %v4245
        %5198 = vmatprep.subr.mxu0 %v4238
        %5199 = vmatpush1.msra.mxu0 %v4237
        %5200 = vmatprep.subr.mxu0 %v4230
        %5201 = vmatpush1.msra.mxu0 %v4229
        %5202 = vmatprep.subr.mxu0 %v4222
        %5203 = vmatpush1.msra.mxu0 %v4221
        %5204 = vmatprep.subr.mxu0 %v4214
        %5205 = vmatpush1.msra.mxu0 %v4213
        %5206 = vmatprep.subr.mxu0 %v4206
        %5207 = vmatpush1.msra.mxu0 %v4205
        %5208 = vmatprep.subr.mxu0 %v4198
        %5209 = vmatpush1.msra.mxu0 %v4197
        %5210 = vmatprep.subr.mxu0 %v4190
        %5211 = vmatpush1.msra.mxu0 %v4189
        %5212 = vmatprep.subr.mxu0 %v4182
        %5213 = vmatpush1.msra.mxu0 %v4181
        %5214 = vmatprep.subr.mxu0 0.0
        %5215 = vmatpush2.msra.mxu0 0.0
        %5216 = vmatprep.subr.mxu0 0.0
        %5217 = vmatpush2.msra.mxu0 0.0
        %5218 = vmatprep.subr.mxu0 0.0
        %5219 = vmatpush2.msra.mxu0 0.0
        %5220 = vmatprep.subr.mxu0 0.0
        %5221 = vmatpush2.msra.mxu0 0.0
        %5222 = vmatprep.subr.mxu0 0.0
        %5223 = vmatpush2.msra.mxu0 0.0
        %5224 = vmatprep.subr.mxu0 0.0
        %5225 = vmatpush2.msra.mxu0 0.0
        %5226 = vmatprep.subr.mxu0 0.0
        %5227 = vmatpush2.msra.mxu0 0.0
        %5228 = vmatprep.subr.mxu0 0.0
        %5229 = vmatpush2.msra.mxu0 0.0
        %5230 = vmatprep.subr.mxu0 0.0
        %5231 = vmatpush2.msra.mxu0 0.0
        %5232 = vmatprep.subr.mxu0 0.0
        %5233 = vmatpush2.msra.mxu0 0.0
        %5234 = vmatprep.subr.mxu0 0.0
        %5235 = vmatpush2.msra.mxu0 0.0
        %5236 = vmatprep.subr.mxu0 0.0
        %5237 = vmatpush2.msra.mxu0 0.0
        %5238 = vmatprep.subr.mxu0 0.0
        %5239 = vmatpush2.msra.mxu0 0.0
        %5240 = vmatprep.subr.mxu0 0.0
        %5241 = vmatpush2.msra.mxu0 0.0
        %5242 = vmatprep.subr.mxu0 0.0
        %5243 = vmatpush2.msra.mxu0 0.0
        %5244 = vmatprep.subr.mxu0 0.0
        %5245 = vmatpush2.msra.mxu0 0.0
        %5246 = vmatprep.mubr.f32.mxu0 0.0
        %5247 = vmatmul.mubr.f32.gmra.mxu0 %v702
        %v5248 = vpop.f32.mrf.mxu0
        %v5249 = vadd.f32 0.0, %v5248
        %v5250 = vpop.f32.mrf.mxu0
        %v5251 = vadd.f32 0.0, %v5250
        %5252 = vmatprep.mubr.f32.mxu0 0.0
        %5253 = vmatmul.mubr.f32.gmra.mxu0 %v703
        %v5254 = vpop.f32.mrf.mxu0
        %v5255 = vadd.f32 0.0, %v5254
        %v5256 = vpop.f32.mrf.mxu0
        %v5257 = vadd.f32 0.0, %v5256
        %5258 = vdwg.mxu0
        %5259 = vmatprep.subr.mxu0 %v4304
        %5260 = vmatpush1.msra.mxu0 %v4303
        %5261 = vmatprep.subr.mxu0 %v4296
        %5262 = vmatpush1.msra.mxu0 %v4295
        %5263 = vmatprep.subr.mxu0 %v4288
        %5264 = vmatpush1.msra.mxu0 %v4287
        %5265 = vmatprep.subr.mxu0 %v4280
        %5266 = vmatpush1.msra.mxu0 %v4279
        %5267 = vmatprep.subr.mxu0 %v4272
        %5268 = vmatpush1.msra.mxu0 %v4271
        %5269 = vmatprep.subr.mxu0 %v4264
        %5270 = vmatpush1.msra.mxu0 %v4263
        %5271 = vmatprep.subr.mxu0 %v4256
        %5272 = vmatpush1.msra.mxu0 %v4255
        %5273 = vmatprep.subr.mxu0 %v4248
        %5274 = vmatpush1.msra.mxu0 %v4247
        %5275 = vmatprep.subr.mxu0 %v4240
        %5276 = vmatpush1.msra.mxu0 %v4239
        %5277 = vmatprep.subr.mxu0 %v4232
        %5278 = vmatpush1.msra.mxu0 %v4231
        %5279 = vmatprep.subr.mxu0 %v4224
        %5280 = vmatpush1.msra.mxu0 %v4223
        %5281 = vmatprep.subr.mxu0 %v4216
        %5282 = vmatpush1.msra.mxu0 %v4215
        %5283 = vmatprep.subr.mxu0 %v4208
        %5284 = vmatpush1.msra.mxu0 %v4207
        %5285 = vmatprep.subr.mxu0 %v4200
        %5286 = vmatpush1.msra.mxu0 %v4199
        %5287 = vmatprep.subr.mxu0 %v4192
        %5288 = vmatpush1.msra.mxu0 %v4191
        %5289 = vmatprep.subr.mxu0 %v4184
        %5290 = vmatpush1.msra.mxu0 %v4183
        %5291 = vmatprep.subr.mxu0 0.0
        %5292 = vmatpush2.msra.mxu0 0.0
        %5293 = vmatprep.subr.mxu0 0.0
        %5294 = vmatpush2.msra.mxu0 0.0
        %5295 = vmatprep.subr.mxu0 0.0
        %5296 = vmatpush2.msra.mxu0 0.0
        %5297 = vmatprep.subr.mxu0 0.0
        %5298 = vmatpush2.msra.mxu0 0.0
        %5299 = vmatprep.subr.mxu0 0.0
        %5300 = vmatpush2.msra.mxu0 0.0
        %5301 = vmatprep.subr.mxu0 0.0
        %5302 = vmatpush2.msra.mxu0 0.0
        %5303 = vmatprep.subr.mxu0 0.0
        %5304 = vmatpush2.msra.mxu0 0.0
        %5305 = vmatprep.subr.mxu0 0.0
        %5306 = vmatpush2.msra.mxu0 0.0
        %5307 = vmatprep.subr.mxu0 0.0
        %5308 = vmatpush2.msra.mxu0 0.0
        %5309 = vmatprep.subr.mxu0 0.0
        %5310 = vmatpush2.msra.mxu0 0.0
        %5311 = vmatprep.subr.mxu0 0.0
        %5312 = vmatpush2.msra.mxu0 0.0
        %5313 = vmatprep.subr.mxu0 0.0
        %5314 = vmatpush2.msra.mxu0 0.0
        %5315 = vmatprep.subr.mxu0 0.0
        %5316 = vmatpush2.msra.mxu0 0.0
        %5317 = vmatprep.subr.mxu0 0.0
        %5318 = vmatpush2.msra.mxu0 0.0
        %5319 = vmatprep.subr.mxu0 0.0
        %5320 = vmatpush2.msra.mxu0 0.0
        %5321 = vmatprep.subr.mxu0 0.0
        %5322 = vmatpush2.msra.mxu0 0.0
        %5323 = vmatprep.mubr.f32.mxu0 0.0
        %5324 = vmatmul.mubr.f32.gmra.mxu0 %v702
        %v5325 = vpop.f32.mrf.mxu0
        %v5326 = vadd.f32 0.0, %v5325
        %v5327 = vpop.f32.mrf.mxu0
        %v5328 = vadd.f32 0.0, %v5327
        %5329 = vmatprep.mubr.f32.mxu0 0.0
        %5330 = vmatmul.mubr.f32.gmra.mxu0 %v703
        %v5331 = vpop.f32.mrf.mxu0
        %v5332 = vadd.f32 0.0, %v5331
        %v5333 = vpop.f32.mrf.mxu0
        %v5334 = vadd.f32 0.0, %v5333
        %5335 = vdwg.mxu0
        %v5337 = vlaneseq
        %v5338 = vshrl.u32 %v5337, 7
        %v5339 = vsub.s32 0, %v5338
        %v5340 = vrot.slane %v4433, %v5339
        %v5342 = vadd.f32 %v3920, %v5340
        %5343 = vmatprep.subr.mxu0 0.0
        %5344 = vmatpush1.xpose.msra.mxu0 0.0
        %5345 = vmatprep.subr.mxu0 0.0
        %5346 = vmatpush1.xpose.msra.mxu0 0.0
        %5347 = vmatprep.subr.mxu0 0.0
        %5348 = vmatpush1.xpose.msra.mxu0 0.0
        %5349 = vmatprep.subr.mxu0 0.0
        %5350 = vmatpush1.xpose.msra.mxu0 0.0
        %5351 = vmatprep.subr.mxu0 0.0
        %5352 = vmatpush1.xpose.msra.mxu0 0.0
        %5353 = vmatprep.subr.mxu0 0.0
        %5354 = vmatpush1.xpose.msra.mxu0 0.0
        %5355 = vmatprep.subr.mxu0 0.0
        %5356 = vmatpush1.xpose.msra.mxu0 0.0
        %5357 = vmatprep.subr.mxu0 0.0
        %5358 = vmatpush1.xpose.msra.mxu0 0.0
        %5359 = vmatprep.subr.mxu0 0.0
        %5360 = vmatpush1.xpose.msra.mxu0 0.0
        %5361 = vmatprep.subr.mxu0 0.0
        %5362 = vmatpush1.xpose.msra.mxu0 0.0
        %5363 = vmatprep.subr.mxu0 0.0
        %5364 = vmatpush1.xpose.msra.mxu0 0.0
        %5365 = vmatprep.subr.mxu0 0.0
        %5366 = vmatpush1.xpose.msra.mxu0 0.0
        %5367 = vmatprep.subr.mxu0 0.0
        %5368 = vmatpush1.xpose.msra.mxu0 0.0
        %5369 = vmatprep.subr.mxu0 0.0
        %5370 = vmatpush1.xpose.msra.mxu0 0.0
        %5371 = vmatprep.subr.mxu0 0.0
        %5372 = vmatpush1.xpose.msra.mxu0 %v4793
        %5373 = vmatprep.subr.mxu0 0.0
        %5374 = vmatpush1.xpose.msra.mxu0 %v4787
        %5375 = vmatprep.subr.mxu0 0.0
        %5376 = vmatpush2.xpose.msra.mxu0 0.0
        %5377 = vmatprep.subr.mxu0 0.0
        %5378 = vmatpush2.xpose.msra.mxu0 0.0
        %5379 = vmatprep.subr.mxu0 0.0
        %5380 = vmatpush2.xpose.msra.mxu0 0.0
        %5381 = vmatprep.subr.mxu0 0.0
        %5382 = vmatpush2.xpose.msra.mxu0 0.0
        %5383 = vmatprep.subr.mxu0 0.0
        %5384 = vmatpush2.xpose.msra.mxu0 0.0
        %5385 = vmatprep.subr.mxu0 0.0
        %5386 = vmatpush2.xpose.msra.mxu0 0.0
        %5387 = vmatprep.subr.mxu0 0.0
        %5388 = vmatpush2.xpose.msra.mxu0 0.0
        %5389 = vmatprep.subr.mxu0 0.0
        %5390 = vmatpush2.xpose.msra.mxu0 0.0
        %5391 = vmatprep.subr.mxu0 0.0
        %5392 = vmatpush2.xpose.msra.mxu0 0.0
        %5393 = vmatprep.subr.mxu0 0.0
        %5394 = vmatpush2.xpose.msra.mxu0 0.0
        %5395 = vmatprep.subr.mxu0 0.0
        %5396 = vmatpush2.xpose.msra.mxu0 0.0
        %5397 = vmatprep.subr.mxu0 0.0
        %5398 = vmatpush2.xpose.msra.mxu0 0.0
        %5399 = vmatprep.subr.mxu0 0.0
        %5400 = vmatpush2.xpose.msra.mxu0 0.0
        %5401 = vmatprep.subr.mxu0 0.0
        %5402 = vmatpush2.xpose.msra.mxu0 0.0
        %5403 = vmatprep.subr.mxu0 0.0
        %5404 = vmatpush2.xpose.msra.mxu0 0.0
        %5405 = vmatprep.subr.mxu0 0.0
        %5406 = vmatpush2.xpose.msra.mxu0 0.0
        %5407 = vmatprep.mubr.f32.mxu0 0.0
        %5408 = vmatmul.mubr.f32.gmra.mxu0 %v4503
        %v5409 = vpop.f32.mrf.mxu0
        %v5410 = vadd.f32 0.0, %v5409
        %v5411 = vpop.f32.mrf.mxu0
        %5412 = vdwg.mxu0
        %v5413 = vmul.f32 %v5410, 0.088388346
        %vm5414 = vcmask 130048
        %v5415 = vsel %vm5414, %v5413, -inf
        %5416 = vmax.xlane.f32.xlu0 %v5415
        %v5417 = vpop.xlane.xlu0 %5416
        %v5418 = vsub.f32 %v5413, %v5417
        %v5419 = vmul.f32 %v5418, 1.442695
        %v5420 = vpow.pop %v5419
        %v5421 = vsel %vm5414, %v5420, 0.0
        %5422 = vadd.xlane.f32.xlu0 %v5421
        %v5423 = vpop.xlane.xlu0 %5422
        %v5424 = vrcp.pop %v5423
        %v5425 = vmul.f32 %v5420, %v5424
        %v5427 = vsel %vm5414, %v5425, 0
        %5429 = vmatprep.subr.mxu0 0.0
        %5430 = vmatpush1.msra.mxu0 0.0
        %5431 = vmatprep.subr.mxu0 0.0
        %5432 = vmatpush1.msra.mxu0 0.0
        %5433 = vmatprep.subr.mxu0 0.0
        %5434 = vmatpush1.msra.mxu0 0.0
        %5435 = vmatprep.subr.mxu0 0.0
        %5436 = vmatpush1.msra.mxu0 0.0
        %5437 = vmatprep.subr.mxu0 0.0
        %5438 = vmatpush1.msra.mxu0 0.0
        %5439 = vmatprep.subr.mxu0 0.0
        %5440 = vmatpush1.msra.mxu0 0.0
        %5441 = vmatprep.subr.mxu0 0.0
        %5442 = vmatpush1.msra.mxu0 0.0
        %5443 = vmatprep.subr.mxu0 0.0
        %5444 = vmatpush1.msra.mxu0 0.0
        %5445 = vmatprep.subr.mxu0 0.0
        %5446 = vmatpush1.msra.mxu0 0.0
        %5447 = vmatprep.subr.mxu0 0.0
        %5448 = vmatpush1.msra.mxu0 0.0
        %5449 = vmatprep.subr.mxu0 0.0
        %5450 = vmatpush1.msra.mxu0 0.0
        %5451 = vmatprep.subr.mxu0 0.0
        %5452 = vmatpush1.msra.mxu0 0.0
        %5453 = vmatprep.subr.mxu0 0.0
        %5454 = vmatpush1.msra.mxu0 0.0
        %5455 = vmatprep.subr.mxu0 0.0
        %5456 = vmatpush1.msra.mxu0 0.0
        %5457 = vmatprep.subr.mxu0 0.0
        %5458 = vmatpush1.msra.mxu0 %v5101
        %5459 = vmatprep.subr.mxu0 0.0
        %5460 = vmatpush1.msra.mxu0 %v5095
        %5461 = vmatprep.subr.mxu0 0.0
        %5462 = vmatpush2.msra.mxu0 0.0
        %5463 = vmatprep.subr.mxu0 0.0
        %5464 = vmatpush2.msra.mxu0 0.0
        %5465 = vmatprep.subr.mxu0 0.0
        %5466 = vmatpush2.msra.mxu0 0.0
        %5467 = vmatprep.subr.mxu0 0.0
        %5468 = vmatpush2.msra.mxu0 0.0
        %5469 = vmatprep.subr.mxu0 0.0
        %5470 = vmatpush2.msra.mxu0 0.0
        %5471 = vmatprep.subr.mxu0 0.0
        %5472 = vmatpush2.msra.mxu0 0.0
        %5473 = vmatprep.subr.mxu0 0.0
        %5474 = vmatpush2.msra.mxu0 0.0
        %5475 = vmatprep.subr.mxu0 0.0
        %5476 = vmatpush2.msra.mxu0 0.0
        %5477 = vmatprep.subr.mxu0 0.0
        %5478 = vmatpush2.msra.mxu0 0.0
        %5479 = vmatprep.subr.mxu0 0.0
        %5480 = vmatpush2.msra.mxu0 0.0
        %5481 = vmatprep.subr.mxu0 0.0
        %5482 = vmatpush2.msra.mxu0 0.0
        %5483 = vmatprep.subr.mxu0 0.0
        %5484 = vmatpush2.msra.mxu0 0.0
        %5485 = vmatprep.subr.mxu0 0.0
        %5486 = vmatpush2.msra.mxu0 0.0
        %5487 = vmatprep.subr.mxu0 0.0
        %5488 = vmatpush2.msra.mxu0 0.0
        %5489 = vmatprep.subr.mxu0 0.0
        %5490 = vmatpush2.msra.mxu0 0.0
        %5491 = vmatprep.subr.mxu0 0.0
        %5492 = vmatpush2.msra.mxu0 0.0
        %5493 = vmatprep.mubr.f32.mxu0 0.0
        %5494 = vmatmul.mubr.f32.gmra.mxu0 %v5427
        %v5495 = vpop.f32.mrf.mxu0
        %v5496 = vadd.f32 0.0, %v5495
        %v5497 = vpop.f32.mrf.mxu0
        %5498 = vdwg.mxu0
        %5499 = vmatprep.subr.mxu0 0.0
        %5500 = vmatpush1.msra.mxu0 %v4320
        %5501 = vmatprep.subr.mxu0 0.0
        %5502 = vmatpush1.msra.mxu0 %v4319
        %5503 = vmatprep.subr.mxu0 0.0
        %5504 = vmatpush1.msra.mxu0 %v4318
        %5505 = vmatprep.subr.mxu0 0.0
        %5506 = vmatpush1.msra.mxu0 %v4317
        %5507 = vmatprep.subr.mxu0 0.0
        %5508 = vmatpush1.msra.mxu0 %v4316
        %5509 = vmatprep.subr.mxu0 0.0
        %5510 = vmatpush1.msra.mxu0 %v4315
        %5511 = vmatprep.subr.mxu0 0.0
        %5512 = vmatpush1.msra.mxu0 %v4314
        %5513 = vmatprep.subr.mxu0 0.0
        %5514 = vmatpush1.msra.mxu0 %v4313
        %5515 = vmatprep.subr.mxu0 0.0
        %5516 = vmatpush1.msra.mxu0 %v4312
        %5517 = vmatprep.subr.mxu0 0.0
        %5518 = vmatpush1.msra.mxu0 %v4311
        %5519 = vmatprep.subr.mxu0 0.0
        %5520 = vmatpush1.msra.mxu0 %v4310
        %5521 = vmatprep.subr.mxu0 0.0
        %5522 = vmatpush1.msra.mxu0 %v4309
        %5523 = vmatprep.subr.mxu0 0.0
        %5524 = vmatpush1.msra.mxu0 %v4308
        %5525 = vmatprep.subr.mxu0 0.0
        %5526 = vmatpush1.msra.mxu0 %v4307
        %5527 = vmatprep.subr.mxu0 0.0
        %5528 = vmatpush1.msra.mxu0 %v4306
        %5529 = vmatprep.subr.mxu0 0.0
        %5530 = vmatpush1.msra.mxu0 %v4305
        %5531 = vmatprep.subr.mxu0 0.0
        %5532 = vmatpush2.msra.mxu0 0.0
        %5533 = vmatprep.subr.mxu0 0.0
        %5534 = vmatpush2.msra.mxu0 0.0
        %5535 = vmatprep.subr.mxu0 0.0
        %5536 = vmatpush2.msra.mxu0 0.0
        %5537 = vmatprep.subr.mxu0 0.0
        %5538 = vmatpush2.msra.mxu0 0.0
        %5539 = vmatprep.subr.mxu0 0.0
        %5540 = vmatpush2.msra.mxu0 0.0
        %5541 = vmatprep.subr.mxu0 0.0
        %5542 = vmatpush2.msra.mxu0 0.0
        %5543 = vmatprep.subr.mxu0 0.0
        %5544 = vmatpush2.msra.mxu0 0.0
        %5545 = vmatprep.subr.mxu0 0.0
        %5546 = vmatpush2.msra.mxu0 0.0
        %5547 = vmatprep.subr.mxu0 0.0
        %5548 = vmatpush2.msra.mxu0 0.0
        %5549 = vmatprep.subr.mxu0 0.0
        %5550 = vmatpush2.msra.mxu0 0.0
        %5551 = vmatprep.subr.mxu0 0.0
        %5552 = vmatpush2.msra.mxu0 0.0
        %5553 = vmatprep.subr.mxu0 0.0
        %5554 = vmatpush2.msra.mxu0 0.0
        %5555 = vmatprep.subr.mxu0 0.0
        %5556 = vmatpush2.msra.mxu0 0.0
        %5557 = vmatprep.subr.mxu0 0.0
        %5558 = vmatpush2.msra.mxu0 0.0
        %5559 = vmatprep.subr.mxu0 0.0
        %5560 = vmatpush2.msra.mxu0 0.0
        %5561 = vmatprep.subr.mxu0 0.0
        %5562 = vmatpush2.msra.mxu0 0.0
        %5563 = vmatprep.mubr.f32.mxu0 0.0
        %5564 = vmatmul.mubr.f32.gmra.mxu0 %v5496
        %v5565 = vpop.f32.mrf.mxu0
        %v5566 = vadd.f32 0.0, %v5565
        %v5567 = vpop.f32.mrf.mxu0
        %5568 = vdwg.mxu0
        %v5569 = vadd.f32 %v5342, %v5566
        %5570 = vmatprep.subr.mxu0 0.0
        %5571 = vmatpush1.xpose.msra.mxu0 0.0
        %5572 = vmatprep.subr.mxu0 0.0
        %5573 = vmatpush1.xpose.msra.mxu0 0.0
        %5574 = vmatprep.subr.mxu0 0.0
        %5575 = vmatpush1.xpose.msra.mxu0 0.0
        %5576 = vmatprep.subr.mxu0 0.0
        %5577 = vmatpush1.xpose.msra.mxu0 0.0
        %5578 = vmatprep.subr.mxu0 0.0
        %5579 = vmatpush1.xpose.msra.mxu0 0.0
        %5580 = vmatprep.subr.mxu0 0.0
        %5581 = vmatpush1.xpose.msra.mxu0 0.0
        %5582 = vmatprep.subr.mxu0 0.0
        %5583 = vmatpush1.xpose.msra.mxu0 0.0
        %5584 = vmatprep.subr.mxu0 0.0
        %5585 = vmatpush1.xpose.msra.mxu0 0.0
        %5586 = vmatprep.subr.mxu0 0.0
        %5587 = vmatpush1.xpose.msra.mxu0 0.0
        %5588 = vmatprep.subr.mxu0 0.0
        %5589 = vmatpush1.xpose.msra.mxu0 0.0
        %5590 = vmatprep.subr.mxu0 0.0
        %5591 = vmatpush1.xpose.msra.mxu0 0.0
        %5592 = vmatprep.subr.mxu0 0.0
        %5593 = vmatpush1.xpose.msra.mxu0 0.0
        %5594 = vmatprep.subr.mxu0 0.0
        %5595 = vmatpush1.xpose.msra.mxu0 0.0
        %5596 = vmatprep.subr.mxu0 0.0
        %5597 = vmatpush1.xpose.msra.mxu0 0.0
        %5598 = vmatprep.subr.mxu0 0.0
        %5599 = vmatpush1.xpose.msra.mxu0 %v4795
        %5600 = vmatprep.subr.mxu0 0.0
        %5601 = vmatpush1.xpose.msra.mxu0 %v4789
        %5602 = vmatprep.subr.mxu0 0.0
        %5603 = vmatpush2.xpose.msra.mxu0 0.0
        %5604 = vmatprep.subr.mxu0 0.0
        %5605 = vmatpush2.xpose.msra.mxu0 0.0
        %5606 = vmatprep.subr.mxu0 0.0
        %5607 = vmatpush2.xpose.msra.mxu0 0.0
        %5608 = vmatprep.subr.mxu0 0.0
        %5609 = vmatpush2.xpose.msra.mxu0 0.0
        %5610 = vmatprep.subr.mxu0 0.0
        %5611 = vmatpush2.xpose.msra.mxu0 0.0
        %5612 = vmatprep.subr.mxu0 0.0
        %5613 = vmatpush2.xpose.msra.mxu0 0.0
        %5614 = vmatprep.subr.mxu0 0.0
        %5615 = vmatpush2.xpose.msra.mxu0 0.0
        %5616 = vmatprep.subr.mxu0 0.0
        %5617 = vmatpush2.xpose.msra.mxu0 0.0
        %5618 = vmatprep.subr.mxu0 0.0
        %5619 = vmatpush2.xpose.msra.mxu0 0.0
        %5620 = vmatprep.subr.mxu0 0.0
        %5621 = vmatpush2.xpose.msra.mxu0 0.0
        %5622 = vmatprep.subr.mxu0 0.0
        %5623 = vmatpush2.xpose.msra.mxu0 0.0
        %5624 = vmatprep.subr.mxu0 0.0
        %5625 = vmatpush2.xpose.msra.mxu0 0.0
        %5626 = vmatprep.subr.mxu0 0.0
        %5627 = vmatpush2.xpose.msra.mxu0 0.0
        %5628 = vmatprep.subr.mxu0 0.0
        %5629 = vmatpush2.xpose.msra.mxu0 0.0
        %5630 = vmatprep.subr.mxu0 0.0
        %5631 = vmatpush2.xpose.msra.mxu0 0.0
        %5632 = vmatprep.subr.mxu0 0.0
        %5633 = vmatpush2.xpose.msra.mxu0 0.0
        %5634 = vmatprep.mubr.f32.mxu0 0.0
        %5635 = vmatmul.mubr.f32.gmra.mxu0 %v4505
        %v5636 = vpop.f32.mrf.mxu0
        %v5637 = vadd.f32 0.0, %v5636
        %v5638 = vpop.f32.mrf.mxu0
        %5639 = vdwg.mxu0
        %v5640 = vmul.f32 %v5637, 0.088388346
        %v5641 = vsel %vm5414, %v5640, -inf
        %5642 = vmax.xlane.f32.xlu0 %v5641
        %v5643 = vpop.xlane.xlu0 %5642
        %v5644 = vsub.f32 %v5640, %v5643
        %v5645 = vmul.f32 %v5644, 1.442695
        %v5646 = vpow.pop %v5645
        %v5647 = vsel %vm5414, %v5646, 0.0
        %5648 = vadd.xlane.f32.xlu0 %v5647
        %v5649 = vpop.xlane.xlu0 %5648
        %v5650 = vrcp.pop %v5649
        %v5651 = vmul.f32 %v5646, %v5650
        %v5653 = vsel %vm5414, %v5651, 0
        %5655 = vmatprep.subr.mxu0 0.0
        %5656 = vmatpush1.msra.mxu0 0.0
        %5657 = vmatprep.subr.mxu0 0.0
        %5658 = vmatpush1.msra.mxu0 0.0
        %5659 = vmatprep.subr.mxu0 0.0
        %5660 = vmatpush1.msra.mxu0 0.0
        %5661 = vmatprep.subr.mxu0 0.0
        %5662 = vmatpush1.msra.mxu0 0.0
        %5663 = vmatprep.subr.mxu0 0.0
        %5664 = vmatpush1.msra.mxu0 0.0
        %5665 = vmatprep.subr.mxu0 0.0
        %5666 = vmatpush1.msra.mxu0 0.0
        %5667 = vmatprep.subr.mxu0 0.0
        %5668 = vmatpush1.msra.mxu0 0.0
        %5669 = vmatprep.subr.mxu0 0.0
        %5670 = vmatpush1.msra.mxu0 0.0
        %5671 = vmatprep.subr.mxu0 0.0
        %5672 = vmatpush1.msra.mxu0 0.0
        %5673 = vmatprep.subr.mxu0 0.0
        %5674 = vmatpush1.msra.mxu0 0.0
        %5675 = vmatprep.subr.mxu0 0.0
        %5676 = vmatpush1.msra.mxu0 0.0
        %5677 = vmatprep.subr.mxu0 0.0
        %5678 = vmatpush1.msra.mxu0 0.0
        %5679 = vmatprep.subr.mxu0 0.0
        %5680 = vmatpush1.msra.mxu0 0.0
        %5681 = vmatprep.subr.mxu0 0.0
        %5682 = vmatpush1.msra.mxu0 0.0
        %5683 = vmatprep.subr.mxu0 0.0
        %5684 = vmatpush1.msra.mxu0 %v5103
        %5685 = vmatprep.subr.mxu0 0.0
        %5686 = vmatpush1.msra.mxu0 %v5097
        %5687 = vmatprep.subr.mxu0 0.0
        %5688 = vmatpush2.msra.mxu0 0.0
        %5689 = vmatprep.subr.mxu0 0.0
        %5690 = vmatpush2.msra.mxu0 0.0
        %5691 = vmatprep.subr.mxu0 0.0
        %5692 = vmatpush2.msra.mxu0 0.0
        %5693 = vmatprep.subr.mxu0 0.0
        %5694 = vmatpush2.msra.mxu0 0.0
        %5695 = vmatprep.subr.mxu0 0.0
        %5696 = vmatpush2.msra.mxu0 0.0
        %5697 = vmatprep.subr.mxu0 0.0
        %5698 = vmatpush2.msra.mxu0 0.0
        %5699 = vmatprep.subr.mxu0 0.0
        %5700 = vmatpush2.msra.mxu0 0.0
        %5701 = vmatprep.subr.mxu0 0.0
        %5702 = vmatpush2.msra.mxu0 0.0
        %5703 = vmatprep.subr.mxu0 0.0
        %5704 = vmatpush2.msra.mxu0 0.0
        %5705 = vmatprep.subr.mxu0 0.0
        %5706 = vmatpush2.msra.mxu0 0.0
        %5707 = vmatprep.subr.mxu0 0.0
        %5708 = vmatpush2.msra.mxu0 0.0
        %5709 = vmatprep.subr.mxu0 0.0
        %5710 = vmatpush2.msra.mxu0 0.0
        %5711 = vmatprep.subr.mxu0 0.0
        %5712 = vmatpush2.msra.mxu0 0.0
        %5713 = vmatprep.subr.mxu0 0.0
        %5714 = vmatpush2.msra.mxu0 0.0
        %5715 = vmatprep.subr.mxu0 0.0
        %5716 = vmatpush2.msra.mxu0 0.0
        %5717 = vmatprep.subr.mxu0 0.0
        %5718 = vmatpush2.msra.mxu0 0.0
        %5719 = vmatprep.mubr.f32.mxu0 0.0
        %5720 = vmatmul.mubr.f32.gmra.mxu0 %v5653
        %v5721 = vpop.f32.mrf.mxu0
        %v5722 = vadd.f32 0.0, %v5721
        %v5723 = vpop.f32.mrf.mxu0
        %5724 = vdwg.mxu0
        %5725 = vmatprep.subr.mxu0 0.0
        %5726 = vmatpush1.msra.mxu0 %v4336
        %5727 = vmatprep.subr.mxu0 0.0
        %5728 = vmatpush1.msra.mxu0 %v4335
        %5729 = vmatprep.subr.mxu0 0.0
        %5730 = vmatpush1.msra.mxu0 %v4334
        %5731 = vmatprep.subr.mxu0 0.0
        %5732 = vmatpush1.msra.mxu0 %v4333
        %5733 = vmatprep.subr.mxu0 0.0
        %5734 = vmatpush1.msra.mxu0 %v4332
        %5735 = vmatprep.subr.mxu0 0.0
        %5736 = vmatpush1.msra.mxu0 %v4331
        %5737 = vmatprep.subr.mxu0 0.0
        %5738 = vmatpush1.msra.mxu0 %v4330
        %5739 = vmatprep.subr.mxu0 0.0
        %5740 = vmatpush1.msra.mxu0 %v4329
        %5741 = vmatprep.subr.mxu0 0.0
        %5742 = vmatpush1.msra.mxu0 %v4328
        %5743 = vmatprep.subr.mxu0 0.0
        %5744 = vmatpush1.msra.mxu0 %v4327
        %5745 = vmatprep.subr.mxu0 0.0
        %5746 = vmatpush1.msra.mxu0 %v4326
        %5747 = vmatprep.subr.mxu0 0.0
        %5748 = vmatpush1.msra.mxu0 %v4325
        %5749 = vmatprep.subr.mxu0 0.0
        %5750 = vmatpush1.msra.mxu0 %v4324
        %5751 = vmatprep.subr.mxu0 0.0
        %5752 = vmatpush1.msra.mxu0 %v4323
        %5753 = vmatprep.subr.mxu0 0.0
        %5754 = vmatpush1.msra.mxu0 %v4322
        %5755 = vmatprep.subr.mxu0 0.0
        %5756 = vmatpush1.msra.mxu0 %v4321
        %5757 = vmatprep.subr.mxu0 0.0
        %5758 = vmatpush2.msra.mxu0 0.0
        %5759 = vmatprep.subr.mxu0 0.0
        %5760 = vmatpush2.msra.mxu0 0.0
        %5761 = vmatprep.subr.mxu0 0.0
        %5762 = vmatpush2.msra.mxu0 0.0
        %5763 = vmatprep.subr.mxu0 0.0
        %5764 = vmatpush2.msra.mxu0 0.0
        %5765 = vmatprep.subr.mxu0 0.0
        %5766 = vmatpush2.msra.mxu0 0.0
        %5767 = vmatprep.subr.mxu0 0.0
        %5768 = vmatpush2.msra.mxu0 0.0
        %5769 = vmatprep.subr.mxu0 0.0
        %5770 = vmatpush2.msra.mxu0 0.0
        %5771 = vmatprep.subr.mxu0 0.0
        %5772 = vmatpush2.msra.mxu0 0.0
        %5773 = vmatprep.subr.mxu0 0.0
        %5774 = vmatpush2.msra.mxu0 0.0
        %5775 = vmatprep.subr.mxu0 0.0
        %5776 = vmatpush2.msra.mxu0 0.0
        %5777 = vmatprep.subr.mxu0 0.0
        %5778 = vmatpush2.msra.mxu0 0.0
        %5779 = vmatprep.subr.mxu0 0.0
        %5780 = vmatpush2.msra.mxu0 0.0
        %5781 = vmatprep.subr.mxu0 0.0
        %5782 = vmatpush2.msra.mxu0 0.0
        %5783 = vmatprep.subr.mxu0 0.0
        %5784 = vmatpush2.msra.mxu0 0.0
        %5785 = vmatprep.subr.mxu0 0.0
        %5786 = vmatpush2.msra.mxu0 0.0
        %5787 = vmatprep.subr.mxu0 0.0
        %5788 = vmatpush2.msra.mxu0 0.0
        %5789 = vmatprep.mubr.f32.mxu0 0.0
        %5790 = vmatmul.mubr.f32.gmra.mxu0 %v5722
        %v5791 = vpop.f32.mrf.mxu0
        %v5792 = vadd.f32 0.0, %v5791
        %v5793 = vpop.f32.mrf.mxu0
        %5794 = vdwg.mxu0
        %v5795 = vadd.f32 %v5569, %v5792
        %5796 = vmatprep.subr.mxu0 0.0
        %5797 = vmatpush1.xpose.msra.mxu0 0.0
        %5798 = vmatprep.subr.mxu0 0.0
        %5799 = vmatpush1.xpose.msra.mxu0 0.0
        %5800 = vmatprep.subr.mxu0 0.0
        %5801 = vmatpush1.xpose.msra.mxu0 0.0
        %5802 = vmatprep.subr.mxu0 0.0
        %5803 = vmatpush1.xpose.msra.mxu0 0.0
        %5804 = vmatprep.subr.mxu0 0.0
        %5805 = vmatpush1.xpose.msra.mxu0 0.0
        %5806 = vmatprep.subr.mxu0 0.0
        %5807 = vmatpush1.xpose.msra.mxu0 0.0
        %5808 = vmatprep.subr.mxu0 0.0
        %5809 = vmatpush1.xpose.msra.mxu0 0.0
        %5810 = vmatprep.subr.mxu0 0.0
        %5811 = vmatpush1.xpose.msra.mxu0 0.0
        %5812 = vmatprep.subr.mxu0 0.0
        %5813 = vmatpush1.xpose.msra.mxu0 0.0
        %5814 = vmatprep.subr.mxu0 0.0
        %5815 = vmatpush1.xpose.msra.mxu0 0.0
        %5816 = vmatprep.subr.mxu0 0.0
        %5817 = vmatpush1.xpose.msra.mxu0 0.0
        %5818 = vmatprep.subr.mxu0 0.0
        %5819 = vmatpush1.xpose.msra.mxu0 0.0
        %5820 = vmatprep.subr.mxu0 0.0
        %5821 = vmatpush1.xpose.msra.mxu0 0.0
        %5822 = vmatprep.subr.mxu0 0.0
        %5823 = vmatpush1.xpose.msra.mxu0 0.0
        %5824 = vmatprep.subr.mxu0 0.0
        %5825 = vmatpush1.xpose.msra.mxu0 %v4870
        %5826 = vmatprep.subr.mxu0 0.0
        %5827 = vmatpush1.xpose.msra.mxu0 %v4864
        %5828 = vmatprep.subr.mxu0 0.0
        %5829 = vmatpush2.xpose.msra.mxu0 0.0
        %5830 = vmatprep.subr.mxu0 0.0
        %5831 = vmatpush2.xpose.msra.mxu0 0.0
        %5832 = vmatprep.subr.mxu0 0.0
        %5833 = vmatpush2.xpose.msra.mxu0 0.0
        %5834 = vmatprep.subr.mxu0 0.0
        %5835 = vmatpush2.xpose.msra.mxu0 0.0
        %5836 = vmatprep.subr.mxu0 0.0
        %5837 = vmatpush2.xpose.msra.mxu0 0.0
        %5838 = vmatprep.subr.mxu0 0.0
        %5839 = vmatpush2.xpose.msra.mxu0 0.0
        %5840 = vmatprep.subr.mxu0 0.0
        %5841 = vmatpush2.xpose.msra.mxu0 0.0
        %5842 = vmatprep.subr.mxu0 0.0
        %5843 = vmatpush2.xpose.msra.mxu0 0.0
        %5844 = vmatprep.subr.mxu0 0.0
        %5845 = vmatpush2.xpose.msra.mxu0 0.0
        %5846 = vmatprep.subr.mxu0 0.0
        %5847 = vmatpush2.xpose.msra.mxu0 0.0
        %5848 = vmatprep.subr.mxu0 0.0
        %5849 = vmatpush2.xpose.msra.mxu0 0.0
        %5850 = vmatprep.subr.mxu0 0.0
        %5851 = vmatpush2.xpose.msra.mxu0 0.0
        %5852 = vmatprep.subr.mxu0 0.0
        %5853 = vmatpush2.xpose.msra.mxu0 0.0
        %5854 = vmatprep.subr.mxu0 0.0
        %5855 = vmatpush2.xpose.msra.mxu0 0.0
        %5856 = vmatprep.subr.mxu0 0.0
        %5857 = vmatpush2.xpose.msra.mxu0 0.0
        %5858 = vmatprep.subr.mxu0 0.0
        %5859 = vmatpush2.xpose.msra.mxu0 0.0
        %5860 = vmatprep.mubr.f32.mxu0 0.0
        %5861 = vmatmul.mubr.f32.gmra.mxu0 %v4574
        %v5862 = vpop.f32.mrf.mxu0
        %v5863 = vadd.f32 0.0, %v5862
        %v5864 = vpop.f32.mrf.mxu0
        %5865 = vdwg.mxu0
        %v5866 = vmul.f32 %v5863, 0.088388346
        %v5867 = vsel %vm5414, %v5866, -inf
        %5868 = vmax.xlane.f32.xlu0 %v5867
        %v5869 = vpop.xlane.xlu0 %5868
        %v5870 = vsub.f32 %v5866, %v5869
        %v5871 = vmul.f32 %v5870, 1.442695
        %v5872 = vpow.pop %v5871
        %v5873 = vsel %vm5414, %v5872, 0.0
        %5874 = vadd.xlane.f32.xlu0 %v5873
        %v5875 = vpop.xlane.xlu0 %5874
        %v5876 = vrcp.pop %v5875
        %v5877 = vmul.f32 %v5872, %v5876
        %v5879 = vsel %vm5414, %v5877, 0
        %5881 = vmatprep.subr.mxu0 0.0
        %5882 = vmatpush1.msra.mxu0 0.0
        %5883 = vmatprep.subr.mxu0 0.0
        %5884 = vmatpush1.msra.mxu0 0.0
        %5885 = vmatprep.subr.mxu0 0.0
        %5886 = vmatpush1.msra.mxu0 0.0
        %5887 = vmatprep.subr.mxu0 0.0
        %5888 = vmatpush1.msra.mxu0 0.0
        %5889 = vmatprep.subr.mxu0 0.0
        %5890 = vmatpush1.msra.mxu0 0.0
        %5891 = vmatprep.subr.mxu0 0.0
        %5892 = vmatpush1.msra.mxu0 0.0
        %5893 = vmatprep.subr.mxu0 0.0
        %5894 = vmatpush1.msra.mxu0 0.0
        %5895 = vmatprep.subr.mxu0 0.0
        %5896 = vmatpush1.msra.mxu0 0.0
        %5897 = vmatprep.subr.mxu0 0.0
        %5898 = vmatpush1.msra.mxu0 0.0
        %5899 = vmatprep.subr.mxu0 0.0
        %5900 = vmatpush1.msra.mxu0 0.0
        %5901 = vmatprep.subr.mxu0 0.0
        %5902 = vmatpush1.msra.mxu0 0.0
        %5903 = vmatprep.subr.mxu0 0.0
        %5904 = vmatpush1.msra.mxu0 0.0
        %5905 = vmatprep.subr.mxu0 0.0
        %5906 = vmatpush1.msra.mxu0 0.0
        %5907 = vmatprep.subr.mxu0 0.0
        %5908 = vmatpush1.msra.mxu0 0.0
        %5909 = vmatprep.subr.mxu0 0.0
        %5910 = vmatpush1.msra.mxu0 %v5178
        %5911 = vmatprep.subr.mxu0 0.0
        %5912 = vmatpush1.msra.mxu0 %v5172
        %5913 = vmatprep.subr.mxu0 0.0
        %5914 = vmatpush2.msra.mxu0 0.0
        %5915 = vmatprep.subr.mxu0 0.0
        %5916 = vmatpush2.msra.mxu0 0.0
        %5917 = vmatprep.subr.mxu0 0.0
        %5918 = vmatpush2.msra.mxu0 0.0
        %5919 = vmatprep.subr.mxu0 0.0
        %5920 = vmatpush2.msra.mxu0 0.0
        %5921 = vmatprep.subr.mxu0 0.0
        %5922 = vmatpush2.msra.mxu0 0.0
        %5923 = vmatprep.subr.mxu0 0.0
        %5924 = vmatpush2.msra.mxu0 0.0
        %5925 = vmatprep.subr.mxu0 0.0
        %5926 = vmatpush2.msra.mxu0 0.0
        %5927 = vmatprep.subr.mxu0 0.0
        %5928 = vmatpush2.msra.mxu0 0.0
        %5929 = vmatprep.subr.mxu0 0.0
        %5930 = vmatpush2.msra.mxu0 0.0
        %5931 = vmatprep.subr.mxu0 0.0
        %5932 = vmatpush2.msra.mxu0 0.0
        %5933 = vmatprep.subr.mxu0 0.0
        %5934 = vmatpush2.msra.mxu0 0.0
        %5935 = vmatprep.subr.mxu0 0.0
        %5936 = vmatpush2.msra.mxu0 0.0
        %5937 = vmatprep.subr.mxu0 0.0
        %5938 = vmatpush2.msra.mxu0 0.0
        %5939 = vmatprep.subr.mxu0 0.0
        %5940 = vmatpush2.msra.mxu0 0.0
        %5941 = vmatprep.subr.mxu0 0.0
        %5942 = vmatpush2.msra.mxu0 0.0
        %5943 = vmatprep.subr.mxu0 0.0
        %5944 = vmatpush2.msra.mxu0 0.0
        %5945 = vmatprep.mubr.f32.mxu0 0.0
        %5946 = vmatmul.mubr.f32.gmra.mxu0 %v5879
        %v5947 = vpop.f32.mrf.mxu0
        %v5948 = vadd.f32 0.0, %v5947
        %v5949 = vpop.f32.mrf.mxu0
        %5950 = vdwg.mxu0
        %5951 = vmatprep.subr.mxu0 0.0
        %5952 = vmatpush1.msra.mxu0 %v4352
        %5953 = vmatprep.subr.mxu0 0.0
        %5954 = vmatpush1.msra.mxu0 %v4351
        %5955 = vmatprep.subr.mxu0 0.0
        %5956 = vmatpush1.msra.mxu0 %v4350
        %5957 = vmatprep.subr.mxu0 0.0
        %5958 = vmatpush1.msra.mxu0 %v4349
        %5959 = vmatprep.subr.mxu0 0.0
        %5960 = vmatpush1.msra.mxu0 %v4348
        %5961 = vmatprep.subr.mxu0 0.0
        %5962 = vmatpush1.msra.mxu0 %v4347
        %5963 = vmatprep.subr.mxu0 0.0
        %5964 = vmatpush1.msra.mxu0 %v4346
        %5965 = vmatprep.subr.mxu0 0.0
        %5966 = vmatpush1.msra.mxu0 %v4345
        %5967 = vmatprep.subr.mxu0 0.0
        %5968 = vmatpush1.msra.mxu0 %v4344
        %5969 = vmatprep.subr.mxu0 0.0
        %5970 = vmatpush1.msra.mxu0 %v4343
        %5971 = vmatprep.subr.mxu0 0.0
        %5972 = vmatpush1.msra.mxu0 %v4342
        %5973 = vmatprep.subr.mxu0 0.0
        %5974 = vmatpush1.msra.mxu0 %v4341
        %5975 = vmatprep.subr.mxu0 0.0
        %5976 = vmatpush1.msra.mxu0 %v4340
        %5977 = vmatprep.subr.mxu0 0.0
        %5978 = vmatpush1.msra.mxu0 %v4339
        %5979 = vmatprep.subr.mxu0 0.0
        %5980 = vmatpush1.msra.mxu0 %v4338
        %5981 = vmatprep.subr.mxu0 0.0
        %5982 = vmatpush1.msra.mxu0 %v4337
        %5983 = vmatprep.subr.mxu0 0.0
        %5984 = vmatpush2.msra.mxu0 0.0
        %5985 = vmatprep.subr.mxu0 0.0
        %5986 = vmatpush2.msra.mxu0 0.0
        %5987 = vmatprep.subr.mxu0 0.0
        %5988 = vmatpush2.msra.mxu0 0.0
        %5989 = vmatprep.subr.mxu0 0.0
        %5990 = vmatpush2.msra.mxu0 0.0
        %5991 = vmatprep.subr.mxu0 0.0
        %5992 = vmatpush2.msra.mxu0 0.0
        %5993 = vmatprep.subr.mxu0 0.0
        %5994 = vmatpush2.msra.mxu0 0.0
        %5995 = vmatprep.subr.mxu0 0.0
        %5996 = vmatpush2.msra.mxu0 0.0
        %5997 = vmatprep.subr.mxu0 0.0
        %5998 = vmatpush2.msra.mxu0 0.0
        %5999 = vmatprep.subr.mxu0 0.0
        %6000 = vmatpush2.msra.mxu0 0.0
        %6001 = vmatprep.subr.mxu0 0.0
        %6002 = vmatpush2.msra.mxu0 0.0
        %6003 = vmatprep.subr.mxu0 0.0
        %6004 = vmatpush2.msra.mxu0 0.0
        %6005 = vmatprep.subr.mxu0 0.0
        %6006 = vmatpush2.msra.mxu0 0.0
        %6007 = vmatprep.subr.mxu0 0.0
        %6008 = vmatpush2.msra.mxu0 0.0
        %6009 = vmatprep.subr.mxu0 0.0
        %6010 = vmatpush2.msra.mxu0 0.0
        %6011 = vmatprep.subr.mxu0 0.0
        %6012 = vmatpush2.msra.mxu0 0.0
        %6013 = vmatprep.subr.mxu0 0.0
        %6014 = vmatpush2.msra.mxu0 0.0
        %6015 = vmatprep.mubr.f32.mxu0 0.0
        %6016 = vmatmul.mubr.f32.gmra.mxu0 %v5948
        %v6017 = vpop.f32.mrf.mxu0
        %v6018 = vadd.f32 0.0, %v6017
        %v6019 = vpop.f32.mrf.mxu0
        %6020 = vdwg.mxu0
        %v6021 = vadd.f32 %v5795, %v6018
        %6022 = vmatprep.subr.mxu0 0.0
        %6023 = vmatpush1.xpose.msra.mxu0 0.0
        %6024 = vmatprep.subr.mxu0 0.0
        %6025 = vmatpush1.xpose.msra.mxu0 0.0
        %6026 = vmatprep.subr.mxu0 0.0
        %6027 = vmatpush1.xpose.msra.mxu0 0.0
        %6028 = vmatprep.subr.mxu0 0.0
        %6029 = vmatpush1.xpose.msra.mxu0 0.0
        %6030 = vmatprep.subr.mxu0 0.0
        %6031 = vmatpush1.xpose.msra.mxu0 0.0
        %6032 = vmatprep.subr.mxu0 0.0
        %6033 = vmatpush1.xpose.msra.mxu0 0.0
        %6034 = vmatprep.subr.mxu0 0.0
        %6035 = vmatpush1.xpose.msra.mxu0 0.0
        %6036 = vmatprep.subr.mxu0 0.0
        %6037 = vmatpush1.xpose.msra.mxu0 0.0
        %6038 = vmatprep.subr.mxu0 0.0
        %6039 = vmatpush1.xpose.msra.mxu0 0.0
        %6040 = vmatprep.subr.mxu0 0.0
        %6041 = vmatpush1.xpose.msra.mxu0 0.0
        %6042 = vmatprep.subr.mxu0 0.0
        %6043 = vmatpush1.xpose.msra.mxu0 0.0
        %6044 = vmatprep.subr.mxu0 0.0
        %6045 = vmatpush1.xpose.msra.mxu0 0.0
        %6046 = vmatprep.subr.mxu0 0.0
        %6047 = vmatpush1.xpose.msra.mxu0 0.0
        %6048 = vmatprep.subr.mxu0 0.0
        %6049 = vmatpush1.xpose.msra.mxu0 0.0
        %6050 = vmatprep.subr.mxu0 0.0
        %6051 = vmatpush1.xpose.msra.mxu0 %v4872
        %6052 = vmatprep.subr.mxu0 0.0
        %6053 = vmatpush1.xpose.msra.mxu0 %v4866
        %6054 = vmatprep.subr.mxu0 0.0
        %6055 = vmatpush2.xpose.msra.mxu0 0.0
        %6056 = vmatprep.subr.mxu0 0.0
        %6057 = vmatpush2.xpose.msra.mxu0 0.0
        %6058 = vmatprep.subr.mxu0 0.0
        %6059 = vmatpush2.xpose.msra.mxu0 0.0
        %6060 = vmatprep.subr.mxu0 0.0
        %6061 = vmatpush2.xpose.msra.mxu0 0.0
        %6062 = vmatprep.subr.mxu0 0.0
        %6063 = vmatpush2.xpose.msra.mxu0 0.0
        %6064 = vmatprep.subr.mxu0 0.0
        %6065 = vmatpush2.xpose.msra.mxu0 0.0
        %6066 = vmatprep.subr.mxu0 0.0
        %6067 = vmatpush2.xpose.msra.mxu0 0.0
        %6068 = vmatprep.subr.mxu0 0.0
        %6069 = vmatpush2.xpose.msra.mxu0 0.0
        %6070 = vmatprep.subr.mxu0 0.0
        %6071 = vmatpush2.xpose.msra.mxu0 0.0
        %6072 = vmatprep.subr.mxu0 0.0
        %6073 = vmatpush2.xpose.msra.mxu0 0.0
        %6074 = vmatprep.subr.mxu0 0.0
        %6075 = vmatpush2.xpose.msra.mxu0 0.0
        %6076 = vmatprep.subr.mxu0 0.0
        %6077 = vmatpush2.xpose.msra.mxu0 0.0
        %6078 = vmatprep.subr.mxu0 0.0
        %6079 = vmatpush2.xpose.msra.mxu0 0.0
        %6080 = vmatprep.subr.mxu0 0.0
        %6081 = vmatpush2.xpose.msra.mxu0 0.0
        %6082 = vmatprep.subr.mxu0 0.0
        %6083 = vmatpush2.xpose.msra.mxu0 0.0
        %6084 = vmatprep.subr.mxu0 0.0
        %6085 = vmatpush2.xpose.msra.mxu0 0.0
        %6086 = vmatprep.mubr.f32.mxu0 0.0
        %6087 = vmatmul.mubr.f32.gmra.mxu0 %v4576
        %v6088 = vpop.f32.mrf.mxu0
        %v6089 = vadd.f32 0.0, %v6088
        %v6090 = vpop.f32.mrf.mxu0
        %6091 = vdwg.mxu0
        %v6092 = vmul.f32 %v6089, 0.088388346
        %v6093 = vsel %vm5414, %v6092, -inf
        %6094 = vmax.xlane.f32.xlu0 %v6093
        %v6095 = vpop.xlane.xlu0 %6094
        %v6096 = vsub.f32 %v6092, %v6095
        %v6097 = vmul.f32 %v6096, 1.442695
        %v6098 = vpow.pop %v6097
        %v6099 = vsel %vm5414, %v6098, 0.0
        %6100 = vadd.xlane.f32.xlu0 %v6099
        %v6101 = vpop.xlane.xlu0 %6100
        %v6102 = vrcp.pop %v6101
        %v6103 = vmul.f32 %v6098, %v6102
        %v6105 = vsel %vm5414, %v6103, 0
        %6107 = vmatprep.subr.mxu0 0.0
        %6108 = vmatpush1.msra.mxu0 0.0
        %6109 = vmatprep.subr.mxu0 0.0
        %6110 = vmatpush1.msra.mxu0 0.0
        %6111 = vmatprep.subr.mxu0 0.0
        %6112 = vmatpush1.msra.mxu0 0.0
        %6113 = vmatprep.subr.mxu0 0.0
        %6114 = vmatpush1.msra.mxu0 0.0
        %6115 = vmatprep.subr.mxu0 0.0
        %6116 = vmatpush1.msra.mxu0 0.0
        %6117 = vmatprep.subr.mxu0 0.0
        %6118 = vmatpush1.msra.mxu0 0.0
        %6119 = vmatprep.subr.mxu0 0.0
        %6120 = vmatpush1.msra.mxu0 0.0
        %6121 = vmatprep.subr.mxu0 0.0
        %6122 = vmatpush1.msra.mxu0 0.0
        %6123 = vmatprep.subr.mxu0 0.0
        %6124 = vmatpush1.msra.mxu0 0.0
        %6125 = vmatprep.subr.mxu0 0.0
        %6126 = vmatpush1.msra.mxu0 0.0
        %6127 = vmatprep.subr.mxu0 0.0
        %6128 = vmatpush1.msra.mxu0 0.0
        %6129 = vmatprep.subr.mxu0 0.0
        %6130 = vmatpush1.msra.mxu0 0.0
        %6131 = vmatprep.subr.mxu0 0.0
        %6132 = vmatpush1.msra.mxu0 0.0
        %6133 = vmatprep.subr.mxu0 0.0
        %6134 = vmatpush1.msra.mxu0 0.0
        %6135 = vmatprep.subr.mxu0 0.0
        %6136 = vmatpush1.msra.mxu0 %v5180
        %6137 = vmatprep.subr.mxu0 0.0
        %6138 = vmatpush1.msra.mxu0 %v5174
        %6139 = vmatprep.subr.mxu0 0.0
        %6140 = vmatpush2.msra.mxu0 0.0
        %6141 = vmatprep.subr.mxu0 0.0
        %6142 = vmatpush2.msra.mxu0 0.0
        %6143 = vmatprep.subr.mxu0 0.0
        %6144 = vmatpush2.msra.mxu0 0.0
        %6145 = vmatprep.subr.mxu0 0.0
        %6146 = vmatpush2.msra.mxu0 0.0
        %6147 = vmatprep.subr.mxu0 0.0
        %6148 = vmatpush2.msra.mxu0 0.0
        %6149 = vmatprep.subr.mxu0 0.0
        %6150 = vmatpush2.msra.mxu0 0.0
        %6151 = vmatprep.subr.mxu0 0.0
        %6152 = vmatpush2.msra.mxu0 0.0
        %6153 = vmatprep.subr.mxu0 0.0
        %6154 = vmatpush2.msra.mxu0 0.0
        %6155 = vmatprep.subr.mxu0 0.0
        %6156 = vmatpush2.msra.mxu0 0.0
        %6157 = vmatprep.subr.mxu0 0.0
        %6158 = vmatpush2.msra.mxu0 0.0
        %6159 = vmatprep.subr.mxu0 0.0
        %6160 = vmatpush2.msra.mxu0 0.0
        %6161 = vmatprep.subr.mxu0 0.0
        %6162 = vmatpush2.msra.mxu0 0.0
        %6163 = vmatprep.subr.mxu0 0.0
        %6164 = vmatpush2.msra.mxu0 0.0
        %6165 = vmatprep.subr.mxu0 0.0
        %6166 = vmatpush2.msra.mxu0 0.0
        %6167 = vmatprep.subr.mxu0 0.0
        %6168 = vmatpush2.msra.mxu0 0.0
        %6169 = vmatprep.subr.mxu0 0.0
        %6170 = vmatpush2.msra.mxu0 0.0
        %6171 = vmatprep.mubr.f32.mxu0 0.0
        %6172 = vmatmul.mubr.f32.gmra.mxu0 %v6105
        %v6173 = vpop.f32.mrf.mxu0
        %v6174 = vadd.f32 0.0, %v6173
        %v6175 = vpop.f32.mrf.mxu0
        %6176 = vdwg.mxu0
        %6177 = vmatprep.subr.mxu0 0.0
        %6178 = vmatpush1.msra.mxu0 %v4368
        %6179 = vmatprep.subr.mxu0 0.0
        %6180 = vmatpush1.msra.mxu0 %v4367
        %6181 = vmatprep.subr.mxu0 0.0
        %6182 = vmatpush1.msra.mxu0 %v4366
        %6183 = vmatprep.subr.mxu0 0.0
        %6184 = vmatpush1.msra.mxu0 %v4365
        %6185 = vmatprep.subr.mxu0 0.0
        %6186 = vmatpush1.msra.mxu0 %v4364
        %6187 = vmatprep.subr.mxu0 0.0
        %6188 = vmatpush1.msra.mxu0 %v4363
        %6189 = vmatprep.subr.mxu0 0.0
        %6190 = vmatpush1.msra.mxu0 %v4362
        %6191 = vmatprep.subr.mxu0 0.0
        %6192 = vmatpush1.msra.mxu0 %v4361
        %6193 = vmatprep.subr.mxu0 0.0
        %6194 = vmatpush1.msra.mxu0 %v4360
        %6195 = vmatprep.subr.mxu0 0.0
        %6196 = vmatpush1.msra.mxu0 %v4359
        %6197 = vmatprep.subr.mxu0 0.0
        %6198 = vmatpush1.msra.mxu0 %v4358
        %6199 = vmatprep.subr.mxu0 0.0
        %6200 = vmatpush1.msra.mxu0 %v4357
        %6201 = vmatprep.subr.mxu0 0.0
        %6202 = vmatpush1.msra.mxu0 %v4356
        %6203 = vmatprep.subr.mxu0 0.0
        %6204 = vmatpush1.msra.mxu0 %v4355
        %6205 = vmatprep.subr.mxu0 0.0
        %6206 = vmatpush1.msra.mxu0 %v4354
        %6207 = vmatprep.subr.mxu0 0.0
        %6208 = vmatpush1.msra.mxu0 %v4353
        %6209 = vmatprep.subr.mxu0 0.0
        %6210 = vmatpush2.msra.mxu0 0.0
        %6211 = vmatprep.subr.mxu0 0.0
        %6212 = vmatpush2.msra.mxu0 0.0
        %6213 = vmatprep.subr.mxu0 0.0
        %6214 = vmatpush2.msra.mxu0 0.0
        %6215 = vmatprep.subr.mxu0 0.0
        %6216 = vmatpush2.msra.mxu0 0.0
        %6217 = vmatprep.subr.mxu0 0.0
        %6218 = vmatpush2.msra.mxu0 0.0
        %6219 = vmatprep.subr.mxu0 0.0
        %6220 = vmatpush2.msra.mxu0 0.0
        %6221 = vmatprep.subr.mxu0 0.0
        %6222 = vmatpush2.msra.mxu0 0.0
        %6223 = vmatprep.subr.mxu0 0.0
        %6224 = vmatpush2.msra.mxu0 0.0
        %6225 = vmatprep.subr.mxu0 0.0
        %6226 = vmatpush2.msra.mxu0 0.0
        %6227 = vmatprep.subr.mxu0 0.0
        %6228 = vmatpush2.msra.mxu0 0.0
        %6229 = vmatprep.subr.mxu0 0.0
        %6230 = vmatpush2.msra.mxu0 0.0
        %6231 = vmatprep.subr.mxu0 0.0
        %6232 = vmatpush2.msra.mxu0 0.0
        %6233 = vmatprep.subr.mxu0 0.0
        %6234 = vmatpush2.msra.mxu0 0.0
        %6235 = vmatprep.subr.mxu0 0.0
        %6236 = vmatpush2.msra.mxu0 0.0
        %6237 = vmatprep.subr.mxu0 0.0
        %6238 = vmatpush2.msra.mxu0 0.0
        %6239 = vmatprep.subr.mxu0 0.0
        %6240 = vmatpush2.msra.mxu0 0.0
        %6241 = vmatprep.mubr.f32.mxu0 0.0
        %6242 = vmatmul.mubr.f32.gmra.mxu0 %v6174
        %v6243 = vpop.f32.mrf.mxu0
        %v6244 = vadd.f32 0.0, %v6243
        %v6245 = vpop.f32.mrf.mxu0
        %6246 = vdwg.mxu0
        %v6247 = vadd.f32 %v6021, %v6244
        %6248 = vmatprep.subr.mxu0 0.0
        %6249 = vmatpush1.xpose.msra.mxu0 0.0
        %6250 = vmatprep.subr.mxu0 0.0
        %6251 = vmatpush1.xpose.msra.mxu0 0.0
        %6252 = vmatprep.subr.mxu0 0.0
        %6253 = vmatpush1.xpose.msra.mxu0 0.0
        %6254 = vmatprep.subr.mxu0 0.0
        %6255 = vmatpush1.xpose.msra.mxu0 0.0
        %6256 = vmatprep.subr.mxu0 0.0
        %6257 = vmatpush1.xpose.msra.mxu0 0.0
        %6258 = vmatprep.subr.mxu0 0.0
        %6259 = vmatpush1.xpose.msra.mxu0 0.0
        %6260 = vmatprep.subr.mxu0 0.0
        %6261 = vmatpush1.xpose.msra.mxu0 0.0
        %6262 = vmatprep.subr.mxu0 0.0
        %6263 = vmatpush1.xpose.msra.mxu0 0.0
        %6264 = vmatprep.subr.mxu0 0.0
        %6265 = vmatpush1.xpose.msra.mxu0 0.0
        %6266 = vmatprep.subr.mxu0 0.0
        %6267 = vmatpush1.xpose.msra.mxu0 0.0
        %6268 = vmatprep.subr.mxu0 0.0
        %6269 = vmatpush1.xpose.msra.mxu0 0.0
        %6270 = vmatprep.subr.mxu0 0.0
        %6271 = vmatpush1.xpose.msra.mxu0 0.0
        %6272 = vmatprep.subr.mxu0 0.0
        %6273 = vmatpush1.xpose.msra.mxu0 0.0
        %6274 = vmatprep.subr.mxu0 0.0
        %6275 = vmatpush1.xpose.msra.mxu0 0.0
        %6276 = vmatprep.subr.mxu0 0.0
        %6277 = vmatpush1.xpose.msra.mxu0 %v4947
        %6278 = vmatprep.subr.mxu0 0.0
        %6279 = vmatpush1.xpose.msra.mxu0 %v4941
        %6280 = vmatprep.subr.mxu0 0.0
        %6281 = vmatpush2.xpose.msra.mxu0 0.0
        %6282 = vmatprep.subr.mxu0 0.0
        %6283 = vmatpush2.xpose.msra.mxu0 0.0
        %6284 = vmatprep.subr.mxu0 0.0
        %6285 = vmatpush2.xpose.msra.mxu0 0.0
        %6286 = vmatprep.subr.mxu0 0.0
        %6287 = vmatpush2.xpose.msra.mxu0 0.0
        %6288 = vmatprep.subr.mxu0 0.0
        %6289 = vmatpush2.xpose.msra.mxu0 0.0
        %6290 = vmatprep.subr.mxu0 0.0
        %6291 = vmatpush2.xpose.msra.mxu0 0.0
        %6292 = vmatprep.subr.mxu0 0.0
        %6293 = vmatpush2.xpose.msra.mxu0 0.0
        %6294 = vmatprep.subr.mxu0 0.0
        %6295 = vmatpush2.xpose.msra.mxu0 0.0
        %6296 = vmatprep.subr.mxu0 0.0
        %6297 = vmatpush2.xpose.msra.mxu0 0.0
        %6298 = vmatprep.subr.mxu0 0.0
        %6299 = vmatpush2.xpose.msra.mxu0 0.0
        %6300 = vmatprep.subr.mxu0 0.0
        %6301 = vmatpush2.xpose.msra.mxu0 0.0
        %6302 = vmatprep.subr.mxu0 0.0
        %6303 = vmatpush2.xpose.msra.mxu0 0.0
        %6304 = vmatprep.subr.mxu0 0.0
        %6305 = vmatpush2.xpose.msra.mxu0 0.0
        %6306 = vmatprep.subr.mxu0 0.0
        %6307 = vmatpush2.xpose.msra.mxu0 0.0
        %6308 = vmatprep.subr.mxu0 0.0
        %6309 = vmatpush2.xpose.msra.mxu0 0.0
        %6310 = vmatprep.subr.mxu0 0.0
        %6311 = vmatpush2.xpose.msra.mxu0 0.0
        %6312 = vmatprep.mubr.f32.mxu0 0.0
        %6313 = vmatmul.mubr.f32.gmra.mxu0 %v4645
        %v6314 = vpop.f32.mrf.mxu0
        %v6315 = vadd.f32 0.0, %v6314
        %v6316 = vpop.f32.mrf.mxu0
        %6317 = vdwg.mxu0
        %v6318 = vmul.f32 %v6315, 0.088388346
        %v6319 = vsel %vm5414, %v6318, -inf
        %6320 = vmax.xlane.f32.xlu0 %v6319
        %v6321 = vpop.xlane.xlu0 %6320
        %v6322 = vsub.f32 %v6318, %v6321
        %v6323 = vmul.f32 %v6322, 1.442695
        %v6324 = vpow.pop %v6323
        %v6325 = vsel %vm5414, %v6324, 0.0
        %6326 = vadd.xlane.f32.xlu0 %v6325
        %v6327 = vpop.xlane.xlu0 %6326
        %v6328 = vrcp.pop %v6327
        %v6329 = vmul.f32 %v6324, %v6328
        %v6331 = vsel %vm5414, %v6329, 0
        %6333 = vmatprep.subr.mxu0 0.0
        %6334 = vmatpush1.msra.mxu0 0.0
        %6335 = vmatprep.subr.mxu0 0.0
        %6336 = vmatpush1.msra.mxu0 0.0
        %6337 = vmatprep.subr.mxu0 0.0
        %6338 = vmatpush1.msra.mxu0 0.0
        %6339 = vmatprep.subr.mxu0 0.0
        %6340 = vmatpush1.msra.mxu0 0.0
        %6341 = vmatprep.subr.mxu0 0.0
        %6342 = vmatpush1.msra.mxu0 0.0
        %6343 = vmatprep.subr.mxu0 0.0
        %6344 = vmatpush1.msra.mxu0 0.0
        %6345 = vmatprep.subr.mxu0 0.0
        %6346 = vmatpush1.msra.mxu0 0.0
        %6347 = vmatprep.subr.mxu0 0.0
        %6348 = vmatpush1.msra.mxu0 0.0
        %6349 = vmatprep.subr.mxu0 0.0
        %6350 = vmatpush1.msra.mxu0 0.0
        %6351 = vmatprep.subr.mxu0 0.0
        %6352 = vmatpush1.msra.mxu0 0.0
        %6353 = vmatprep.subr.mxu0 0.0
        %6354 = vmatpush1.msra.mxu0 0.0
        %6355 = vmatprep.subr.mxu0 0.0
        %6356 = vmatpush1.msra.mxu0 0.0
        %6357 = vmatprep.subr.mxu0 0.0
        %6358 = vmatpush1.msra.mxu0 0.0
        %6359 = vmatprep.subr.mxu0 0.0
        %6360 = vmatpush1.msra.mxu0 0.0
        %6361 = vmatprep.subr.mxu0 0.0
        %6362 = vmatpush1.msra.mxu0 %v5255
        %6363 = vmatprep.subr.mxu0 0.0
        %6364 = vmatpush1.msra.mxu0 %v5249
        %6365 = vmatprep.subr.mxu0 0.0
        %6366 = vmatpush2.msra.mxu0 0.0
        %6367 = vmatprep.subr.mxu0 0.0
        %6368 = vmatpush2.msra.mxu0 0.0
        %6369 = vmatprep.subr.mxu0 0.0
        %6370 = vmatpush2.msra.mxu0 0.0
        %6371 = vmatprep.subr.mxu0 0.0
        %6372 = vmatpush2.msra.mxu0 0.0
        %6373 = vmatprep.subr.mxu0 0.0
        %6374 = vmatpush2.msra.mxu0 0.0
        %6375 = vmatprep.subr.mxu0 0.0
        %6376 = vmatpush2.msra.mxu0 0.0
        %6377 = vmatprep.subr.mxu0 0.0
        %6378 = vmatpush2.msra.mxu0 0.0
        %6379 = vmatprep.subr.mxu0 0.0
        %6380 = vmatpush2.msra.mxu0 0.0
        %6381 = vmatprep.subr.mxu0 0.0
        %6382 = vmatpush2.msra.mxu0 0.0
        %6383 = vmatprep.subr.mxu0 0.0
        %6384 = vmatpush2.msra.mxu0 0.0
        %6385 = vmatprep.subr.mxu0 0.0
        %6386 = vmatpush2.msra.mxu0 0.0
        %6387 = vmatprep.subr.mxu0 0.0
        %6388 = vmatpush2.msra.mxu0 0.0
        %6389 = vmatprep.subr.mxu0 0.0
        %6390 = vmatpush2.msra.mxu0 0.0
        %6391 = vmatprep.subr.mxu0 0.0
        %6392 = vmatpush2.msra.mxu0 0.0
        %6393 = vmatprep.subr.mxu0 0.0
        %6394 = vmatpush2.msra.mxu0 0.0
        %6395 = vmatprep.subr.mxu0 0.0
        %6396 = vmatpush2.msra.mxu0 0.0
        %6397 = vmatprep.mubr.f32.mxu0 0.0
        %6398 = vmatmul.mubr.f32.gmra.mxu0 %v6331
        %v6399 = vpop.f32.mrf.mxu0
        %v6400 = vadd.f32 0.0, %v6399
        %v6401 = vpop.f32.mrf.mxu0
        %6402 = vdwg.mxu0
        %6403 = vmatprep.subr.mxu0 0.0
        %6404 = vmatpush1.msra.mxu0 %v4384
        %6405 = vmatprep.subr.mxu0 0.0
        %6406 = vmatpush1.msra.mxu0 %v4383
        %6407 = vmatprep.subr.mxu0 0.0
        %6408 = vmatpush1.msra.mxu0 %v4382
        %6409 = vmatprep.subr.mxu0 0.0
        %6410 = vmatpush1.msra.mxu0 %v4381
        %6411 = vmatprep.subr.mxu0 0.0
        %6412 = vmatpush1.msra.mxu0 %v4380
        %6413 = vmatprep.subr.mxu0 0.0
        %6414 = vmatpush1.msra.mxu0 %v4379
        %6415 = vmatprep.subr.mxu0 0.0
        %6416 = vmatpush1.msra.mxu0 %v4378
        %6417 = vmatprep.subr.mxu0 0.0
        %6418 = vmatpush1.msra.mxu0 %v4377
        %6419 = vmatprep.subr.mxu0 0.0
        %6420 = vmatpush1.msra.mxu0 %v4376
        %6421 = vmatprep.subr.mxu0 0.0
        %6422 = vmatpush1.msra.mxu0 %v4375
        %6423 = vmatprep.subr.mxu0 0.0
        %6424 = vmatpush1.msra.mxu0 %v4374
        %6425 = vmatprep.subr.mxu0 0.0
        %6426 = vmatpush1.msra.mxu0 %v4373
        %6427 = vmatprep.subr.mxu0 0.0
        %6428 = vmatpush1.msra.mxu0 %v4372
        %6429 = vmatprep.subr.mxu0 0.0
        %6430 = vmatpush1.msra.mxu0 %v4371
        %6431 = vmatprep.subr.mxu0 0.0
        %6432 = vmatpush1.msra.mxu0 %v4370
        %6433 = vmatprep.subr.mxu0 0.0
        %6434 = vmatpush1.msra.mxu0 %v4369
        %6435 = vmatprep.subr.mxu0 0.0
        %6436 = vmatpush2.msra.mxu0 0.0
        %6437 = vmatprep.subr.mxu0 0.0
        %6438 = vmatpush2.msra.mxu0 0.0
        %6439 = vmatprep.subr.mxu0 0.0
        %6440 = vmatpush2.msra.mxu0 0.0
        %6441 = vmatprep.subr.mxu0 0.0
        %6442 = vmatpush2.msra.mxu0 0.0
        %6443 = vmatprep.subr.mxu0 0.0
        %6444 = vmatpush2.msra.mxu0 0.0
        %6445 = vmatprep.subr.mxu0 0.0
        %6446 = vmatpush2.msra.mxu0 0.0
        %6447 = vmatprep.subr.mxu0 0.0
        %6448 = vmatpush2.msra.mxu0 0.0
        %6449 = vmatprep.subr.mxu0 0.0
        %6450 = vmatpush2.msra.mxu0 0.0
        %6451 = vmatprep.subr.mxu0 0.0
        %6452 = vmatpush2.msra.mxu0 0.0
        %6453 = vmatprep.subr.mxu0 0.0
        %6454 = vmatpush2.msra.mxu0 0.0
        %6455 = vmatprep.subr.mxu0 0.0
        %6456 = vmatpush2.msra.mxu0 0.0
        %6457 = vmatprep.subr.mxu0 0.0
        %6458 = vmatpush2.msra.mxu0 0.0
        %6459 = vmatprep.subr.mxu0 0.0
        %6460 = vmatpush2.msra.mxu0 0.0
        %6461 = vmatprep.subr.mxu0 0.0
        %6462 = vmatpush2.msra.mxu0 0.0
        %6463 = vmatprep.subr.mxu0 0.0
        %6464 = vmatpush2.msra.mxu0 0.0
        %6465 = vmatprep.subr.mxu0 0.0
        %6466 = vmatpush2.msra.mxu0 0.0
        %6467 = vmatprep.mubr.f32.mxu0 0.0
        %6468 = vmatmul.mubr.f32.gmra.mxu0 %v6400
        %v6469 = vpop.f32.mrf.mxu0
        %v6470 = vadd.f32 0.0, %v6469
        %v6471 = vpop.f32.mrf.mxu0
        %6472 = vdwg.mxu0
        %v6473 = vadd.f32 %v6247, %v6470
        %6474 = vmatprep.subr.mxu0 0.0
        %6475 = vmatpush1.xpose.msra.mxu0 0.0
        %6476 = vmatprep.subr.mxu0 0.0
        %6477 = vmatpush1.xpose.msra.mxu0 0.0
        %6478 = vmatprep.subr.mxu0 0.0
        %6479 = vmatpush1.xpose.msra.mxu0 0.0
        %6480 = vmatprep.subr.mxu0 0.0
        %6481 = vmatpush1.xpose.msra.mxu0 0.0
        %6482 = vmatprep.subr.mxu0 0.0
        %6483 = vmatpush1.xpose.msra.mxu0 0.0
        %6484 = vmatprep.subr.mxu0 0.0
        %6485 = vmatpush1.xpose.msra.mxu0 0.0
        %6486 = vmatprep.subr.mxu0 0.0
        %6487 = vmatpush1.xpose.msra.mxu0 0.0
        %6488 = vmatprep.subr.mxu0 0.0
        %6489 = vmatpush1.xpose.msra.mxu0 0.0
        %6490 = vmatprep.subr.mxu0 0.0
        %6491 = vmatpush1.xpose.msra.mxu0 0.0
        %6492 = vmatprep.subr.mxu0 0.0
        %6493 = vmatpush1.xpose.msra.mxu0 0.0
        %6494 = vmatprep.subr.mxu0 0.0
        %6495 = vmatpush1.xpose.msra.mxu0 0.0
        %6496 = vmatprep.subr.mxu0 0.0
        %6497 = vmatpush1.xpose.msra.mxu0 0.0
        %6498 = vmatprep.subr.mxu0 0.0
        %6499 = vmatpush1.xpose.msra.mxu0 0.0
        %6500 = vmatprep.subr.mxu0 0.0
        %6501 = vmatpush1.xpose.msra.mxu0 0.0
        %6502 = vmatprep.subr.mxu0 0.0
        %6503 = vmatpush1.xpose.msra.mxu0 %v4949
        %6504 = vmatprep.subr.mxu0 0.0
        %6505 = vmatpush1.xpose.msra.mxu0 %v4943
        %6506 = vmatprep.subr.mxu0 0.0
        %6507 = vmatpush2.xpose.msra.mxu0 0.0
        %6508 = vmatprep.subr.mxu0 0.0
        %6509 = vmatpush2.xpose.msra.mxu0 0.0
        %6510 = vmatprep.subr.mxu0 0.0
        %6511 = vmatpush2.xpose.msra.mxu0 0.0
        %6512 = vmatprep.subr.mxu0 0.0
        %6513 = vmatpush2.xpose.msra.mxu0 0.0
        %6514 = vmatprep.subr.mxu0 0.0
        %6515 = vmatpush2.xpose.msra.mxu0 0.0
        %6516 = vmatprep.subr.mxu0 0.0
        %6517 = vmatpush2.xpose.msra.mxu0 0.0
        %6518 = vmatprep.subr.mxu0 0.0
        %6519 = vmatpush2.xpose.msra.mxu0 0.0
        %6520 = vmatprep.subr.mxu0 0.0
        %6521 = vmatpush2.xpose.msra.mxu0 0.0
        %6522 = vmatprep.subr.mxu0 0.0
        %6523 = vmatpush2.xpose.msra.mxu0 0.0
        %6524 = vmatprep.subr.mxu0 0.0
        %6525 = vmatpush2.xpose.msra.mxu0 0.0
        %6526 = vmatprep.subr.mxu0 0.0
        %6527 = vmatpush2.xpose.msra.mxu0 0.0
        %6528 = vmatprep.subr.mxu0 0.0
        %6529 = vmatpush2.xpose.msra.mxu0 0.0
        %6530 = vmatprep.subr.mxu0 0.0
        %6531 = vmatpush2.xpose.msra.mxu0 0.0
        %6532 = vmatprep.subr.mxu0 0.0
        %6533 = vmatpush2.xpose.msra.mxu0 0.0
        %6534 = vmatprep.subr.mxu0 0.0
        %6535 = vmatpush2.xpose.msra.mxu0 0.0
        %6536 = vmatprep.subr.mxu0 0.0
        %6537 = vmatpush2.xpose.msra.mxu0 0.0
        %6538 = vmatprep.mubr.f32.mxu0 0.0
        %6539 = vmatmul.mubr.f32.gmra.mxu0 %v4647
        %v6540 = vpop.f32.mrf.mxu0
        %v6541 = vadd.f32 0.0, %v6540
        %v6542 = vpop.f32.mrf.mxu0
        %6543 = vdwg.mxu0
        %v6544 = vmul.f32 %v6541, 0.088388346
        %v6545 = vsel %vm5414, %v6544, -inf
        %6546 = vmax.xlane.f32.xlu0 %v6545
        %v6547 = vpop.xlane.xlu0 %6546
        %v6548 = vsub.f32 %v6544, %v6547
        %v6549 = vmul.f32 %v6548, 1.442695
        %v6550 = vpow.pop %v6549
        %v6551 = vsel %vm5414, %v6550, 0.0
        %6552 = vadd.xlane.f32.xlu0 %v6551
        %v6553 = vpop.xlane.xlu0 %6552
        %v6554 = vrcp.pop %v6553
        %v6555 = vmul.f32 %v6550, %v6554
        %v6557 = vsel %vm5414, %v6555, 0
        %6559 = vmatprep.subr.mxu0 0.0
        %6560 = vmatpush1.msra.mxu0 0.0
        %6561 = vmatprep.subr.mxu0 0.0
        %6562 = vmatpush1.msra.mxu0 0.0
        %6563 = vmatprep.subr.mxu0 0.0
        %6564 = vmatpush1.msra.mxu0 0.0
        %6565 = vmatprep.subr.mxu0 0.0
        %6566 = vmatpush1.msra.mxu0 0.0
        %6567 = vmatprep.subr.mxu0 0.0
        %6568 = vmatpush1.msra.mxu0 0.0
        %6569 = vmatprep.subr.mxu0 0.0
        %6570 = vmatpush1.msra.mxu0 0.0
        %6571 = vmatprep.subr.mxu0 0.0
        %6572 = vmatpush1.msra.mxu0 0.0
        %6573 = vmatprep.subr.mxu0 0.0
        %6574 = vmatpush1.msra.mxu0 0.0
        %6575 = vmatprep.subr.mxu0 0.0
        %6576 = vmatpush1.msra.mxu0 0.0
        %6577 = vmatprep.subr.mxu0 0.0
        %6578 = vmatpush1.msra.mxu0 0.0
        %6579 = vmatprep.subr.mxu0 0.0
        %6580 = vmatpush1.msra.mxu0 0.0
        %6581 = vmatprep.subr.mxu0 0.0
        %6582 = vmatpush1.msra.mxu0 0.0
        %6583 = vmatprep.subr.mxu0 0.0
        %6584 = vmatpush1.msra.mxu0 0.0
        %6585 = vmatprep.subr.mxu0 0.0
        %6586 = vmatpush1.msra.mxu0 0.0
        %6587 = vmatprep.subr.mxu0 0.0
        %6588 = vmatpush1.msra.mxu0 %v5257
        %6589 = vmatprep.subr.mxu0 0.0
        %6590 = vmatpush1.msra.mxu0 %v5251
        %6591 = vmatprep.subr.mxu0 0.0
        %6592 = vmatpush2.msra.mxu0 0.0
        %6593 = vmatprep.subr.mxu0 0.0
        %6594 = vmatpush2.msra.mxu0 0.0
        %6595 = vmatprep.subr.mxu0 0.0
        %6596 = vmatpush2.msra.mxu0 0.0
        %6597 = vmatprep.subr.mxu0 0.0
        %6598 = vmatpush2.msra.mxu0 0.0
        %6599 = vmatprep.subr.mxu0 0.0
        %6600 = vmatpush2.msra.mxu0 0.0
        %6601 = vmatprep.subr.mxu0 0.0
        %6602 = vmatpush2.msra.mxu0 0.0
        %6603 = vmatprep.subr.mxu0 0.0
        %6604 = vmatpush2.msra.mxu0 0.0
        %6605 = vmatprep.subr.mxu0 0.0
        %6606 = vmatpush2.msra.mxu0 0.0
        %6607 = vmatprep.subr.mxu0 0.0
        %6608 = vmatpush2.msra.mxu0 0.0
        %6609 = vmatprep.subr.mxu0 0.0
        %6610 = vmatpush2.msra.mxu0 0.0
        %6611 = vmatprep.subr.mxu0 0.0
        %6612 = vmatpush2.msra.mxu0 0.0
        %6613 = vmatprep.subr.mxu0 0.0
        %6614 = vmatpush2.msra.mxu0 0.0
        %6615 = vmatprep.subr.mxu0 0.0
        %6616 = vmatpush2.msra.mxu0 0.0
        %6617 = vmatprep.subr.mxu0 0.0
        %6618 = vmatpush2.msra.mxu0 0.0
        %6619 = vmatprep.subr.mxu0 0.0
        %6620 = vmatpush2.msra.mxu0 0.0
        %6621 = vmatprep.subr.mxu0 0.0
        %6622 = vmatpush2.msra.mxu0 0.0
        %6623 = vmatprep.mubr.f32.mxu0 0.0
        %6624 = vmatmul.mubr.f32.gmra.mxu0 %v6557
        %v6625 = vpop.f32.mrf.mxu0
        %v6626 = vadd.f32 0.0, %v6625
        %v6627 = vpop.f32.mrf.mxu0
        %6628 = vdwg.mxu0
        %6629 = vmatprep.subr.mxu0 0.0
        %6630 = vmatpush1.msra.mxu0 %v4400
        %6631 = vmatprep.subr.mxu0 0.0
        %6632 = vmatpush1.msra.mxu0 %v4399
        %6633 = vmatprep.subr.mxu0 0.0
        %6634 = vmatpush1.msra.mxu0 %v4398
        %6635 = vmatprep.subr.mxu0 0.0
        %6636 = vmatpush1.msra.mxu0 %v4397
        %6637 = vmatprep.subr.mxu0 0.0
        %6638 = vmatpush1.msra.mxu0 %v4396
        %6639 = vmatprep.subr.mxu0 0.0
        %6640 = vmatpush1.msra.mxu0 %v4395
        %6641 = vmatprep.subr.mxu0 0.0
        %6642 = vmatpush1.msra.mxu0 %v4394
        %6643 = vmatprep.subr.mxu0 0.0
        %6644 = vmatpush1.msra.mxu0 %v4393
        %6645 = vmatprep.subr.mxu0 0.0
        %6646 = vmatpush1.msra.mxu0 %v4392
        %6647 = vmatprep.subr.mxu0 0.0
        %6648 = vmatpush1.msra.mxu0 %v4391
        %6649 = vmatprep.subr.mxu0 0.0
        %6650 = vmatpush1.msra.mxu0 %v4390
        %6651 = vmatprep.subr.mxu0 0.0
        %6652 = vmatpush1.msra.mxu0 %v4389
        %6653 = vmatprep.subr.mxu0 0.0
        %6654 = vmatpush1.msra.mxu0 %v4388
        %6655 = vmatprep.subr.mxu0 0.0
        %6656 = vmatpush1.msra.mxu0 %v4387
        %6657 = vmatprep.subr.mxu0 0.0
        %6658 = vmatpush1.msra.mxu0 %v4386
        %6659 = vmatprep.subr.mxu0 0.0
        %6660 = vmatpush1.msra.mxu0 %v4385
        %6661 = vmatprep.subr.mxu0 0.0
        %6662 = vmatpush2.msra.mxu0 0.0
        %6663 = vmatprep.subr.mxu0 0.0
        %6664 = vmatpush2.msra.mxu0 0.0
        %6665 = vmatprep.subr.mxu0 0.0
        %6666 = vmatpush2.msra.mxu0 0.0
        %6667 = vmatprep.subr.mxu0 0.0
        %6668 = vmatpush2.msra.mxu0 0.0
        %6669 = vmatprep.subr.mxu0 0.0
        %6670 = vmatpush2.msra.mxu0 0.0
        %6671 = vmatprep.subr.mxu0 0.0
        %6672 = vmatpush2.msra.mxu0 0.0
        %6673 = vmatprep.subr.mxu0 0.0
        %6674 = vmatpush2.msra.mxu0 0.0
        %6675 = vmatprep.subr.mxu0 0.0
        %6676 = vmatpush2.msra.mxu0 0.0
        %6677 = vmatprep.subr.mxu0 0.0
        %6678 = vmatpush2.msra.mxu0 0.0
        %6679 = vmatprep.subr.mxu0 0.0
        %6680 = vmatpush2.msra.mxu0 0.0
        %6681 = vmatprep.subr.mxu0 0.0
        %6682 = vmatpush2.msra.mxu0 0.0
        %6683 = vmatprep.subr.mxu0 0.0
        %6684 = vmatpush2.msra.mxu0 0.0
        %6685 = vmatprep.subr.mxu0 0.0
        %6686 = vmatpush2.msra.mxu0 0.0
        %6687 = vmatprep.subr.mxu0 0.0
        %6688 = vmatpush2.msra.mxu0 0.0
        %6689 = vmatprep.subr.mxu0 0.0
        %6690 = vmatpush2.msra.mxu0 0.0
        %6691 = vmatprep.subr.mxu0 0.0
        %6692 = vmatpush2.msra.mxu0 0.0
        %6693 = vmatprep.mubr.f32.mxu0 0.0
        %6694 = vmatmul.mubr.f32.gmra.mxu0 %v6626
        %v6695 = vpop.f32.mrf.mxu0
        %v6696 = vadd.f32 0.0, %v6695
        %v6697 = vpop.f32.mrf.mxu0
        %6698 = vdwg.mxu0
        %v6699 = vadd.f32 %v6473, %v6696
        %6700 = vmatprep.subr.mxu0 0.0
        %6701 = vmatpush1.xpose.msra.mxu0 0.0
        %6702 = vmatprep.subr.mxu0 0.0
        %6703 = vmatpush1.xpose.msra.mxu0 0.0
        %6704 = vmatprep.subr.mxu0 0.0
        %6705 = vmatpush1.xpose.msra.mxu0 0.0
        %6706 = vmatprep.subr.mxu0 0.0
        %6707 = vmatpush1.xpose.msra.mxu0 0.0
        %6708 = vmatprep.subr.mxu0 0.0
        %6709 = vmatpush1.xpose.msra.mxu0 0.0
        %6710 = vmatprep.subr.mxu0 0.0
        %6711 = vmatpush1.xpose.msra.mxu0 0.0
        %6712 = vmatprep.subr.mxu0 0.0
        %6713 = vmatpush1.xpose.msra.mxu0 0.0
        %6714 = vmatprep.subr.mxu0 0.0
        %6715 = vmatpush1.xpose.msra.mxu0 0.0
        %6716 = vmatprep.subr.mxu0 0.0
        %6717 = vmatpush1.xpose.msra.mxu0 0.0
        %6718 = vmatprep.subr.mxu0 0.0
        %6719 = vmatpush1.xpose.msra.mxu0 0.0
        %6720 = vmatprep.subr.mxu0 0.0
        %6721 = vmatpush1.xpose.msra.mxu0 0.0
        %6722 = vmatprep.subr.mxu0 0.0
        %6723 = vmatpush1.xpose.msra.mxu0 0.0
        %6724 = vmatprep.subr.mxu0 0.0
        %6725 = vmatpush1.xpose.msra.mxu0 0.0
        %6726 = vmatprep.subr.mxu0 0.0
        %6727 = vmatpush1.xpose.msra.mxu0 0.0
        %6728 = vmatprep.subr.mxu0 0.0
        %6729 = vmatpush1.xpose.msra.mxu0 %v5024
        %6730 = vmatprep.subr.mxu0 0.0
        %6731 = vmatpush1.xpose.msra.mxu0 %v5018
        %6732 = vmatprep.subr.mxu0 0.0
        %6733 = vmatpush2.xpose.msra.mxu0 0.0
        %6734 = vmatprep.subr.mxu0 0.0
        %6735 = vmatpush2.xpose.msra.mxu0 0.0
        %6736 = vmatprep.subr.mxu0 0.0
        %6737 = vmatpush2.xpose.msra.mxu0 0.0
        %6738 = vmatprep.subr.mxu0 0.0
        %6739 = vmatpush2.xpose.msra.mxu0 0.0
        %6740 = vmatprep.subr.mxu0 0.0
        %6741 = vmatpush2.xpose.msra.mxu0 0.0
        %6742 = vmatprep.subr.mxu0 0.0
        %6743 = vmatpush2.xpose.msra.mxu0 0.0
        %6744 = vmatprep.subr.mxu0 0.0
        %6745 = vmatpush2.xpose.msra.mxu0 0.0
        %6746 = vmatprep.subr.mxu0 0.0
        %6747 = vmatpush2.xpose.msra.mxu0 0.0
        %6748 = vmatprep.subr.mxu0 0.0
        %6749 = vmatpush2.xpose.msra.mxu0 0.0
        %6750 = vmatprep.subr.mxu0 0.0
        %6751 = vmatpush2.xpose.msra.mxu0 0.0
        %6752 = vmatprep.subr.mxu0 0.0
        %6753 = vmatpush2.xpose.msra.mxu0 0.0
        %6754 = vmatprep.subr.mxu0 0.0
        %6755 = vmatpush2.xpose.msra.mxu0 0.0
        %6756 = vmatprep.subr.mxu0 0.0
        %6757 = vmatpush2.xpose.msra.mxu0 0.0
        %6758 = vmatprep.subr.mxu0 0.0
        %6759 = vmatpush2.xpose.msra.mxu0 0.0
        %6760 = vmatprep.subr.mxu0 0.0
        %6761 = vmatpush2.xpose.msra.mxu0 0.0
        %6762 = vmatprep.subr.mxu0 0.0
        %6763 = vmatpush2.xpose.msra.mxu0 0.0
        %6764 = vmatprep.mubr.f32.mxu0 0.0
        %6765 = vmatmul.mubr.f32.gmra.mxu0 %v4716
        %v6766 = vpop.f32.mrf.mxu0
        %v6767 = vadd.f32 0.0, %v6766
        %v6768 = vpop.f32.mrf.mxu0
        %6769 = vdwg.mxu0
        %v6770 = vmul.f32 %v6767, 0.088388346
        %v6771 = vsel %vm5414, %v6770, -inf
        %6772 = vmax.xlane.f32.xlu0 %v6771
        %v6773 = vpop.xlane.xlu0 %6772
        %v6774 = vsub.f32 %v6770, %v6773
        %v6775 = vmul.f32 %v6774, 1.442695
        %v6776 = vpow.pop %v6775
        %v6777 = vsel %vm5414, %v6776, 0.0
        %6778 = vadd.xlane.f32.xlu0 %v6777
        %v6779 = vpop.xlane.xlu0 %6778
        %v6780 = vrcp.pop %v6779
        %v6781 = vmul.f32 %v6776, %v6780
        %v6783 = vsel %vm5414, %v6781, 0
        %6785 = vmatprep.subr.mxu0 0.0
        %6786 = vmatpush1.msra.mxu0 0.0
        %6787 = vmatprep.subr.mxu0 0.0
        %6788 = vmatpush1.msra.mxu0 0.0
        %6789 = vmatprep.subr.mxu0 0.0
        %6790 = vmatpush1.msra.mxu0 0.0
        %6791 = vmatprep.subr.mxu0 0.0
        %6792 = vmatpush1.msra.mxu0 0.0
        %6793 = vmatprep.subr.mxu0 0.0
        %6794 = vmatpush1.msra.mxu0 0.0
        %6795 = vmatprep.subr.mxu0 0.0
        %6796 = vmatpush1.msra.mxu0 0.0
        %6797 = vmatprep.subr.mxu0 0.0
        %6798 = vmatpush1.msra.mxu0 0.0
        %6799 = vmatprep.subr.mxu0 0.0
        %6800 = vmatpush1.msra.mxu0 0.0
        %6801 = vmatprep.subr.mxu0 0.0
        %6802 = vmatpush1.msra.mxu0 0.0
        %6803 = vmatprep.subr.mxu0 0.0
        %6804 = vmatpush1.msra.mxu0 0.0
        %6805 = vmatprep.subr.mxu0 0.0
        %6806 = vmatpush1.msra.mxu0 0.0
        %6807 = vmatprep.subr.mxu0 0.0
        %6808 = vmatpush1.msra.mxu0 0.0
        %6809 = vmatprep.subr.mxu0 0.0
        %6810 = vmatpush1.msra.mxu0 0.0
        %6811 = vmatprep.subr.mxu0 0.0
        %6812 = vmatpush1.msra.mxu0 0.0
        %6813 = vmatprep.subr.mxu0 0.0
        %6814 = vmatpush1.msra.mxu0 %v5332
        %6815 = vmatprep.subr.mxu0 0.0
        %6816 = vmatpush1.msra.mxu0 %v5326
        %6817 = vmatprep.subr.mxu0 0.0
        %6818 = vmatpush2.msra.mxu0 0.0
        %6819 = vmatprep.subr.mxu0 0.0
        %6820 = vmatpush2.msra.mxu0 0.0
        %6821 = vmatprep.subr.mxu0 0.0
        %6822 = vmatpush2.msra.mxu0 0.0
        %6823 = vmatprep.subr.mxu0 0.0
        %6824 = vmatpush2.msra.mxu0 0.0
        %6825 = vmatprep.subr.mxu0 0.0
        %6826 = vmatpush2.msra.mxu0 0.0
        %6827 = vmatprep.subr.mxu0 0.0
        %6828 = vmatpush2.msra.mxu0 0.0
        %6829 = vmatprep.subr.mxu0 0.0
        %6830 = vmatpush2.msra.mxu0 0.0
        %6831 = vmatprep.subr.mxu0 0.0
        %6832 = vmatpush2.msra.mxu0 0.0
        %6833 = vmatprep.subr.mxu0 0.0
        %6834 = vmatpush2.msra.mxu0 0.0
        %6835 = vmatprep.subr.mxu0 0.0
        %6836 = vmatpush2.msra.mxu0 0.0
        %6837 = vmatprep.subr.mxu0 0.0
        %6838 = vmatpush2.msra.mxu0 0.0
        %6839 = vmatprep.subr.mxu0 0.0
        %6840 = vmatpush2.msra.mxu0 0.0
        %6841 = vmatprep.subr.mxu0 0.0
        %6842 = vmatpush2.msra.mxu0 0.0
        %6843 = vmatprep.subr.mxu0 0.0
        %6844 = vmatpush2.msra.mxu0 0.0
        %6845 = vmatprep.subr.mxu0 0.0
        %6846 = vmatpush2.msra.mxu0 0.0
        %6847 = vmatprep.subr.mxu0 0.0
        %6848 = vmatpush2.msra.mxu0 0.0
        %6849 = vmatprep.mubr.f32.mxu0 0.0
        %6850 = vmatmul.mubr.f32.gmra.mxu0 %v6783
        %v6851 = vpop.f32.mrf.mxu0
        %v6852 = vadd.f32 0.0, %v6851
        %v6853 = vpop.f32.mrf.mxu0
        %6854 = vdwg.mxu0
        %6855 = vmatprep.subr.mxu0 0.0
        %6856 = vmatpush1.msra.mxu0 %v4416
        %6857 = vmatprep.subr.mxu0 0.0
        %6858 = vmatpush1.msra.mxu0 %v4415
        %6859 = vmatprep.subr.mxu0 0.0
        %6860 = vmatpush1.msra.mxu0 %v4414
        %6861 = vmatprep.subr.mxu0 0.0
        %6862 = vmatpush1.msra.mxu0 %v4413
        %6863 = vmatprep.subr.mxu0 0.0
        %6864 = vmatpush1.msra.mxu0 %v4412
        %6865 = vmatprep.subr.mxu0 0.0
        %6866 = vmatpush1.msra.mxu0 %v4411
        %6867 = vmatprep.subr.mxu0 0.0
        %6868 = vmatpush1.msra.mxu0 %v4410
        %6869 = vmatprep.subr.mxu0 0.0
        %6870 = vmatpush1.msra.mxu0 %v4409
        %6871 = vmatprep.subr.mxu0 0.0
        %6872 = vmatpush1.msra.mxu0 %v4408
        %6873 = vmatprep.subr.mxu0 0.0
        %6874 = vmatpush1.msra.mxu0 %v4407
        %6875 = vmatprep.subr.mxu0 0.0
        %6876 = vmatpush1.msra.mxu0 %v4406
        %6877 = vmatprep.subr.mxu0 0.0
        %6878 = vmatpush1.msra.mxu0 %v4405
        %6879 = vmatprep.subr.mxu0 0.0
        %6880 = vmatpush1.msra.mxu0 %v4404
        %6881 = vmatprep.subr.mxu0 0.0
        %6882 = vmatpush1.msra.mxu0 %v4403
        %6883 = vmatprep.subr.mxu0 0.0
        %6884 = vmatpush1.msra.mxu0 %v4402
        %6885 = vmatprep.subr.mxu0 0.0
        %6886 = vmatpush1.msra.mxu0 %v4401
        %6887 = vmatprep.subr.mxu0 0.0
        %6888 = vmatpush2.msra.mxu0 0.0
        %6889 = vmatprep.subr.mxu0 0.0
        %6890 = vmatpush2.msra.mxu0 0.0
        %6891 = vmatprep.subr.mxu0 0.0
        %6892 = vmatpush2.msra.mxu0 0.0
        %6893 = vmatprep.subr.mxu0 0.0
        %6894 = vmatpush2.msra.mxu0 0.0
        %6895 = vmatprep.subr.mxu0 0.0
        %6896 = vmatpush2.msra.mxu0 0.0
        %6897 = vmatprep.subr.mxu0 0.0
        %6898 = vmatpush2.msra.mxu0 0.0
        %6899 = vmatprep.subr.mxu0 0.0
        %6900 = vmatpush2.msra.mxu0 0.0
        %6901 = vmatprep.subr.mxu0 0.0
        %6902 = vmatpush2.msra.mxu0 0.0
        %6903 = vmatprep.subr.mxu0 0.0
        %6904 = vmatpush2.msra.mxu0 0.0
        %6905 = vmatprep.subr.mxu0 0.0
        %6906 = vmatpush2.msra.mxu0 0.0
        %6907 = vmatprep.subr.mxu0 0.0
        %6908 = vmatpush2.msra.mxu0 0.0
        %6909 = vmatprep.subr.mxu0 0.0
        %6910 = vmatpush2.msra.mxu0 0.0
        %6911 = vmatprep.subr.mxu0 0.0
        %6912 = vmatpush2.msra.mxu0 0.0
        %6913 = vmatprep.subr.mxu0 0.0
        %6914 = vmatpush2.msra.mxu0 0.0
        %6915 = vmatprep.subr.mxu0 0.0
        %6916 = vmatpush2.msra.mxu0 0.0
        %6917 = vmatprep.subr.mxu0 0.0
        %6918 = vmatpush2.msra.mxu0 0.0
        %6919 = vmatprep.mubr.f32.mxu0 0.0
        %6920 = vmatmul.mubr.f32.gmra.mxu0 %v6852
        %v6921 = vpop.f32.mrf.mxu0
        %v6922 = vadd.f32 0.0, %v6921
        %v6923 = vpop.f32.mrf.mxu0
        %6924 = vdwg.mxu0
        %v6925 = vadd.f32 %v6699, %v6922
        %6926 = vmatprep.subr.mxu0 0.0
        %6927 = vmatpush1.xpose.msra.mxu0 0.0
        %6928 = vmatprep.subr.mxu0 0.0
        %6929 = vmatpush1.xpose.msra.mxu0 0.0
        %6930 = vmatprep.subr.mxu0 0.0
        %6931 = vmatpush1.xpose.msra.mxu0 0.0
        %6932 = vmatprep.subr.mxu0 0.0
        %6933 = vmatpush1.xpose.msra.mxu0 0.0
        %6934 = vmatprep.subr.mxu0 0.0
        %6935 = vmatpush1.xpose.msra.mxu0 0.0
        %6936 = vmatprep.subr.mxu0 0.0
        %6937 = vmatpush1.xpose.msra.mxu0 0.0
        %6938 = vmatprep.subr.mxu0 0.0
        %6939 = vmatpush1.xpose.msra.mxu0 0.0
        %6940 = vmatprep.subr.mxu0 0.0
        %6941 = vmatpush1.xpose.msra.mxu0 0.0
        %6942 = vmatprep.subr.mxu0 0.0
        %6943 = vmatpush1.xpose.msra.mxu0 0.0
        %6944 = vmatprep.subr.mxu0 0.0
        %6945 = vmatpush1.xpose.msra.mxu0 0.0
        %6946 = vmatprep.subr.mxu0 0.0
        %6947 = vmatpush1.xpose.msra.mxu0 0.0
        %6948 = vmatprep.subr.mxu0 0.0
        %6949 = vmatpush1.xpose.msra.mxu0 0.0
        %6950 = vmatprep.subr.mxu0 0.0
        %6951 = vmatpush1.xpose.msra.mxu0 0.0
        %6952 = vmatprep.subr.mxu0 0.0
        %6953 = vmatpush1.xpose.msra.mxu0 0.0
        %6954 = vmatprep.subr.mxu0 0.0
        %6955 = vmatpush1.xpose.msra.mxu0 %v5026
        %6956 = vmatprep.subr.mxu0 0.0
        %6957 = vmatpush1.xpose.msra.mxu0 %v5020
        %6958 = vmatprep.subr.mxu0 0.0
        %6959 = vmatpush2.xpose.msra.mxu0 0.0
        %6960 = vmatprep.subr.mxu0 0.0
        %6961 = vmatpush2.xpose.msra.mxu0 0.0
        %6962 = vmatprep.subr.mxu0 0.0
        %6963 = vmatpush2.xpose.msra.mxu0 0.0
        %6964 = vmatprep.subr.mxu0 0.0
        %6965 = vmatpush2.xpose.msra.mxu0 0.0
        %6966 = vmatprep.subr.mxu0 0.0
        %6967 = vmatpush2.xpose.msra.mxu0 0.0
        %6968 = vmatprep.subr.mxu0 0.0
        %6969 = vmatpush2.xpose.msra.mxu0 0.0
        %6970 = vmatprep.subr.mxu0 0.0
        %6971 = vmatpush2.xpose.msra.mxu0 0.0
        %6972 = vmatprep.subr.mxu0 0.0
        %6973 = vmatpush2.xpose.msra.mxu0 0.0
        %6974 = vmatprep.subr.mxu0 0.0
        %6975 = vmatpush2.xpose.msra.mxu0 0.0
        %6976 = vmatprep.subr.mxu0 0.0
        %6977 = vmatpush2.xpose.msra.mxu0 0.0
        %6978 = vmatprep.subr.mxu0 0.0
        %6979 = vmatpush2.xpose.msra.mxu0 0.0
        %6980 = vmatprep.subr.mxu0 0.0
        %6981 = vmatpush2.xpose.msra.mxu0 0.0
        %6982 = vmatprep.subr.mxu0 0.0
        %6983 = vmatpush2.xpose.msra.mxu0 0.0
        %6984 = vmatprep.subr.mxu0 0.0
        %6985 = vmatpush2.xpose.msra.mxu0 0.0
        %6986 = vmatprep.subr.mxu0 0.0
        %6987 = vmatpush2.xpose.msra.mxu0 0.0
        %6988 = vmatprep.subr.mxu0 0.0
        %6989 = vmatpush2.xpose.msra.mxu0 0.0
        %6990 = vmatprep.mubr.f32.mxu0 0.0
        %6991 = vmatmul.mubr.f32.gmra.mxu0 %v4718
        %v6992 = vpop.f32.mrf.mxu0
        %v6993 = vadd.f32 0.0, %v6992
        %v6994 = vpop.f32.mrf.mxu0
        %6995 = vdwg.mxu0
        %v6996 = vmul.f32 %v6993, 0.088388346
        %v6997 = vsel %vm5414, %v6996, -inf
        %6998 = vmax.xlane.f32.xlu0 %v6997
        %v6999 = vpop.xlane.xlu0 %6998
        %v7000 = vsub.f32 %v6996, %v6999
        %v7001 = vmul.f32 %v7000, 1.442695
        %v7002 = vpow.pop %v7001
        %v7003 = vsel %vm5414, %v7002, 0.0
        %7004 = vadd.xlane.f32.xlu0 %v7003
        %v7005 = vpop.xlane.xlu0 %7004
        %v7006 = vrcp.pop %v7005
        %v7007 = vmul.f32 %v7002, %v7006
        %v7009 = vsel %vm5414, %v7007, 0
        %7011 = vmatprep.subr.mxu0 0.0
        %7012 = vmatpush1.msra.mxu0 0.0
        %7013 = vmatprep.subr.mxu0 0.0
        %7014 = vmatpush1.msra.mxu0 0.0
        %7015 = vmatprep.subr.mxu0 0.0
        %7016 = vmatpush1.msra.mxu0 0.0
        %7017 = vmatprep.subr.mxu0 0.0
        %7018 = vmatpush1.msra.mxu0 0.0
        %7019 = vmatprep.subr.mxu0 0.0
        %7020 = vmatpush1.msra.mxu0 0.0
        %7021 = vmatprep.subr.mxu0 0.0
        %7022 = vmatpush1.msra.mxu0 0.0
        %7023 = vmatprep.subr.mxu0 0.0
        %7024 = vmatpush1.msra.mxu0 0.0
        %7025 = vmatprep.subr.mxu0 0.0
        %7026 = vmatpush1.msra.mxu0 0.0
        %7027 = vmatprep.subr.mxu0 0.0
        %7028 = vmatpush1.msra.mxu0 0.0
        %7029 = vmatprep.subr.mxu0 0.0
        %7030 = vmatpush1.msra.mxu0 0.0
        %7031 = vmatprep.subr.mxu0 0.0
        %7032 = vmatpush1.msra.mxu0 0.0
        %7033 = vmatprep.subr.mxu0 0.0
        %7034 = vmatpush1.msra.mxu0 0.0
        %7035 = vmatprep.subr.mxu0 0.0
        %7036 = vmatpush1.msra.mxu0 0.0
        %7037 = vmatprep.subr.mxu0 0.0
        %7038 = vmatpush1.msra.mxu0 0.0
        %7039 = vmatprep.subr.mxu0 0.0
        %7040 = vmatpush1.msra.mxu0 %v5334
        %7041 = vmatprep.subr.mxu0 0.0
        %7042 = vmatpush1.msra.mxu0 %v5328
        %7043 = vmatprep.subr.mxu0 0.0
        %7044 = vmatpush2.msra.mxu0 0.0
        %7045 = vmatprep.subr.mxu0 0.0
        %7046 = vmatpush2.msra.mxu0 0.0
        %7047 = vmatprep.subr.mxu0 0.0
        %7048 = vmatpush2.msra.mxu0 0.0
        %7049 = vmatprep.subr.mxu0 0.0
        %7050 = vmatpush2.msra.mxu0 0.0
        %7051 = vmatprep.subr.mxu0 0.0
        %7052 = vmatpush2.msra.mxu0 0.0
        %7053 = vmatprep.subr.mxu0 0.0
        %7054 = vmatpush2.msra.mxu0 0.0
        %7055 = vmatprep.subr.mxu0 0.0
        %7056 = vmatpush2.msra.mxu0 0.0
        %7057 = vmatprep.subr.mxu0 0.0
        %7058 = vmatpush2.msra.mxu0 0.0
        %7059 = vmatprep.subr.mxu0 0.0
        %7060 = vmatpush2.msra.mxu0 0.0
        %7061 = vmatprep.subr.mxu0 0.0
        %7062 = vmatpush2.msra.mxu0 0.0
        %7063 = vmatprep.subr.mxu0 0.0
        %7064 = vmatpush2.msra.mxu0 0.0
        %7065 = vmatprep.subr.mxu0 0.0
        %7066 = vmatpush2.msra.mxu0 0.0
        %7067 = vmatprep.subr.mxu0 0.0
        %7068 = vmatpush2.msra.mxu0 0.0
        %7069 = vmatprep.subr.mxu0 0.0
        %7070 = vmatpush2.msra.mxu0 0.0
        %7071 = vmatprep.subr.mxu0 0.0
        %7072 = vmatpush2.msra.mxu0 0.0
        %7073 = vmatprep.subr.mxu0 0.0
        %7074 = vmatpush2.msra.mxu0 0.0
        %7075 = vmatprep.mubr.f32.mxu0 0.0
        %7076 = vmatmul.mubr.f32.gmra.mxu0 %v7009
        %v7077 = vpop.f32.mrf.mxu0
        %v7078 = vadd.f32 0.0, %v7077
        %v7079 = vpop.f32.mrf.mxu0
        %7080 = vdwg.mxu0
        %7081 = vmatprep.subr.mxu0 0.0
        %7082 = vmatpush1.msra.mxu0 %v4432
        %7083 = vmatprep.subr.mxu0 0.0
        %7084 = vmatpush1.msra.mxu0 %v4431
        %7085 = vmatprep.subr.mxu0 0.0
        %7086 = vmatpush1.msra.mxu0 %v4430
        %7087 = vmatprep.subr.mxu0 0.0
        %7088 = vmatpush1.msra.mxu0 %v4429
        %7089 = vmatprep.subr.mxu0 0.0
        %7090 = vmatpush1.msra.mxu0 %v4428
        %7091 = vmatprep.subr.mxu0 0.0
        %7092 = vmatpush1.msra.mxu0 %v4427
        %7093 = vmatprep.subr.mxu0 0.0
        %7094 = vmatpush1.msra.mxu0 %v4426
        %7095 = vmatprep.subr.mxu0 0.0
        %7096 = vmatpush1.msra.mxu0 %v4425
        %7097 = vmatprep.subr.mxu0 0.0
        %7098 = vmatpush1.msra.mxu0 %v4424
        %7099 = vmatprep.subr.mxu0 0.0
        %7100 = vmatpush1.msra.mxu0 %v4423
        %7101 = vmatprep.subr.mxu0 0.0
        %7102 = vmatpush1.msra.mxu0 %v4422
        %7103 = vmatprep.subr.mxu0 0.0
        %7104 = vmatpush1.msra.mxu0 %v4421
        %7105 = vmatprep.subr.mxu0 0.0
        %7106 = vmatpush1.msra.mxu0 %v4420
        %7107 = vmatprep.subr.mxu0 0.0
        %7108 = vmatpush1.msra.mxu0 %v4419
        %7109 = vmatprep.subr.mxu0 0.0
        %7110 = vmatpush1.msra.mxu0 %v4418
        %7111 = vmatprep.subr.mxu0 0.0
        %7112 = vmatpush1.msra.mxu0 %v4417
        %7113 = vmatprep.subr.mxu0 0.0
        %7114 = vmatpush2.msra.mxu0 0.0
        %7115 = vmatprep.subr.mxu0 0.0
        %7116 = vmatpush2.msra.mxu0 0.0
        %7117 = vmatprep.subr.mxu0 0.0
        %7118 = vmatpush2.msra.mxu0 0.0
        %7119 = vmatprep.subr.mxu0 0.0
        %7120 = vmatpush2.msra.mxu0 0.0
        %7121 = vmatprep.subr.mxu0 0.0
        %7122 = vmatpush2.msra.mxu0 0.0
        %7123 = vmatprep.subr.mxu0 0.0
        %7124 = vmatpush2.msra.mxu0 0.0
        %7125 = vmatprep.subr.mxu0 0.0
        %7126 = vmatpush2.msra.mxu0 0.0
        %7127 = vmatprep.subr.mxu0 0.0
        %7128 = vmatpush2.msra.mxu0 0.0
        %7129 = vmatprep.subr.mxu0 0.0
        %7130 = vmatpush2.msra.mxu0 0.0
        %7131 = vmatprep.subr.mxu0 0.0
        %7132 = vmatpush2.msra.mxu0 0.0
        %7133 = vmatprep.subr.mxu0 0.0
        %7134 = vmatpush2.msra.mxu0 0.0
        %7135 = vmatprep.subr.mxu0 0.0
        %7136 = vmatpush2.msra.mxu0 0.0
        %7137 = vmatprep.subr.mxu0 0.0
        %7138 = vmatpush2.msra.mxu0 0.0
        %7139 = vmatprep.subr.mxu0 0.0
        %7140 = vmatpush2.msra.mxu0 0.0
        %7141 = vmatprep.subr.mxu0 0.0
        %7142 = vmatpush2.msra.mxu0 0.0
        %7143 = vmatprep.subr.mxu0 0.0
        %7144 = vmatpush2.msra.mxu0 0.0
        %7145 = vmatprep.mubr.f32.mxu0 0.0
        %7146 = vmatmul.mubr.f32.gmra.mxu0 %v7078
        %v7147 = vpop.f32.mrf.mxu0
        %v7148 = vadd.f32 0.0, %v7147
        %v7149 = vpop.f32.mrf.mxu0
        %7150 = vdwg.mxu0
        %v7151 = vadd.f32 %v6925, %v7148
        %7152 = vadd.xlane.f32.xlu0 %v7151
        %v7153 = vpop.xlane.xlu0 %7152
        %v7154 = vmul.f32 %v7153, %v3889
        %v7155 = vsub.f32 %v7151, %v7154
        %v7156 = vmul.f32 %v7155, %v7155
        %7157 = vadd.xlane.f32.xlu0 %v7156
        %v7158 = vpop.xlane.xlu0 %7157
        %v7159 = vmul.f32 %v7158, %v3895
        %v7160 = vrsqrt.pop %v7159
        %v7161 = vmul.f32 %v7159, %v7160
        %vm7162 = vcmp.eq.f32.partialorder %v7159, inf
        %v7163 = vsel %vm7162, %v7159, %v7161
        %vm7164 = vcmp.eq.f32.partialorder %v7159, 0.0
        %v7165 = vand.u32 %v7159, 2147483648
        %v7166 = vsel %vm7164, %v7165, %v7163
        %v7167 = vadd.f32 %v7166, 0.001
        %v7168 = vrcp.pop %v7167
        %v7169 = vmul.f32 %v7155, %v7168
        %v7171 = vlaneseq
        %v7172 = vshrl.u32 %v7171, 7
        %v7173 = vsub.s32 0, %v7172
        %v7174 = vrot.slane %v4434, %v7173
        %v7176 = vmul.f32 %v7169, %v7174
        %v7178 = vlaneseq
        %v7179 = vshrl.u32 %v7178, 7
        %v7180 = vsub.s32 0, %v7179
        %v7181 = vrot.slane %v4435, %v7180
        %v7183 = vadd.f32 %v7176, %v7181
        %v7184 = vld [vmem:[%s16] sm:$0xff]
        %v7185 = vld [vmem:[%s16 + $0x8] sm:$0xff]
        %v7186 = vld [vmem:[%s16 + $0x10] sm:$0xff]
        %v7187 = vld [vmem:[%s16 + $0x18] sm:$0xff]
        %v7188 = vld [vmem:[%s16 + $0x20] sm:$0xff]
        %v7189 = vld [vmem:[%s16 + $0x28] sm:$0xff]
        %v7190 = vld [vmem:[%s16 + $0x30] sm:$0xff]
        %v7191 = vld [vmem:[%s16 + $0x38] sm:$0xff]
        %v7192 = vld [vmem:[%s16 + $0x40] sm:$0xff]
        %v7193 = vld [vmem:[%s16 + $0x48] sm:$0xff]
        %v7194 = vld [vmem:[%s16 + $0x50] sm:$0xff]
        %v7195 = vld [vmem:[%s16 + $0x58] sm:$0xff]
        %v7196 = vld [vmem:[%s16 + $0x60] sm:$0xff]
        %v7197 = vld [vmem:[%s16 + $0x68] sm:$0xff]
        %v7198 = vld [vmem:[%s16 + $0x70] sm:$0xff]
        %v7199 = vld [vmem:[%s16 + $0x78] sm:$0xff]
        %v7200 = vld [vmem:[%s16 + $0x80] sm:$0xff]
        %v7201 = vld [vmem:[%s16 + $0x88] sm:$0xff]
        %v7202 = vld [vmem:[%s16 + $0x90] sm:$0xff]
        %v7203 = vld [vmem:[%s16 + $0x98] sm:$0xff]
        %v7204 = vld [vmem:[%s16 + $0xa0] sm:$0xff]
        %v7205 = vld [vmem:[%s16 + $0xa8] sm:$0xff]
        %v7206 = vld [vmem:[%s16 + $0xb0] sm:$0xff]
        %v7207 = vld [vmem:[%s16 + $0xb8] sm:$0xff]
        %v7208 = vld [vmem:[%s16 + $0xc0] sm:$0xff]
        %v7209 = vld [vmem:[%s16 + $0xc8] sm:$0xff]
        %v7210 = vld [vmem:[%s16 + $0xd0] sm:$0xff]
        %v7211 = vld [vmem:[%s16 + $0xd8] sm:$0xff]
        %v7212 = vld [vmem:[%s16 + $0xe0] sm:$0xff]
        %v7213 = vld [vmem:[%s16 + $0xe8] sm:$0xff]
        %v7214 = vld [vmem:[%s16 + $0xf0] sm:$0xff]
        %v7215 = vld [vmem:[%s16 + $0xf8] sm:$0xff]
        %v7216 = vld [vmem:[%s16 + $0x100] sm:$0xff]
        %v7217 = vld [vmem:[%s16 + $0x108] sm:$0xff]
        %v7218 = vld [vmem:[%s16 + $0x110] sm:$0xff]
        %v7219 = vld [vmem:[%s16 + $0x118] sm:$0xff]
        %v7220 = vld [vmem:[%s16 + $0x120] sm:$0xff]
        %v7221 = vld [vmem:[%s16 + $0x128] sm:$0xff]
        %v7222 = vld [vmem:[%s16 + $0x130] sm:$0xff]
        %v7223 = vld [vmem:[%s16 + $0x138] sm:$0xff]
        %v7224 = vld [vmem:[%s16 + $0x140] sm:$0xff]
        %v7225 = vld [vmem:[%s16 + $0x148] sm:$0xff]
        %v7226 = vld [vmem:[%s16 + $0x150] sm:$0xff]
        %v7227 = vld [vmem:[%s16 + $0x158] sm:$0xff]
        %v7228 = vld [vmem:[%s16 + $0x160] sm:$0xff]
        %v7229 = vld [vmem:[%s16 + $0x168] sm:$0xff]
        %v7230 = vld [vmem:[%s16 + $0x170] sm:$0xff]
        %v7231 = vld [vmem:[%s16 + $0x178] sm:$0xff]
        %v7232 = vld [vmem:[%s16 + $0x180] sm:$0xff]
        %v7233 = vld [vmem:[%s16 + $0x188] sm:$0xff]
        %v7234 = vld [vmem:[%s16 + $0x190] sm:$0xff]
        %v7235 = vld [vmem:[%s16 + $0x198] sm:$0xff]
        %v7236 = vld [vmem:[%s16 + $0x1a0] sm:$0xff]
        %v7237 = vld [vmem:[%s16 + $0x1a8] sm:$0xff]
        %v7238 = vld [vmem:[%s16 + $0x1b0] sm:$0xff]
        %v7239 = vld [vmem:[%s16 + $0x1b8] sm:$0xff]
        %v7240 = vld [vmem:[%s16 + $0x1c0] sm:$0xff]
        %v7241 = vld [vmem:[%s16 + $0x1c8] sm:$0xff]
        %v7242 = vld [vmem:[%s16 + $0x1d0] sm:$0xff]
        %v7243 = vld [vmem:[%s16 + $0x1d8] sm:$0xff]
        %v7244 = vld [vmem:[%s16 + $0x1e0] sm:$0xff]
        %v7245 = vld [vmem:[%s16 + $0x1e8] sm:$0xff]
        %v7246 = vld [vmem:[%s16 + $0x1f0] sm:$0xff]
        %v7247 = vld [vmem:[%s16 + $0x1f8] sm:$0xff]
        %v7248 = vld [vmem:[%s17] sm:$0xf]
        %v7249 = vld [vmem:[%s18] sm:$0xff]
        %v7250 = vld [vmem:[%s18 + $0x8] sm:$0xff]
        %v7251 = vld [vmem:[%s18 + $0x10] sm:$0xff]
        %v7252 = vld [vmem:[%s18 + $0x18] sm:$0xff]
        %v7253 = vld [vmem:[%s18 + $0x20] sm:$0xff]
        %v7254 = vld [vmem:[%s18 + $0x28] sm:$0xff]
        %v7255 = vld [vmem:[%s18 + $0x30] sm:$0xff]
        %v7256 = vld [vmem:[%s18 + $0x38] sm:$0xff]
        %v7257 = vld [vmem:[%s18 + $0x40] sm:$0xff]
        %v7258 = vld [vmem:[%s18 + $0x48] sm:$0xff]
        %v7259 = vld [vmem:[%s18 + $0x50] sm:$0xff]
        %v7260 = vld [vmem:[%s18 + $0x58] sm:$0xff]
        %v7261 = vld [vmem:[%s18 + $0x60] sm:$0xff]
        %v7262 = vld [vmem:[%s18 + $0x68] sm:$0xff]
        %v7263 = vld [vmem:[%s18 + $0x70] sm:$0xff]
        %v7264 = vld [vmem:[%s18 + $0x78] sm:$0xff]
        %v7265 = vld [vmem:[%s18 + $0x80] sm:$0xff]
        %v7266 = vld [vmem:[%s18 + $0x88] sm:$0xff]
        %v7267 = vld [vmem:[%s18 + $0x90] sm:$0xff]
        %v7268 = vld [vmem:[%s18 + $0x98] sm:$0xff]
        %v7269 = vld [vmem:[%s18 + $0xa0] sm:$0xff]
        %v7270 = vld [vmem:[%s18 + $0xa8] sm:$0xff]
        %v7271 = vld [vmem:[%s18 + $0xb0] sm:$0xff]
        %v7272 = vld [vmem:[%s18 + $0xb8] sm:$0xff]
        %v7273 = vld [vmem:[%s18 + $0xc0] sm:$0xff]
        %v7274 = vld [vmem:[%s18 + $0xc8] sm:$0xff]
        %v7275 = vld [vmem:[%s18 + $0xd0] sm:$0xff]
        %v7276 = vld [vmem:[%s18 + $0xd8] sm:$0xff]
        %v7277 = vld [vmem:[%s18 + $0xe0] sm:$0xff]
        %v7278 = vld [vmem:[%s18 + $0xe8] sm:$0xff]
        %v7279 = vld [vmem:[%s18 + $0xf0] sm:$0xff]
        %v7280 = vld [vmem:[%s18 + $0xf8] sm:$0xff]
        %v7281 = vld [vmem:[%s18 + $0x100] sm:$0xff]
        %v7282 = vld [vmem:[%s18 + $0x108] sm:$0xff]
        %v7283 = vld [vmem:[%s18 + $0x110] sm:$0xff]
        %v7284 = vld [vmem:[%s18 + $0x118] sm:$0xff]
        %v7285 = vld [vmem:[%s18 + $0x120] sm:$0xff]
        %v7286 = vld [vmem:[%s18 + $0x128] sm:$0xff]
        %v7287 = vld [vmem:[%s18 + $0x130] sm:$0xff]
        %v7288 = vld [vmem:[%s18 + $0x138] sm:$0xff]
        %v7289 = vld [vmem:[%s18 + $0x140] sm:$0xff]
        %v7290 = vld [vmem:[%s18 + $0x148] sm:$0xff]
        %v7291 = vld [vmem:[%s18 + $0x150] sm:$0xff]
        %v7292 = vld [vmem:[%s18 + $0x158] sm:$0xff]
        %v7293 = vld [vmem:[%s18 + $0x160] sm:$0xff]
        %v7294 = vld [vmem:[%s18 + $0x168] sm:$0xff]
        %v7295 = vld [vmem:[%s18 + $0x170] sm:$0xff]
        %v7296 = vld [vmem:[%s18 + $0x178] sm:$0xff]
        %v7297 = vld [vmem:[%s18 + $0x180] sm:$0xff]
        %v7298 = vld [vmem:[%s18 + $0x188] sm:$0xff]
        %v7299 = vld [vmem:[%s18 + $0x190] sm:$0xff]
        %v7300 = vld [vmem:[%s18 + $0x198] sm:$0xff]
        %v7301 = vld [vmem:[%s18 + $0x1a0] sm:$0xff]
        %v7302 = vld [vmem:[%s18 + $0x1a8] sm:$0xff]
        %v7303 = vld [vmem:[%s18 + $0x1b0] sm:$0xff]
        %v7304 = vld [vmem:[%s18 + $0x1b8] sm:$0xff]
        %v7305 = vld [vmem:[%s18 + $0x1c0] sm:$0xff]
        %v7306 = vld [vmem:[%s18 + $0x1c8] sm:$0xff]
        %v7307 = vld [vmem:[%s18 + $0x1d0] sm:$0xff]
        %v7308 = vld [vmem:[%s18 + $0x1d8] sm:$0xff]
        %v7309 = vld [vmem:[%s18 + $0x1e0] sm:$0xff]
        %v7310 = vld [vmem:[%s18 + $0x1e8] sm:$0xff]
        %v7311 = vld [vmem:[%s18 + $0x1f0] sm:$0xff]
        %v7312 = vld [vmem:[%s18 + $0x1f8] sm:$0xff]
        %v7313 = vld [vmem:[%s19] sm:$0x1]
        %v7314 = vld [vmem:[%s20] sm:$0x1]
        %v7315 = vld [vmem:[%s21] sm:$0x1]
        %v7317 = vlaneseq
        %v7318 = vshrl.u32 %v7317, 7
        %v7319 = vsub.s32 0, %v7318
        %v7320 = vrot.slane %v7248, %v7319
        %v7321 = vlaneseq
        %v7322 = vshrl.u32 %v7321, 7
        %v7323 = vsub.s32 1, %v7322
        %v7324 = vrot.slane %v7248, %v7323
        %v7325 = vlaneseq
        %v7326 = vshrl.u32 %v7325, 7
        %v7327 = vsub.s32 2, %v7326
        %v7328 = vrot.slane %v7248, %v7327
        %v7329 = vlaneseq
        %v7330 = vshrl.u32 %v7329, 7
        %v7331 = vsub.s32 3, %v7330
        %v7332 = vrot.slane %v7248, %v7331
        %7337 = vmatprep.subr.mxu0 %v7245
        %7338 = vmatpush1.msra.mxu0 %v7244
        %7339 = vmatprep.subr.mxu0 %v7241
        %7340 = vmatpush1.msra.mxu0 %v7240
        %7341 = vmatprep.subr.mxu0 %v7237
        %7342 = vmatpush1.msra.mxu0 %v7236
        %7343 = vmatprep.subr.mxu0 %v7233
        %7344 = vmatpush1.msra.mxu0 %v7232
        %7345 = vmatprep.subr.mxu0 %v7229
        %7346 = vmatpush1.msra.mxu0 %v7228
        %7347 = vmatprep.subr.mxu0 %v7225
        %7348 = vmatpush1.msra.mxu0 %v7224
        %7349 = vmatprep.subr.mxu0 %v7221
        %7350 = vmatpush1.msra.mxu0 %v7220
        %7351 = vmatprep.subr.mxu0 %v7217
        %7352 = vmatpush1.msra.mxu0 %v7216
        %7353 = vmatprep.subr.mxu0 %v7213
        %7354 = vmatpush1.msra.mxu0 %v7212
        %7355 = vmatprep.subr.mxu0 %v7209
        %7356 = vmatpush1.msra.mxu0 %v7208
        %7357 = vmatprep.subr.mxu0 %v7205
        %7358 = vmatpush1.msra.mxu0 %v7204
        %7359 = vmatprep.subr.mxu0 %v7201
        %7360 = vmatpush1.msra.mxu0 %v7200
        %7361 = vmatprep.subr.mxu0 %v7197
        %7362 = vmatpush1.msra.mxu0 %v7196
        %7363 = vmatprep.subr.mxu0 %v7193
        %7364 = vmatpush1.msra.mxu0 %v7192
        %7365 = vmatprep.subr.mxu0 %v7189
        %7366 = vmatpush1.msra.mxu0 %v7188
        %7367 = vmatprep.subr.mxu0 %v7185
        %7368 = vmatpush1.msra.mxu0 %v7184
        %7369 = vmatprep.subr.mxu0 0.0
        %7370 = vmatpush2.msra.mxu0 0.0
        %7371 = vmatprep.subr.mxu0 0.0
        %7372 = vmatpush2.msra.mxu0 0.0
        %7373 = vmatprep.subr.mxu0 0.0
        %7374 = vmatpush2.msra.mxu0 0.0
        %7375 = vmatprep.subr.mxu0 0.0
        %7376 = vmatpush2.msra.mxu0 0.0
        %7377 = vmatprep.subr.mxu0 0.0
        %7378 = vmatpush2.msra.mxu0 0.0
        %7379 = vmatprep.subr.mxu0 0.0
        %7380 = vmatpush2.msra.mxu0 0.0
        %7381 = vmatprep.subr.mxu0 0.0
        %7382 = vmatpush2.msra.mxu0 0.0
        %7383 = vmatprep.subr.mxu0 0.0
        %7384 = vmatpush2.msra.mxu0 0.0
        %7385 = vmatprep.subr.mxu0 0.0
        %7386 = vmatpush2.msra.mxu0 0.0
        %7387 = vmatprep.subr.mxu0 0.0
        %7388 = vmatpush2.msra.mxu0 0.0
        %7389 = vmatprep.subr.mxu0 0.0
        %7390 = vmatpush2.msra.mxu0 0.0
        %7391 = vmatprep.subr.mxu0 0.0
        %7392 = vmatpush2.msra.mxu0 0.0
        %7393 = vmatprep.subr.mxu0 0.0
        %7394 = vmatpush2.msra.mxu0 0.0
        %7395 = vmatprep.subr.mxu0 0.0
        %7396 = vmatpush2.msra.mxu0 0.0
        %7397 = vmatprep.subr.mxu0 0.0
        %7398 = vmatpush2.msra.mxu0 0.0
        %7399 = vmatprep.subr.mxu0 0.0
        %7400 = vmatpush2.msra.mxu0 0.0
        %7401 = vmatprep.mubr.f32.mxu0 0.0
        %7402 = vmatmul.mubr.f32.gmra.mxu0 %v7183
        %v7403 = vpop.f32.mrf.mxu0
        %v7404 = vadd.f32 %v7320, %v7403
        %v7405 = vpop.f32.mrf.mxu0
        %v7406 = vadd.f32 %v7324, %v7405
        %7407 = vdwg.mxu0
        %7408 = vmatprep.subr.mxu0 %v7247
        %7409 = vmatpush1.msra.mxu0 %v7246
        %7410 = vmatprep.subr.mxu0 %v7243
        %7411 = vmatpush1.msra.mxu0 %v7242
        %7412 = vmatprep.subr.mxu0 %v7239
        %7413 = vmatpush1.msra.mxu0 %v7238
        %7414 = vmatprep.subr.mxu0 %v7235
        %7415 = vmatpush1.msra.mxu0 %v7234
        %7416 = vmatprep.subr.mxu0 %v7231
        %7417 = vmatpush1.msra.mxu0 %v7230
        %7418 = vmatprep.subr.mxu0 %v7227
        %7419 = vmatpush1.msra.mxu0 %v7226
        %7420 = vmatprep.subr.mxu0 %v7223
        %7421 = vmatpush1.msra.mxu0 %v7222
        %7422 = vmatprep.subr.mxu0 %v7219
        %7423 = vmatpush1.msra.mxu0 %v7218
        %7424 = vmatprep.subr.mxu0 %v7215
        %7425 = vmatpush1.msra.mxu0 %v7214
        %7426 = vmatprep.subr.mxu0 %v7211
        %7427 = vmatpush1.msra.mxu0 %v7210
        %7428 = vmatprep.subr.mxu0 %v7207
        %7429 = vmatpush1.msra.mxu0 %v7206
        %7430 = vmatprep.subr.mxu0 %v7203
        %7431 = vmatpush1.msra.mxu0 %v7202
        %7432 = vmatprep.subr.mxu0 %v7199
        %7433 = vmatpush1.msra.mxu0 %v7198
        %7434 = vmatprep.subr.mxu0 %v7195
        %7435 = vmatpush1.msra.mxu0 %v7194
        %7436 = vmatprep.subr.mxu0 %v7191
        %7437 = vmatpush1.msra.mxu0 %v7190
        %7438 = vmatprep.subr.mxu0 %v7187
        %7439 = vmatpush1.msra.mxu0 %v7186
        %7440 = vmatprep.subr.mxu0 0.0
        %7441 = vmatpush2.msra.mxu0 0.0
        %7442 = vmatprep.subr.mxu0 0.0
        %7443 = vmatpush2.msra.mxu0 0.0
        %7444 = vmatprep.subr.mxu0 0.0
        %7445 = vmatpush2.msra.mxu0 0.0
        %7446 = vmatprep.subr.mxu0 0.0
        %7447 = vmatpush2.msra.mxu0 0.0
        %7448 = vmatprep.subr.mxu0 0.0
        %7449 = vmatpush2.msra.mxu0 0.0
        %7450 = vmatprep.subr.mxu0 0.0
        %7451 = vmatpush2.msra.mxu0 0.0
        %7452 = vmatprep.subr.mxu0 0.0
        %7453 = vmatpush2.msra.mxu0 0.0
        %7454 = vmatprep.subr.mxu0 0.0
        %7455 = vmatpush2.msra.mxu0 0.0
        %7456 = vmatprep.subr.mxu0 0.0
        %7457 = vmatpush2.msra.mxu0 0.0
        %7458 = vmatprep.subr.mxu0 0.0
        %7459 = vmatpush2.msra.mxu0 0.0
        %7460 = vmatprep.subr.mxu0 0.0
        %7461 = vmatpush2.msra.mxu0 0.0
        %7462 = vmatprep.subr.mxu0 0.0
        %7463 = vmatpush2.msra.mxu0 0.0
        %7464 = vmatprep.subr.mxu0 0.0
        %7465 = vmatpush2.msra.mxu0 0.0
        %7466 = vmatprep.subr.mxu0 0.0
        %7467 = vmatpush2.msra.mxu0 0.0
        %7468 = vmatprep.subr.mxu0 0.0
        %7469 = vmatpush2.msra.mxu0 0.0
        %7470 = vmatprep.subr.mxu0 0.0
        %7471 = vmatpush2.msra.mxu0 0.0
        %7472 = vmatprep.mubr.f32.mxu0 0.0
        %7473 = vmatmul.mubr.f32.gmra.mxu0 %v7183
        %v7474 = vpop.f32.mrf.mxu0
        %v7475 = vadd.f32 %v7328, %v7474
        %v7476 = vpop.f32.mrf.mxu0
        %v7477 = vadd.f32 %v7332, %v7476
        %7478 = vdwg.mxu0
        %v7479 = vmax.f32 %v7404, 0.0
        %v7480 = vmax.f32 %v7406, 0.0
        %v7481 = vmax.f32 %v7475, 0.0
        %v7482 = vmax.f32 %v7477, 0.0
        %v7484 = vlaneseq
        %v7485 = vshrl.u32 %v7484, 7
        %v7486 = vsub.s32 0, %v7485
        %v7487 = vrot.slane %v7313, %v7486
        %7489 = vmatprep.subr.mxu0 0.0
        %7490 = vmatpush1.msra.mxu0 %v7264
        %7491 = vmatprep.subr.mxu0 0.0
        %7492 = vmatpush1.msra.mxu0 %v7263
        %7493 = vmatprep.subr.mxu0 0.0
        %7494 = vmatpush1.msra.mxu0 %v7262
        %7495 = vmatprep.subr.mxu0 0.0
        %7496 = vmatpush1.msra.mxu0 %v7261
        %7497 = vmatprep.subr.mxu0 0.0
        %7498 = vmatpush1.msra.mxu0 %v7260
        %7499 = vmatprep.subr.mxu0 0.0
        %7500 = vmatpush1.msra.mxu0 %v7259
        %7501 = vmatprep.subr.mxu0 0.0
        %7502 = vmatpush1.msra.mxu0 %v7258
        %7503 = vmatprep.subr.mxu0 0.0
        %7504 = vmatpush1.msra.mxu0 %v7257
        %7505 = vmatprep.subr.mxu0 0.0
        %7506 = vmatpush1.msra.mxu0 %v7256
        %7507 = vmatprep.subr.mxu0 0.0
        %7508 = vmatpush1.msra.mxu0 %v7255
        %7509 = vmatprep.subr.mxu0 0.0
        %7510 = vmatpush1.msra.mxu0 %v7254
        %7511 = vmatprep.subr.mxu0 0.0
        %7512 = vmatpush1.msra.mxu0 %v7253
        %7513 = vmatprep.subr.mxu0 0.0
        %7514 = vmatpush1.msra.mxu0 %v7252
        %7515 = vmatprep.subr.mxu0 0.0
        %7516 = vmatpush1.msra.mxu0 %v7251
        %7517 = vmatprep.subr.mxu0 0.0
        %7518 = vmatpush1.msra.mxu0 %v7250
        %7519 = vmatprep.subr.mxu0 0.0
        %7520 = vmatpush1.msra.mxu0 %v7249
        %7521 = vmatprep.subr.mxu0 0.0
        %7522 = vmatpush2.msra.mxu0 %v7280
        %7523 = vmatprep.subr.mxu0 0.0
        %7524 = vmatpush2.msra.mxu0 %v7279
        %7525 = vmatprep.subr.mxu0 0.0
        %7526 = vmatpush2.msra.mxu0 %v7278
        %7527 = vmatprep.subr.mxu0 0.0
        %7528 = vmatpush2.msra.mxu0 %v7277
        %7529 = vmatprep.subr.mxu0 0.0
        %7530 = vmatpush2.msra.mxu0 %v7276
        %7531 = vmatprep.subr.mxu0 0.0
        %7532 = vmatpush2.msra.mxu0 %v7275
        %7533 = vmatprep.subr.mxu0 0.0
        %7534 = vmatpush2.msra.mxu0 %v7274
        %7535 = vmatprep.subr.mxu0 0.0
        %7536 = vmatpush2.msra.mxu0 %v7273
        %7537 = vmatprep.subr.mxu0 0.0
        %7538 = vmatpush2.msra.mxu0 %v7272
        %7539 = vmatprep.subr.mxu0 0.0
        %7540 = vmatpush2.msra.mxu0 %v7271
        %7541 = vmatprep.subr.mxu0 0.0
        %7542 = vmatpush2.msra.mxu0 %v7270
        %7543 = vmatprep.subr.mxu0 0.0
        %7544 = vmatpush2.msra.mxu0 %v7269
        %7545 = vmatprep.subr.mxu0 0.0
        %7546 = vmatpush2.msra.mxu0 %v7268
        %7547 = vmatprep.subr.mxu0 0.0
        %7548 = vmatpush2.msra.mxu0 %v7267
        %7549 = vmatprep.subr.mxu0 0.0
        %7550 = vmatpush2.msra.mxu0 %v7266
        %7551 = vmatprep.subr.mxu0 0.0
        %7552 = vmatpush2.msra.mxu0 %v7265
        %7553 = vmatprep.mubr.f32.mxu0 %v7480
        %7554 = vmatmul.mubr.f32.gmra.mxu0 %v7479
        %v7555 = vpop.f32.mrf.mxu0
        %v7556 = vadd.f32 %v7487, %v7555
        %v7557 = vpop.f32.mrf.mxu0
        %7558 = vdwg.mxu0
        %7559 = vmatprep.subr.mxu0 0.0
        %7560 = vmatpush1.msra.mxu0 %v7296
        %7561 = vmatprep.subr.mxu0 0.0
        %7562 = vmatpush1.msra.mxu0 %v7295
        %7563 = vmatprep.subr.mxu0 0.0
        %7564 = vmatpush1.msra.mxu0 %v7294
        %7565 = vmatprep.subr.mxu0 0.0
        %7566 = vmatpush1.msra.mxu0 %v7293
        %7567 = vmatprep.subr.mxu0 0.0
        %7568 = vmatpush1.msra.mxu0 %v7292
        %7569 = vmatprep.subr.mxu0 0.0
        %7570 = vmatpush1.msra.mxu0 %v7291
        %7571 = vmatprep.subr.mxu0 0.0
        %7572 = vmatpush1.msra.mxu0 %v7290
        %7573 = vmatprep.subr.mxu0 0.0
        %7574 = vmatpush1.msra.mxu0 %v7289
        %7575 = vmatprep.subr.mxu0 0.0
        %7576 = vmatpush1.msra.mxu0 %v7288
        %7577 = vmatprep.subr.mxu0 0.0
        %7578 = vmatpush1.msra.mxu0 %v7287
        %7579 = vmatprep.subr.mxu0 0.0
        %7580 = vmatpush1.msra.mxu0 %v7286
        %7581 = vmatprep.subr.mxu0 0.0
        %7582 = vmatpush1.msra.mxu0 %v7285
        %7583 = vmatprep.subr.mxu0 0.0
        %7584 = vmatpush1.msra.mxu0 %v7284
        %7585 = vmatprep.subr.mxu0 0.0
        %7586 = vmatpush1.msra.mxu0 %v7283
        %7587 = vmatprep.subr.mxu0 0.0
        %7588 = vmatpush1.msra.mxu0 %v7282
        %7589 = vmatprep.subr.mxu0 0.0
        %7590 = vmatpush1.msra.mxu0 %v7281
        %7591 = vmatprep.subr.mxu0 0.0
        %7592 = vmatpush2.msra.mxu0 %v7312
        %7593 = vmatprep.subr.mxu0 0.0
        %7594 = vmatpush2.msra.mxu0 %v7311
        %7595 = vmatprep.subr.mxu0 0.0
        %7596 = vmatpush2.msra.mxu0 %v7310
        %7597 = vmatprep.subr.mxu0 0.0
        %7598 = vmatpush2.msra.mxu0 %v7309
        %7599 = vmatprep.subr.mxu0 0.0
        %7600 = vmatpush2.msra.mxu0 %v7308
        %7601 = vmatprep.subr.mxu0 0.0
        %7602 = vmatpush2.msra.mxu0 %v7307
        %7603 = vmatprep.subr.mxu0 0.0
        %7604 = vmatpush2.msra.mxu0 %v7306
        %7605 = vmatprep.subr.mxu0 0.0
        %7606 = vmatpush2.msra.mxu0 %v7305
        %7607 = vmatprep.subr.mxu0 0.0
        %7608 = vmatpush2.msra.mxu0 %v7304
        %7609 = vmatprep.subr.mxu0 0.0
        %7610 = vmatpush2.msra.mxu0 %v7303
        %7611 = vmatprep.subr.mxu0 0.0
        %7612 = vmatpush2.msra.mxu0 %v7302
        %7613 = vmatprep.subr.mxu0 0.0
        %7614 = vmatpush2.msra.mxu0 %v7301
        %7615 = vmatprep.subr.mxu0 0.0
        %7616 = vmatpush2.msra.mxu0 %v7300
        %7617 = vmatprep.subr.mxu0 0.0
        %7618 = vmatpush2.msra.mxu0 %v7299
        %7619 = vmatprep.subr.mxu0 0.0
        %7620 = vmatpush2.msra.mxu0 %v7298
        %7621 = vmatprep.subr.mxu0 0.0
        %7622 = vmatpush2.msra.mxu0 %v7297
        %7623 = vmatprep.mubr.f32.mxu0 %v7482
        %7624 = vmatmul.mubr.f32.gmra.mxu0 %v7481
        %v7625 = vpop.f32.mrf.mxu0
        %v7626 = vadd.f32 %v7556, %v7625
        %v7627 = vpop.f32.mrf.mxu0
        %7628 = vdwg.mxu0
        %v7629 = vadd.f32 %v7626, %v7183
        %7630 = vadd.xlane.f32.xlu0 %v7629
        %v7631 = vpop.xlane.xlu0 %7630
        %v7632 = vmul.f32 %v7631, %v3889
        %v7633 = vsub.f32 %v7629, %v7632
        %v7634 = vmul.f32 %v7633, %v7633
        %7635 = vadd.xlane.f32.xlu0 %v7634
        %v7636 = vpop.xlane.xlu0 %7635
        %v7637 = vmul.f32 %v7636, %v3895
        %v7638 = vrsqrt.pop %v7637
        %v7639 = vmul.f32 %v7637, %v7638
        %vm7640 = vcmp.eq.f32.partialorder %v7637, inf
        %v7641 = vsel %vm7640, %v7637, %v7639
        %vm7642 = vcmp.eq.f32.partialorder %v7637, 0.0
        %v7643 = vand.u32 %v7637, 2147483648
        %v7644 = vsel %vm7642, %v7643, %v7641
        %v7645 = vadd.f32 %v7644, 0.001
        %v7646 = vrcp.pop %v7645
        %v7647 = vmul.f32 %v7633, %v7646
        %v7649 = vlaneseq
        %v7650 = vshrl.u32 %v7649, 7
        %v7651 = vsub.s32 0, %v7650
        %v7652 = vrot.slane %v7314, %v7651
        %v7654 = vmul.f32 %v7647, %v7652
        %v7656 = vlaneseq
        %v7657 = vshrl.u32 %v7656, 7
        %v7658 = vsub.s32 0, %v7657
        %v7659 = vrot.slane %v7315, %v7658
        %v7661 = vadd.f32 %v7654, %v7659
        %7662 = vst [vmem:[%s690] sm:$0xff] %v7661
        %s7663 = sand.u32 %s516, 1
        %s7664 = scalar_lea.sflag [#allocation3], %s7663
        %s7665 = sand.u32 %s516, 1
        %s7666 = smul.addr %s7665, 8
        %s7667 = scalar_lea.vmem [#allocation2], %s7666
        // Predicated region
        $region109: #{decoder_forward.1} parent=107 // pred_check
          %p7668 = pneg %p526
        $region110: #{decoder_forward.1} parent=107 // pred_check_branch
          %7670 = sbr.rel (%p7668) target = $region112
        $region111: #{decoder_forward.1} parent=107 // pred_region
          %s7672 = ssub.s32 128, 128
          %7673 = vsyncadd %s7664, %s7672
          %s7674 = smul.addr %s36, 128
          %s7675 = scalar_lea.hbm %s22, %s7674
          %s7677 = sshll.u32 %s7667, 4
          %s7678 = int_to_ptr.vmem [resolvable:$true] %s7677
          %7680 = dma.vmem_to_hbm [thread:$0]  %s7678, 128, %s7675, %s7664
        $region112: #{decoder_forward.1} parent=107 // pred_fallthru
          _
      $region108: #{decoder_forward.1} parent=5 // pred_fallthru
        _
      %p7681 = scmp.le.s32.totalorder 2, %s31
      // Predicated region
      $region113: #{decoder_forward.1} parent=5 // pred_check
        %p7682 = pneg %p7681
      $region114: #{decoder_forward.1} parent=5 // pred_check_branch
        %7684 = sbr.rel (%p7682) target = $region116
      $region115: #{decoder_forward.1} parent=5 // pred_region
        %s7685 = ssub.s32 %s31, 2
        // Predicated region
        $region117: #{decoder_forward.1} parent=115 // pred_check
          %p7686 = pneg %p532
        $region118: #{decoder_forward.1} parent=115 // pred_check_branch
          %7688 = sbr.rel (%p7686) target = $region120
        $region119: #{decoder_forward.1} parent=115 // pred_region
          %s7689 = sand.u32 %s517, 1
          %s7690 = scalar_lea.sflag [#allocation3], %s7689
          %s7691 = sand.u32 %s517, 1
          %s7692 = smul.addr %s7691, 8
          %s7693 = scalar_lea.vmem [#allocation2], %s7692
          %7694 = dma.done %s7690, 128
        $region120: #{decoder_forward.1} parent=115 // pred_fallthru
          _
      $region116: #{decoder_forward.1} parent=5 // pred_fallthru
        _
    $region6: #{decoder_forward.1} parent=1 // loop_footer
      %s35 = sadd.s32 1, %s31
    $region7: #{decoder_forward.1} parent=1 // loop_footer_branch
      %30 = sbr.rel target = $region3
    $region8: #{decoder_forward.1} parent=1 // loop_exit
      _
    %7695 = vsyncpa [#allocation3], 1
    %s7696 = scalar_lea.sflag [#allocation3], 1
    %7697 = vsyncpa %s7696, 1

</llo_original>
